<compile_context>
chip_gen: v7x
topology: tpu7x:2x2x1
jax: 0.10.0
libtpu: 0.0.40
codegen_flags: <defaults>
</compile_context>

<pallas_src>
import jax
import jax.numpy as jnp
import numpy as np
from jax.experimental import pallas as pl
from jax.experimental.pallas import tpu as pltpu

# ---------------- model config (small but structurally faithful) ----------------
D = 8
W = 64                  # hidden width (torch default is 256; small here per task)
INPUT_CH = 3
INPUT_CH_VIEWS = 3
IN_TOTAL = INPUT_CH + INPUT_CH_VIEWS
SKIPS = (4,)            # skip connection after pts_linears[4]
USE_VIEWDIRS = True
OUT_CH = 4              # cat([rgb(3), alpha(1)])
HEAD_PAD = 128          # fused feature+alpha head padded to one 128-lane tile
FRONT_N = 2 * W + W // 2  # width of the fused front matmul (160)


# ---------------- Pallas kernel ----------------
def nerf_kernel(x_ref,
                w_front_ref,  # (6, FRONT_N)  bf16: [pts->layer0 | pts->skip | views->views_lin]
                w_sq_ref,     # (7, W, W)     bf16: layers 1,2,3,4, skip-layer h part, 6, 7
                b_pts_ref,    # (8, W)        f32 : biases of pts_linears[0..7]
                w_head_ref,   # (W, 128)      bf16: [feature | alpha | zeros]
                b_head_ref,   # (1, 128)      f32
                wv_f_ref,     # (W, W//2)     bf16: views_linears[0] feature part
                bv_ref,       # (1, W//2)     f32
                wr_ref,       # (W//2, 4)     bf16: rgb_linear, col 3 zero
                br_ref,       # (1, 4)        f32 : rgb bias, col 3 zero
                out_ref):     # (TB, 4)       f32
    x = x_ref[...]                                   # (TB, 6) f32
    x_bf = x.astype(jnp.bfloat16)

    def mm(a_f32, w_bf16):
        # bf16 MXU matmul, f32 accumulation.
        return jnp.dot(a_f32.astype(jnp.bfloat16), w_bf16,
                       preferred_element_type=jnp.float32)

    # One front matmul covers the three x-fed matmuls:
    #   front[:, :W]         = pts   @ pts_linears[0].W
    #   front[:, W:2W]       = pts   @ (skip layer pts part)
    #   front[:, 2W:2W+W//2] = views @ (views_linears[0] views part)
    front = jnp.dot(x_bf, w_front_ref[...], preferred_element_type=jnp.float32)

    # pts_linears[0]
    h = jnp.maximum(front[:, :W] + b_pts_ref[0:1, :], 0.0)

    # pts_linears[1..4]
    for i in range(4):
        h = jnp.maximum(mm(h, w_sq_ref[i]) + b_pts_ref[i + 1:i + 2, :], 0.0)

    # skip: h = cat([input_pts, h]) @ W5  ==  pts @ W5[:ic] + h @ W5[ic:]
    h = jnp.maximum(front[:, W:2 * W] + mm(h, w_sq_ref[4]) + b_pts_ref[5:6, :], 0.0)

    # pts_linears[6..7]
    h = jnp.maximum(mm(h, w_sq_ref[5]) + b_pts_ref[6:7, :], 0.0)
    h = jnp.maximum(mm(h, w_sq_ref[6]) + b_pts_ref[7:8, :], 0.0)

    # fused feature_linear + alpha_linear head (one 128-lane matmul)
    fa = mm(h, w_head_ref[...]) + b_head_ref[...]    # (TB, 128)
    feature = fa[:, :W]                              # (TB, W)   (no ReLU, matches torch)
    alpha = fa[:, W:W + 1]                           # (TB, 1)

    # views_linears[0] on cat([feature, input_views]) (split matmul; views term from front)
    hv = jnp.maximum(
        mm(feature, wv_f_ref[...]) + front[:, 2 * W:2 * W + W // 2] + bv_ref[...], 0.0)

    # rgb_linear (col 3 of the weight is zero) -> (TB, 4); overwrite lane 3 with alpha
    rgb4 = mm(hv, wr_ref[...]) + br_ref[...]         # (TB, 4)
    lane = jax.lax.broadcasted_iota(jnp.int32, rgb4.shape, 1)
    out_ref[...] = jnp.where(lane == OUT_CH - 1, alpha, rgb4)


# ---------------- wrapper ----------------
def _param_spec(p):
    nd = p.ndim
    return pl.BlockSpec(p.shape, lambda i, _nd=nd: (0,) * _nd)


def _choose_tb(n, tb_max=4096):
    # Largest tile up to tb_max, but keep at least 2 grid steps (v7x: 2 TensorCores),
    # rounded up to a sublane multiple of 8.
    tb = min(tb_max, max(8, pl.cdiv(n, 2)))
    return pl.cdiv(tb, 8) * 8


def nerf_forward(x, params, *, tb=None):
    """x: (N, 6) float32 = [pts(3), viewdirs(3)]. Returns (N, 4) = [rgb(3), alpha(1)]."""
    n = x.shape[0]
    if tb is None:
        tb = _choose_tb(n)
    n_pad = pl.cdiv(n, tb) * tb
    if n_pad != n:
        x = jnp.pad(x, ((0, n_pad - n), (0, 0)))
    grid = (n_pad // tb,)

    x_spec = pl.BlockSpec((tb, IN_TOTAL), lambda i: (i, 0))
    out_spec = pl.BlockSpec((tb, OUT_CH), lambda i: (i, 0))

    macs_per_row = (IN_TOTAL * FRONT_N                 # fused front matmul
                    + 4 * W * W                        # layers 1..4
                    + W * W                            # skip layer 5 (h part)
                    + 2 * W * W                        # layers 6, 7
                    + W * HEAD_PAD                     # fused feature+alpha (padded)
                    + W * (W // 2)                     # views layer (feature part)
                    + (W // 2) * OUT_CH)               # rgb
    flops = 2 * macs_per_row * n_pad
    bytes_accessed = (x.size * 4 + n_pad * OUT_CH * 4
                      + int(sum(int(p.nbytes) for p in params)))

    out = pl.pallas_call(
        nerf_kernel,
        out_shape=jax.ShapeDtypeStruct((n_pad, OUT_CH), jnp.float32),
        grid=grid,
        in_specs=[x_spec] + [_param_spec(p) for p in params],
        out_specs=out_spec,
        compiler_params=pltpu.CompilerParams(
            dimension_semantics=("parallel",)),
        cost_estimate=pl.CostEstimate(flops=flops, transcendentals=0,
                                      bytes_accessed=bytes_accessed),
    )(x, *params)
    return out[:n]


# ---------------- deterministic parameter init (PyTorch Linear style) ----------------
def _linear_params(key, fan_in, fan_out):
    k = 1.0 / np.sqrt(fan_in)
    kw, kb = jax.random.split(key)
    w = jax.random.uniform(kw, (fan_in, fan_out), jnp.float32, -k, k)
    b = jax.random.uniform(kb, (1, fan_out), jnp.float32, -k, k)
    return w, b


def init_params(key):
    keys = jax.random.split(key, 12)
    it = iter(keys)

    # pts_linears
    w0, b0 = _linear_params(next(it), INPUT_CH, W)
    w1, b1 = _linear_params(next(it), W, W)
    w2, b2 = _linear_params(next(it), W, W)
    w3, b3 = _linear_params(next(it), W, W)
    w4, b4 = _linear_params(next(it), W, W)
    w5, b5 = _linear_params(next(it), W + INPUT_CH, W)     # skip layer
    w5p, w5h = w5[:INPUT_CH], w5[INPUT_CH:]
    w6, b6 = _linear_params(next(it), W, W)
    w7, b7 = _linear_params(next(it), W, W)

    # heads
    wf, bfeat = _linear_params(next(it), W, W)                       # feature_linear
    wa, ba = _linear_params(next(it), W, 1)                          # alpha_linear
    wv, bv = _linear_params(next(it), W + INPUT_CH_VIEWS, W // 2)    # views_linears[0]
    wv_f, wv_v = wv[:W], wv[W:]
    wr, br = _linear_params(next(it), W // 2, 3)                     # rgb_linear

    bf16 = jnp.bfloat16

    # Fused front matrix: rows 0..2 (pts) -> [w0 | w5p | 0], rows 3..5 (views) -> [0 | 0 | wv_v]
    w_front = jnp.zeros((IN_TOTAL, FRONT_N), jnp.float32)
    w_front = w_front.at[:INPUT_CH, :W].set(w0)
    w_front = w_front.at[:INPUT_CH, W:2 * W].set(w5p)
    w_front = w_front.at[INPUT_CH:, 2 * W:].set(wv_v)
    w_front = w_front.astype(bf16)

    w_sq = jnp.stack([w1, w2, w3, w4, w5h, w6, w7]).astype(bf16)     # (7, W, W)
    b_pts = jnp.concatenate([b0, b1, b2, b3, b4, b5, b6, b7], 0)     # (8, W) f32

    # Fused feature+alpha head, padded to one 128-lane tile.
    w_head = jnp.zeros((W, HEAD_PAD), jnp.float32)
    w_head = w_head.at[:, :W].set(wf).at[:, W:W + 1].set(wa).astype(bf16)
    b_head = jnp.zeros((1, HEAD_PAD), jnp.float32)
    b_head = b_head.at[:, :W].set(bfeat).at[:, W:W + 1].set(ba)

    # rgb_linear padded to 4 output columns (col 3 zero; alpha overwrites lane 3).
    wr_pad = jnp.zeros((W // 2, OUT_CH), jnp.float32).at[:, :3].set(wr).astype(bf16)
    br_pad = jnp.zeros((1, OUT_CH), jnp.float32).at[:, :3].set(br)

    return [w_front, w_sq, b_pts, w_head, b_head,
            wv_f.astype(bf16), bv, wr_pad, br_pad]


# ---------------- pure-JAX reference (mirrors the torch forward, concat-style) ----------------
def nerf_reference(x, params):
    (w_front, w_sq, b_pts, w_head, b_head, wv_f, bv, wr_pad, br_pad) = params
    pts = x[:, :INPUT_CH]
    views = x[:, INPUT_CH:IN_TOTAL]

    def mm(a, w_bf16):
        return jnp.dot(a.astype(jnp.bfloat16), w_bf16,
                       preferred_element_type=jnp.float32)

    w0 = w_front[:INPUT_CH, :W]
    w5p = w_front[:INPUT_CH, W:2 * W]
    wv_v = w_front[INPUT_CH:, 2 * W:]

    pts_w = [w0, w_sq[0], w_sq[1], w_sq[2], w_sq[3],
             jnp.concatenate([w5p, w_sq[4]], 0), w_sq[5], w_sq[6]]
    h = pts
    for i in range(D):
        h = jax.nn.relu(mm(h, pts_w[i]) + b_pts[i])
        if i in SKIPS:
            h = jnp.concatenate([pts, h], -1)

    alpha = mm(h, w_head[:, W:W + 1]) + b_head[:, W:W + 1]
    feature = mm(h, w_head[:, :W]) + b_head[:, :W]
    hv = jnp.concatenate([feature, views], -1)
    wv = jnp.concatenate([wv_f, wv_v], 0)
    hv = jax.nn.relu(mm(hv, wv) + bv)
    rgb = mm(hv, wr_pad[:, :3]) + br_pad[:, :3]
    return jnp.concatenate([rgb, alpha], -1)


if __name__ == "__main__":
    key = jax.random.PRNGKey(0)
    k_x, k_p = jax.random.split(key)

    N = 2048  # number of ray samples (rows); auto tb -> 1024, grid of 2 parallel steps
    x = jax.random.normal(k_x, (N, IN_TOTAL), jnp.float32)
    params = init_params(k_p)

    out = nerf_forward(x, params)
    out = jax.block_until_ready(out)

    ref = nerf_reference(x, params)
    np.testing.assert_allclose(np.asarray(out), np.asarray(ref),
                               rtol=2e-3, atol=2e-3)

    print("KERNEL_OK")
</pallas_src>

<mosaic_0001>
module attributes {stable_mosaic.version = 11 : i64} {
  func.func @nerf_kernel(%arg0: i32, %arg1: memref<1024x6xf32, #tpu.memory_space<vmem>>, %arg2: memref<6x160xbf16, #tpu.memory_space<vmem>>, %arg3: memref<7x64x64xbf16, #tpu.memory_space<vmem>>, %arg4: memref<8x64xf32, #tpu.memory_space<vmem>>, %arg5: memref<64x128xbf16, #tpu.memory_space<vmem>>, %arg6: memref<1x128xf32, #tpu.memory_space<vmem>>, %arg7: memref<64x32xbf16, #tpu.memory_space<vmem>>, %arg8: memref<1x32xf32, #tpu.memory_space<vmem>>, %arg9: memref<32x4xbf16, #tpu.memory_space<vmem>>, %arg10: memref<1x4xf32, #tpu.memory_space<vmem>>, %arg11: memref<1024x4xf32, #tpu.memory_space<vmem>>) attributes {dimension_semantics = [#tpu.dimension_semantics<parallel>], iteration_bounds = array<i64: 2>, scalar_prefetch = 0 : i64, scratch_operands = 0 : i64, tpu.core_type = #tpu.core_type<tc>, window_params = [{transform_indices = @transform_0, window_bounds = array<i64: 1024, 6>}, {pipeline_mode = #tpu.pipeline_mode<synchronous>, transform_indices = @transform_1, window_bounds = array<i64: 6, 160>}, {pipeline_mode = #tpu.pipeline_mode<synchronous>, transform_indices = @transform_2, window_bounds = array<i64: 7, 64, 64>}, {pipeline_mode = #tpu.pipeline_mode<synchronous>, transform_indices = @transform_3, window_bounds = array<i64: 8, 64>}, {pipeline_mode = #tpu.pipeline_mode<synchronous>, transform_indices = @transform_4, window_bounds = array<i64: 64, 128>}, {pipeline_mode = #tpu.pipeline_mode<synchronous>, transform_indices = @transform_5, window_bounds = array<i64: 1, 128>}, {pipeline_mode = #tpu.pipeline_mode<synchronous>, transform_indices = @transform_6, window_bounds = array<i64: 64, 32>}, {pipeline_mode = #tpu.pipeline_mode<synchronous>, transform_indices = @transform_7, window_bounds = array<i64: 1, 32>}, {pipeline_mode = #tpu.pipeline_mode<synchronous>, transform_indices = @transform_8, window_bounds = array<i64: 32, 4>}, {pipeline_mode = #tpu.pipeline_mode<synchronous>, transform_indices = @transform_9, window_bounds = array<i64: 1, 4>}, {transform_indices = @transform_10, window_bounds = array<i64: 1024, 4>}]} {
    %c0 = arith.constant 0 : index
    %c0_0 = arith.constant 0 : index
    %0 = vector.load %arg1[%c0, %c0_0] : memref<1024x6xf32, #tpu.memory_space<vmem>>, vector<1024x6xf32>
    %1 = arith.truncf %0 : vector<1024x6xf32> to vector<1024x6xbf16>
    %c0_1 = arith.constant 0 : index
    %c0_2 = arith.constant 0 : index
    %2 = vector.load %arg2[%c0_1, %c0_2] : memref<6x160xbf16, #tpu.memory_space<vmem>>, vector<6x160xbf16>
    %cst = arith.constant dense<0.000000e+00> : vector<1024x160xf32>
    %3 = tpu.matmul %1, %2, %cst {dimension_numbers = #tpu.dot_dimension_numbers<[1], [0], [0], [1], [0, 0, 1, 1], [], []>} : vector<1024x6xbf16>, vector<6x160xbf16>, vector<1024x160xf32> -> vector<1024x160xf32>
    %4 = vector.extract_strided_slice %3 {offsets = [0, 0], sizes = [1024, 64], strides = [1, 1]} : vector<1024x160xf32> to vector<1024x64xf32>
    %c0_3 = arith.constant 0 : index
    %c0_4 = arith.constant 0 : index
    %5 = vector.load %arg4[%c0_3, %c0_4] : memref<8x64xf32, #tpu.memory_space<vmem>>, vector<1x64xf32>
    %6 = vector.broadcast %5 : vector<1x64xf32> to vector<1024x64xf32>
    %7 = arith.addf %4, %6 : vector<1024x64xf32>
    %cst_5 = arith.constant 0.000000e+00 : f32
    %8 = vector.broadcast %cst_5 : f32 to vector<1024x64xf32>
    %9 = arith.maximumf %7, %8 : vector<1024x64xf32>
    %c0_6 = arith.constant 0 : index
    %c0_7 = arith.constant 0 : index
    %c0_8 = arith.constant 0 : index
    %10 = vector.load %arg3[%c0_6, %c0_7, %c0_8] : memref<7x64x64xbf16, #tpu.memory_space<vmem>>, vector<1x64x64xbf16>
    %11 = vector.shape_cast %10 : vector<1x64x64xbf16> to vector<64x64xbf16>
    %12 = arith.truncf %9 : vector<1024x64xf32> to vector<1024x64xbf16>
    %cst_9 = arith.constant dense<0.000000e+00> : vector<1024x64xf32>
    %13 = tpu.matmul %12, %11, %cst_9 {dimension_numbers = #tpu.dot_dimension_numbers<[1], [0], [0], [1], [0, 0, 1, 1], [], []>} : vector<1024x64xbf16>, vector<64x64xbf16>, vector<1024x64xf32> -> vector<1024x64xf32>
    %c1 = arith.constant 1 : index
    %c0_10 = arith.constant 0 : index
    %14 = vector.load %arg4[%c1, %c0_10] : memref<8x64xf32, #tpu.memory_space<vmem>>, vector<1x64xf32>
    %15 = vector.broadcast %14 : vector<1x64xf32> to vector<1024x64xf32>
    %16 = arith.addf %13, %15 : vector<1024x64xf32>
    %cst_11 = arith.constant 0.000000e+00 : f32
    %17 = vector.broadcast %cst_11 : f32 to vector<1024x64xf32>
    %18 = arith.maximumf %16, %17 : vector<1024x64xf32>
    %c1_12 = arith.constant 1 : index
    %c0_13 = arith.constant 0 : index
    %c0_14 = arith.constant 0 : index
    %19 = vector.load %arg3[%c1_12, %c0_13, %c0_14] : memref<7x64x64xbf16, #tpu.memory_space<vmem>>, vector<1x64x64xbf16>
    %20 = vector.shape_cast %19 : vector<1x64x64xbf16> to vector<64x64xbf16>
    %21 = arith.truncf %18 : vector<1024x64xf32> to vector<1024x64xbf16>
    %cst_15 = arith.constant dense<0.000000e+00> : vector<1024x64xf32>
    %22 = tpu.matmul %21, %20, %cst_15 {dimension_numbers = #tpu.dot_dimension_numbers<[1], [0], [0], [1], [0, 0, 1, 1], [], []>} : vector<1024x64xbf16>, vector<64x64xbf16>, vector<1024x64xf32> -> vector<1024x64xf32>
    %c2 = arith.constant 2 : index
    %c0_16 = arith.constant 0 : index
    %23 = vector.load %arg4[%c2, %c0_16] : memref<8x64xf32, #tpu.memory_space<vmem>>, vector<1x64xf32>
    %24 = vector.broadcast %23 : vector<1x64xf32> to vector<1024x64xf32>
    %25 = arith.addf %22, %24 : vector<1024x64xf32>
    %cst_17 = arith.constant 0.000000e+00 : f32
    %26 = vector.broadcast %cst_17 : f32 to vector<1024x64xf32>
    %27 = arith.maximumf %25, %26 : vector<1024x64xf32>
    %c2_18 = arith.constant 2 : index
    %c0_19 = arith.constant 0 : index
    %c0_20 = arith.constant 0 : index
    %28 = vector.load %arg3[%c2_18, %c0_19, %c0_20] : memref<7x64x64xbf16, #tpu.memory_space<vmem>>, vector<1x64x64xbf16>
    %29 = vector.shape_cast %28 : vector<1x64x64xbf16> to vector<64x64xbf16>
    %30 = arith.truncf %27 : vector<1024x64xf32> to vector<1024x64xbf16>
    %cst_21 = arith.constant dense<0.000000e+00> : vector<1024x64xf32>
    %31 = tpu.matmul %30, %29, %cst_21 {dimension_numbers = #tpu.dot_dimension_numbers<[1], [0], [0], [1], [0, 0, 1, 1], [], []>} : vector<1024x64xbf16>, vector<64x64xbf16>, vector<1024x64xf32> -> vector<1024x64xf32>
    %c3 = arith.constant 3 : index
    %c0_22 = arith.constant 0 : index
    %32 = vector.load %arg4[%c3, %c0_22] : memref<8x64xf32, #tpu.memory_space<vmem>>, vector<1x64xf32>
    %33 = vector.broadcast %32 : vector<1x64xf32> to vector<1024x64xf32>
    %34 = arith.addf %31, %33 : vector<1024x64xf32>
    %cst_23 = arith.constant 0.000000e+00 : f32
    %35 = vector.broadcast %cst_23 : f32 to vector<1024x64xf32>
    %36 = arith.maximumf %34, %35 : vector<1024x64xf32>
    %c3_24 = arith.constant 3 : index
    %c0_25 = arith.constant 0 : index
    %c0_26 = arith.constant 0 : index
    %37 = vector.load %arg3[%c3_24, %c0_25, %c0_26] : memref<7x64x64xbf16, #tpu.memory_space<vmem>>, vector<1x64x64xbf16>
    %38 = vector.shape_cast %37 : vector<1x64x64xbf16> to vector<64x64xbf16>
    %39 = arith.truncf %36 : vector<1024x64xf32> to vector<1024x64xbf16>
    %cst_27 = arith.constant dense<0.000000e+00> : vector<1024x64xf32>
    %40 = tpu.matmul %39, %38, %cst_27 {dimension_numbers = #tpu.dot_dimension_numbers<[1], [0], [0], [1], [0, 0, 1, 1], [], []>} : vector<1024x64xbf16>, vector<64x64xbf16>, vector<1024x64xf32> -> vector<1024x64xf32>
    %c4 = arith.constant 4 : index
    %c0_28 = arith.constant 0 : index
    %41 = vector.load %arg4[%c4, %c0_28] : memref<8x64xf32, #tpu.memory_space<vmem>>, vector<1x64xf32>
    %42 = vector.broadcast %41 : vector<1x64xf32> to vector<1024x64xf32>
    %43 = arith.addf %40, %42 : vector<1024x64xf32>
    %cst_29 = arith.constant 0.000000e+00 : f32
    %44 = vector.broadcast %cst_29 : f32 to vector<1024x64xf32>
    %45 = arith.maximumf %43, %44 : vector<1024x64xf32>
    %46 = vector.extract_strided_slice %3 {offsets = [0, 64], sizes = [1024, 64], strides = [1, 1]} : vector<1024x160xf32> to vector<1024x64xf32>
    %c4_30 = arith.constant 4 : index
    %c0_31 = arith.constant 0 : index
    %c0_32 = arith.constant 0 : index
    %47 = vector.load %arg3[%c4_30, %c0_31, %c0_32] : memref<7x64x64xbf16, #tpu.memory_space<vmem>>, vector<1x64x64xbf16>
    %48 = vector.shape_cast %47 : vector<1x64x64xbf16> to vector<64x64xbf16>
    %49 = arith.truncf %45 : vector<1024x64xf32> to vector<1024x64xbf16>
    %cst_33 = arith.constant dense<0.000000e+00> : vector<1024x64xf32>
    %50 = tpu.matmul %49, %48, %cst_33 {dimension_numbers = #tpu.dot_dimension_numbers<[1], [0], [0], [1], [0, 0, 1, 1], [], []>} : vector<1024x64xbf16>, vector<64x64xbf16>, vector<1024x64xf32> -> vector<1024x64xf32>
    %51 = arith.addf %46, %50 : vector<1024x64xf32>
    %c5 = arith.constant 5 : index
    %c0_34 = arith.constant 0 : index
    %52 = vector.load %arg4[%c5, %c0_34] : memref<8x64xf32, #tpu.memory_space<vmem>>, vector<1x64xf32>
    %53 = vector.broadcast %52 : vector<1x64xf32> to vector<1024x64xf32>
    %54 = arith.addf %51, %53 : vector<1024x64xf32>
    %cst_35 = arith.constant 0.000000e+00 : f32
    %55 = vector.broadcast %cst_35 : f32 to vector<1024x64xf32>
    %56 = arith.maximumf %54, %55 : vector<1024x64xf32>
    %c5_36 = arith.constant 5 : index
    %c0_37 = arith.constant 0 : index
    %c0_38 = arith.constant 0 : index
    %57 = vector.load %arg3[%c5_36, %c0_37, %c0_38] : memref<7x64x64xbf16, #tpu.memory_space<vmem>>, vector<1x64x64xbf16>
    %58 = vector.shape_cast %57 : vector<1x64x64xbf16> to vector<64x64xbf16>
    %59 = arith.truncf %56 : vector<1024x64xf32> to vector<1024x64xbf16>
    %cst_39 = arith.constant dense<0.000000e+00> : vector<1024x64xf32>
    %60 = tpu.matmul %59, %58, %cst_39 {dimension_numbers = #tpu.dot_dimension_numbers<[1], [0], [0], [1], [0, 0, 1, 1], [], []>} : vector<1024x64xbf16>, vector<64x64xbf16>, vector<1024x64xf32> -> vector<1024x64xf32>
    %c6 = arith.constant 6 : index
    %c0_40 = arith.constant 0 : index
    %61 = vector.load %arg4[%c6, %c0_40] : memref<8x64xf32, #tpu.memory_space<vmem>>, vector<1x64xf32>
    %62 = vector.broadcast %61 : vector<1x64xf32> to vector<1024x64xf32>
    %63 = arith.addf %60, %62 : vector<1024x64xf32>
    %cst_41 = arith.constant 0.000000e+00 : f32
    %64 = vector.broadcast %cst_41 : f32 to vector<1024x64xf32>
    %65 = arith.maximumf %63, %64 : vector<1024x64xf32>
    %c6_42 = arith.constant 6 : index
    %c0_43 = arith.constant 0 : index
    %c0_44 = arith.constant 0 : index
    %66 = vector.load %arg3[%c6_42, %c0_43, %c0_44] : memref<7x64x64xbf16, #tpu.memory_space<vmem>>, vector<1x64x64xbf16>
    %67 = vector.shape_cast %66 : vector<1x64x64xbf16> to vector<64x64xbf16>
    %68 = arith.truncf %65 : vector<1024x64xf32> to vector<1024x64xbf16>
    %cst_45 = arith.constant dense<0.000000e+00> : vector<1024x64xf32>
    %69 = tpu.matmul %68, %67, %cst_45 {dimension_numbers = #tpu.dot_dimension_numbers<[1], [0], [0], [1], [0, 0, 1, 1], [], []>} : vector<1024x64xbf16>, vector<64x64xbf16>, vector<1024x64xf32> -> vector<1024x64xf32>
    %c7 = arith.constant 7 : index
    %c0_46 = arith.constant 0 : index
    %70 = vector.load %arg4[%c7, %c0_46] : memref<8x64xf32, #tpu.memory_space<vmem>>, vector<1x64xf32>
    %71 = vector.broadcast %70 : vector<1x64xf32> to vector<1024x64xf32>
    %72 = arith.addf %69, %71 : vector<1024x64xf32>
    %cst_47 = arith.constant 0.000000e+00 : f32
    %73 = vector.broadcast %cst_47 : f32 to vector<1024x64xf32>
    %74 = arith.maximumf %72, %73 : vector<1024x64xf32>
    %c0_48 = arith.constant 0 : index
    %c0_49 = arith.constant 0 : index
    %75 = vector.load %arg5[%c0_48, %c0_49] : memref<64x128xbf16, #tpu.memory_space<vmem>>, vector<64x128xbf16>
    %76 = arith.truncf %74 : vector<1024x64xf32> to vector<1024x64xbf16>
    %cst_50 = arith.constant dense<0.000000e+00> : vector<1024x128xf32>
    %77 = tpu.matmul %76, %75, %cst_50 {dimension_numbers = #tpu.dot_dimension_numbers<[1], [0], [0], [1], [0, 0, 1, 1], [], []>} : vector<1024x64xbf16>, vector<64x128xbf16>, vector<1024x128xf32> -> vector<1024x128xf32>
    %c0_51 = arith.constant 0 : index
    %c0_52 = arith.constant 0 : index
    %78 = vector.load %arg6[%c0_51, %c0_52] : memref<1x128xf32, #tpu.memory_space<vmem>>, vector<1x128xf32>
    %79 = vector.broadcast %78 : vector<1x128xf32> to vector<1024x128xf32>
    %80 = arith.addf %77, %79 : vector<1024x128xf32>
    %81 = vector.extract_strided_slice %80 {offsets = [0, 0], sizes = [1024, 64], strides = [1, 1]} : vector<1024x128xf32> to vector<1024x64xf32>
    %82 = vector.extract_strided_slice %80 {offsets = [0, 64], sizes = [1024, 1], strides = [1, 1]} : vector<1024x128xf32> to vector<1024x1xf32>
    %c0_53 = arith.constant 0 : index
    %c0_54 = arith.constant 0 : index
    %83 = vector.load %arg7[%c0_53, %c0_54] : memref<64x32xbf16, #tpu.memory_space<vmem>>, vector<64x32xbf16>
    %84 = arith.truncf %81 : vector<1024x64xf32> to vector<1024x64xbf16>
    %cst_55 = arith.constant dense<0.000000e+00> : vector<1024x32xf32>
    %85 = tpu.matmul %84, %83, %cst_55 {dimension_numbers = #tpu.dot_dimension_numbers<[1], [0], [0], [1], [0, 0, 1, 1], [], []>} : vector<1024x64xbf16>, vector<64x32xbf16>, vector<1024x32xf32> -> vector<1024x32xf32>
    %86 = vector.extract_strided_slice %3 {offsets = [0, 128], sizes = [1024, 32], strides = [1, 1]} : vector<1024x160xf32> to vector<1024x32xf32>
    %87 = arith.addf %85, %86 : vector<1024x32xf32>
    %c0_56 = arith.constant 0 : index
    %c0_57 = arith.constant 0 : index
    %88 = vector.load %arg8[%c0_56, %c0_57] : memref<1x32xf32, #tpu.memory_space<vmem>>, vector<1x32xf32>
    %89 = vector.broadcast %88 : vector<1x32xf32> to vector<1024x32xf32>
    %90 = arith.addf %87, %89 : vector<1024x32xf32>
    %cst_58 = arith.constant 0.000000e+00 : f32
    %91 = vector.broadcast %cst_58 : f32 to vector<1024x32xf32>
    %92 = arith.maximumf %90, %91 : vector<1024x32xf32>
    %c0_59 = arith.constant 0 : index
    %c0_60 = arith.constant 0 : index
    %93 = vector.load %arg9[%c0_59, %c0_60] : memref<32x4xbf16, #tpu.memory_space<vmem>>, vector<32x4xbf16>
    %94 = arith.truncf %92 : vector<1024x32xf32> to vector<1024x32xbf16>
    %cst_61 = arith.constant dense<0.000000e+00> : vector<1024x4xf32>
    %95 = tpu.matmul %94, %93, %cst_61 {dimension_numbers = #tpu.dot_dimension_numbers<[1], [0], [0], [1], [0, 0, 1, 1], [], []>} : vector<1024x32xbf16>, vector<32x4xbf16>, vector<1024x4xf32> -> vector<1024x4xf32>
    %c0_62 = arith.constant 0 : index
    %c0_63 = arith.constant 0 : index
    %96 = vector.load %arg10[%c0_62, %c0_63] : memref<1x4xf32, #tpu.memory_space<vmem>>, vector<1x4xf32>
    %97 = vector.broadcast %96 : vector<1x4xf32> to vector<1024x4xf32>
    %98 = arith.addf %95, %97 : vector<1024x4xf32>
    %99 = tpu.iota {dimensions = array<i32: 1>} : vector<1024x4xi32>
    %c3_i32 = arith.constant 3 : i32
    %100 = vector.broadcast %c3_i32 : i32 to vector<1024x4xi32>
    %101 = arith.cmpi eq, %99, %100 : vector<1024x4xi32>
    %102 = vector.shape_cast %82 : vector<1024x1xf32> to vector<1024x1xf32>
    %103 = vector.broadcast %102 : vector<1024x1xf32> to vector<1024x4xf32>
    %104 = arith.select %101, %103, %98 : vector<1024x4xi1>, vector<1024x4xf32>
    %c0_64 = arith.constant 0 : index
    %c0_65 = arith.constant 0 : index
    %105 = vector.load %arg11[%c0_64, %c0_65] : memref<1024x4xf32, #tpu.memory_space<vmem>>, vector<1024x4xf32>
    tpu.vector_store %arg11[%c0_64, %c0_65], %104 {strides = array<i32>} : memref<1024x4xf32, #tpu.memory_space<vmem>>, vector<1024x4xf32>,
    return
  }
  func.func @transform_0(%arg0: i32) -> (i32, i32) {
    %c0_i32 = arith.constant 0 : i32
    %c0_i32_0 = arith.constant 0 : i32
    return %arg0, %c0_i32 : i32, i32
  }
  func.func @transform_1(%arg0: i32) -> (i32, i32) {
    %c0_i32 = arith.constant 0 : i32
    %c0_i32_0 = arith.constant 0 : i32
    %c0_i32_1 = arith.constant 0 : i32
    return %c0_i32, %c0_i32_0 : i32, i32
  }
  func.func @transform_2(%arg0: i32) -> (i32, i32, i32) {
    %c0_i32 = arith.constant 0 : i32
    %c0_i32_0 = arith.constant 0 : i32
    %c0_i32_1 = arith.constant 0 : i32
    %c0_i32_2 = arith.constant 0 : i32
    return %c0_i32, %c0_i32_0, %c0_i32_1 : i32, i32, i32
  }
  func.func @transform_3(%arg0: i32) -> (i32, i32) {
    %c0_i32 = arith.constant 0 : i32
    %c0_i32_0 = arith.constant 0 : i32
    %c0_i32_1 = arith.constant 0 : i32
    return %c0_i32, %c0_i32_0 : i32, i32
  }
  func.func @transform_4(%arg0: i32) -> (i32, i32) {
    %c0_i32 = arith.constant 0 : i32
    %c0_i32_0 = arith.constant 0 : i32
    %c0_i32_1 = arith.constant 0 : i32
    return %c0_i32, %c0_i32_0 : i32, i32
  }
  func.func @transform_5(%arg0: i32) -> (i32, i32) {
    %c0_i32 = arith.constant 0 : i32
    %c0_i32_0 = arith.constant 0 : i32
    %c0_i32_1 = arith.constant 0 : i32
    return %c0_i32, %c0_i32_0 : i32, i32
  }
  func.func @transform_6(%arg0: i32) -> (i32, i32) {
    %c0_i32 = arith.constant 0 : i32
    %c0_i32_0 = arith.constant 0 : i32
    %c0_i32_1 = arith.constant 0 : i32
    return %c0_i32, %c0_i32_0 : i32, i32
  }
  func.func @transform_7(%arg0: i32) -> (i32, i32) {
    %c0_i32 = arith.constant 0 : i32
    %c0_i32_0 = arith.constant 0 : i32
    %c0_i32_1 = arith.constant 0 : i32
    return %c0_i32, %c0_i32_0 : i32, i32
  }
  func.func @transform_8(%arg0: i32) -> (i32, i32) {
    %c0_i32 = arith.constant 0 : i32
    %c0_i32_0 = arith.constant 0 : i32
    %c0_i32_1 = arith.constant 0 : i32
    return %c0_i32, %c0_i32_0 : i32, i32
  }
  func.func @transform_9(%arg0: i32) -> (i32, i32) {
    %c0_i32 = arith.constant 0 : i32
    %c0_i32_0 = arith.constant 0 : i32
    %c0_i32_1 = arith.constant 0 : i32
    return %c0_i32, %c0_i32_0 : i32, i32
  }
  func.func @transform_10(%arg0: i32) -> (i32, i32) {
    %c0_i32 = arith.constant 0 : i32
    %c0_i32_0 = arith.constant 0 : i32
    return %arg0, %c0_i32 : i32, i32
  }
}

</mosaic_0001>

<llo_original>
// kernel: tpu_custom_call.1
$region0: #{tpu_custom_call.1}
  #allocation0 [shape = 'u32[]', space=smem, size = 0x4, offset = 0x4, fixed_abs, tag = 'smem constant byte address 0x4 - core index']
  #allocation1 [shape = 'u32[144,128]{1,0:T(1,128)}', space=vmem, size = 0x12000, scoped, tag = 'internal scratch']
  %s0 = inlined_call_operand.vmem [shape: f32[2048,6], index: 0, kind: input, shape index: {}]
  %s1 = inlined_call_operand.vmem [shape: bf16[6,160], index: 1, kind: input, shape index: {}]
  %s2 = inlined_call_operand.vmem [shape: bf16[7,64,64], index: 2, kind: input, shape index: {}]
  %s3 = inlined_call_operand.vmem [shape: f32[8,64], index: 3, kind: input, shape index: {}]
  %s4 = inlined_call_operand.vmem [shape: bf16[64,128], index: 4, kind: input, shape index: {}]
  %s5 = inlined_call_operand.vmem [shape: f32[1,128], index: 5, kind: input, shape index: {}]
  %s6 = inlined_call_operand.vmem [shape: bf16[64,32], index: 6, kind: input, shape index: {}]
  %s7 = inlined_call_operand.vmem [shape: f32[1,32], index: 7, kind: input, shape index: {}]
  %s8 = inlined_call_operand.vmem [shape: bf16[32,4], index: 8, kind: input, shape index: {}]
  %s9 = inlined_call_operand.vmem [shape: f32[1,4], index: 9, kind: input, shape index: {}]
  %s10 = inlined_call_operand.vmem [shape: f32[2048,4], index: 10, kind: output, shape index: {}]
  %s11 = sld [smem:[#allocation0]]
  $region73: #{tpu_custom_call.1} parent=0
    _
  %s13 = ssub.s32 1, %s11
  %s14 = scalar_select 0, %s13, %s11
  loop: start=0, step=1, limit=4
  $region2: #{tpu_custom_call.1} parent=0 // loop_pre_header
    _
  $region3: #{tpu_custom_call.1} parent=0 // loop_header
    %s16 = sphi 0, %s20
    %p17 = scmp.ge.s32.totalorder %s16, 4
    %s26 = sphi 0, %s28
    %s29 = sphi 0, %s26
    %s30 = sphi 0, %s29
    %s46 = sphi 0, %s30
    %s50 = sphi 0, %s50
    %s52 = sphi 0, %s50
    %s53 = sphi 0, %s52
    %s67 = sphi 0, %s53
    %s71 = sphi 0, %s71
    %s73 = sphi 0, %s71
    %s74 = sphi 0, %s73
    %s88 = sphi 0, %s74
    %s92 = sphi 0, %s92
    %s94 = sphi 0, %s92
    %s95 = sphi 0, %s94
    %s109 = sphi 0, %s95
    %s113 = sphi 0, %s113
    %s115 = sphi 0, %s113
    %s116 = sphi 0, %s115
    %s130 = sphi 0, %s116
    %s134 = sphi 0, %s134
    %s136 = sphi 0, %s134
    %s137 = sphi 0, %s136
    %s151 = sphi 0, %s137
    %s155 = sphi 0, %s155
    %s157 = sphi 0, %s155
    %s158 = sphi 0, %s157
    %s172 = sphi 0, %s158
    %s176 = sphi 0, %s176
    %s178 = sphi 0, %s176
    %s179 = sphi 0, %s178
    %s193 = sphi 0, %s179
    %s197 = sphi 0, %s197
    %s199 = sphi 0, %s197
    %s200 = sphi 0, %s199
    %s214 = sphi 0, %s200
    %s218 = sphi 0, %s218
    %s220 = sphi 0, %s218
    %s221 = sphi 0, %s220
    %s235 = sphi 0, %s221
    %s241 = sphi 0, %s243
    %s244 = sphi 0, %s241
    %s245 = sphi 0, %s244
    %s261 = sphi 0, %s245
  $region4: #{tpu_custom_call.1} parent=0 // loop_header_branch
    %19 = sbr.rel (%p17) target = $region8
  $region5: #{tpu_custom_call.1} parent=0 // loop_body
    %s21 = ssub.s32 %s16, 1
    %s22 = ssub.s32 %s16, 2
    %s23 = sadd.s32 %s16, 1
    %s24 = ssub.s32 %s16, %s23
    %p25 = scmp.eq.s32.totalorder %s24, 0
    %s27 = sadd.s32 %s26, 1
    %s28 = scalar_select %p25, %s26, %s27
    %p31 = pneg %p25
    %p32 = scmp.eq.s32.totalorder %s16, 1
    %p33 = por %p31, %p32
    %p34 = scmp.ne.s32.totalorder %s26, %s29
    %p35 = scmp.eq.s32.totalorder %s16, 0
    %p36 = por %p34, %p35
    %p37 = scmp.ne.s32.totalorder %s26, %s29
    %p38 = scmp.eq.s32.totalorder %s21, 1
    %p39 = por %p37, %p38
    %p40 = scmp.ne.s32.totalorder %s29, %s30
    %p41 = scmp.eq.s32.totalorder %s21, 0
    %p42 = por %p40, %p41
    %p43 = scmp.ne.s32.totalorder %s29, %s30
    %p44 = scmp.eq.s32.totalorder %s22, 1
    %p45 = por %p43, %p44
    %p47 = scmp.ne.s32.totalorder %s30, %s46
    %p48 = scmp.eq.s32.totalorder %s22, 0
    %p49 = por %p47, %p48
    %s51 = sadd.s32 %s50, 1
    %p54 = scmp.eq.s32.totalorder %s16, 1
    %p55 = scmp.ne.s32.totalorder %s50, %s52
    %p56 = scmp.eq.s32.totalorder %s16, 0
    %p57 = por %p55, %p56
    %p58 = scmp.ne.s32.totalorder %s50, %s52
    %p59 = scmp.eq.s32.totalorder %s21, 1
    %p60 = por %p58, %p59
    %p61 = scmp.ne.s32.totalorder %s52, %s53
    %p62 = scmp.eq.s32.totalorder %s21, 0
    %p63 = por %p61, %p62
    %p64 = scmp.ne.s32.totalorder %s52, %s53
    %p65 = scmp.eq.s32.totalorder %s22, 1
    %p66 = por %p64, %p65
    %p68 = scmp.ne.s32.totalorder %s53, %s67
    %p69 = scmp.eq.s32.totalorder %s22, 0
    %p70 = por %p68, %p69
    %s72 = sadd.s32 %s71, 1
    %p75 = scmp.eq.s32.totalorder %s16, 1
    %p76 = scmp.ne.s32.totalorder %s71, %s73
    %p77 = scmp.eq.s32.totalorder %s16, 0
    %p78 = por %p76, %p77
    %p79 = scmp.ne.s32.totalorder %s71, %s73
    %p80 = scmp.eq.s32.totalorder %s21, 1
    %p81 = por %p79, %p80
    %p82 = scmp.ne.s32.totalorder %s73, %s74
    %p83 = scmp.eq.s32.totalorder %s21, 0
    %p84 = por %p82, %p83
    %p85 = scmp.ne.s32.totalorder %s73, %s74
    %p86 = scmp.eq.s32.totalorder %s22, 1
    %p87 = por %p85, %p86
    %p89 = scmp.ne.s32.totalorder %s74, %s88
    %p90 = scmp.eq.s32.totalorder %s22, 0
    %p91 = por %p89, %p90
    %s93 = sadd.s32 %s92, 1
    %p96 = scmp.eq.s32.totalorder %s16, 1
    %p97 = scmp.ne.s32.totalorder %s92, %s94
    %p98 = scmp.eq.s32.totalorder %s16, 0
    %p99 = por %p97, %p98
    %p100 = scmp.ne.s32.totalorder %s92, %s94
    %p101 = scmp.eq.s32.totalorder %s21, 1
    %p102 = por %p100, %p101
    %p103 = scmp.ne.s32.totalorder %s94, %s95
    %p104 = scmp.eq.s32.totalorder %s21, 0
    %p105 = por %p103, %p104
    %p106 = scmp.ne.s32.totalorder %s94, %s95
    %p107 = scmp.eq.s32.totalorder %s22, 1
    %p108 = por %p106, %p107
    %p110 = scmp.ne.s32.totalorder %s95, %s109
    %p111 = scmp.eq.s32.totalorder %s22, 0
    %p112 = por %p110, %p111
    %s114 = sadd.s32 %s113, 1
    %p117 = scmp.eq.s32.totalorder %s16, 1
    %p118 = scmp.ne.s32.totalorder %s113, %s115
    %p119 = scmp.eq.s32.totalorder %s16, 0
    %p120 = por %p118, %p119
    %p121 = scmp.ne.s32.totalorder %s113, %s115
    %p122 = scmp.eq.s32.totalorder %s21, 1
    %p123 = por %p121, %p122
    %p124 = scmp.ne.s32.totalorder %s115, %s116
    %p125 = scmp.eq.s32.totalorder %s21, 0
    %p126 = por %p124, %p125
    %p127 = scmp.ne.s32.totalorder %s115, %s116
    %p128 = scmp.eq.s32.totalorder %s22, 1
    %p129 = por %p127, %p128
    %p131 = scmp.ne.s32.totalorder %s116, %s130
    %p132 = scmp.eq.s32.totalorder %s22, 0
    %p133 = por %p131, %p132
    %s135 = sadd.s32 %s134, 1
    %p138 = scmp.eq.s32.totalorder %s16, 1
    %p139 = scmp.ne.s32.totalorder %s134, %s136
    %p140 = scmp.eq.s32.totalorder %s16, 0
    %p141 = por %p139, %p140
    %p142 = scmp.ne.s32.totalorder %s134, %s136
    %p143 = scmp.eq.s32.totalorder %s21, 1
    %p144 = por %p142, %p143
    %p145 = scmp.ne.s32.totalorder %s136, %s137
    %p146 = scmp.eq.s32.totalorder %s21, 0
    %p147 = por %p145, %p146
    %p148 = scmp.ne.s32.totalorder %s136, %s137
    %p149 = scmp.eq.s32.totalorder %s22, 1
    %p150 = por %p148, %p149
    %p152 = scmp.ne.s32.totalorder %s137, %s151
    %p153 = scmp.eq.s32.totalorder %s22, 0
    %p154 = por %p152, %p153
    %s156 = sadd.s32 %s155, 1
    %p159 = scmp.eq.s32.totalorder %s16, 1
    %p160 = scmp.ne.s32.totalorder %s155, %s157
    %p161 = scmp.eq.s32.totalorder %s16, 0
    %p162 = por %p160, %p161
    %p163 = scmp.ne.s32.totalorder %s155, %s157
    %p164 = scmp.eq.s32.totalorder %s21, 1
    %p165 = por %p163, %p164
    %p166 = scmp.ne.s32.totalorder %s157, %s158
    %p167 = scmp.eq.s32.totalorder %s21, 0
    %p168 = por %p166, %p167
    %p169 = scmp.ne.s32.totalorder %s157, %s158
    %p170 = scmp.eq.s32.totalorder %s22, 1
    %p171 = por %p169, %p170
    %p173 = scmp.ne.s32.totalorder %s158, %s172
    %p174 = scmp.eq.s32.totalorder %s22, 0
    %p175 = por %p173, %p174
    %s177 = sadd.s32 %s176, 1
    %p180 = scmp.eq.s32.totalorder %s16, 1
    %p181 = scmp.ne.s32.totalorder %s176, %s178
    %p182 = scmp.eq.s32.totalorder %s16, 0
    %p183 = por %p181, %p182
    %p184 = scmp.ne.s32.totalorder %s176, %s178
    %p185 = scmp.eq.s32.totalorder %s21, 1
    %p186 = por %p184, %p185
    %p187 = scmp.ne.s32.totalorder %s178, %s179
    %p188 = scmp.eq.s32.totalorder %s21, 0
    %p189 = por %p187, %p188
    %p190 = scmp.ne.s32.totalorder %s178, %s179
    %p191 = scmp.eq.s32.totalorder %s22, 1
    %p192 = por %p190, %p191
    %p194 = scmp.ne.s32.totalorder %s179, %s193
    %p195 = scmp.eq.s32.totalorder %s22, 0
    %p196 = por %p194, %p195
    %s198 = sadd.s32 %s197, 1
    %p201 = scmp.eq.s32.totalorder %s16, 1
    %p202 = scmp.ne.s32.totalorder %s197, %s199
    %p203 = scmp.eq.s32.totalorder %s16, 0
    %p204 = por %p202, %p203
    %p205 = scmp.ne.s32.totalorder %s197, %s199
    %p206 = scmp.eq.s32.totalorder %s21, 1
    %p207 = por %p205, %p206
    %p208 = scmp.ne.s32.totalorder %s199, %s200
    %p209 = scmp.eq.s32.totalorder %s21, 0
    %p210 = por %p208, %p209
    %p211 = scmp.ne.s32.totalorder %s199, %s200
    %p212 = scmp.eq.s32.totalorder %s22, 1
    %p213 = por %p211, %p212
    %p215 = scmp.ne.s32.totalorder %s200, %s214
    %p216 = scmp.eq.s32.totalorder %s22, 0
    %p217 = por %p215, %p216
    %s219 = sadd.s32 %s218, 1
    %p222 = scmp.eq.s32.totalorder %s16, 1
    %p223 = scmp.ne.s32.totalorder %s218, %s220
    %p224 = scmp.eq.s32.totalorder %s16, 0
    %p225 = por %p223, %p224
    %p226 = scmp.ne.s32.totalorder %s218, %s220
    %p227 = scmp.eq.s32.totalorder %s21, 1
    %p228 = por %p226, %p227
    %p229 = scmp.ne.s32.totalorder %s220, %s221
    %p230 = scmp.eq.s32.totalorder %s21, 0
    %p231 = por %p229, %p230
    %p232 = scmp.ne.s32.totalorder %s220, %s221
    %p233 = scmp.eq.s32.totalorder %s22, 1
    %p234 = por %p232, %p233
    %p236 = scmp.ne.s32.totalorder %s221, %s235
    %p237 = scmp.eq.s32.totalorder %s22, 0
    %p238 = por %p236, %p237
    %s239 = ssub.s32 %s16, %s23
    %p240 = scmp.eq.s32.totalorder %s239, 0
    %s242 = sadd.s32 %s241, 1
    %s243 = scalar_select %p240, %s241, %s242
    %p246 = pneg %p240
    %p247 = scmp.eq.s32.totalorder %s16, 1
    %p248 = por %p246, %p247
    %p249 = scmp.ne.s32.totalorder %s241, %s244
    %p250 = scmp.eq.s32.totalorder %s16, 0
    %p251 = por %p249, %p250
    %p252 = scmp.ne.s32.totalorder %s241, %s244
    %p253 = scmp.eq.s32.totalorder %s21, 1
    %p254 = por %p252, %p253
    %p255 = scmp.ne.s32.totalorder %s244, %s245
    %p256 = scmp.eq.s32.totalorder %s21, 0
    %p257 = por %p255, %p256
    %p258 = scmp.ne.s32.totalorder %s244, %s245
    %p259 = scmp.eq.s32.totalorder %s22, 1
    %p260 = por %p258, %p259
    %p262 = scmp.ne.s32.totalorder %s245, %s261
    %p263 = scmp.eq.s32.totalorder %s22, 0
    %p264 = por %p262, %p263
    %p265 = scmp.le.s32.totalorder 1, %s16
    %p266 = scmp.lt.s32.totalorder %s16, 3
    %p267 = pnand %p265, %p266
    %p268 = pneg %p267
    // Predicated region
    $region9: #{tpu_custom_call.1} parent=5 // pred_check
      _
    $region10: #{tpu_custom_call.1} parent=5 // pred_check_branch
      %270 = sbr.rel (%p267) target = $region12
    $region11: #{tpu_custom_call.1} parent=5 // pred_region
      %s271 = ssub.s32 %s16, 1
      // Predicated region
      $region13: #{tpu_custom_call.1} parent=11 // pred_check
        %p272 = pneg %p63
      $region14: #{tpu_custom_call.1} parent=11 // pred_check_branch
        %274 = sbr.rel (%p272) target = $region16
      $region15: #{tpu_custom_call.1} parent=11 // pred_region
        _
      $region16: #{tpu_custom_call.1} parent=11 // pred_fallthru
        _
      // Predicated region
      $region17: #{tpu_custom_call.1} parent=11 // pred_check
        %p275 = pneg %p84
      $region18: #{tpu_custom_call.1} parent=11 // pred_check_branch
        %277 = sbr.rel (%p275) target = $region20
      $region19: #{tpu_custom_call.1} parent=11 // pred_region
        _
      $region20: #{tpu_custom_call.1} parent=11 // pred_fallthru
        _
      // Predicated region
      $region21: #{tpu_custom_call.1} parent=11 // pred_check
        %p278 = pneg %p105
      $region22: #{tpu_custom_call.1} parent=11 // pred_check_branch
        %280 = sbr.rel (%p278) target = $region24
      $region23: #{tpu_custom_call.1} parent=11 // pred_region
        _
      $region24: #{tpu_custom_call.1} parent=11 // pred_fallthru
        _
      // Predicated region
      $region25: #{tpu_custom_call.1} parent=11 // pred_check
        %p281 = pneg %p126
      $region26: #{tpu_custom_call.1} parent=11 // pred_check_branch
        %283 = sbr.rel (%p281) target = $region28
      $region27: #{tpu_custom_call.1} parent=11 // pred_region
        _
      $region28: #{tpu_custom_call.1} parent=11 // pred_fallthru
        _
      // Predicated region
      $region29: #{tpu_custom_call.1} parent=11 // pred_check
        %p284 = pneg %p147
      $region30: #{tpu_custom_call.1} parent=11 // pred_check_branch
        %286 = sbr.rel (%p284) target = $region32
      $region31: #{tpu_custom_call.1} parent=11 // pred_region
        _
      $region32: #{tpu_custom_call.1} parent=11 // pred_fallthru
        _
      // Predicated region
      $region33: #{tpu_custom_call.1} parent=11 // pred_check
        %p287 = pneg %p168
      $region34: #{tpu_custom_call.1} parent=11 // pred_check_branch
        %289 = sbr.rel (%p287) target = $region36
      $region35: #{tpu_custom_call.1} parent=11 // pred_region
        _
      $region36: #{tpu_custom_call.1} parent=11 // pred_fallthru
        _
      // Predicated region
      $region37: #{tpu_custom_call.1} parent=11 // pred_check
        %p290 = pneg %p189
      $region38: #{tpu_custom_call.1} parent=11 // pred_check_branch
        %292 = sbr.rel (%p290) target = $region40
      $region39: #{tpu_custom_call.1} parent=11 // pred_region
        _
      $region40: #{tpu_custom_call.1} parent=11 // pred_fallthru
        _
      // Predicated region
      $region41: #{tpu_custom_call.1} parent=11 // pred_check
        %p293 = pneg %p210
      $region42: #{tpu_custom_call.1} parent=11 // pred_check_branch
        %295 = sbr.rel (%p293) target = $region44
      $region43: #{tpu_custom_call.1} parent=11 // pred_region
        _
      $region44: #{tpu_custom_call.1} parent=11 // pred_fallthru
        _
      // Predicated region
      $region45: #{tpu_custom_call.1} parent=11 // pred_check
        %p296 = pneg %p231
      $region46: #{tpu_custom_call.1} parent=11 // pred_check_branch
        %298 = sbr.rel (%p296) target = $region48
      $region47: #{tpu_custom_call.1} parent=11 // pred_region
        _
      $region48: #{tpu_custom_call.1} parent=11 // pred_fallthru
        _
    $region12: #{tpu_custom_call.1} parent=5 // pred_fallthru
      _
    %p299 = scmp.lt.s32.totalorder %s16, 2
    // Predicated region
    $region49: #{tpu_custom_call.1} parent=5 // pred_check
      %p300 = pneg %p299
    $region50: #{tpu_custom_call.1} parent=5 // pred_check_branch
      %302 = sbr.rel (%p300) target = $region52
    $region51: #{tpu_custom_call.1} parent=5 // pred_region
      // Predicated region
      $region53: #{tpu_custom_call.1} parent=51 // pred_check
        %p303 = pneg %p36
      $region54: #{tpu_custom_call.1} parent=51 // pred_check_branch
        %305 = sbr.rel (%p303) target = $region56
      $region55: #{tpu_custom_call.1} parent=51 // pred_region
        %s306 = smul.u32 128, %s16
        %p307 = scmp.lt.s32.totalorder %s306, 255
        %s308 = scalar_select %p307, %s306, 255
        %s309 = smul.addr %s308, 8
        %s310 = scalar_lea.vmem %s0, %s309
        %s311 = smul.u32 128, %s16
      $region56: #{tpu_custom_call.1} parent=51 // pred_fallthru
        _
    $region52: #{tpu_custom_call.1} parent=5 // pred_fallthru
      _
    %p312 = scmp.le.s32.totalorder 1, %s16
    %p313 = scmp.lt.s32.totalorder %s16, 3
    %p314 = pnand %p312, %p313
    %p315 = pneg %p314
    // Predicated region
    $region57: #{tpu_custom_call.1} parent=5 // pred_check
      _
    $region58: #{tpu_custom_call.1} parent=5 // pred_check_branch
      %317 = sbr.rel (%p314) target = $region60
    $region59: #{tpu_custom_call.1} parent=5 // pred_region
      %s318 = ssub.s32 %s16, 1
      %s319 = smul.u32 128, %s21
      %p320 = scmp.lt.s32.totalorder %s319, 255
      %s321 = scalar_select %p320, %s319, 255
      %s322 = smul.addr %s321, 8
      %s323 = scalar_lea.vmem %s0, %s322
      %p324 = pneg %p42
      %p325 = pneg %p39
      %p326 = pneg %p63
      %p327 = pneg %p60
      %p328 = pneg %p84
      %p329 = pneg %p81
      %p330 = pneg %p105
      %p331 = pneg %p102
      %p332 = pneg %p126
      %p333 = pneg %p123
      %p334 = pneg %p147
      %p335 = pneg %p144
      %p336 = pneg %p168
      %p337 = pneg %p165
      %p338 = pneg %p189
      %p339 = pneg %p186
      %p340 = pneg %p210
      %p341 = pneg %p207
      %p342 = pneg %p231
      %p343 = pneg %p228
      %p344 = pneg %p257
      %p345 = pneg %p254
      %s346 = smul.u32 128, %s21
      %p347 = scmp.lt.s32.totalorder %s346, 255
      %s348 = scalar_select %p347, %s346, 255
      %s349 = smul.addr %s348, 8
      %s350 = scalar_lea.vmem %s10, %s349
      %s351 = smul.u32 128, %s21
      %p352 = scmp.lt.s32.totalorder %s351, 255
      %s353 = scalar_select %p352, %s351, 255
      %s354 = smul.addr %s353, 8
      %s355 = scalar_lea.vmem %s0, %s354
      %s356 = smul.u32 128, %s21
      %s357 = smul.u32 128, %s21
      %p358 = scmp.lt.s32.totalorder %s357, 255
      %s359 = scalar_select %p358, %s357, 255
      %s360 = smul.addr %s359, 8
      %s361 = scalar_lea.vmem %s10, %s360
      %s362 = smul.u32 128, %s21
      %v364 = vld [vmem:[%s355] sm:$0xff]
      %v365 = vld [vmem:[%s355 + $0x8] sm:$0xff]
      %v366 = vld [vmem:[%s355 + $0x10] sm:$0xff]
      %v367 = vld [vmem:[%s355 + $0x18] sm:$0xff]
      %v368 = vld [vmem:[%s355 + $0x20] sm:$0xff]
      %v369 = vld [vmem:[%s355 + $0x28] sm:$0xff]
      %v370 = vld [vmem:[%s355 + $0x30] sm:$0xff]
      %v371 = vld [vmem:[%s355 + $0x38] sm:$0xff]
      %v372 = vld [vmem:[%s355 + $0x40] sm:$0xff]
      %v373 = vld [vmem:[%s355 + $0x48] sm:$0xff]
      %v374 = vld [vmem:[%s355 + $0x50] sm:$0xff]
      %v375 = vld [vmem:[%s355 + $0x58] sm:$0xff]
      %v376 = vld [vmem:[%s355 + $0x60] sm:$0xff]
      %v377 = vld [vmem:[%s355 + $0x68] sm:$0xff]
      %v378 = vld [vmem:[%s355 + $0x70] sm:$0xff]
      %v379 = vld [vmem:[%s355 + $0x78] sm:$0xff]
      %v380 = vld [vmem:[%s355 + $0x80] sm:$0xff]
      %v381 = vld [vmem:[%s355 + $0x88] sm:$0xff]
      %v382 = vld [vmem:[%s355 + $0x90] sm:$0xff]
      %v383 = vld [vmem:[%s355 + $0x98] sm:$0xff]
      %v384 = vld [vmem:[%s355 + $0xa0] sm:$0xff]
      %v385 = vld [vmem:[%s355 + $0xa8] sm:$0xff]
      %v386 = vld [vmem:[%s355 + $0xb0] sm:$0xff]
      %v387 = vld [vmem:[%s355 + $0xb8] sm:$0xff]
      %v388 = vld [vmem:[%s355 + $0xc0] sm:$0xff]
      %v389 = vld [vmem:[%s355 + $0xc8] sm:$0xff]
      %v390 = vld [vmem:[%s355 + $0xd0] sm:$0xff]
      %v391 = vld [vmem:[%s355 + $0xd8] sm:$0xff]
      %v392 = vld [vmem:[%s355 + $0xe0] sm:$0xff]
      %v393 = vld [vmem:[%s355 + $0xe8] sm:$0xff]
      %v394 = vld [vmem:[%s355 + $0xf0] sm:$0xff]
      %v395 = vld [vmem:[%s355 + $0xf8] sm:$0xff]
      %v396 = vld [vmem:[%s355 + $0x100] sm:$0xff]
      %v397 = vld [vmem:[%s355 + $0x108] sm:$0xff]
      %v398 = vld [vmem:[%s355 + $0x110] sm:$0xff]
      %v399 = vld [vmem:[%s355 + $0x118] sm:$0xff]
      %v400 = vld [vmem:[%s355 + $0x120] sm:$0xff]
      %v401 = vld [vmem:[%s355 + $0x128] sm:$0xff]
      %v402 = vld [vmem:[%s355 + $0x130] sm:$0xff]
      %v403 = vld [vmem:[%s355 + $0x138] sm:$0xff]
      %v404 = vld [vmem:[%s355 + $0x140] sm:$0xff]
      %v405 = vld [vmem:[%s355 + $0x148] sm:$0xff]
      %v406 = vld [vmem:[%s355 + $0x150] sm:$0xff]
      %v407 = vld [vmem:[%s355 + $0x158] sm:$0xff]
      %v408 = vld [vmem:[%s355 + $0x160] sm:$0xff]
      %v409 = vld [vmem:[%s355 + $0x168] sm:$0xff]
      %v410 = vld [vmem:[%s355 + $0x170] sm:$0xff]
      %v411 = vld [vmem:[%s355 + $0x178] sm:$0xff]
      %v412 = vld [vmem:[%s355 + $0x180] sm:$0xff]
      %v413 = vld [vmem:[%s355 + $0x188] sm:$0xff]
      %v414 = vld [vmem:[%s355 + $0x190] sm:$0xff]
      %v415 = vld [vmem:[%s355 + $0x198] sm:$0xff]
      %v416 = vld [vmem:[%s355 + $0x1a0] sm:$0xff]
      %v417 = vld [vmem:[%s355 + $0x1a8] sm:$0xff]
      %v418 = vld [vmem:[%s355 + $0x1b0] sm:$0xff]
      %v419 = vld [vmem:[%s355 + $0x1b8] sm:$0xff]
      %v420 = vld [vmem:[%s355 + $0x1c0] sm:$0xff]
      %v421 = vld [vmem:[%s355 + $0x1c8] sm:$0xff]
      %v422 = vld [vmem:[%s355 + $0x1d0] sm:$0xff]
      %v423 = vld [vmem:[%s355 + $0x1d8] sm:$0xff]
      %v424 = vld [vmem:[%s355 + $0x1e0] sm:$0xff]
      %v425 = vld [vmem:[%s355 + $0x1e8] sm:$0xff]
      %v426 = vld [vmem:[%s355 + $0x1f0] sm:$0xff]
      %v427 = vld [vmem:[%s355 + $0x1f8] sm:$0xff]
      %v428 = vld [vmem:[%s355 + $0x200] sm:$0xff]
      %v429 = vld [vmem:[%s355 + $0x208] sm:$0xff]
      %v430 = vld [vmem:[%s355 + $0x210] sm:$0xff]
      %v431 = vld [vmem:[%s355 + $0x218] sm:$0xff]
      %v432 = vld [vmem:[%s355 + $0x220] sm:$0xff]
      %v433 = vld [vmem:[%s355 + $0x228] sm:$0xff]
      %v434 = vld [vmem:[%s355 + $0x230] sm:$0xff]
      %v435 = vld [vmem:[%s355 + $0x238] sm:$0xff]
      %v436 = vld [vmem:[%s355 + $0x240] sm:$0xff]
      %v437 = vld [vmem:[%s355 + $0x248] sm:$0xff]
      %v438 = vld [vmem:[%s355 + $0x250] sm:$0xff]
      %v439 = vld [vmem:[%s355 + $0x258] sm:$0xff]
      %v440 = vld [vmem:[%s355 + $0x260] sm:$0xff]
      %v441 = vld [vmem:[%s355 + $0x268] sm:$0xff]
      %v442 = vld [vmem:[%s355 + $0x270] sm:$0xff]
      %v443 = vld [vmem:[%s355 + $0x278] sm:$0xff]
      %v444 = vld [vmem:[%s355 + $0x280] sm:$0xff]
      %v445 = vld [vmem:[%s355 + $0x288] sm:$0xff]
      %v446 = vld [vmem:[%s355 + $0x290] sm:$0xff]
      %v447 = vld [vmem:[%s355 + $0x298] sm:$0xff]
      %v448 = vld [vmem:[%s355 + $0x2a0] sm:$0xff]
      %v449 = vld [vmem:[%s355 + $0x2a8] sm:$0xff]
      %v450 = vld [vmem:[%s355 + $0x2b0] sm:$0xff]
      %v451 = vld [vmem:[%s355 + $0x2b8] sm:$0xff]
      %v452 = vld [vmem:[%s355 + $0x2c0] sm:$0xff]
      %v453 = vld [vmem:[%s355 + $0x2c8] sm:$0xff]
      %v454 = vld [vmem:[%s355 + $0x2d0] sm:$0xff]
      %v455 = vld [vmem:[%s355 + $0x2d8] sm:$0xff]
      %v456 = vld [vmem:[%s355 + $0x2e0] sm:$0xff]
      %v457 = vld [vmem:[%s355 + $0x2e8] sm:$0xff]
      %v458 = vld [vmem:[%s355 + $0x2f0] sm:$0xff]
      %v459 = vld [vmem:[%s355 + $0x2f8] sm:$0xff]
      %v460 = vld [vmem:[%s355 + $0x300] sm:$0xff]
      %v461 = vld [vmem:[%s355 + $0x308] sm:$0xff]
      %v462 = vld [vmem:[%s355 + $0x310] sm:$0xff]
      %v463 = vld [vmem:[%s355 + $0x318] sm:$0xff]
      %v464 = vld [vmem:[%s355 + $0x320] sm:$0xff]
      %v465 = vld [vmem:[%s355 + $0x328] sm:$0xff]
      %v466 = vld [vmem:[%s355 + $0x330] sm:$0xff]
      %v467 = vld [vmem:[%s355 + $0x338] sm:$0xff]
      %v468 = vld [vmem:[%s355 + $0x340] sm:$0xff]
      %v469 = vld [vmem:[%s355 + $0x348] sm:$0xff]
      %v470 = vld [vmem:[%s355 + $0x350] sm:$0xff]
      %v471 = vld [vmem:[%s355 + $0x358] sm:$0xff]
      %v472 = vld [vmem:[%s355 + $0x360] sm:$0xff]
      %v473 = vld [vmem:[%s355 + $0x368] sm:$0xff]
      %v474 = vld [vmem:[%s355 + $0x370] sm:$0xff]
      %v475 = vld [vmem:[%s355 + $0x378] sm:$0xff]
      %v476 = vld [vmem:[%s355 + $0x380] sm:$0xff]
      %v477 = vld [vmem:[%s355 + $0x388] sm:$0xff]
      %v478 = vld [vmem:[%s355 + $0x390] sm:$0xff]
      %v479 = vld [vmem:[%s355 + $0x398] sm:$0xff]
      %v480 = vld [vmem:[%s355 + $0x3a0] sm:$0xff]
      %v481 = vld [vmem:[%s355 + $0x3a8] sm:$0xff]
      %v482 = vld [vmem:[%s355 + $0x3b0] sm:$0xff]
      %v483 = vld [vmem:[%s355 + $0x3b8] sm:$0xff]
      %v484 = vld [vmem:[%s355 + $0x3c0] sm:$0xff]
      %v485 = vld [vmem:[%s355 + $0x3c8] sm:$0xff]
      %v486 = vld [vmem:[%s355 + $0x3d0] sm:$0xff]
      %v487 = vld [vmem:[%s355 + $0x3d8] sm:$0xff]
      %v488 = vld [vmem:[%s355 + $0x3e0] sm:$0xff]
      %v489 = vld [vmem:[%s355 + $0x3e8] sm:$0xff]
      %v490 = vld [vmem:[%s355 + $0x3f0] sm:$0xff]
      %v491 = vld [vmem:[%s355 + $0x3f8] sm:$0xff]
      %v492 = vpack.c.bf16 %v365, %v364
      %v493 = vpack.c.bf16 %v367, %v366
      %v494 = vpack.c.bf16 %v369, %v368
      %v495 = vpack.c.bf16 %v371, %v370
      %v496 = vpack.c.bf16 %v373, %v372
      %v497 = vpack.c.bf16 %v375, %v374
      %v498 = vpack.c.bf16 %v377, %v376
      %v499 = vpack.c.bf16 %v379, %v378
      %v500 = vpack.c.bf16 %v381, %v380
      %v501 = vpack.c.bf16 %v383, %v382
      %v502 = vpack.c.bf16 %v385, %v384
      %v503 = vpack.c.bf16 %v387, %v386
      %v504 = vpack.c.bf16 %v389, %v388
      %v505 = vpack.c.bf16 %v391, %v390
      %v506 = vpack.c.bf16 %v393, %v392
      %v507 = vpack.c.bf16 %v395, %v394
      %v508 = vpack.c.bf16 %v397, %v396
      %v509 = vpack.c.bf16 %v399, %v398
      %v510 = vpack.c.bf16 %v401, %v400
      %v511 = vpack.c.bf16 %v403, %v402
      %v512 = vpack.c.bf16 %v405, %v404
      %v513 = vpack.c.bf16 %v407, %v406
      %v514 = vpack.c.bf16 %v409, %v408
      %v515 = vpack.c.bf16 %v411, %v410
      %v516 = vpack.c.bf16 %v413, %v412
      %v517 = vpack.c.bf16 %v415, %v414
      %v518 = vpack.c.bf16 %v417, %v416
      %v519 = vpack.c.bf16 %v419, %v418
      %v520 = vpack.c.bf16 %v421, %v420
      %v521 = vpack.c.bf16 %v423, %v422
      %v522 = vpack.c.bf16 %v425, %v424
      %v523 = vpack.c.bf16 %v427, %v426
      %v524 = vpack.c.bf16 %v429, %v428
      %v525 = vpack.c.bf16 %v431, %v430
      %v526 = vpack.c.bf16 %v433, %v432
      %v527 = vpack.c.bf16 %v435, %v434
      %v528 = vpack.c.bf16 %v437, %v436
      %v529 = vpack.c.bf16 %v439, %v438
      %v530 = vpack.c.bf16 %v441, %v440
      %v531 = vpack.c.bf16 %v443, %v442
      %v532 = vpack.c.bf16 %v445, %v444
      %v533 = vpack.c.bf16 %v447, %v446
      %v534 = vpack.c.bf16 %v449, %v448
      %v535 = vpack.c.bf16 %v451, %v450
      %v536 = vpack.c.bf16 %v453, %v452
      %v537 = vpack.c.bf16 %v455, %v454
      %v538 = vpack.c.bf16 %v457, %v456
      %v539 = vpack.c.bf16 %v459, %v458
      %v540 = vpack.c.bf16 %v461, %v460
      %v541 = vpack.c.bf16 %v463, %v462
      %v542 = vpack.c.bf16 %v465, %v464
      %v543 = vpack.c.bf16 %v467, %v466
      %v544 = vpack.c.bf16 %v469, %v468
      %v545 = vpack.c.bf16 %v471, %v470
      %v546 = vpack.c.bf16 %v473, %v472
      %v547 = vpack.c.bf16 %v475, %v474
      %v548 = vpack.c.bf16 %v477, %v476
      %v549 = vpack.c.bf16 %v479, %v478
      %v550 = vpack.c.bf16 %v481, %v480
      %v551 = vpack.c.bf16 %v483, %v482
      %v552 = vpack.c.bf16 %v485, %v484
      %v553 = vpack.c.bf16 %v487, %v486
      %v554 = vpack.c.bf16 %v489, %v488
      %v555 = vpack.c.bf16 %v491, %v490
      %v556 = vld [vmem:[%s1] sm:$0x77]
      %v558 = vunpack.c.l.b16 %v556
      %v559 = vunpack.c.h.b16 %v556
      %v560 = vpack.c.b16 %v558, %v558
      %v561 = vpack.c.b16 %v559, %v559
      %vm562 = vcmask 48128
      %v564 = vsel %vm562, %v492, 0
      %v567 = vsel %vm562, %v493, 0
      %v570 = vsel %vm562, %v494, 0
      %v573 = vsel %vm562, %v495, 0
      %v576 = vsel %vm562, %v496, 0
      %v579 = vsel %vm562, %v497, 0
      %v582 = vsel %vm562, %v498, 0
      %v585 = vsel %vm562, %v499, 0
      %v588 = vsel %vm562, %v500, 0
      %v591 = vsel %vm562, %v501, 0
      %v594 = vsel %vm562, %v502, 0
      %v597 = vsel %vm562, %v503, 0
      %v600 = vsel %vm562, %v504, 0
      %v603 = vsel %vm562, %v505, 0
      %v606 = vsel %vm562, %v506, 0
      %v609 = vsel %vm562, %v507, 0
      %v612 = vsel %vm562, %v508, 0
      %v615 = vsel %vm562, %v509, 0
      %v618 = vsel %vm562, %v510, 0
      %v621 = vsel %vm562, %v511, 0
      %v624 = vsel %vm562, %v512, 0
      %v627 = vsel %vm562, %v513, 0
      %v630 = vsel %vm562, %v514, 0
      %v633 = vsel %vm562, %v515, 0
      %v636 = vsel %vm562, %v516, 0
      %v639 = vsel %vm562, %v517, 0
      %v642 = vsel %vm562, %v518, 0
      %v645 = vsel %vm562, %v519, 0
      %v648 = vsel %vm562, %v520, 0
      %v651 = vsel %vm562, %v521, 0
      %v654 = vsel %vm562, %v522, 0
      %v657 = vsel %vm562, %v523, 0
      %v660 = vsel %vm562, %v524, 0
      %v663 = vsel %vm562, %v525, 0
      %v666 = vsel %vm562, %v526, 0
      %v669 = vsel %vm562, %v527, 0
      %v672 = vsel %vm562, %v528, 0
      %v675 = vsel %vm562, %v529, 0
      %v678 = vsel %vm562, %v530, 0
      %v681 = vsel %vm562, %v531, 0
      %v684 = vsel %vm562, %v532, 0
      %v687 = vsel %vm562, %v533, 0
      %v690 = vsel %vm562, %v534, 0
      %v693 = vsel %vm562, %v535, 0
      %v696 = vsel %vm562, %v536, 0
      %v699 = vsel %vm562, %v537, 0
      %v702 = vsel %vm562, %v538, 0
      %v705 = vsel %vm562, %v539, 0
      %v708 = vsel %vm562, %v540, 0
      %v711 = vsel %vm562, %v541, 0
      %v714 = vsel %vm562, %v542, 0
      %v717 = vsel %vm562, %v543, 0
      %v720 = vsel %vm562, %v544, 0
      %v723 = vsel %vm562, %v545, 0
      %v726 = vsel %vm562, %v546, 0
      %v729 = vsel %vm562, %v547, 0
      %v732 = vsel %vm562, %v548, 0
      %v735 = vsel %vm562, %v549, 0
      %v738 = vsel %vm562, %v550, 0
      %v741 = vsel %vm562, %v551, 0
      %v744 = vsel %vm562, %v552, 0
      %v747 = vsel %vm562, %v553, 0
      %v750 = vsel %vm562, %v554, 0
      %v753 = vsel %vm562, %v555, 0
      %vm755 = vcmask 1042432
      %v757 = vsel %vm755, %v560, 0
      %v760 = vsel %vm755, %v561, 0
      %762 = vmatprep.subr.bf16.mxu0 %v760
      %763 = vmatpush1.bf16.msra.mxu0 %v757
      %764 = vmatprep.subr.bf16.mxu0 0
      %765 = vmatpush1.bf16.msra.mxu0 0
      %766 = vmatprep.subr.bf16.mxu0 0
      %767 = vmatpush1.bf16.msra.mxu0 0
      %768 = vmatprep.subr.bf16.mxu0 0
      %769 = vmatpush1.bf16.msra.mxu0 0
      %770 = vmatprep.subr.bf16.mxu0 0
      %771 = vmatpush1.bf16.msra.mxu0 0
      %772 = vmatprep.subr.bf16.mxu0 0
      %773 = vmatpush1.bf16.msra.mxu0 0
      %774 = vmatprep.subr.bf16.mxu0 0
      %775 = vmatpush1.bf16.msra.mxu0 0
      %776 = vmatprep.subr.bf16.mxu0 0
      %777 = vmatpush1.bf16.msra.mxu0 0
      %778 = vmatprep.subr.bf16.mxu0 0
      %779 = vmatpush1.bf16.msra.mxu0 0
      %780 = vmatprep.subr.bf16.mxu0 0
      %781 = vmatpush1.bf16.msra.mxu0 0
      %782 = vmatprep.subr.bf16.mxu0 0
      %783 = vmatpush1.bf16.msra.mxu0 0
      %784 = vmatprep.subr.bf16.mxu0 0
      %785 = vmatpush1.bf16.msra.mxu0 0
      %786 = vmatprep.subr.bf16.mxu0 0
      %787 = vmatpush1.bf16.msra.mxu0 0
      %788 = vmatprep.subr.bf16.mxu0 0
      %789 = vmatpush1.bf16.msra.mxu0 0
      %790 = vmatprep.subr.bf16.mxu0 0
      %791 = vmatpush1.bf16.msra.mxu0 0
      %792 = vmatprep.subr.bf16.mxu0 0
      %793 = vmatpush1.bf16.msra.mxu0 0
      %794 = vmatprep.mubr.bf16.mxu0 0
      %795 = vmatmul.mubr.bf16.gmra.mrb[0].mxu0 %v564
      %v796 = vpop.f32.mrb[0].mxu0
      %v797 = vadd.f32 0.0, %v796
      %v798 = vpop.f32.mrb[0].mxu0
      %v799 = vadd.f32 0.0, %v798
      %v800 = vpop.f32.mrb[0].mxu0
      %v801 = vadd.f32 0.0, %v800
      %v802 = vpop.f32.mrb[0].mxu0
      %v803 = vadd.f32 0.0, %v802
      %804 = vmatprep.mubr.bf16.mxu0 0
      %805 = vmatmul.mubr.bf16.gmra.mrb[0].mxu0 %v567
      %v806 = vpop.f32.mrb[0].mxu0
      %v807 = vadd.f32 0.0, %v806
      %v808 = vpop.f32.mrb[0].mxu0
      %v809 = vadd.f32 0.0, %v808
      %v810 = vpop.f32.mrb[0].mxu0
      %v811 = vadd.f32 0.0, %v810
      %v812 = vpop.f32.mrb[0].mxu0
      %v813 = vadd.f32 0.0, %v812
      %814 = vmatprep.mubr.bf16.mxu0 0
      %815 = vmatmul.mubr.bf16.gmra.mrb[0].mxu0 %v570
      %v816 = vpop.f32.mrb[0].mxu0
      %v817 = vadd.f32 0.0, %v816
      %v818 = vpop.f32.mrb[0].mxu0
      %v819 = vadd.f32 0.0, %v818
      %v820 = vpop.f32.mrb[0].mxu0
      %v821 = vadd.f32 0.0, %v820
      %v822 = vpop.f32.mrb[0].mxu0
      %v823 = vadd.f32 0.0, %v822
      %824 = vmatprep.mubr.bf16.mxu0 0
      %825 = vmatmul.mubr.bf16.gmra.mrb[0].mxu0 %v573
      %v826 = vpop.f32.mrb[0].mxu0
      %v827 = vadd.f32 0.0, %v826
      %v828 = vpop.f32.mrb[0].mxu0
      %v829 = vadd.f32 0.0, %v828
      %v830 = vpop.f32.mrb[0].mxu0
      %v831 = vadd.f32 0.0, %v830
      %v832 = vpop.f32.mrb[0].mxu0
      %v833 = vadd.f32 0.0, %v832
      %834 = vmatprep.mubr.bf16.mxu0 0
      %835 = vmatmul.mubr.bf16.gmra.mrb[0].mxu0 %v576
      %v836 = vpop.f32.mrb[0].mxu0
      %v837 = vadd.f32 0.0, %v836
      %v838 = vpop.f32.mrb[0].mxu0
      %v839 = vadd.f32 0.0, %v838
      %v840 = vpop.f32.mrb[0].mxu0
      %v841 = vadd.f32 0.0, %v840
      %v842 = vpop.f32.mrb[0].mxu0
      %v843 = vadd.f32 0.0, %v842
      %844 = vmatprep.mubr.bf16.mxu0 0
      %845 = vmatmul.mubr.bf16.gmra.mrb[0].mxu0 %v579
      %v846 = vpop.f32.mrb[0].mxu0
      %v847 = vadd.f32 0.0, %v846
      %v848 = vpop.f32.mrb[0].mxu0
      %v849 = vadd.f32 0.0, %v848
      %v850 = vpop.f32.mrb[0].mxu0
      %v851 = vadd.f32 0.0, %v850
      %v852 = vpop.f32.mrb[0].mxu0
      %v853 = vadd.f32 0.0, %v852
      %854 = vmatprep.mubr.bf16.mxu0 0
      %855 = vmatmul.mubr.bf16.gmra.mrb[0].mxu0 %v582
      %v856 = vpop.f32.mrb[0].mxu0
      %v857 = vadd.f32 0.0, %v856
      %v858 = vpop.f32.mrb[0].mxu0
      %v859 = vadd.f32 0.0, %v858
      %v860 = vpop.f32.mrb[0].mxu0
      %v861 = vadd.f32 0.0, %v860
      %v862 = vpop.f32.mrb[0].mxu0
      %v863 = vadd.f32 0.0, %v862
      %864 = vmatprep.mubr.bf16.mxu0 0
      %865 = vmatmul.mubr.bf16.gmra.mrb[0].mxu0 %v585
      %v866 = vpop.f32.mrb[0].mxu0
      %v867 = vadd.f32 0.0, %v866
      %v868 = vpop.f32.mrb[0].mxu0
      %v869 = vadd.f32 0.0, %v868
      %v870 = vpop.f32.mrb[0].mxu0
      %v871 = vadd.f32 0.0, %v870
      %v872 = vpop.f32.mrb[0].mxu0
      %v873 = vadd.f32 0.0, %v872
      %874 = vmatprep.mubr.bf16.mxu0 0
      %875 = vmatmul.mubr.bf16.gmra.mrb[0].mxu0 %v588
      %v876 = vpop.f32.mrb[0].mxu0
      %v877 = vadd.f32 0.0, %v876
      %v878 = vpop.f32.mrb[0].mxu0
      %v879 = vadd.f32 0.0, %v878
      %v880 = vpop.f32.mrb[0].mxu0
      %v881 = vadd.f32 0.0, %v880
      %v882 = vpop.f32.mrb[0].mxu0
      %v883 = vadd.f32 0.0, %v882
      %884 = vmatprep.mubr.bf16.mxu0 0
      %885 = vmatmul.mubr.bf16.gmra.mrb[0].mxu0 %v591
      %v886 = vpop.f32.mrb[0].mxu0
      %v887 = vadd.f32 0.0, %v886
      %v888 = vpop.f32.mrb[0].mxu0
      %v889 = vadd.f32 0.0, %v888
      %v890 = vpop.f32.mrb[0].mxu0
      %v891 = vadd.f32 0.0, %v890
      %v892 = vpop.f32.mrb[0].mxu0
      %v893 = vadd.f32 0.0, %v892
      %894 = vmatprep.mubr.bf16.mxu0 0
      %895 = vmatmul.mubr.bf16.gmra.mrb[0].mxu0 %v594
      %v896 = vpop.f32.mrb[0].mxu0
      %v897 = vadd.f32 0.0, %v896
      %v898 = vpop.f32.mrb[0].mxu0
      %v899 = vadd.f32 0.0, %v898
      %v900 = vpop.f32.mrb[0].mxu0
      %v901 = vadd.f32 0.0, %v900
      %v902 = vpop.f32.mrb[0].mxu0
      %v903 = vadd.f32 0.0, %v902
      %904 = vmatprep.mubr.bf16.mxu0 0
      %905 = vmatmul.mubr.bf16.gmra.mrb[0].mxu0 %v597
      %v906 = vpop.f32.mrb[0].mxu0
      %v907 = vadd.f32 0.0, %v906
      %v908 = vpop.f32.mrb[0].mxu0
      %v909 = vadd.f32 0.0, %v908
      %v910 = vpop.f32.mrb[0].mxu0
      %v911 = vadd.f32 0.0, %v910
      %v912 = vpop.f32.mrb[0].mxu0
      %v913 = vadd.f32 0.0, %v912
      %914 = vmatprep.mubr.bf16.mxu0 0
      %915 = vmatmul.mubr.bf16.gmra.mrb[0].mxu0 %v600
      %v916 = vpop.f32.mrb[0].mxu0
      %v917 = vadd.f32 0.0, %v916
      %v918 = vpop.f32.mrb[0].mxu0
      %v919 = vadd.f32 0.0, %v918
      %v920 = vpop.f32.mrb[0].mxu0
      %v921 = vadd.f32 0.0, %v920
      %v922 = vpop.f32.mrb[0].mxu0
      %v923 = vadd.f32 0.0, %v922
      %924 = vmatprep.mubr.bf16.mxu0 0
      %925 = vmatmul.mubr.bf16.gmra.mrb[0].mxu0 %v603
      %v926 = vpop.f32.mrb[0].mxu0
      %v927 = vadd.f32 0.0, %v926
      %v928 = vpop.f32.mrb[0].mxu0
      %v929 = vadd.f32 0.0, %v928
      %v930 = vpop.f32.mrb[0].mxu0
      %v931 = vadd.f32 0.0, %v930
      %v932 = vpop.f32.mrb[0].mxu0
      %v933 = vadd.f32 0.0, %v932
      %934 = vmatprep.mubr.bf16.mxu0 0
      %935 = vmatmul.mubr.bf16.gmra.mrb[0].mxu0 %v606
      %v936 = vpop.f32.mrb[0].mxu0
      %v937 = vadd.f32 0.0, %v936
      %v938 = vpop.f32.mrb[0].mxu0
      %v939 = vadd.f32 0.0, %v938
      %v940 = vpop.f32.mrb[0].mxu0
      %v941 = vadd.f32 0.0, %v940
      %v942 = vpop.f32.mrb[0].mxu0
      %v943 = vadd.f32 0.0, %v942
      %944 = vmatprep.mubr.bf16.mxu0 0
      %945 = vmatmul.mubr.bf16.gmra.mrb[0].mxu0 %v609
      %v946 = vpop.f32.mrb[0].mxu0
      %v947 = vadd.f32 0.0, %v946
      %v948 = vpop.f32.mrb[0].mxu0
      %v949 = vadd.f32 0.0, %v948
      %v950 = vpop.f32.mrb[0].mxu0
      %v951 = vadd.f32 0.0, %v950
      %v952 = vpop.f32.mrb[0].mxu0
      %v953 = vadd.f32 0.0, %v952
      %954 = vmatprep.mubr.bf16.mxu0 0
      %955 = vmatmul.mubr.bf16.gmra.mrb[0].mxu0 %v612
      %v956 = vpop.f32.mrb[0].mxu0
      %v957 = vadd.f32 0.0, %v956
      %v958 = vpop.f32.mrb[0].mxu0
      %v959 = vadd.f32 0.0, %v958
      %v960 = vpop.f32.mrb[0].mxu0
      %v961 = vadd.f32 0.0, %v960
      %v962 = vpop.f32.mrb[0].mxu0
      %v963 = vadd.f32 0.0, %v962
      %964 = vmatprep.mubr.bf16.mxu0 0
      %965 = vmatmul.mubr.bf16.gmra.mrb[0].mxu0 %v615
      %v966 = vpop.f32.mrb[0].mxu0
      %v967 = vadd.f32 0.0, %v966
      %v968 = vpop.f32.mrb[0].mxu0
      %v969 = vadd.f32 0.0, %v968
      %v970 = vpop.f32.mrb[0].mxu0
      %v971 = vadd.f32 0.0, %v970
      %v972 = vpop.f32.mrb[0].mxu0
      %v973 = vadd.f32 0.0, %v972
      %974 = vmatprep.mubr.bf16.mxu0 0
      %975 = vmatmul.mubr.bf16.gmra.mrb[0].mxu0 %v618
      %v976 = vpop.f32.mrb[0].mxu0
      %v977 = vadd.f32 0.0, %v976
      %v978 = vpop.f32.mrb[0].mxu0
      %v979 = vadd.f32 0.0, %v978
      %v980 = vpop.f32.mrb[0].mxu0
      %v981 = vadd.f32 0.0, %v980
      %v982 = vpop.f32.mrb[0].mxu0
      %v983 = vadd.f32 0.0, %v982
      %984 = vmatprep.mubr.bf16.mxu0 0
      %985 = vmatmul.mubr.bf16.gmra.mrb[0].mxu0 %v621
      %v986 = vpop.f32.mrb[0].mxu0
      %v987 = vadd.f32 0.0, %v986
      %v988 = vpop.f32.mrb[0].mxu0
      %v989 = vadd.f32 0.0, %v988
      %v990 = vpop.f32.mrb[0].mxu0
      %v991 = vadd.f32 0.0, %v990
      %v992 = vpop.f32.mrb[0].mxu0
      %v993 = vadd.f32 0.0, %v992
      %994 = vmatprep.mubr.bf16.mxu0 0
      %995 = vmatmul.mubr.bf16.gmra.mrb[0].mxu0 %v624
      %v996 = vpop.f32.mrb[0].mxu0
      %v997 = vadd.f32 0.0, %v996
      %v998 = vpop.f32.mrb[0].mxu0
      %v999 = vadd.f32 0.0, %v998
      %v1000 = vpop.f32.mrb[0].mxu0
      %v1001 = vadd.f32 0.0, %v1000
      %v1002 = vpop.f32.mrb[0].mxu0
      %v1003 = vadd.f32 0.0, %v1002
      %1004 = vmatprep.mubr.bf16.mxu0 0
      %1005 = vmatmul.mubr.bf16.gmra.mrb[0].mxu0 %v627
      %v1006 = vpop.f32.mrb[0].mxu0
      %v1007 = vadd.f32 0.0, %v1006
      %v1008 = vpop.f32.mrb[0].mxu0
      %v1009 = vadd.f32 0.0, %v1008
      %v1010 = vpop.f32.mrb[0].mxu0
      %v1011 = vadd.f32 0.0, %v1010
      %v1012 = vpop.f32.mrb[0].mxu0
      %v1013 = vadd.f32 0.0, %v1012
      %1014 = vmatprep.mubr.bf16.mxu0 0
      %1015 = vmatmul.mubr.bf16.gmra.mrb[0].mxu0 %v630
      %v1016 = vpop.f32.mrb[0].mxu0
      %v1017 = vadd.f32 0.0, %v1016
      %v1018 = vpop.f32.mrb[0].mxu0
      %v1019 = vadd.f32 0.0, %v1018
      %v1020 = vpop.f32.mrb[0].mxu0
      %v1021 = vadd.f32 0.0, %v1020
      %v1022 = vpop.f32.mrb[0].mxu0
      %v1023 = vadd.f32 0.0, %v1022
      %1024 = vmatprep.mubr.bf16.mxu0 0
      %1025 = vmatmul.mubr.bf16.gmra.mrb[0].mxu0 %v633
      %v1026 = vpop.f32.mrb[0].mxu0
      %v1027 = vadd.f32 0.0, %v1026
      %v1028 = vpop.f32.mrb[0].mxu0
      %v1029 = vadd.f32 0.0, %v1028
      %v1030 = vpop.f32.mrb[0].mxu0
      %v1031 = vadd.f32 0.0, %v1030
      %v1032 = vpop.f32.mrb[0].mxu0
      %v1033 = vadd.f32 0.0, %v1032
      %1034 = vmatprep.mubr.bf16.mxu0 0
      %1035 = vmatmul.mubr.bf16.gmra.mrb[0].mxu0 %v636
      %v1036 = vpop.f32.mrb[0].mxu0
      %v1037 = vadd.f32 0.0, %v1036
      %v1038 = vpop.f32.mrb[0].mxu0
      %v1039 = vadd.f32 0.0, %v1038
      %v1040 = vpop.f32.mrb[0].mxu0
      %v1041 = vadd.f32 0.0, %v1040
      %v1042 = vpop.f32.mrb[0].mxu0
      %v1043 = vadd.f32 0.0, %v1042
      %1044 = vmatprep.mubr.bf16.mxu0 0
      %1045 = vmatmul.mubr.bf16.gmra.mrb[0].mxu0 %v639
      %v1046 = vpop.f32.mrb[0].mxu0
      %v1047 = vadd.f32 0.0, %v1046
      %v1048 = vpop.f32.mrb[0].mxu0
      %v1049 = vadd.f32 0.0, %v1048
      %v1050 = vpop.f32.mrb[0].mxu0
      %v1051 = vadd.f32 0.0, %v1050
      %v1052 = vpop.f32.mrb[0].mxu0
      %v1053 = vadd.f32 0.0, %v1052
      %1054 = vmatprep.mubr.bf16.mxu0 0
      %1055 = vmatmul.mubr.bf16.gmra.mrb[0].mxu0 %v642
      %v1056 = vpop.f32.mrb[0].mxu0
      %v1057 = vadd.f32 0.0, %v1056
      %v1058 = vpop.f32.mrb[0].mxu0
      %v1059 = vadd.f32 0.0, %v1058
      %v1060 = vpop.f32.mrb[0].mxu0
      %v1061 = vadd.f32 0.0, %v1060
      %v1062 = vpop.f32.mrb[0].mxu0
      %v1063 = vadd.f32 0.0, %v1062
      %1064 = vmatprep.mubr.bf16.mxu0 0
      %1065 = vmatmul.mubr.bf16.gmra.mrb[0].mxu0 %v645
      %v1066 = vpop.f32.mrb[0].mxu0
      %v1067 = vadd.f32 0.0, %v1066
      %v1068 = vpop.f32.mrb[0].mxu0
      %v1069 = vadd.f32 0.0, %v1068
      %v1070 = vpop.f32.mrb[0].mxu0
      %v1071 = vadd.f32 0.0, %v1070
      %v1072 = vpop.f32.mrb[0].mxu0
      %v1073 = vadd.f32 0.0, %v1072
      %1074 = vmatprep.mubr.bf16.mxu0 0
      %1075 = vmatmul.mubr.bf16.gmra.mrb[0].mxu0 %v648
      %v1076 = vpop.f32.mrb[0].mxu0
      %v1077 = vadd.f32 0.0, %v1076
      %v1078 = vpop.f32.mrb[0].mxu0
      %v1079 = vadd.f32 0.0, %v1078
      %v1080 = vpop.f32.mrb[0].mxu0
      %v1081 = vadd.f32 0.0, %v1080
      %v1082 = vpop.f32.mrb[0].mxu0
      %v1083 = vadd.f32 0.0, %v1082
      %1084 = vmatprep.mubr.bf16.mxu0 0
      %1085 = vmatmul.mubr.bf16.gmra.mrb[0].mxu0 %v651
      %v1086 = vpop.f32.mrb[0].mxu0
      %v1087 = vadd.f32 0.0, %v1086
      %v1088 = vpop.f32.mrb[0].mxu0
      %v1089 = vadd.f32 0.0, %v1088
      %v1090 = vpop.f32.mrb[0].mxu0
      %v1091 = vadd.f32 0.0, %v1090
      %v1092 = vpop.f32.mrb[0].mxu0
      %v1093 = vadd.f32 0.0, %v1092
      %1094 = vmatprep.mubr.bf16.mxu0 0
      %1095 = vmatmul.mubr.bf16.gmra.mrb[0].mxu0 %v654
      %v1096 = vpop.f32.mrb[0].mxu0
      %v1097 = vadd.f32 0.0, %v1096
      %v1098 = vpop.f32.mrb[0].mxu0
      %v1099 = vadd.f32 0.0, %v1098
      %v1100 = vpop.f32.mrb[0].mxu0
      %v1101 = vadd.f32 0.0, %v1100
      %v1102 = vpop.f32.mrb[0].mxu0
      %v1103 = vadd.f32 0.0, %v1102
      %1104 = vmatprep.mubr.bf16.mxu0 0
      %1105 = vmatmul.mubr.bf16.gmra.mrb[0].mxu0 %v657
      %v1106 = vpop.f32.mrb[0].mxu0
      %v1107 = vadd.f32 0.0, %v1106
      %v1108 = vpop.f32.mrb[0].mxu0
      %v1109 = vadd.f32 0.0, %v1108
      %v1110 = vpop.f32.mrb[0].mxu0
      %v1111 = vadd.f32 0.0, %v1110
      %v1112 = vpop.f32.mrb[0].mxu0
      %v1113 = vadd.f32 0.0, %v1112
      %1114 = vmatprep.mubr.bf16.mxu0 0
      %1115 = vmatmul.mubr.bf16.gmra.mrb[0].mxu0 %v660
      %v1116 = vpop.f32.mrb[0].mxu0
      %v1117 = vadd.f32 0.0, %v1116
      %v1118 = vpop.f32.mrb[0].mxu0
      %v1119 = vadd.f32 0.0, %v1118
      %v1120 = vpop.f32.mrb[0].mxu0
      %v1121 = vadd.f32 0.0, %v1120
      %v1122 = vpop.f32.mrb[0].mxu0
      %v1123 = vadd.f32 0.0, %v1122
      %1124 = vmatprep.mubr.bf16.mxu0 0
      %1125 = vmatmul.mubr.bf16.gmra.mrb[0].mxu0 %v663
      %v1126 = vpop.f32.mrb[0].mxu0
      %v1127 = vadd.f32 0.0, %v1126
      %v1128 = vpop.f32.mrb[0].mxu0
      %v1129 = vadd.f32 0.0, %v1128
      %v1130 = vpop.f32.mrb[0].mxu0
      %v1131 = vadd.f32 0.0, %v1130
      %v1132 = vpop.f32.mrb[0].mxu0
      %v1133 = vadd.f32 0.0, %v1132
      %1134 = vmatprep.mubr.bf16.mxu0 0
      %1135 = vmatmul.mubr.bf16.gmra.mrb[0].mxu0 %v666
      %v1136 = vpop.f32.mrb[0].mxu0
      %v1137 = vadd.f32 0.0, %v1136
      %v1138 = vpop.f32.mrb[0].mxu0
      %v1139 = vadd.f32 0.0, %v1138
      %v1140 = vpop.f32.mrb[0].mxu0
      %v1141 = vadd.f32 0.0, %v1140
      %v1142 = vpop.f32.mrb[0].mxu0
      %v1143 = vadd.f32 0.0, %v1142
      %1144 = vmatprep.mubr.bf16.mxu0 0
      %1145 = vmatmul.mubr.bf16.gmra.mrb[0].mxu0 %v669
      %v1146 = vpop.f32.mrb[0].mxu0
      %v1147 = vadd.f32 0.0, %v1146
      %v1148 = vpop.f32.mrb[0].mxu0
      %v1149 = vadd.f32 0.0, %v1148
      %v1150 = vpop.f32.mrb[0].mxu0
      %v1151 = vadd.f32 0.0, %v1150
      %v1152 = vpop.f32.mrb[0].mxu0
      %v1153 = vadd.f32 0.0, %v1152
      %1154 = vmatprep.mubr.bf16.mxu0 0
      %1155 = vmatmul.mubr.bf16.gmra.mrb[0].mxu0 %v672
      %v1156 = vpop.f32.mrb[0].mxu0
      %v1157 = vadd.f32 0.0, %v1156
      %v1158 = vpop.f32.mrb[0].mxu0
      %v1159 = vadd.f32 0.0, %v1158
      %v1160 = vpop.f32.mrb[0].mxu0
      %v1161 = vadd.f32 0.0, %v1160
      %v1162 = vpop.f32.mrb[0].mxu0
      %v1163 = vadd.f32 0.0, %v1162
      %1164 = vmatprep.mubr.bf16.mxu0 0
      %1165 = vmatmul.mubr.bf16.gmra.mrb[0].mxu0 %v675
      %v1166 = vpop.f32.mrb[0].mxu0
      %v1167 = vadd.f32 0.0, %v1166
      %v1168 = vpop.f32.mrb[0].mxu0
      %v1169 = vadd.f32 0.0, %v1168
      %v1170 = vpop.f32.mrb[0].mxu0
      %v1171 = vadd.f32 0.0, %v1170
      %v1172 = vpop.f32.mrb[0].mxu0
      %v1173 = vadd.f32 0.0, %v1172
      %1174 = vmatprep.mubr.bf16.mxu0 0
      %1175 = vmatmul.mubr.bf16.gmra.mrb[0].mxu0 %v678
      %v1176 = vpop.f32.mrb[0].mxu0
      %v1177 = vadd.f32 0.0, %v1176
      %v1178 = vpop.f32.mrb[0].mxu0
      %v1179 = vadd.f32 0.0, %v1178
      %v1180 = vpop.f32.mrb[0].mxu0
      %v1181 = vadd.f32 0.0, %v1180
      %v1182 = vpop.f32.mrb[0].mxu0
      %v1183 = vadd.f32 0.0, %v1182
      %1184 = vmatprep.mubr.bf16.mxu0 0
      %1185 = vmatmul.mubr.bf16.gmra.mrb[0].mxu0 %v681
      %v1186 = vpop.f32.mrb[0].mxu0
      %v1187 = vadd.f32 0.0, %v1186
      %v1188 = vpop.f32.mrb[0].mxu0
      %v1189 = vadd.f32 0.0, %v1188
      %v1190 = vpop.f32.mrb[0].mxu0
      %v1191 = vadd.f32 0.0, %v1190
      %v1192 = vpop.f32.mrb[0].mxu0
      %v1193 = vadd.f32 0.0, %v1192
      %1194 = vmatprep.mubr.bf16.mxu0 0
      %1195 = vmatmul.mubr.bf16.gmra.mrb[0].mxu0 %v684
      %v1196 = vpop.f32.mrb[0].mxu0
      %v1197 = vadd.f32 0.0, %v1196
      %v1198 = vpop.f32.mrb[0].mxu0
      %v1199 = vadd.f32 0.0, %v1198
      %v1200 = vpop.f32.mrb[0].mxu0
      %v1201 = vadd.f32 0.0, %v1200
      %v1202 = vpop.f32.mrb[0].mxu0
      %v1203 = vadd.f32 0.0, %v1202
      %1204 = vmatprep.mubr.bf16.mxu0 0
      %1205 = vmatmul.mubr.bf16.gmra.mrb[0].mxu0 %v687
      %v1206 = vpop.f32.mrb[0].mxu0
      %v1207 = vadd.f32 0.0, %v1206
      %v1208 = vpop.f32.mrb[0].mxu0
      %v1209 = vadd.f32 0.0, %v1208
      %v1210 = vpop.f32.mrb[0].mxu0
      %v1211 = vadd.f32 0.0, %v1210
      %v1212 = vpop.f32.mrb[0].mxu0
      %v1213 = vadd.f32 0.0, %v1212
      %1214 = vmatprep.mubr.bf16.mxu0 0
      %1215 = vmatmul.mubr.bf16.gmra.mrb[0].mxu0 %v690
      %v1216 = vpop.f32.mrb[0].mxu0
      %v1217 = vadd.f32 0.0, %v1216
      %v1218 = vpop.f32.mrb[0].mxu0
      %v1219 = vadd.f32 0.0, %v1218
      %v1220 = vpop.f32.mrb[0].mxu0
      %v1221 = vadd.f32 0.0, %v1220
      %v1222 = vpop.f32.mrb[0].mxu0
      %v1223 = vadd.f32 0.0, %v1222
      %1224 = vmatprep.mubr.bf16.mxu0 0
      %1225 = vmatmul.mubr.bf16.gmra.mrb[0].mxu0 %v693
      %v1226 = vpop.f32.mrb[0].mxu0
      %v1227 = vadd.f32 0.0, %v1226
      %v1228 = vpop.f32.mrb[0].mxu0
      %v1229 = vadd.f32 0.0, %v1228
      %v1230 = vpop.f32.mrb[0].mxu0
      %v1231 = vadd.f32 0.0, %v1230
      %v1232 = vpop.f32.mrb[0].mxu0
      %v1233 = vadd.f32 0.0, %v1232
      %1234 = vmatprep.mubr.bf16.mxu0 0
      %1235 = vmatmul.mubr.bf16.gmra.mrb[0].mxu0 %v696
      %v1236 = vpop.f32.mrb[0].mxu0
      %v1237 = vadd.f32 0.0, %v1236
      %v1238 = vpop.f32.mrb[0].mxu0
      %v1239 = vadd.f32 0.0, %v1238
      %v1240 = vpop.f32.mrb[0].mxu0
      %v1241 = vadd.f32 0.0, %v1240
      %v1242 = vpop.f32.mrb[0].mxu0
      %v1243 = vadd.f32 0.0, %v1242
      %1244 = vmatprep.mubr.bf16.mxu0 0
      %1245 = vmatmul.mubr.bf16.gmra.mrb[0].mxu0 %v699
      %v1246 = vpop.f32.mrb[0].mxu0
      %v1247 = vadd.f32 0.0, %v1246
      %v1248 = vpop.f32.mrb[0].mxu0
      %v1249 = vadd.f32 0.0, %v1248
      %v1250 = vpop.f32.mrb[0].mxu0
      %v1251 = vadd.f32 0.0, %v1250
      %v1252 = vpop.f32.mrb[0].mxu0
      %v1253 = vadd.f32 0.0, %v1252
      %1254 = vmatprep.mubr.bf16.mxu0 0
      %1255 = vmatmul.mubr.bf16.gmra.mrb[0].mxu0 %v702
      %v1256 = vpop.f32.mrb[0].mxu0
      %v1257 = vadd.f32 0.0, %v1256
      %v1258 = vpop.f32.mrb[0].mxu0
      %v1259 = vadd.f32 0.0, %v1258
      %v1260 = vpop.f32.mrb[0].mxu0
      %v1261 = vadd.f32 0.0, %v1260
      %v1262 = vpop.f32.mrb[0].mxu0
      %v1263 = vadd.f32 0.0, %v1262
      %1264 = vmatprep.mubr.bf16.mxu0 0
      %1265 = vmatmul.mubr.bf16.gmra.mrb[0].mxu0 %v705
      %v1266 = vpop.f32.mrb[0].mxu0
      %v1267 = vadd.f32 0.0, %v1266
      %v1268 = vpop.f32.mrb[0].mxu0
      %v1269 = vadd.f32 0.0, %v1268
      %v1270 = vpop.f32.mrb[0].mxu0
      %v1271 = vadd.f32 0.0, %v1270
      %v1272 = vpop.f32.mrb[0].mxu0
      %v1273 = vadd.f32 0.0, %v1272
      %1274 = vmatprep.mubr.bf16.mxu0 0
      %1275 = vmatmul.mubr.bf16.gmra.mrb[0].mxu0 %v708
      %v1276 = vpop.f32.mrb[0].mxu0
      %v1277 = vadd.f32 0.0, %v1276
      %v1278 = vpop.f32.mrb[0].mxu0
      %v1279 = vadd.f32 0.0, %v1278
      %v1280 = vpop.f32.mrb[0].mxu0
      %v1281 = vadd.f32 0.0, %v1280
      %v1282 = vpop.f32.mrb[0].mxu0
      %v1283 = vadd.f32 0.0, %v1282
      %1284 = vmatprep.mubr.bf16.mxu0 0
      %1285 = vmatmul.mubr.bf16.gmra.mrb[0].mxu0 %v711
      %v1286 = vpop.f32.mrb[0].mxu0
      %v1287 = vadd.f32 0.0, %v1286
      %v1288 = vpop.f32.mrb[0].mxu0
      %v1289 = vadd.f32 0.0, %v1288
      %v1290 = vpop.f32.mrb[0].mxu0
      %v1291 = vadd.f32 0.0, %v1290
      %v1292 = vpop.f32.mrb[0].mxu0
      %v1293 = vadd.f32 0.0, %v1292
      %1294 = vmatprep.mubr.bf16.mxu0 0
      %1295 = vmatmul.mubr.bf16.gmra.mrb[0].mxu0 %v714
      %v1296 = vpop.f32.mrb[0].mxu0
      %v1297 = vadd.f32 0.0, %v1296
      %v1298 = vpop.f32.mrb[0].mxu0
      %v1299 = vadd.f32 0.0, %v1298
      %v1300 = vpop.f32.mrb[0].mxu0
      %v1301 = vadd.f32 0.0, %v1300
      %v1302 = vpop.f32.mrb[0].mxu0
      %v1303 = vadd.f32 0.0, %v1302
      %1304 = vmatprep.mubr.bf16.mxu0 0
      %1305 = vmatmul.mubr.bf16.gmra.mrb[0].mxu0 %v717
      %v1306 = vpop.f32.mrb[0].mxu0
      %v1307 = vadd.f32 0.0, %v1306
      %v1308 = vpop.f32.mrb[0].mxu0
      %v1309 = vadd.f32 0.0, %v1308
      %v1310 = vpop.f32.mrb[0].mxu0
      %v1311 = vadd.f32 0.0, %v1310
      %v1312 = vpop.f32.mrb[0].mxu0
      %v1313 = vadd.f32 0.0, %v1312
      %1314 = vmatprep.mubr.bf16.mxu0 0
      %1315 = vmatmul.mubr.bf16.gmra.mrb[0].mxu0 %v720
      %v1316 = vpop.f32.mrb[0].mxu0
      %v1317 = vadd.f32 0.0, %v1316
      %v1318 = vpop.f32.mrb[0].mxu0
      %v1319 = vadd.f32 0.0, %v1318
      %v1320 = vpop.f32.mrb[0].mxu0
      %v1321 = vadd.f32 0.0, %v1320
      %v1322 = vpop.f32.mrb[0].mxu0
      %v1323 = vadd.f32 0.0, %v1322
      %1324 = vmatprep.mubr.bf16.mxu0 0
      %1325 = vmatmul.mubr.bf16.gmra.mrb[0].mxu0 %v723
      %v1326 = vpop.f32.mrb[0].mxu0
      %v1327 = vadd.f32 0.0, %v1326
      %v1328 = vpop.f32.mrb[0].mxu0
      %v1329 = vadd.f32 0.0, %v1328
      %v1330 = vpop.f32.mrb[0].mxu0
      %v1331 = vadd.f32 0.0, %v1330
      %v1332 = vpop.f32.mrb[0].mxu0
      %v1333 = vadd.f32 0.0, %v1332
      %1334 = vmatprep.mubr.bf16.mxu0 0
      %1335 = vmatmul.mubr.bf16.gmra.mrb[0].mxu0 %v726
      %v1336 = vpop.f32.mrb[0].mxu0
      %v1337 = vadd.f32 0.0, %v1336
      %v1338 = vpop.f32.mrb[0].mxu0
      %v1339 = vadd.f32 0.0, %v1338
      %v1340 = vpop.f32.mrb[0].mxu0
      %v1341 = vadd.f32 0.0, %v1340
      %v1342 = vpop.f32.mrb[0].mxu0
      %v1343 = vadd.f32 0.0, %v1342
      %1344 = vmatprep.mubr.bf16.mxu0 0
      %1345 = vmatmul.mubr.bf16.gmra.mrb[0].mxu0 %v729
      %v1346 = vpop.f32.mrb[0].mxu0
      %v1347 = vadd.f32 0.0, %v1346
      %v1348 = vpop.f32.mrb[0].mxu0
      %v1349 = vadd.f32 0.0, %v1348
      %v1350 = vpop.f32.mrb[0].mxu0
      %v1351 = vadd.f32 0.0, %v1350
      %v1352 = vpop.f32.mrb[0].mxu0
      %v1353 = vadd.f32 0.0, %v1352
      %1354 = vmatprep.mubr.bf16.mxu0 0
      %1355 = vmatmul.mubr.bf16.gmra.mrb[0].mxu0 %v732
      %v1356 = vpop.f32.mrb[0].mxu0
      %v1357 = vadd.f32 0.0, %v1356
      %v1358 = vpop.f32.mrb[0].mxu0
      %v1359 = vadd.f32 0.0, %v1358
      %v1360 = vpop.f32.mrb[0].mxu0
      %v1361 = vadd.f32 0.0, %v1360
      %v1362 = vpop.f32.mrb[0].mxu0
      %v1363 = vadd.f32 0.0, %v1362
      %1364 = vmatprep.mubr.bf16.mxu0 0
      %1365 = vmatmul.mubr.bf16.gmra.mrb[0].mxu0 %v735
      %v1366 = vpop.f32.mrb[0].mxu0
      %v1367 = vadd.f32 0.0, %v1366
      %v1368 = vpop.f32.mrb[0].mxu0
      %v1369 = vadd.f32 0.0, %v1368
      %v1370 = vpop.f32.mrb[0].mxu0
      %v1371 = vadd.f32 0.0, %v1370
      %v1372 = vpop.f32.mrb[0].mxu0
      %v1373 = vadd.f32 0.0, %v1372
      %1374 = vmatprep.mubr.bf16.mxu0 0
      %1375 = vmatmul.mubr.bf16.gmra.mrb[0].mxu0 %v738
      %v1376 = vpop.f32.mrb[0].mxu0
      %v1377 = vadd.f32 0.0, %v1376
      %v1378 = vpop.f32.mrb[0].mxu0
      %v1379 = vadd.f32 0.0, %v1378
      %v1380 = vpop.f32.mrb[0].mxu0
      %v1381 = vadd.f32 0.0, %v1380
      %v1382 = vpop.f32.mrb[0].mxu0
      %v1383 = vadd.f32 0.0, %v1382
      %1384 = vmatprep.mubr.bf16.mxu0 0
      %1385 = vmatmul.mubr.bf16.gmra.mrb[0].mxu0 %v741
      %v1386 = vpop.f32.mrb[0].mxu0
      %v1387 = vadd.f32 0.0, %v1386
      %v1388 = vpop.f32.mrb[0].mxu0
      %v1389 = vadd.f32 0.0, %v1388
      %v1390 = vpop.f32.mrb[0].mxu0
      %v1391 = vadd.f32 0.0, %v1390
      %v1392 = vpop.f32.mrb[0].mxu0
      %v1393 = vadd.f32 0.0, %v1392
      %1394 = vmatprep.mubr.bf16.mxu0 0
      %1395 = vmatmul.mubr.bf16.gmra.mrb[0].mxu0 %v744
      %v1396 = vpop.f32.mrb[0].mxu0
      %v1397 = vadd.f32 0.0, %v1396
      %v1398 = vpop.f32.mrb[0].mxu0
      %v1399 = vadd.f32 0.0, %v1398
      %v1400 = vpop.f32.mrb[0].mxu0
      %v1401 = vadd.f32 0.0, %v1400
      %v1402 = vpop.f32.mrb[0].mxu0
      %v1403 = vadd.f32 0.0, %v1402
      %1404 = vmatprep.mubr.bf16.mxu0 0
      %1405 = vmatmul.mubr.bf16.gmra.mrb[0].mxu0 %v747
      %v1406 = vpop.f32.mrb[0].mxu0
      %v1407 = vadd.f32 0.0, %v1406
      %v1408 = vpop.f32.mrb[0].mxu0
      %v1409 = vadd.f32 0.0, %v1408
      %v1410 = vpop.f32.mrb[0].mxu0
      %v1411 = vadd.f32 0.0, %v1410
      %v1412 = vpop.f32.mrb[0].mxu0
      %v1413 = vadd.f32 0.0, %v1412
      %1414 = vmatprep.mubr.bf16.mxu0 0
      %1415 = vmatmul.mubr.bf16.gmra.mrb[0].mxu0 %v750
      %v1416 = vpop.f32.mrb[0].mxu0
      %v1417 = vadd.f32 0.0, %v1416
      %v1418 = vpop.f32.mrb[0].mxu0
      %v1419 = vadd.f32 0.0, %v1418
      %v1420 = vpop.f32.mrb[0].mxu0
      %v1421 = vadd.f32 0.0, %v1420
      %v1422 = vpop.f32.mrb[0].mxu0
      %v1423 = vadd.f32 0.0, %v1422
      %1424 = vmatprep.mubr.bf16.mxu0 0
      %1425 = vmatmul.mubr.bf16.gmra.mrb[0].mxu0 %v753
      %v1426 = vpop.f32.mrb[0].mxu0
      %v1427 = vadd.f32 0.0, %v1426
      %v1428 = vpop.f32.mrb[0].mxu0
      %v1429 = vadd.f32 0.0, %v1428
      %v1430 = vpop.f32.mrb[0].mxu0
      %v1431 = vadd.f32 0.0, %v1430
      %v1432 = vpop.f32.mrb[0].mxu0
      %v1433 = vadd.f32 0.0, %v1432
      %1434 = vdwg.mxu0
      %v1435 = vld [vmem:[%s3] sm:$0x1]
      %v1436 = vlaneseq
      %v1437 = vshrl.u32 %v1436, 7
      %v1438 = vsub.s32 0, %v1437
      %v1439 = vrot.slane %v1435, %v1438
      %v1440 = vadd.f32 %v797, %v1439
      %v1441 = vadd.f32 %v801, %v1439
      %v1442 = vadd.f32 %v807, %v1439
      %v1443 = vadd.f32 %v811, %v1439
      %v1444 = vadd.f32 %v817, %v1439
      %v1445 = vadd.f32 %v821, %v1439
      %v1446 = vadd.f32 %v827, %v1439
      %v1447 = vadd.f32 %v831, %v1439
      %v1448 = vadd.f32 %v837, %v1439
      %v1449 = vadd.f32 %v841, %v1439
      %v1450 = vadd.f32 %v847, %v1439
      %v1451 = vadd.f32 %v851, %v1439
      %v1452 = vadd.f32 %v857, %v1439
      %v1453 = vadd.f32 %v861, %v1439
      %v1454 = vadd.f32 %v867, %v1439
      %v1455 = vadd.f32 %v871, %v1439
      %v1456 = vadd.f32 %v877, %v1439
      %v1457 = vadd.f32 %v881, %v1439
      %v1458 = vadd.f32 %v887, %v1439
      %v1459 = vadd.f32 %v891, %v1439
      %v1460 = vadd.f32 %v897, %v1439
      %v1461 = vadd.f32 %v901, %v1439
      %v1462 = vadd.f32 %v907, %v1439
      %v1463 = vadd.f32 %v911, %v1439
      %v1464 = vadd.f32 %v917, %v1439
      %v1465 = vadd.f32 %v921, %v1439
      %v1466 = vadd.f32 %v927, %v1439
      %v1467 = vadd.f32 %v931, %v1439
      %v1468 = vadd.f32 %v937, %v1439
      %v1469 = vadd.f32 %v941, %v1439
      %v1470 = vadd.f32 %v947, %v1439
      %v1471 = vadd.f32 %v951, %v1439
      %v1472 = vadd.f32 %v957, %v1439
      %v1473 = vadd.f32 %v961, %v1439
      %v1474 = vadd.f32 %v967, %v1439
      %v1475 = vadd.f32 %v971, %v1439
      %v1476 = vadd.f32 %v977, %v1439
      %v1477 = vadd.f32 %v981, %v1439
      %v1478 = vadd.f32 %v987, %v1439
      %v1479 = vadd.f32 %v991, %v1439
      %v1480 = vadd.f32 %v997, %v1439
      %v1481 = vadd.f32 %v1001, %v1439
      %v1482 = vadd.f32 %v1007, %v1439
      %v1483 = vadd.f32 %v1011, %v1439
      %v1484 = vadd.f32 %v1017, %v1439
      %v1485 = vadd.f32 %v1021, %v1439
      %v1486 = vadd.f32 %v1027, %v1439
      %v1487 = vadd.f32 %v1031, %v1439
      %v1488 = vadd.f32 %v1037, %v1439
      %v1489 = vadd.f32 %v1041, %v1439
      %v1490 = vadd.f32 %v1047, %v1439
      %v1491 = vadd.f32 %v1051, %v1439
      %v1492 = vadd.f32 %v1057, %v1439
      %v1493 = vadd.f32 %v1061, %v1439
      %v1494 = vadd.f32 %v1067, %v1439
      %v1495 = vadd.f32 %v1071, %v1439
      %v1496 = vadd.f32 %v1077, %v1439
      %v1497 = vadd.f32 %v1081, %v1439
      %v1498 = vadd.f32 %v1087, %v1439
      %v1499 = vadd.f32 %v1091, %v1439
      %v1500 = vadd.f32 %v1097, %v1439
      %v1501 = vadd.f32 %v1101, %v1439
      %v1502 = vadd.f32 %v1107, %v1439
      %v1503 = vadd.f32 %v1111, %v1439
      %v1504 = vadd.f32 %v1117, %v1439
      %v1505 = vadd.f32 %v1121, %v1439
      %v1506 = vadd.f32 %v1127, %v1439
      %v1507 = vadd.f32 %v1131, %v1439
      %v1508 = vadd.f32 %v1137, %v1439
      %v1509 = vadd.f32 %v1141, %v1439
      %v1510 = vadd.f32 %v1147, %v1439
      %v1511 = vadd.f32 %v1151, %v1439
      %v1512 = vadd.f32 %v1157, %v1439
      %v1513 = vadd.f32 %v1161, %v1439
      %v1514 = vadd.f32 %v1167, %v1439
      %v1515 = vadd.f32 %v1171, %v1439
      %v1516 = vadd.f32 %v1177, %v1439
      %v1517 = vadd.f32 %v1181, %v1439
      %v1518 = vadd.f32 %v1187, %v1439
      %v1519 = vadd.f32 %v1191, %v1439
      %v1520 = vadd.f32 %v1197, %v1439
      %v1521 = vadd.f32 %v1201, %v1439
      %v1522 = vadd.f32 %v1207, %v1439
      %v1523 = vadd.f32 %v1211, %v1439
      %v1524 = vadd.f32 %v1217, %v1439
      %v1525 = vadd.f32 %v1221, %v1439
      %v1526 = vadd.f32 %v1227, %v1439
      %v1527 = vadd.f32 %v1231, %v1439
      %v1528 = vadd.f32 %v1237, %v1439
      %v1529 = vadd.f32 %v1241, %v1439
      %v1530 = vadd.f32 %v1247, %v1439
      %v1531 = vadd.f32 %v1251, %v1439
      %v1532 = vadd.f32 %v1257, %v1439
      %v1533 = vadd.f32 %v1261, %v1439
      %v1534 = vadd.f32 %v1267, %v1439
      %v1535 = vadd.f32 %v1271, %v1439
      %v1536 = vadd.f32 %v1277, %v1439
      %v1537 = vadd.f32 %v1281, %v1439
      %v1538 = vadd.f32 %v1287, %v1439
      %v1539 = vadd.f32 %v1291, %v1439
      %v1540 = vadd.f32 %v1297, %v1439
      %v1541 = vadd.f32 %v1301, %v1439
      %v1542 = vadd.f32 %v1307, %v1439
      %v1543 = vadd.f32 %v1311, %v1439
      %v1544 = vadd.f32 %v1317, %v1439
      %v1545 = vadd.f32 %v1321, %v1439
      %v1546 = vadd.f32 %v1327, %v1439
      %v1547 = vadd.f32 %v1331, %v1439
      %v1548 = vadd.f32 %v1337, %v1439
      %v1549 = vadd.f32 %v1341, %v1439
      %v1550 = vadd.f32 %v1347, %v1439
      %v1551 = vadd.f32 %v1351, %v1439
      %v1552 = vadd.f32 %v1357, %v1439
      %v1553 = vadd.f32 %v1361, %v1439
      %v1554 = vadd.f32 %v1367, %v1439
      %v1555 = vadd.f32 %v1371, %v1439
      %v1556 = vadd.f32 %v1377, %v1439
      %v1557 = vadd.f32 %v1381, %v1439
      %v1558 = vadd.f32 %v1387, %v1439
      %v1559 = vadd.f32 %v1391, %v1439
      %v1560 = vadd.f32 %v1397, %v1439
      %v1561 = vadd.f32 %v1401, %v1439
      %v1562 = vadd.f32 %v1407, %v1439
      %v1563 = vadd.f32 %v1411, %v1439
      %v1564 = vadd.f32 %v1417, %v1439
      %v1565 = vadd.f32 %v1421, %v1439
      %v1566 = vadd.f32 %v1427, %v1439
      %v1567 = vadd.f32 %v1431, %v1439
      %v1568 = vmax.f32 %v1440, 0.0
      %v1569 = vmax.f32 %v1441, 0.0
      %v1570 = vmax.f32 %v1442, 0.0
      %v1571 = vmax.f32 %v1443, 0.0
      %v1572 = vmax.f32 %v1444, 0.0
      %v1573 = vmax.f32 %v1445, 0.0
      %v1574 = vmax.f32 %v1446, 0.0
      %v1575 = vmax.f32 %v1447, 0.0
      %v1576 = vmax.f32 %v1448, 0.0
      %v1577 = vmax.f32 %v1449, 0.0
      %v1578 = vmax.f32 %v1450, 0.0
      %v1579 = vmax.f32 %v1451, 0.0
      %v1580 = vmax.f32 %v1452, 0.0
      %v1581 = vmax.f32 %v1453, 0.0
      %v1582 = vmax.f32 %v1454, 0.0
      %v1583 = vmax.f32 %v1455, 0.0
      %v1584 = vmax.f32 %v1456, 0.0
      %v1585 = vmax.f32 %v1457, 0.0
      %v1586 = vmax.f32 %v1458, 0.0
      %v1587 = vmax.f32 %v1459, 0.0
      %v1588 = vmax.f32 %v1460, 0.0
      %v1589 = vmax.f32 %v1461, 0.0
      %v1590 = vmax.f32 %v1462, 0.0
      %v1591 = vmax.f32 %v1463, 0.0
      %v1592 = vmax.f32 %v1464, 0.0
      %v1593 = vmax.f32 %v1465, 0.0
      %v1594 = vmax.f32 %v1466, 0.0
      %v1595 = vmax.f32 %v1467, 0.0
      %v1596 = vmax.f32 %v1468, 0.0
      %v1597 = vmax.f32 %v1469, 0.0
      %v1598 = vmax.f32 %v1470, 0.0
      %v1599 = vmax.f32 %v1471, 0.0
      %v1600 = vmax.f32 %v1472, 0.0
      %v1601 = vmax.f32 %v1473, 0.0
      %v1602 = vmax.f32 %v1474, 0.0
      %v1603 = vmax.f32 %v1475, 0.0
      %v1604 = vmax.f32 %v1476, 0.0
      %v1605 = vmax.f32 %v1477, 0.0
      %v1606 = vmax.f32 %v1478, 0.0
      %v1607 = vmax.f32 %v1479, 0.0
      %v1608 = vmax.f32 %v1480, 0.0
      %v1609 = vmax.f32 %v1481, 0.0
      %v1610 = vmax.f32 %v1482, 0.0
      %v1611 = vmax.f32 %v1483, 0.0
      %v1612 = vmax.f32 %v1484, 0.0
      %v1613 = vmax.f32 %v1485, 0.0
      %v1614 = vmax.f32 %v1486, 0.0
      %v1615 = vmax.f32 %v1487, 0.0
      %v1616 = vmax.f32 %v1488, 0.0
      %v1617 = vmax.f32 %v1489, 0.0
      %v1618 = vmax.f32 %v1490, 0.0
      %v1619 = vmax.f32 %v1491, 0.0
      %v1620 = vmax.f32 %v1492, 0.0
      %v1621 = vmax.f32 %v1493, 0.0
      %v1622 = vmax.f32 %v1494, 0.0
      %v1623 = vmax.f32 %v1495, 0.0
      %v1624 = vmax.f32 %v1496, 0.0
      %v1625 = vmax.f32 %v1497, 0.0
      %v1626 = vmax.f32 %v1498, 0.0
      %v1627 = vmax.f32 %v1499, 0.0
      %v1628 = vmax.f32 %v1500, 0.0
      %v1629 = vmax.f32 %v1501, 0.0
      %v1630 = vmax.f32 %v1502, 0.0
      %v1631 = vmax.f32 %v1503, 0.0
      %v1632 = vmax.f32 %v1504, 0.0
      %v1633 = vmax.f32 %v1505, 0.0
      %v1634 = vmax.f32 %v1506, 0.0
      %v1635 = vmax.f32 %v1507, 0.0
      %v1636 = vmax.f32 %v1508, 0.0
      %v1637 = vmax.f32 %v1509, 0.0
      %v1638 = vmax.f32 %v1510, 0.0
      %v1639 = vmax.f32 %v1511, 0.0
      %v1640 = vmax.f32 %v1512, 0.0
      %v1641 = vmax.f32 %v1513, 0.0
      %v1642 = vmax.f32 %v1514, 0.0
      %v1643 = vmax.f32 %v1515, 0.0
      %v1644 = vmax.f32 %v1516, 0.0
      %v1645 = vmax.f32 %v1517, 0.0
      %v1646 = vmax.f32 %v1518, 0.0
      %v1647 = vmax.f32 %v1519, 0.0
      %v1648 = vmax.f32 %v1520, 0.0
      %v1649 = vmax.f32 %v1521, 0.0
      %v1650 = vmax.f32 %v1522, 0.0
      %v1651 = vmax.f32 %v1523, 0.0
      %v1652 = vmax.f32 %v1524, 0.0
      %v1653 = vmax.f32 %v1525, 0.0
      %v1654 = vmax.f32 %v1526, 0.0
      %v1655 = vmax.f32 %v1527, 0.0
      %v1656 = vmax.f32 %v1528, 0.0
      %v1657 = vmax.f32 %v1529, 0.0
      %v1658 = vmax.f32 %v1530, 0.0
      %v1659 = vmax.f32 %v1531, 0.0
      %v1660 = vmax.f32 %v1532, 0.0
      %v1661 = vmax.f32 %v1533, 0.0
      %v1662 = vmax.f32 %v1534, 0.0
      %v1663 = vmax.f32 %v1535, 0.0
      %v1664 = vmax.f32 %v1536, 0.0
      %v1665 = vmax.f32 %v1537, 0.0
      %v1666 = vmax.f32 %v1538, 0.0
      %v1667 = vmax.f32 %v1539, 0.0
      %v1668 = vmax.f32 %v1540, 0.0
      %v1669 = vmax.f32 %v1541, 0.0
      %v1670 = vmax.f32 %v1542, 0.0
      %v1671 = vmax.f32 %v1543, 0.0
      %v1672 = vmax.f32 %v1544, 0.0
      %v1673 = vmax.f32 %v1545, 0.0
      %v1674 = vmax.f32 %v1546, 0.0
      %v1675 = vmax.f32 %v1547, 0.0
      %v1676 = vmax.f32 %v1548, 0.0
      %v1677 = vmax.f32 %v1549, 0.0
      %v1678 = vmax.f32 %v1550, 0.0
      %v1679 = vmax.f32 %v1551, 0.0
      %v1680 = vmax.f32 %v1552, 0.0
      %v1681 = vmax.f32 %v1553, 0.0
      %v1682 = vmax.f32 %v1554, 0.0
      %v1683 = vmax.f32 %v1555, 0.0
      %v1684 = vmax.f32 %v1556, 0.0
      %v1685 = vmax.f32 %v1557, 0.0
      %v1686 = vmax.f32 %v1558, 0.0
      %v1687 = vmax.f32 %v1559, 0.0
      %v1688 = vmax.f32 %v1560, 0.0
      %v1689 = vmax.f32 %v1561, 0.0
      %v1690 = vmax.f32 %v1562, 0.0
      %v1691 = vmax.f32 %v1563, 0.0
      %v1692 = vmax.f32 %v1564, 0.0
      %v1693 = vmax.f32 %v1565, 0.0
      %v1694 = vmax.f32 %v1566, 0.0
      %v1695 = vmax.f32 %v1567, 0.0
      %v1696 = vld [vmem:[%s2] sm:$0xf]
      %v1697 = vld [vmem:[%s2 + $0x4] sm:$0xf]
      %v1698 = vld [vmem:[%s2 + $0x8] sm:$0xf]
      %v1699 = vld [vmem:[%s2 + $0xc] sm:$0xf]
      %v1700 = vld [vmem:[%s2 + $0x10] sm:$0xf]
      %v1701 = vld [vmem:[%s2 + $0x14] sm:$0xf]
      %v1702 = vld [vmem:[%s2 + $0x18] sm:$0xf]
      %v1703 = vld [vmem:[%s2 + $0x1c] sm:$0xf]
      %v1704 = vpack.c.bf16 %v1569, %v1568
      %v1705 = vpack.c.bf16 %v1571, %v1570
      %v1706 = vpack.c.bf16 %v1573, %v1572
      %v1707 = vpack.c.bf16 %v1575, %v1574
      %v1708 = vpack.c.bf16 %v1577, %v1576
      %v1709 = vpack.c.bf16 %v1579, %v1578
      %v1710 = vpack.c.bf16 %v1581, %v1580
      %v1711 = vpack.c.bf16 %v1583, %v1582
      %v1712 = vpack.c.bf16 %v1585, %v1584
      %v1713 = vpack.c.bf16 %v1587, %v1586
      %v1714 = vpack.c.bf16 %v1589, %v1588
      %v1715 = vpack.c.bf16 %v1591, %v1590
      %v1716 = vpack.c.bf16 %v1593, %v1592
      %v1717 = vpack.c.bf16 %v1595, %v1594
      %v1718 = vpack.c.bf16 %v1597, %v1596
      %v1719 = vpack.c.bf16 %v1599, %v1598
      %v1720 = vpack.c.bf16 %v1601, %v1600
      %v1721 = vpack.c.bf16 %v1603, %v1602
      %v1722 = vpack.c.bf16 %v1605, %v1604
      %v1723 = vpack.c.bf16 %v1607, %v1606
      %v1724 = vpack.c.bf16 %v1609, %v1608
      %v1725 = vpack.c.bf16 %v1611, %v1610
      %v1726 = vpack.c.bf16 %v1613, %v1612
      %v1727 = vpack.c.bf16 %v1615, %v1614
      %v1728 = vpack.c.bf16 %v1617, %v1616
      %v1729 = vpack.c.bf16 %v1619, %v1618
      %v1730 = vpack.c.bf16 %v1621, %v1620
      %v1731 = vpack.c.bf16 %v1623, %v1622
      %v1732 = vpack.c.bf16 %v1625, %v1624
      %v1733 = vpack.c.bf16 %v1627, %v1626
      %v1734 = vpack.c.bf16 %v1629, %v1628
      %v1735 = vpack.c.bf16 %v1631, %v1630
      %v1736 = vpack.c.bf16 %v1633, %v1632
      %v1737 = vpack.c.bf16 %v1635, %v1634
      %v1738 = vpack.c.bf16 %v1637, %v1636
      %v1739 = vpack.c.bf16 %v1639, %v1638
      %v1740 = vpack.c.bf16 %v1641, %v1640
      %v1741 = vpack.c.bf16 %v1643, %v1642
      %v1742 = vpack.c.bf16 %v1645, %v1644
      %v1743 = vpack.c.bf16 %v1647, %v1646
      %v1744 = vpack.c.bf16 %v1649, %v1648
      %v1745 = vpack.c.bf16 %v1651, %v1650
      %v1746 = vpack.c.bf16 %v1653, %v1652
      %v1747 = vpack.c.bf16 %v1655, %v1654
      %v1748 = vpack.c.bf16 %v1657, %v1656
      %v1749 = vpack.c.bf16 %v1659, %v1658
      %v1750 = vpack.c.bf16 %v1661, %v1660
      %v1751 = vpack.c.bf16 %v1663, %v1662
      %v1752 = vpack.c.bf16 %v1665, %v1664
      %v1753 = vpack.c.bf16 %v1667, %v1666
      %v1754 = vpack.c.bf16 %v1669, %v1668
      %v1755 = vpack.c.bf16 %v1671, %v1670
      %v1756 = vpack.c.bf16 %v1673, %v1672
      %v1757 = vpack.c.bf16 %v1675, %v1674
      %v1758 = vpack.c.bf16 %v1677, %v1676
      %v1759 = vpack.c.bf16 %v1679, %v1678
      %v1760 = vpack.c.bf16 %v1681, %v1680
      %v1761 = vpack.c.bf16 %v1683, %v1682
      %v1762 = vpack.c.bf16 %v1685, %v1684
      %v1763 = vpack.c.bf16 %v1687, %v1686
      %v1764 = vpack.c.bf16 %v1689, %v1688
      %v1765 = vpack.c.bf16 %v1691, %v1690
      %v1766 = vpack.c.bf16 %v1693, %v1692
      %v1767 = vpack.c.bf16 %v1695, %v1694
      %v1768 = vld [vmem:[%s3 + $0x1] sm:$0x1]
      %v1769 = vlaneseq
      %v1770 = vshrl.u32 %v1769, 7
      %v1771 = vsub.s32 0, %v1770
      %v1772 = vrot.slane %v1768, %v1771
      %v1781 = vunpack.c.l.b16 %v1696
      %v1782 = vunpack.c.l.b16 %v1697
      %v1783 = vunpack.c.l.b16 %v1698
      %v1784 = vunpack.c.l.b16 %v1699
      %v1785 = vunpack.c.l.b16 %v1700
      %v1786 = vunpack.c.l.b16 %v1701
      %v1787 = vunpack.c.l.b16 %v1702
      %v1788 = vunpack.c.l.b16 %v1703
      %v1789 = vpack.c.b16 %v1782, %v1781
      %v1790 = vpack.c.b16 %v1784, %v1783
      %v1791 = vpack.c.b16 %v1786, %v1785
      %v1792 = vpack.c.b16 %v1788, %v1787
      %vm1797 = vcmask 523264
      %v1799 = vsel %vm1797, %v1704, 0
      %v1802 = vsel %vm1797, %v1705, 0
      %v1805 = vsel %vm1797, %v1706, 0
      %v1808 = vsel %vm1797, %v1707, 0
      %v1811 = vsel %vm1797, %v1708, 0
      %v1814 = vsel %vm1797, %v1709, 0
      %v1817 = vsel %vm1797, %v1710, 0
      %v1820 = vsel %vm1797, %v1711, 0
      %v1823 = vsel %vm1797, %v1712, 0
      %v1826 = vsel %vm1797, %v1713, 0
      %v1829 = vsel %vm1797, %v1714, 0
      %v1832 = vsel %vm1797, %v1715, 0
      %v1835 = vsel %vm1797, %v1716, 0
      %v1838 = vsel %vm1797, %v1717, 0
      %v1841 = vsel %vm1797, %v1718, 0
      %v1844 = vsel %vm1797, %v1719, 0
      %v1847 = vsel %vm1797, %v1720, 0
      %v1850 = vsel %vm1797, %v1721, 0
      %v1853 = vsel %vm1797, %v1722, 0
      %v1856 = vsel %vm1797, %v1723, 0
      %v1859 = vsel %vm1797, %v1724, 0
      %v1862 = vsel %vm1797, %v1725, 0
      %v1865 = vsel %vm1797, %v1726, 0
      %v1868 = vsel %vm1797, %v1727, 0
      %v1871 = vsel %vm1797, %v1728, 0
      %v1874 = vsel %vm1797, %v1729, 0
      %v1877 = vsel %vm1797, %v1730, 0
      %v1880 = vsel %vm1797, %v1731, 0
      %v1883 = vsel %vm1797, %v1732, 0
      %v1886 = vsel %vm1797, %v1733, 0
      %v1889 = vsel %vm1797, %v1734, 0
      %v1892 = vsel %vm1797, %v1735, 0
      %v1895 = vsel %vm1797, %v1736, 0
      %v1898 = vsel %vm1797, %v1737, 0
      %v1901 = vsel %vm1797, %v1738, 0
      %v1904 = vsel %vm1797, %v1739, 0
      %v1907 = vsel %vm1797, %v1740, 0
      %v1910 = vsel %vm1797, %v1741, 0
      %v1913 = vsel %vm1797, %v1742, 0
      %v1916 = vsel %vm1797, %v1743, 0
      %v1919 = vsel %vm1797, %v1744, 0
      %v1922 = vsel %vm1797, %v1745, 0
      %v1925 = vsel %vm1797, %v1746, 0
      %v1928 = vsel %vm1797, %v1747, 0
      %v1931 = vsel %vm1797, %v1748, 0
      %v1934 = vsel %vm1797, %v1749, 0
      %v1937 = vsel %vm1797, %v1750, 0
      %v1940 = vsel %vm1797, %v1751, 0
      %v1943 = vsel %vm1797, %v1752, 0
      %v1946 = vsel %vm1797, %v1753, 0
      %v1949 = vsel %vm1797, %v1754, 0
      %v1952 = vsel %vm1797, %v1755, 0
      %v1955 = vsel %vm1797, %v1756, 0
      %v1958 = vsel %vm1797, %v1757, 0
      %v1961 = vsel %vm1797, %v1758, 0
      %v1964 = vsel %vm1797, %v1759, 0
      %v1967 = vsel %vm1797, %v1760, 0
      %v1970 = vsel %vm1797, %v1761, 0
      %v1973 = vsel %vm1797, %v1762, 0
      %v1976 = vsel %vm1797, %v1763, 0
      %v1979 = vsel %vm1797, %v1764, 0
      %v1982 = vsel %vm1797, %v1765, 0
      %v1985 = vsel %vm1797, %v1766, 0
      %v1988 = vsel %vm1797, %v1767, 0
      %1990 = vmatprep.subr.bf16.mxu0 0
      %1991 = vmatpush1.bf16.msra.mxu0 %v1789
      %1992 = vmatprep.subr.bf16.mxu0 0
      %1993 = vmatpush1.bf16.msra.mxu0 %v1790
      %1994 = vmatprep.subr.bf16.mxu0 0
      %1995 = vmatpush1.bf16.msra.mxu0 %v1791
      %1996 = vmatprep.subr.bf16.mxu0 0
      %1997 = vmatpush1.bf16.msra.mxu0 %v1792
      %1998 = vmatprep.subr.bf16.mxu0 0
      %1999 = vmatpush1.bf16.msra.mxu0 0
      %2000 = vmatprep.subr.bf16.mxu0 0
      %2001 = vmatpush1.bf16.msra.mxu0 0
      %2002 = vmatprep.subr.bf16.mxu0 0
      %2003 = vmatpush1.bf16.msra.mxu0 0
      %2004 = vmatprep.subr.bf16.mxu0 0
      %2005 = vmatpush1.bf16.msra.mxu0 0
      %2006 = vmatprep.subr.bf16.mxu0 0
      %2007 = vmatpush1.bf16.msra.mxu0 0
      %2008 = vmatprep.subr.bf16.mxu0 0
      %2009 = vmatpush1.bf16.msra.mxu0 0
      %2010 = vmatprep.subr.bf16.mxu0 0
      %2011 = vmatpush1.bf16.msra.mxu0 0
      %2012 = vmatprep.subr.bf16.mxu0 0
      %2013 = vmatpush1.bf16.msra.mxu0 0
      %2014 = vmatprep.subr.bf16.mxu0 0
      %2015 = vmatpush1.bf16.msra.mxu0 0
      %2016 = vmatprep.subr.bf16.mxu0 0
      %2017 = vmatpush1.bf16.msra.mxu0 0
      %2018 = vmatprep.subr.bf16.mxu0 0
      %2019 = vmatpush1.bf16.msra.mxu0 0
      %2020 = vmatprep.subr.bf16.mxu0 0
      %2021 = vmatpush1.bf16.msra.mxu0 0
      %2022 = vmatprep.mubr.bf16.mxu0 0
      %2023 = vmatmul.mubr.bf16.gmra.mrb[0].mxu0 %v1799
      %v2024 = vpop.f32.mrb[0].mxu0
      %v2025 = vadd.f32 %v1772, %v2024
      %v2026 = vpop.f32.mrb[0].mxu0
      %v2027 = vpop.f32.mrb[0].mxu0
      %v2028 = vadd.f32 %v1772, %v2027
      %v2029 = vpop.f32.mrb[0].mxu0
      %2030 = vmatprep.mubr.bf16.mxu0 0
      %2031 = vmatmul.mubr.bf16.gmra.mrb[0].mxu0 %v1802
      %v2032 = vpop.f32.mrb[0].mxu0
      %v2033 = vadd.f32 %v1772, %v2032
      %v2034 = vpop.f32.mrb[0].mxu0
      %v2035 = vpop.f32.mrb[0].mxu0
      %v2036 = vadd.f32 %v1772, %v2035
      %v2037 = vpop.f32.mrb[0].mxu0
      %2038 = vmatprep.mubr.bf16.mxu0 0
      %2039 = vmatmul.mubr.bf16.gmra.mrb[0].mxu0 %v1805
      %v2040 = vpop.f32.mrb[0].mxu0
      %v2041 = vadd.f32 %v1772, %v2040
      %v2042 = vpop.f32.mrb[0].mxu0
      %v2043 = vpop.f32.mrb[0].mxu0
      %v2044 = vadd.f32 %v1772, %v2043
      %v2045 = vpop.f32.mrb[0].mxu0
      %2046 = vmatprep.mubr.bf16.mxu0 0
      %2047 = vmatmul.mubr.bf16.gmra.mrb[0].mxu0 %v1808
      %v2048 = vpop.f32.mrb[0].mxu0
      %v2049 = vadd.f32 %v1772, %v2048
      %v2050 = vpop.f32.mrb[0].mxu0
      %v2051 = vpop.f32.mrb[0].mxu0
      %v2052 = vadd.f32 %v1772, %v2051
      %v2053 = vpop.f32.mrb[0].mxu0
      %2054 = vmatprep.mubr.bf16.mxu0 0
      %2055 = vmatmul.mubr.bf16.gmra.mrb[0].mxu0 %v1811
      %v2056 = vpop.f32.mrb[0].mxu0
      %v2057 = vadd.f32 %v1772, %v2056
      %v2058 = vpop.f32.mrb[0].mxu0
      %v2059 = vpop.f32.mrb[0].mxu0
      %v2060 = vadd.f32 %v1772, %v2059
      %v2061 = vpop.f32.mrb[0].mxu0
      %2062 = vmatprep.mubr.bf16.mxu0 0
      %2063 = vmatmul.mubr.bf16.gmra.mrb[0].mxu0 %v1814
      %v2064 = vpop.f32.mrb[0].mxu0
      %v2065 = vadd.f32 %v1772, %v2064
      %v2066 = vpop.f32.mrb[0].mxu0
      %v2067 = vpop.f32.mrb[0].mxu0
      %v2068 = vadd.f32 %v1772, %v2067
      %v2069 = vpop.f32.mrb[0].mxu0
      %2070 = vmatprep.mubr.bf16.mxu0 0
      %2071 = vmatmul.mubr.bf16.gmra.mrb[0].mxu0 %v1817
      %v2072 = vpop.f32.mrb[0].mxu0
      %v2073 = vadd.f32 %v1772, %v2072
      %v2074 = vpop.f32.mrb[0].mxu0
      %v2075 = vpop.f32.mrb[0].mxu0
      %v2076 = vadd.f32 %v1772, %v2075
      %v2077 = vpop.f32.mrb[0].mxu0
      %2078 = vmatprep.mubr.bf16.mxu0 0
      %2079 = vmatmul.mubr.bf16.gmra.mrb[0].mxu0 %v1820
      %v2080 = vpop.f32.mrb[0].mxu0
      %v2081 = vadd.f32 %v1772, %v2080
      %v2082 = vpop.f32.mrb[0].mxu0
      %v2083 = vpop.f32.mrb[0].mxu0
      %v2084 = vadd.f32 %v1772, %v2083
      %v2085 = vpop.f32.mrb[0].mxu0
      %2086 = vmatprep.mubr.bf16.mxu0 0
      %2087 = vmatmul.mubr.bf16.gmra.mrb[0].mxu0 %v1823
      %v2088 = vpop.f32.mrb[0].mxu0
      %v2089 = vadd.f32 %v1772, %v2088
      %v2090 = vpop.f32.mrb[0].mxu0
      %v2091 = vpop.f32.mrb[0].mxu0
      %v2092 = vadd.f32 %v1772, %v2091
      %v2093 = vpop.f32.mrb[0].mxu0
      %2094 = vmatprep.mubr.bf16.mxu0 0
      %2095 = vmatmul.mubr.bf16.gmra.mrb[0].mxu0 %v1826
      %v2096 = vpop.f32.mrb[0].mxu0
      %v2097 = vadd.f32 %v1772, %v2096
      %v2098 = vpop.f32.mrb[0].mxu0
      %v2099 = vpop.f32.mrb[0].mxu0
      %v2100 = vadd.f32 %v1772, %v2099
      %v2101 = vpop.f32.mrb[0].mxu0
      %2102 = vmatprep.mubr.bf16.mxu0 0
      %2103 = vmatmul.mubr.bf16.gmra.mrb[0].mxu0 %v1829
      %v2104 = vpop.f32.mrb[0].mxu0
      %v2105 = vadd.f32 %v1772, %v2104
      %v2106 = vpop.f32.mrb[0].mxu0
      %v2107 = vpop.f32.mrb[0].mxu0
      %v2108 = vadd.f32 %v1772, %v2107
      %v2109 = vpop.f32.mrb[0].mxu0
      %2110 = vmatprep.mubr.bf16.mxu0 0
      %2111 = vmatmul.mubr.bf16.gmra.mrb[0].mxu0 %v1832
      %v2112 = vpop.f32.mrb[0].mxu0
      %v2113 = vadd.f32 %v1772, %v2112
      %v2114 = vpop.f32.mrb[0].mxu0
      %v2115 = vpop.f32.mrb[0].mxu0
      %v2116 = vadd.f32 %v1772, %v2115
      %v2117 = vpop.f32.mrb[0].mxu0
      %2118 = vmatprep.mubr.bf16.mxu0 0
      %2119 = vmatmul.mubr.bf16.gmra.mrb[0].mxu0 %v1835
      %v2120 = vpop.f32.mrb[0].mxu0
      %v2121 = vadd.f32 %v1772, %v2120
      %v2122 = vpop.f32.mrb[0].mxu0
      %v2123 = vpop.f32.mrb[0].mxu0
      %v2124 = vadd.f32 %v1772, %v2123
      %v2125 = vpop.f32.mrb[0].mxu0
      %2126 = vmatprep.mubr.bf16.mxu0 0
      %2127 = vmatmul.mubr.bf16.gmra.mrb[0].mxu0 %v1838
      %v2128 = vpop.f32.mrb[0].mxu0
      %v2129 = vadd.f32 %v1772, %v2128
      %v2130 = vpop.f32.mrb[0].mxu0
      %v2131 = vpop.f32.mrb[0].mxu0
      %v2132 = vadd.f32 %v1772, %v2131
      %v2133 = vpop.f32.mrb[0].mxu0
      %2134 = vmatprep.mubr.bf16.mxu0 0
      %2135 = vmatmul.mubr.bf16.gmra.mrb[0].mxu0 %v1841
      %v2136 = vpop.f32.mrb[0].mxu0
      %v2137 = vadd.f32 %v1772, %v2136
      %v2138 = vpop.f32.mrb[0].mxu0
      %v2139 = vpop.f32.mrb[0].mxu0
      %v2140 = vadd.f32 %v1772, %v2139
      %v2141 = vpop.f32.mrb[0].mxu0
      %2142 = vmatprep.mubr.bf16.mxu0 0
      %2143 = vmatmul.mubr.bf16.gmra.mrb[0].mxu0 %v1844
      %v2144 = vpop.f32.mrb[0].mxu0
      %v2145 = vadd.f32 %v1772, %v2144
      %v2146 = vpop.f32.mrb[0].mxu0
      %v2147 = vpop.f32.mrb[0].mxu0
      %v2148 = vadd.f32 %v1772, %v2147
      %v2149 = vpop.f32.mrb[0].mxu0
      %2150 = vmatprep.mubr.bf16.mxu0 0
      %2151 = vmatmul.mubr.bf16.gmra.mrb[0].mxu0 %v1847
      %v2152 = vpop.f32.mrb[0].mxu0
      %v2153 = vadd.f32 %v1772, %v2152
      %v2154 = vpop.f32.mrb[0].mxu0
      %v2155 = vpop.f32.mrb[0].mxu0
      %v2156 = vadd.f32 %v1772, %v2155
      %v2157 = vpop.f32.mrb[0].mxu0
      %2158 = vmatprep.mubr.bf16.mxu0 0
      %2159 = vmatmul.mubr.bf16.gmra.mrb[0].mxu0 %v1850
      %v2160 = vpop.f32.mrb[0].mxu0
      %v2161 = vadd.f32 %v1772, %v2160
      %v2162 = vpop.f32.mrb[0].mxu0
      %v2163 = vpop.f32.mrb[0].mxu0
      %v2164 = vadd.f32 %v1772, %v2163
      %v2165 = vpop.f32.mrb[0].mxu0
      %2166 = vmatprep.mubr.bf16.mxu0 0
      %2167 = vmatmul.mubr.bf16.gmra.mrb[0].mxu0 %v1853
      %v2168 = vpop.f32.mrb[0].mxu0
      %v2169 = vadd.f32 %v1772, %v2168
      %v2170 = vpop.f32.mrb[0].mxu0
      %v2171 = vpop.f32.mrb[0].mxu0
      %v2172 = vadd.f32 %v1772, %v2171
      %v2173 = vpop.f32.mrb[0].mxu0
      %2174 = vmatprep.mubr.bf16.mxu0 0
      %2175 = vmatmul.mubr.bf16.gmra.mrb[0].mxu0 %v1856
      %v2176 = vpop.f32.mrb[0].mxu0
      %v2177 = vadd.f32 %v1772, %v2176
      %v2178 = vpop.f32.mrb[0].mxu0
      %v2179 = vpop.f32.mrb[0].mxu0
      %v2180 = vadd.f32 %v1772, %v2179
      %v2181 = vpop.f32.mrb[0].mxu0
      %2182 = vmatprep.mubr.bf16.mxu0 0
      %2183 = vmatmul.mubr.bf16.gmra.mrb[0].mxu0 %v1859
      %v2184 = vpop.f32.mrb[0].mxu0
      %v2185 = vadd.f32 %v1772, %v2184
      %v2186 = vpop.f32.mrb[0].mxu0
      %v2187 = vpop.f32.mrb[0].mxu0
      %v2188 = vadd.f32 %v1772, %v2187
      %v2189 = vpop.f32.mrb[0].mxu0
      %2190 = vmatprep.mubr.bf16.mxu0 0
      %2191 = vmatmul.mubr.bf16.gmra.mrb[0].mxu0 %v1862
      %v2192 = vpop.f32.mrb[0].mxu0
      %v2193 = vadd.f32 %v1772, %v2192
      %v2194 = vpop.f32.mrb[0].mxu0
      %v2195 = vpop.f32.mrb[0].mxu0
      %v2196 = vadd.f32 %v1772, %v2195
      %v2197 = vpop.f32.mrb[0].mxu0
      %2198 = vmatprep.mubr.bf16.mxu0 0
      %2199 = vmatmul.mubr.bf16.gmra.mrb[0].mxu0 %v1865
      %v2200 = vpop.f32.mrb[0].mxu0
      %v2201 = vadd.f32 %v1772, %v2200
      %v2202 = vpop.f32.mrb[0].mxu0
      %v2203 = vpop.f32.mrb[0].mxu0
      %v2204 = vadd.f32 %v1772, %v2203
      %v2205 = vpop.f32.mrb[0].mxu0
      %2206 = vmatprep.mubr.bf16.mxu0 0
      %2207 = vmatmul.mubr.bf16.gmra.mrb[0].mxu0 %v1868
      %v2208 = vpop.f32.mrb[0].mxu0
      %v2209 = vadd.f32 %v1772, %v2208
      %v2210 = vpop.f32.mrb[0].mxu0
      %v2211 = vpop.f32.mrb[0].mxu0
      %v2212 = vadd.f32 %v1772, %v2211
      %v2213 = vpop.f32.mrb[0].mxu0
      %2214 = vmatprep.mubr.bf16.mxu0 0
      %2215 = vmatmul.mubr.bf16.gmra.mrb[0].mxu0 %v1871
      %v2216 = vpop.f32.mrb[0].mxu0
      %v2217 = vadd.f32 %v1772, %v2216
      %v2218 = vpop.f32.mrb[0].mxu0
      %v2219 = vpop.f32.mrb[0].mxu0
      %v2220 = vadd.f32 %v1772, %v2219
      %v2221 = vpop.f32.mrb[0].mxu0
      %2222 = vmatprep.mubr.bf16.mxu0 0
      %2223 = vmatmul.mubr.bf16.gmra.mrb[0].mxu0 %v1874
      %v2224 = vpop.f32.mrb[0].mxu0
      %v2225 = vadd.f32 %v1772, %v2224
      %v2226 = vpop.f32.mrb[0].mxu0
      %v2227 = vpop.f32.mrb[0].mxu0
      %v2228 = vadd.f32 %v1772, %v2227
      %v2229 = vpop.f32.mrb[0].mxu0
      %2230 = vmatprep.mubr.bf16.mxu0 0
      %2231 = vmatmul.mubr.bf16.gmra.mrb[0].mxu0 %v1877
      %v2232 = vpop.f32.mrb[0].mxu0
      %v2233 = vadd.f32 %v1772, %v2232
      %v2234 = vpop.f32.mrb[0].mxu0
      %v2235 = vpop.f32.mrb[0].mxu0
      %v2236 = vadd.f32 %v1772, %v2235
      %v2237 = vpop.f32.mrb[0].mxu0
      %2238 = vmatprep.mubr.bf16.mxu0 0
      %2239 = vmatmul.mubr.bf16.gmra.mrb[0].mxu0 %v1880
      %v2240 = vpop.f32.mrb[0].mxu0
      %v2241 = vadd.f32 %v1772, %v2240
      %v2242 = vpop.f32.mrb[0].mxu0
      %v2243 = vpop.f32.mrb[0].mxu0
      %v2244 = vadd.f32 %v1772, %v2243
      %v2245 = vpop.f32.mrb[0].mxu0
      %2246 = vmatprep.mubr.bf16.mxu0 0
      %2247 = vmatmul.mubr.bf16.gmra.mrb[0].mxu0 %v1883
      %v2248 = vpop.f32.mrb[0].mxu0
      %v2249 = vadd.f32 %v1772, %v2248
      %v2250 = vpop.f32.mrb[0].mxu0
      %v2251 = vpop.f32.mrb[0].mxu0
      %v2252 = vadd.f32 %v1772, %v2251
      %v2253 = vpop.f32.mrb[0].mxu0
      %2254 = vmatprep.mubr.bf16.mxu0 0
      %2255 = vmatmul.mubr.bf16.gmra.mrb[0].mxu0 %v1886
      %v2256 = vpop.f32.mrb[0].mxu0
      %v2257 = vadd.f32 %v1772, %v2256
      %v2258 = vpop.f32.mrb[0].mxu0
      %v2259 = vpop.f32.mrb[0].mxu0
      %v2260 = vadd.f32 %v1772, %v2259
      %v2261 = vpop.f32.mrb[0].mxu0
      %2262 = vmatprep.mubr.bf16.mxu0 0
      %2263 = vmatmul.mubr.bf16.gmra.mrb[0].mxu0 %v1889
      %v2264 = vpop.f32.mrb[0].mxu0
      %v2265 = vadd.f32 %v1772, %v2264
      %v2266 = vpop.f32.mrb[0].mxu0
      %v2267 = vpop.f32.mrb[0].mxu0
      %v2268 = vadd.f32 %v1772, %v2267
      %v2269 = vpop.f32.mrb[0].mxu0
      %2270 = vmatprep.mubr.bf16.mxu0 0
      %2271 = vmatmul.mubr.bf16.gmra.mrb[0].mxu0 %v1892
      %v2272 = vpop.f32.mrb[0].mxu0
      %v2273 = vadd.f32 %v1772, %v2272
      %v2274 = vpop.f32.mrb[0].mxu0
      %v2275 = vpop.f32.mrb[0].mxu0
      %v2276 = vadd.f32 %v1772, %v2275
      %v2277 = vpop.f32.mrb[0].mxu0
      %2278 = vmatprep.mubr.bf16.mxu0 0
      %2279 = vmatmul.mubr.bf16.gmra.mrb[0].mxu0 %v1895
      %v2280 = vpop.f32.mrb[0].mxu0
      %v2281 = vadd.f32 %v1772, %v2280
      %v2282 = vpop.f32.mrb[0].mxu0
      %v2283 = vpop.f32.mrb[0].mxu0
      %v2284 = vadd.f32 %v1772, %v2283
      %v2285 = vpop.f32.mrb[0].mxu0
      %2286 = vmatprep.mubr.bf16.mxu0 0
      %2287 = vmatmul.mubr.bf16.gmra.mrb[0].mxu0 %v1898
      %v2288 = vpop.f32.mrb[0].mxu0
      %v2289 = vadd.f32 %v1772, %v2288
      %v2290 = vpop.f32.mrb[0].mxu0
      %v2291 = vpop.f32.mrb[0].mxu0
      %v2292 = vadd.f32 %v1772, %v2291
      %v2293 = vpop.f32.mrb[0].mxu0
      %2294 = vmatprep.mubr.bf16.mxu0 0
      %2295 = vmatmul.mubr.bf16.gmra.mrb[0].mxu0 %v1901
      %v2296 = vpop.f32.mrb[0].mxu0
      %v2297 = vadd.f32 %v1772, %v2296
      %v2298 = vpop.f32.mrb[0].mxu0
      %v2299 = vpop.f32.mrb[0].mxu0
      %v2300 = vadd.f32 %v1772, %v2299
      %v2301 = vpop.f32.mrb[0].mxu0
      %2302 = vmatprep.mubr.bf16.mxu0 0
      %2303 = vmatmul.mubr.bf16.gmra.mrb[0].mxu0 %v1904
      %v2304 = vpop.f32.mrb[0].mxu0
      %v2305 = vadd.f32 %v1772, %v2304
      %v2306 = vpop.f32.mrb[0].mxu0
      %v2307 = vpop.f32.mrb[0].mxu0
      %v2308 = vadd.f32 %v1772, %v2307
      %v2309 = vpop.f32.mrb[0].mxu0
      %2310 = vmatprep.mubr.bf16.mxu0 0
      %2311 = vmatmul.mubr.bf16.gmra.mrb[0].mxu0 %v1907
      %v2312 = vpop.f32.mrb[0].mxu0
      %v2313 = vadd.f32 %v1772, %v2312
      %v2314 = vpop.f32.mrb[0].mxu0
      %v2315 = vpop.f32.mrb[0].mxu0
      %v2316 = vadd.f32 %v1772, %v2315
      %v2317 = vpop.f32.mrb[0].mxu0
      %2318 = vmatprep.mubr.bf16.mxu0 0
      %2319 = vmatmul.mubr.bf16.gmra.mrb[0].mxu0 %v1910
      %v2320 = vpop.f32.mrb[0].mxu0
      %v2321 = vadd.f32 %v1772, %v2320
      %v2322 = vpop.f32.mrb[0].mxu0
      %v2323 = vpop.f32.mrb[0].mxu0
      %v2324 = vadd.f32 %v1772, %v2323
      %v2325 = vpop.f32.mrb[0].mxu0
      %2326 = vmatprep.mubr.bf16.mxu0 0
      %2327 = vmatmul.mubr.bf16.gmra.mrb[0].mxu0 %v1913
      %v2328 = vpop.f32.mrb[0].mxu0
      %v2329 = vadd.f32 %v1772, %v2328
      %v2330 = vpop.f32.mrb[0].mxu0
      %v2331 = vpop.f32.mrb[0].mxu0
      %v2332 = vadd.f32 %v1772, %v2331
      %v2333 = vpop.f32.mrb[0].mxu0
      %2334 = vmatprep.mubr.bf16.mxu0 0
      %2335 = vmatmul.mubr.bf16.gmra.mrb[0].mxu0 %v1916
      %v2336 = vpop.f32.mrb[0].mxu0
      %v2337 = vadd.f32 %v1772, %v2336
      %v2338 = vpop.f32.mrb[0].mxu0
      %v2339 = vpop.f32.mrb[0].mxu0
      %v2340 = vadd.f32 %v1772, %v2339
      %v2341 = vpop.f32.mrb[0].mxu0
      %2342 = vmatprep.mubr.bf16.mxu0 0
      %2343 = vmatmul.mubr.bf16.gmra.mrb[0].mxu0 %v1919
      %v2344 = vpop.f32.mrb[0].mxu0
      %v2345 = vadd.f32 %v1772, %v2344
      %v2346 = vpop.f32.mrb[0].mxu0
      %v2347 = vpop.f32.mrb[0].mxu0
      %v2348 = vadd.f32 %v1772, %v2347
      %v2349 = vpop.f32.mrb[0].mxu0
      %2350 = vmatprep.mubr.bf16.mxu0 0
      %2351 = vmatmul.mubr.bf16.gmra.mrb[0].mxu0 %v1922
      %v2352 = vpop.f32.mrb[0].mxu0
      %v2353 = vadd.f32 %v1772, %v2352
      %v2354 = vpop.f32.mrb[0].mxu0
      %v2355 = vpop.f32.mrb[0].mxu0
      %v2356 = vadd.f32 %v1772, %v2355
      %v2357 = vpop.f32.mrb[0].mxu0
      %2358 = vmatprep.mubr.bf16.mxu0 0
      %2359 = vmatmul.mubr.bf16.gmra.mrb[0].mxu0 %v1925
      %v2360 = vpop.f32.mrb[0].mxu0
      %v2361 = vadd.f32 %v1772, %v2360
      %v2362 = vpop.f32.mrb[0].mxu0
      %v2363 = vpop.f32.mrb[0].mxu0
      %v2364 = vadd.f32 %v1772, %v2363
      %v2365 = vpop.f32.mrb[0].mxu0
      %2366 = vmatprep.mubr.bf16.mxu0 0
      %2367 = vmatmul.mubr.bf16.gmra.mrb[0].mxu0 %v1928
      %v2368 = vpop.f32.mrb[0].mxu0
      %v2369 = vadd.f32 %v1772, %v2368
      %v2370 = vpop.f32.mrb[0].mxu0
      %v2371 = vpop.f32.mrb[0].mxu0
      %v2372 = vadd.f32 %v1772, %v2371
      %v2373 = vpop.f32.mrb[0].mxu0
      %2374 = vmatprep.mubr.bf16.mxu0 0
      %2375 = vmatmul.mubr.bf16.gmra.mrb[0].mxu0 %v1931
      %v2376 = vpop.f32.mrb[0].mxu0
      %v2377 = vadd.f32 %v1772, %v2376
      %v2378 = vpop.f32.mrb[0].mxu0
      %v2379 = vpop.f32.mrb[0].mxu0
      %v2380 = vadd.f32 %v1772, %v2379
      %v2381 = vpop.f32.mrb[0].mxu0
      %2382 = vmatprep.mubr.bf16.mxu0 0
      %2383 = vmatmul.mubr.bf16.gmra.mrb[0].mxu0 %v1934
      %v2384 = vpop.f32.mrb[0].mxu0
      %v2385 = vadd.f32 %v1772, %v2384
      %v2386 = vpop.f32.mrb[0].mxu0
      %v2387 = vpop.f32.mrb[0].mxu0
      %v2388 = vadd.f32 %v1772, %v2387
      %v2389 = vpop.f32.mrb[0].mxu0
      %2390 = vmatprep.mubr.bf16.mxu0 0
      %2391 = vmatmul.mubr.bf16.gmra.mrb[0].mxu0 %v1937
      %v2392 = vpop.f32.mrb[0].mxu0
      %v2393 = vadd.f32 %v1772, %v2392
      %v2394 = vpop.f32.mrb[0].mxu0
      %v2395 = vpop.f32.mrb[0].mxu0
      %v2396 = vadd.f32 %v1772, %v2395
      %v2397 = vpop.f32.mrb[0].mxu0
      %2398 = vmatprep.mubr.bf16.mxu0 0
      %2399 = vmatmul.mubr.bf16.gmra.mrb[0].mxu0 %v1940
      %v2400 = vpop.f32.mrb[0].mxu0
      %v2401 = vadd.f32 %v1772, %v2400
      %v2402 = vpop.f32.mrb[0].mxu0
      %v2403 = vpop.f32.mrb[0].mxu0
      %v2404 = vadd.f32 %v1772, %v2403
      %v2405 = vpop.f32.mrb[0].mxu0
      %2406 = vmatprep.mubr.bf16.mxu0 0
      %2407 = vmatmul.mubr.bf16.gmra.mrb[0].mxu0 %v1943
      %v2408 = vpop.f32.mrb[0].mxu0
      %v2409 = vadd.f32 %v1772, %v2408
      %v2410 = vpop.f32.mrb[0].mxu0
      %v2411 = vpop.f32.mrb[0].mxu0
      %v2412 = vadd.f32 %v1772, %v2411
      %v2413 = vpop.f32.mrb[0].mxu0
      %2414 = vmatprep.mubr.bf16.mxu0 0
      %2415 = vmatmul.mubr.bf16.gmra.mrb[0].mxu0 %v1946
      %v2416 = vpop.f32.mrb[0].mxu0
      %v2417 = vadd.f32 %v1772, %v2416
      %v2418 = vpop.f32.mrb[0].mxu0
      %v2419 = vpop.f32.mrb[0].mxu0
      %v2420 = vadd.f32 %v1772, %v2419
      %v2421 = vpop.f32.mrb[0].mxu0
      %2422 = vmatprep.mubr.bf16.mxu0 0
      %2423 = vmatmul.mubr.bf16.gmra.mrb[0].mxu0 %v1949
      %v2424 = vpop.f32.mrb[0].mxu0
      %v2425 = vadd.f32 %v1772, %v2424
      %v2426 = vpop.f32.mrb[0].mxu0
      %v2427 = vpop.f32.mrb[0].mxu0
      %v2428 = vadd.f32 %v1772, %v2427
      %v2429 = vpop.f32.mrb[0].mxu0
      %2430 = vmatprep.mubr.bf16.mxu0 0
      %2431 = vmatmul.mubr.bf16.gmra.mrb[0].mxu0 %v1952
      %v2432 = vpop.f32.mrb[0].mxu0
      %v2433 = vadd.f32 %v1772, %v2432
      %v2434 = vpop.f32.mrb[0].mxu0
      %v2435 = vpop.f32.mrb[0].mxu0
      %v2436 = vadd.f32 %v1772, %v2435
      %v2437 = vpop.f32.mrb[0].mxu0
      %2438 = vmatprep.mubr.bf16.mxu0 0
      %2439 = vmatmul.mubr.bf16.gmra.mrb[0].mxu0 %v1955
      %v2440 = vpop.f32.mrb[0].mxu0
      %v2441 = vadd.f32 %v1772, %v2440
      %v2442 = vpop.f32.mrb[0].mxu0
      %v2443 = vpop.f32.mrb[0].mxu0
      %v2444 = vadd.f32 %v1772, %v2443
      %v2445 = vpop.f32.mrb[0].mxu0
      %2446 = vmatprep.mubr.bf16.mxu0 0
      %2447 = vmatmul.mubr.bf16.gmra.mrb[0].mxu0 %v1958
      %v2448 = vpop.f32.mrb[0].mxu0
      %v2449 = vadd.f32 %v1772, %v2448
      %v2450 = vpop.f32.mrb[0].mxu0
      %v2451 = vpop.f32.mrb[0].mxu0
      %v2452 = vadd.f32 %v1772, %v2451
      %v2453 = vpop.f32.mrb[0].mxu0
      %2454 = vmatprep.mubr.bf16.mxu0 0
      %2455 = vmatmul.mubr.bf16.gmra.mrb[0].mxu0 %v1961
      %v2456 = vpop.f32.mrb[0].mxu0
      %v2457 = vadd.f32 %v1772, %v2456
      %v2458 = vpop.f32.mrb[0].mxu0
      %v2459 = vpop.f32.mrb[0].mxu0
      %v2460 = vadd.f32 %v1772, %v2459
      %v2461 = vpop.f32.mrb[0].mxu0
      %2462 = vmatprep.mubr.bf16.mxu0 0
      %2463 = vmatmul.mubr.bf16.gmra.mrb[0].mxu0 %v1964
      %v2464 = vpop.f32.mrb[0].mxu0
      %v2465 = vadd.f32 %v1772, %v2464
      %v2466 = vpop.f32.mrb[0].mxu0
      %v2467 = vpop.f32.mrb[0].mxu0
      %v2468 = vadd.f32 %v1772, %v2467
      %v2469 = vpop.f32.mrb[0].mxu0
      %2470 = vmatprep.mubr.bf16.mxu0 0
      %2471 = vmatmul.mubr.bf16.gmra.mrb[0].mxu0 %v1967
      %v2472 = vpop.f32.mrb[0].mxu0
      %v2473 = vadd.f32 %v1772, %v2472
      %v2474 = vpop.f32.mrb[0].mxu0
      %v2475 = vpop.f32.mrb[0].mxu0
      %v2476 = vadd.f32 %v1772, %v2475
      %v2477 = vpop.f32.mrb[0].mxu0
      %2478 = vmatprep.mubr.bf16.mxu0 0
      %2479 = vmatmul.mubr.bf16.gmra.mrb[0].mxu0 %v1970
      %v2480 = vpop.f32.mrb[0].mxu0
      %v2481 = vadd.f32 %v1772, %v2480
      %v2482 = vpop.f32.mrb[0].mxu0
      %v2483 = vpop.f32.mrb[0].mxu0
      %v2484 = vadd.f32 %v1772, %v2483
      %v2485 = vpop.f32.mrb[0].mxu0
      %2486 = vmatprep.mubr.bf16.mxu0 0
      %2487 = vmatmul.mubr.bf16.gmra.mrb[0].mxu0 %v1973
      %v2488 = vpop.f32.mrb[0].mxu0
      %v2489 = vadd.f32 %v1772, %v2488
      %v2490 = vpop.f32.mrb[0].mxu0
      %v2491 = vpop.f32.mrb[0].mxu0
      %v2492 = vadd.f32 %v1772, %v2491
      %v2493 = vpop.f32.mrb[0].mxu0
      %2494 = vmatprep.mubr.bf16.mxu0 0
      %2495 = vmatmul.mubr.bf16.gmra.mrb[0].mxu0 %v1976
      %v2496 = vpop.f32.mrb[0].mxu0
      %v2497 = vadd.f32 %v1772, %v2496
      %v2498 = vpop.f32.mrb[0].mxu0
      %v2499 = vpop.f32.mrb[0].mxu0
      %v2500 = vadd.f32 %v1772, %v2499
      %v2501 = vpop.f32.mrb[0].mxu0
      %2502 = vmatprep.mubr.bf16.mxu0 0
      %2503 = vmatmul.mubr.bf16.gmra.mrb[0].mxu0 %v1979
      %v2504 = vpop.f32.mrb[0].mxu0
      %v2505 = vadd.f32 %v1772, %v2504
      %v2506 = vpop.f32.mrb[0].mxu0
      %v2507 = vpop.f32.mrb[0].mxu0
      %v2508 = vadd.f32 %v1772, %v2507
      %v2509 = vpop.f32.mrb[0].mxu0
      %2510 = vmatprep.mubr.bf16.mxu0 0
      %2511 = vmatmul.mubr.bf16.gmra.mrb[0].mxu0 %v1982
      %v2512 = vpop.f32.mrb[0].mxu0
      %v2513 = vadd.f32 %v1772, %v2512
      %v2514 = vpop.f32.mrb[0].mxu0
      %v2515 = vpop.f32.mrb[0].mxu0
      %v2516 = vadd.f32 %v1772, %v2515
      %v2517 = vpop.f32.mrb[0].mxu0
      %2518 = vmatprep.mubr.bf16.mxu0 0
      %2519 = vmatmul.mubr.bf16.gmra.mrb[0].mxu0 %v1985
      %v2520 = vpop.f32.mrb[0].mxu0
      %v2521 = vadd.f32 %v1772, %v2520
      %v2522 = vpop.f32.mrb[0].mxu0
      %v2523 = vpop.f32.mrb[0].mxu0
      %v2524 = vadd.f32 %v1772, %v2523
      %v2525 = vpop.f32.mrb[0].mxu0
      %2526 = vmatprep.mubr.bf16.mxu0 0
      %2527 = vmatmul.mubr.bf16.gmra.mrb[0].mxu0 %v1988
      %v2528 = vpop.f32.mrb[0].mxu0
      %v2529 = vadd.f32 %v1772, %v2528
      %v2530 = vpop.f32.mrb[0].mxu0
      %v2531 = vpop.f32.mrb[0].mxu0
      %v2532 = vadd.f32 %v1772, %v2531
      %v2533 = vpop.f32.mrb[0].mxu0
      %2534 = vdwg.mxu0
      %v2535 = vmax.f32 %v2025, 0.0
      %v2536 = vmax.f32 %v2028, 0.0
      %v2537 = vmax.f32 %v2033, 0.0
      %v2538 = vmax.f32 %v2036, 0.0
      %v2539 = vmax.f32 %v2041, 0.0
      %v2540 = vmax.f32 %v2044, 0.0
      %v2541 = vmax.f32 %v2049, 0.0
      %v2542 = vmax.f32 %v2052, 0.0
      %v2543 = vmax.f32 %v2057, 0.0
      %v2544 = vmax.f32 %v2060, 0.0
      %v2545 = vmax.f32 %v2065, 0.0
      %v2546 = vmax.f32 %v2068, 0.0
      %v2547 = vmax.f32 %v2073, 0.0
      %v2548 = vmax.f32 %v2076, 0.0
      %v2549 = vmax.f32 %v2081, 0.0
      %v2550 = vmax.f32 %v2084, 0.0
      %v2551 = vmax.f32 %v2089, 0.0
      %v2552 = vmax.f32 %v2092, 0.0
      %v2553 = vmax.f32 %v2097, 0.0
      %v2554 = vmax.f32 %v2100, 0.0
      %v2555 = vmax.f32 %v2105, 0.0
      %v2556 = vmax.f32 %v2108, 0.0
      %v2557 = vmax.f32 %v2113, 0.0
      %v2558 = vmax.f32 %v2116, 0.0
      %v2559 = vmax.f32 %v2121, 0.0
      %v2560 = vmax.f32 %v2124, 0.0
      %v2561 = vmax.f32 %v2129, 0.0
      %v2562 = vmax.f32 %v2132, 0.0
      %v2563 = vmax.f32 %v2137, 0.0
      %v2564 = vmax.f32 %v2140, 0.0
      %v2565 = vmax.f32 %v2145, 0.0
      %v2566 = vmax.f32 %v2148, 0.0
      %v2567 = vmax.f32 %v2153, 0.0
      %v2568 = vmax.f32 %v2156, 0.0
      %v2569 = vmax.f32 %v2161, 0.0
      %v2570 = vmax.f32 %v2164, 0.0
      %v2571 = vmax.f32 %v2169, 0.0
      %v2572 = vmax.f32 %v2172, 0.0
      %v2573 = vmax.f32 %v2177, 0.0
      %v2574 = vmax.f32 %v2180, 0.0
      %v2575 = vmax.f32 %v2185, 0.0
      %v2576 = vmax.f32 %v2188, 0.0
      %v2577 = vmax.f32 %v2193, 0.0
      %v2578 = vmax.f32 %v2196, 0.0
      %v2579 = vmax.f32 %v2201, 0.0
      %v2580 = vmax.f32 %v2204, 0.0
      %v2581 = vmax.f32 %v2209, 0.0
      %v2582 = vmax.f32 %v2212, 0.0
      %v2583 = vmax.f32 %v2217, 0.0
      %v2584 = vmax.f32 %v2220, 0.0
      %v2585 = vmax.f32 %v2225, 0.0
      %v2586 = vmax.f32 %v2228, 0.0
      %v2587 = vmax.f32 %v2233, 0.0
      %v2588 = vmax.f32 %v2236, 0.0
      %v2589 = vmax.f32 %v2241, 0.0
      %v2590 = vmax.f32 %v2244, 0.0
      %v2591 = vmax.f32 %v2249, 0.0
      %v2592 = vmax.f32 %v2252, 0.0
      %v2593 = vmax.f32 %v2257, 0.0
      %v2594 = vmax.f32 %v2260, 0.0
      %v2595 = vmax.f32 %v2265, 0.0
      %v2596 = vmax.f32 %v2268, 0.0
      %v2597 = vmax.f32 %v2273, 0.0
      %v2598 = vmax.f32 %v2276, 0.0
      %v2599 = vmax.f32 %v2281, 0.0
      %v2600 = vmax.f32 %v2284, 0.0
      %v2601 = vmax.f32 %v2289, 0.0
      %v2602 = vmax.f32 %v2292, 0.0
      %v2603 = vmax.f32 %v2297, 0.0
      %v2604 = vmax.f32 %v2300, 0.0
      %v2605 = vmax.f32 %v2305, 0.0
      %v2606 = vmax.f32 %v2308, 0.0
      %v2607 = vmax.f32 %v2313, 0.0
      %v2608 = vmax.f32 %v2316, 0.0
      %v2609 = vmax.f32 %v2321, 0.0
      %v2610 = vmax.f32 %v2324, 0.0
      %v2611 = vmax.f32 %v2329, 0.0
      %v2612 = vmax.f32 %v2332, 0.0
      %v2613 = vmax.f32 %v2337, 0.0
      %v2614 = vmax.f32 %v2340, 0.0
      %v2615 = vmax.f32 %v2345, 0.0
      %v2616 = vmax.f32 %v2348, 0.0
      %v2617 = vmax.f32 %v2353, 0.0
      %v2618 = vmax.f32 %v2356, 0.0
      %v2619 = vmax.f32 %v2361, 0.0
      %v2620 = vmax.f32 %v2364, 0.0
      %v2621 = vmax.f32 %v2369, 0.0
      %v2622 = vmax.f32 %v2372, 0.0
      %v2623 = vmax.f32 %v2377, 0.0
      %v2624 = vmax.f32 %v2380, 0.0
      %v2625 = vmax.f32 %v2385, 0.0
      %v2626 = vmax.f32 %v2388, 0.0
      %v2627 = vmax.f32 %v2393, 0.0
      %v2628 = vmax.f32 %v2396, 0.0
      %v2629 = vmax.f32 %v2401, 0.0
      %v2630 = vmax.f32 %v2404, 0.0
      %v2631 = vmax.f32 %v2409, 0.0
      %v2632 = vmax.f32 %v2412, 0.0
      %v2633 = vmax.f32 %v2417, 0.0
      %v2634 = vmax.f32 %v2420, 0.0
      %v2635 = vmax.f32 %v2425, 0.0
      %v2636 = vmax.f32 %v2428, 0.0
      %v2637 = vmax.f32 %v2433, 0.0
      %v2638 = vmax.f32 %v2436, 0.0
      %v2639 = vmax.f32 %v2441, 0.0
      %v2640 = vmax.f32 %v2444, 0.0
      %v2641 = vmax.f32 %v2449, 0.0
      %v2642 = vmax.f32 %v2452, 0.0
      %v2643 = vmax.f32 %v2457, 0.0
      %v2644 = vmax.f32 %v2460, 0.0
      %v2645 = vmax.f32 %v2465, 0.0
      %v2646 = vmax.f32 %v2468, 0.0
      %v2647 = vmax.f32 %v2473, 0.0
      %v2648 = vmax.f32 %v2476, 0.0
      %v2649 = vmax.f32 %v2481, 0.0
      %v2650 = vmax.f32 %v2484, 0.0
      %v2651 = vmax.f32 %v2489, 0.0
      %v2652 = vmax.f32 %v2492, 0.0
      %v2653 = vmax.f32 %v2497, 0.0
      %v2654 = vmax.f32 %v2500, 0.0
      %v2655 = vmax.f32 %v2505, 0.0
      %v2656 = vmax.f32 %v2508, 0.0
      %v2657 = vmax.f32 %v2513, 0.0
      %v2658 = vmax.f32 %v2516, 0.0
      %v2659 = vmax.f32 %v2521, 0.0
      %v2660 = vmax.f32 %v2524, 0.0
      %v2661 = vmax.f32 %v2529, 0.0
      %v2662 = vmax.f32 %v2532, 0.0
      %s2663 = scalar_lea.vmem %s2, 32
      %v2664 = vld [vmem:[%s2663] sm:$0xf]
      %v2665 = vld [vmem:[%s2663 + $0x4] sm:$0xf]
      %v2666 = vld [vmem:[%s2663 + $0x8] sm:$0xf]
      %v2667 = vld [vmem:[%s2663 + $0xc] sm:$0xf]
      %v2668 = vld [vmem:[%s2663 + $0x10] sm:$0xf]
      %v2669 = vld [vmem:[%s2663 + $0x14] sm:$0xf]
      %v2670 = vld [vmem:[%s2663 + $0x18] sm:$0xf]
      %v2671 = vld [vmem:[%s2663 + $0x1c] sm:$0xf]
      %v2672 = vpack.c.bf16 %v2536, %v2535
      %v2673 = vpack.c.bf16 %v2538, %v2537
      %v2674 = vpack.c.bf16 %v2540, %v2539
      %v2675 = vpack.c.bf16 %v2542, %v2541
      %v2676 = vpack.c.bf16 %v2544, %v2543
      %v2677 = vpack.c.bf16 %v2546, %v2545
      %v2678 = vpack.c.bf16 %v2548, %v2547
      %v2679 = vpack.c.bf16 %v2550, %v2549
      %v2680 = vpack.c.bf16 %v2552, %v2551
      %v2681 = vpack.c.bf16 %v2554, %v2553
      %v2682 = vpack.c.bf16 %v2556, %v2555
      %v2683 = vpack.c.bf16 %v2558, %v2557
      %v2684 = vpack.c.bf16 %v2560, %v2559
      %v2685 = vpack.c.bf16 %v2562, %v2561
      %v2686 = vpack.c.bf16 %v2564, %v2563
      %v2687 = vpack.c.bf16 %v2566, %v2565
      %v2688 = vpack.c.bf16 %v2568, %v2567
      %v2689 = vpack.c.bf16 %v2570, %v2569
      %v2690 = vpack.c.bf16 %v2572, %v2571
      %v2691 = vpack.c.bf16 %v2574, %v2573
      %v2692 = vpack.c.bf16 %v2576, %v2575
      %v2693 = vpack.c.bf16 %v2578, %v2577
      %v2694 = vpack.c.bf16 %v2580, %v2579
      %v2695 = vpack.c.bf16 %v2582, %v2581
      %v2696 = vpack.c.bf16 %v2584, %v2583
      %v2697 = vpack.c.bf16 %v2586, %v2585
      %v2698 = vpack.c.bf16 %v2588, %v2587
      %v2699 = vpack.c.bf16 %v2590, %v2589
      %v2700 = vpack.c.bf16 %v2592, %v2591
      %v2701 = vpack.c.bf16 %v2594, %v2593
      %v2702 = vpack.c.bf16 %v2596, %v2595
      %v2703 = vpack.c.bf16 %v2598, %v2597
      %v2704 = vpack.c.bf16 %v2600, %v2599
      %v2705 = vpack.c.bf16 %v2602, %v2601
      %v2706 = vpack.c.bf16 %v2604, %v2603
      %v2707 = vpack.c.bf16 %v2606, %v2605
      %v2708 = vpack.c.bf16 %v2608, %v2607
      %v2709 = vpack.c.bf16 %v2610, %v2609
      %v2710 = vpack.c.bf16 %v2612, %v2611
      %v2711 = vpack.c.bf16 %v2614, %v2613
      %v2712 = vpack.c.bf16 %v2616, %v2615
      %v2713 = vpack.c.bf16 %v2618, %v2617
      %v2714 = vpack.c.bf16 %v2620, %v2619
      %v2715 = vpack.c.bf16 %v2622, %v2621
      %v2716 = vpack.c.bf16 %v2624, %v2623
      %v2717 = vpack.c.bf16 %v2626, %v2625
      %v2718 = vpack.c.bf16 %v2628, %v2627
      %v2719 = vpack.c.bf16 %v2630, %v2629
      %v2720 = vpack.c.bf16 %v2632, %v2631
      %v2721 = vpack.c.bf16 %v2634, %v2633
      %v2722 = vpack.c.bf16 %v2636, %v2635
      %v2723 = vpack.c.bf16 %v2638, %v2637
      %v2724 = vpack.c.bf16 %v2640, %v2639
      %v2725 = vpack.c.bf16 %v2642, %v2641
      %v2726 = vpack.c.bf16 %v2644, %v2643
      %v2727 = vpack.c.bf16 %v2646, %v2645
      %v2728 = vpack.c.bf16 %v2648, %v2647
      %v2729 = vpack.c.bf16 %v2650, %v2649
      %v2730 = vpack.c.bf16 %v2652, %v2651
      %v2731 = vpack.c.bf16 %v2654, %v2653
      %v2732 = vpack.c.bf16 %v2656, %v2655
      %v2733 = vpack.c.bf16 %v2658, %v2657
      %v2734 = vpack.c.bf16 %v2660, %v2659
      %v2735 = vpack.c.bf16 %v2662, %v2661
      %v2736 = vld [vmem:[%s3 + $0x2] sm:$0x1]
      %v2737 = vlaneseq
      %v2738 = vshrl.u32 %v2737, 7
      %v2739 = vsub.s32 0, %v2738
      %v2740 = vrot.slane %v2736, %v2739
      %v2749 = vunpack.c.l.b16 %v2664
      %v2750 = vunpack.c.l.b16 %v2665
      %v2751 = vunpack.c.l.b16 %v2666
      %v2752 = vunpack.c.l.b16 %v2667
      %v2753 = vunpack.c.l.b16 %v2668
      %v2754 = vunpack.c.l.b16 %v2669
      %v2755 = vunpack.c.l.b16 %v2670
      %v2756 = vunpack.c.l.b16 %v2671
      %v2757 = vpack.c.b16 %v2750, %v2749
      %v2758 = vpack.c.b16 %v2752, %v2751
      %v2759 = vpack.c.b16 %v2754, %v2753
      %v2760 = vpack.c.b16 %v2756, %v2755
      %v2766 = vsel %vm1797, %v2672, 0
      %v2769 = vsel %vm1797, %v2673, 0
      %v2772 = vsel %vm1797, %v2674, 0
      %v2775 = vsel %vm1797, %v2675, 0
      %v2778 = vsel %vm1797, %v2676, 0
      %v2781 = vsel %vm1797, %v2677, 0
      %v2784 = vsel %vm1797, %v2678, 0
      %v2787 = vsel %vm1797, %v2679, 0
      %v2790 = vsel %vm1797, %v2680, 0
      %v2793 = vsel %vm1797, %v2681, 0
      %v2796 = vsel %vm1797, %v2682, 0
      %v2799 = vsel %vm1797, %v2683, 0
      %v2802 = vsel %vm1797, %v2684, 0
      %v2805 = vsel %vm1797, %v2685, 0
      %v2808 = vsel %vm1797, %v2686, 0
      %v2811 = vsel %vm1797, %v2687, 0
      %v2814 = vsel %vm1797, %v2688, 0
      %v2817 = vsel %vm1797, %v2689, 0
      %v2820 = vsel %vm1797, %v2690, 0
      %v2823 = vsel %vm1797, %v2691, 0
      %v2826 = vsel %vm1797, %v2692, 0
      %v2829 = vsel %vm1797, %v2693, 0
      %v2832 = vsel %vm1797, %v2694, 0
      %v2835 = vsel %vm1797, %v2695, 0
      %v2838 = vsel %vm1797, %v2696, 0
      %v2841 = vsel %vm1797, %v2697, 0
      %v2844 = vsel %vm1797, %v2698, 0
      %v2847 = vsel %vm1797, %v2699, 0
      %v2850 = vsel %vm1797, %v2700, 0
      %v2853 = vsel %vm1797, %v2701, 0
      %v2856 = vsel %vm1797, %v2702, 0
      %v2859 = vsel %vm1797, %v2703, 0
      %v2862 = vsel %vm1797, %v2704, 0
      %v2865 = vsel %vm1797, %v2705, 0
      %v2868 = vsel %vm1797, %v2706, 0
      %v2871 = vsel %vm1797, %v2707, 0
      %v2874 = vsel %vm1797, %v2708, 0
      %v2877 = vsel %vm1797, %v2709, 0
      %v2880 = vsel %vm1797, %v2710, 0
      %v2883 = vsel %vm1797, %v2711, 0
      %v2886 = vsel %vm1797, %v2712, 0
      %v2889 = vsel %vm1797, %v2713, 0
      %v2892 = vsel %vm1797, %v2714, 0
      %v2895 = vsel %vm1797, %v2715, 0
      %v2898 = vsel %vm1797, %v2716, 0
      %v2901 = vsel %vm1797, %v2717, 0
      %v2904 = vsel %vm1797, %v2718, 0
      %v2907 = vsel %vm1797, %v2719, 0
      %v2910 = vsel %vm1797, %v2720, 0
      %v2913 = vsel %vm1797, %v2721, 0
      %v2916 = vsel %vm1797, %v2722, 0
      %v2919 = vsel %vm1797, %v2723, 0
      %v2922 = vsel %vm1797, %v2724, 0
      %v2925 = vsel %vm1797, %v2725, 0
      %v2928 = vsel %vm1797, %v2726, 0
      %v2931 = vsel %vm1797, %v2727, 0
      %v2934 = vsel %vm1797, %v2728, 0
      %v2937 = vsel %vm1797, %v2729, 0
      %v2940 = vsel %vm1797, %v2730, 0
      %v2943 = vsel %vm1797, %v2731, 0
      %v2946 = vsel %vm1797, %v2732, 0
      %v2949 = vsel %vm1797, %v2733, 0
      %v2952 = vsel %vm1797, %v2734, 0
      %v2955 = vsel %vm1797, %v2735, 0
      %2957 = vmatprep.subr.bf16.mxu0 0
      %2958 = vmatpush1.bf16.msra.mxu0 %v2757
      %2959 = vmatprep.subr.bf16.mxu0 0
      %2960 = vmatpush1.bf16.msra.mxu0 %v2758
      %2961 = vmatprep.subr.bf16.mxu0 0
      %2962 = vmatpush1.bf16.msra.mxu0 %v2759
      %2963 = vmatprep.subr.bf16.mxu0 0
      %2964 = vmatpush1.bf16.msra.mxu0 %v2760
      %2965 = vmatprep.subr.bf16.mxu0 0
      %2966 = vmatpush1.bf16.msra.mxu0 0
      %2967 = vmatprep.subr.bf16.mxu0 0
      %2968 = vmatpush1.bf16.msra.mxu0 0
      %2969 = vmatprep.subr.bf16.mxu0 0
      %2970 = vmatpush1.bf16.msra.mxu0 0
      %2971 = vmatprep.subr.bf16.mxu0 0
      %2972 = vmatpush1.bf16.msra.mxu0 0
      %2973 = vmatprep.subr.bf16.mxu0 0
      %2974 = vmatpush1.bf16.msra.mxu0 0
      %2975 = vmatprep.subr.bf16.mxu0 0
      %2976 = vmatpush1.bf16.msra.mxu0 0
      %2977 = vmatprep.subr.bf16.mxu0 0
      %2978 = vmatpush1.bf16.msra.mxu0 0
      %2979 = vmatprep.subr.bf16.mxu0 0
      %2980 = vmatpush1.bf16.msra.mxu0 0
      %2981 = vmatprep.subr.bf16.mxu0 0
      %2982 = vmatpush1.bf16.msra.mxu0 0
      %2983 = vmatprep.subr.bf16.mxu0 0
      %2984 = vmatpush1.bf16.msra.mxu0 0
      %2985 = vmatprep.subr.bf16.mxu0 0
      %2986 = vmatpush1.bf16.msra.mxu0 0
      %2987 = vmatprep.subr.bf16.mxu0 0
      %2988 = vmatpush1.bf16.msra.mxu0 0
      %2989 = vmatprep.mubr.bf16.mxu0 0
      %2990 = vmatmul.mubr.bf16.gmra.mrb[0].mxu0 %v2766
      %v2991 = vpop.f32.mrb[0].mxu0
      %v2992 = vadd.f32 %v2740, %v2991
      %v2993 = vpop.f32.mrb[0].mxu0
      %v2994 = vpop.f32.mrb[0].mxu0
      %v2995 = vadd.f32 %v2740, %v2994
      %v2996 = vpop.f32.mrb[0].mxu0
      %2997 = vmatprep.mubr.bf16.mxu0 0
      %2998 = vmatmul.mubr.bf16.gmra.mrb[0].mxu0 %v2769
      %v2999 = vpop.f32.mrb[0].mxu0
      %v3000 = vadd.f32 %v2740, %v2999
      %v3001 = vpop.f32.mrb[0].mxu0
      %v3002 = vpop.f32.mrb[0].mxu0
      %v3003 = vadd.f32 %v2740, %v3002
      %v3004 = vpop.f32.mrb[0].mxu0
      %3005 = vmatprep.mubr.bf16.mxu0 0
      %3006 = vmatmul.mubr.bf16.gmra.mrb[0].mxu0 %v2772
      %v3007 = vpop.f32.mrb[0].mxu0
      %v3008 = vadd.f32 %v2740, %v3007
      %v3009 = vpop.f32.mrb[0].mxu0
      %v3010 = vpop.f32.mrb[0].mxu0
      %v3011 = vadd.f32 %v2740, %v3010
      %v3012 = vpop.f32.mrb[0].mxu0
      %3013 = vmatprep.mubr.bf16.mxu0 0
      %3014 = vmatmul.mubr.bf16.gmra.mrb[0].mxu0 %v2775
      %v3015 = vpop.f32.mrb[0].mxu0
      %v3016 = vadd.f32 %v2740, %v3015
      %v3017 = vpop.f32.mrb[0].mxu0
      %v3018 = vpop.f32.mrb[0].mxu0
      %v3019 = vadd.f32 %v2740, %v3018
      %v3020 = vpop.f32.mrb[0].mxu0
      %3021 = vmatprep.mubr.bf16.mxu0 0
      %3022 = vmatmul.mubr.bf16.gmra.mrb[0].mxu0 %v2778
      %v3023 = vpop.f32.mrb[0].mxu0
      %v3024 = vadd.f32 %v2740, %v3023
      %v3025 = vpop.f32.mrb[0].mxu0
      %v3026 = vpop.f32.mrb[0].mxu0
      %v3027 = vadd.f32 %v2740, %v3026
      %v3028 = vpop.f32.mrb[0].mxu0
      %3029 = vmatprep.mubr.bf16.mxu0 0
      %3030 = vmatmul.mubr.bf16.gmra.mrb[0].mxu0 %v2781
      %v3031 = vpop.f32.mrb[0].mxu0
      %v3032 = vadd.f32 %v2740, %v3031
      %v3033 = vpop.f32.mrb[0].mxu0
      %v3034 = vpop.f32.mrb[0].mxu0
      %v3035 = vadd.f32 %v2740, %v3034
      %v3036 = vpop.f32.mrb[0].mxu0
      %3037 = vmatprep.mubr.bf16.mxu0 0
      %3038 = vmatmul.mubr.bf16.gmra.mrb[0].mxu0 %v2784
      %v3039 = vpop.f32.mrb[0].mxu0
      %v3040 = vadd.f32 %v2740, %v3039
      %v3041 = vpop.f32.mrb[0].mxu0
      %v3042 = vpop.f32.mrb[0].mxu0
      %v3043 = vadd.f32 %v2740, %v3042
      %v3044 = vpop.f32.mrb[0].mxu0
      %3045 = vmatprep.mubr.bf16.mxu0 0
      %3046 = vmatmul.mubr.bf16.gmra.mrb[0].mxu0 %v2787
      %v3047 = vpop.f32.mrb[0].mxu0
      %v3048 = vadd.f32 %v2740, %v3047
      %v3049 = vpop.f32.mrb[0].mxu0
      %v3050 = vpop.f32.mrb[0].mxu0
      %v3051 = vadd.f32 %v2740, %v3050
      %v3052 = vpop.f32.mrb[0].mxu0
      %3053 = vmatprep.mubr.bf16.mxu0 0
      %3054 = vmatmul.mubr.bf16.gmra.mrb[0].mxu0 %v2790
      %v3055 = vpop.f32.mrb[0].mxu0
      %v3056 = vadd.f32 %v2740, %v3055
      %v3057 = vpop.f32.mrb[0].mxu0
      %v3058 = vpop.f32.mrb[0].mxu0
      %v3059 = vadd.f32 %v2740, %v3058
      %v3060 = vpop.f32.mrb[0].mxu0
      %3061 = vmatprep.mubr.bf16.mxu0 0
      %3062 = vmatmul.mubr.bf16.gmra.mrb[0].mxu0 %v2793
      %v3063 = vpop.f32.mrb[0].mxu0
      %v3064 = vadd.f32 %v2740, %v3063
      %v3065 = vpop.f32.mrb[0].mxu0
      %v3066 = vpop.f32.mrb[0].mxu0
      %v3067 = vadd.f32 %v2740, %v3066
      %v3068 = vpop.f32.mrb[0].mxu0
      %3069 = vmatprep.mubr.bf16.mxu0 0
      %3070 = vmatmul.mubr.bf16.gmra.mrb[0].mxu0 %v2796
      %v3071 = vpop.f32.mrb[0].mxu0
      %v3072 = vadd.f32 %v2740, %v3071
      %v3073 = vpop.f32.mrb[0].mxu0
      %v3074 = vpop.f32.mrb[0].mxu0
      %v3075 = vadd.f32 %v2740, %v3074
      %v3076 = vpop.f32.mrb[0].mxu0
      %3077 = vmatprep.mubr.bf16.mxu0 0
      %3078 = vmatmul.mubr.bf16.gmra.mrb[0].mxu0 %v2799
      %v3079 = vpop.f32.mrb[0].mxu0
      %v3080 = vadd.f32 %v2740, %v3079
      %v3081 = vpop.f32.mrb[0].mxu0
      %v3082 = vpop.f32.mrb[0].mxu0
      %v3083 = vadd.f32 %v2740, %v3082
      %v3084 = vpop.f32.mrb[0].mxu0
      %3085 = vmatprep.mubr.bf16.mxu0 0
      %3086 = vmatmul.mubr.bf16.gmra.mrb[0].mxu0 %v2802
      %v3087 = vpop.f32.mrb[0].mxu0
      %v3088 = vadd.f32 %v2740, %v3087
      %v3089 = vpop.f32.mrb[0].mxu0
      %v3090 = vpop.f32.mrb[0].mxu0
      %v3091 = vadd.f32 %v2740, %v3090
      %v3092 = vpop.f32.mrb[0].mxu0
      %3093 = vmatprep.mubr.bf16.mxu0 0
      %3094 = vmatmul.mubr.bf16.gmra.mrb[0].mxu0 %v2805
      %v3095 = vpop.f32.mrb[0].mxu0
      %v3096 = vadd.f32 %v2740, %v3095
      %v3097 = vpop.f32.mrb[0].mxu0
      %v3098 = vpop.f32.mrb[0].mxu0
      %v3099 = vadd.f32 %v2740, %v3098
      %v3100 = vpop.f32.mrb[0].mxu0
      %3101 = vmatprep.mubr.bf16.mxu0 0
      %3102 = vmatmul.mubr.bf16.gmra.mrb[0].mxu0 %v2808
      %v3103 = vpop.f32.mrb[0].mxu0
      %v3104 = vadd.f32 %v2740, %v3103
      %v3105 = vpop.f32.mrb[0].mxu0
      %v3106 = vpop.f32.mrb[0].mxu0
      %v3107 = vadd.f32 %v2740, %v3106
      %v3108 = vpop.f32.mrb[0].mxu0
      %3109 = vmatprep.mubr.bf16.mxu0 0
      %3110 = vmatmul.mubr.bf16.gmra.mrb[0].mxu0 %v2811
      %v3111 = vpop.f32.mrb[0].mxu0
      %v3112 = vadd.f32 %v2740, %v3111
      %v3113 = vpop.f32.mrb[0].mxu0
      %v3114 = vpop.f32.mrb[0].mxu0
      %v3115 = vadd.f32 %v2740, %v3114
      %v3116 = vpop.f32.mrb[0].mxu0
      %3117 = vmatprep.mubr.bf16.mxu0 0
      %3118 = vmatmul.mubr.bf16.gmra.mrb[0].mxu0 %v2814
      %v3119 = vpop.f32.mrb[0].mxu0
      %v3120 = vadd.f32 %v2740, %v3119
      %v3121 = vpop.f32.mrb[0].mxu0
      %v3122 = vpop.f32.mrb[0].mxu0
      %v3123 = vadd.f32 %v2740, %v3122
      %v3124 = vpop.f32.mrb[0].mxu0
      %3125 = vmatprep.mubr.bf16.mxu0 0
      %3126 = vmatmul.mubr.bf16.gmra.mrb[0].mxu0 %v2817
      %v3127 = vpop.f32.mrb[0].mxu0
      %v3128 = vadd.f32 %v2740, %v3127
      %v3129 = vpop.f32.mrb[0].mxu0
      %v3130 = vpop.f32.mrb[0].mxu0
      %v3131 = vadd.f32 %v2740, %v3130
      %v3132 = vpop.f32.mrb[0].mxu0
      %3133 = vmatprep.mubr.bf16.mxu0 0
      %3134 = vmatmul.mubr.bf16.gmra.mrb[0].mxu0 %v2820
      %v3135 = vpop.f32.mrb[0].mxu0
      %v3136 = vadd.f32 %v2740, %v3135
      %v3137 = vpop.f32.mrb[0].mxu0
      %v3138 = vpop.f32.mrb[0].mxu0
      %v3139 = vadd.f32 %v2740, %v3138
      %v3140 = vpop.f32.mrb[0].mxu0
      %3141 = vmatprep.mubr.bf16.mxu0 0
      %3142 = vmatmul.mubr.bf16.gmra.mrb[0].mxu0 %v2823
      %v3143 = vpop.f32.mrb[0].mxu0
      %v3144 = vadd.f32 %v2740, %v3143
      %v3145 = vpop.f32.mrb[0].mxu0
      %v3146 = vpop.f32.mrb[0].mxu0
      %v3147 = vadd.f32 %v2740, %v3146
      %v3148 = vpop.f32.mrb[0].mxu0
      %3149 = vmatprep.mubr.bf16.mxu0 0
      %3150 = vmatmul.mubr.bf16.gmra.mrb[0].mxu0 %v2826
      %v3151 = vpop.f32.mrb[0].mxu0
      %v3152 = vadd.f32 %v2740, %v3151
      %v3153 = vpop.f32.mrb[0].mxu0
      %v3154 = vpop.f32.mrb[0].mxu0
      %v3155 = vadd.f32 %v2740, %v3154
      %v3156 = vpop.f32.mrb[0].mxu0
      %3157 = vmatprep.mubr.bf16.mxu0 0
      %3158 = vmatmul.mubr.bf16.gmra.mrb[0].mxu0 %v2829
      %v3159 = vpop.f32.mrb[0].mxu0
      %v3160 = vadd.f32 %v2740, %v3159
      %v3161 = vpop.f32.mrb[0].mxu0
      %v3162 = vpop.f32.mrb[0].mxu0
      %v3163 = vadd.f32 %v2740, %v3162
      %v3164 = vpop.f32.mrb[0].mxu0
      %3165 = vmatprep.mubr.bf16.mxu0 0
      %3166 = vmatmul.mubr.bf16.gmra.mrb[0].mxu0 %v2832
      %v3167 = vpop.f32.mrb[0].mxu0
      %v3168 = vadd.f32 %v2740, %v3167
      %v3169 = vpop.f32.mrb[0].mxu0
      %v3170 = vpop.f32.mrb[0].mxu0
      %v3171 = vadd.f32 %v2740, %v3170
      %v3172 = vpop.f32.mrb[0].mxu0
      %3173 = vmatprep.mubr.bf16.mxu0 0
      %3174 = vmatmul.mubr.bf16.gmra.mrb[0].mxu0 %v2835
      %v3175 = vpop.f32.mrb[0].mxu0
      %v3176 = vadd.f32 %v2740, %v3175
      %v3177 = vpop.f32.mrb[0].mxu0
      %v3178 = vpop.f32.mrb[0].mxu0
      %v3179 = vadd.f32 %v2740, %v3178
      %v3180 = vpop.f32.mrb[0].mxu0
      %3181 = vmatprep.mubr.bf16.mxu0 0
      %3182 = vmatmul.mubr.bf16.gmra.mrb[0].mxu0 %v2838
      %v3183 = vpop.f32.mrb[0].mxu0
      %v3184 = vadd.f32 %v2740, %v3183
      %v3185 = vpop.f32.mrb[0].mxu0
      %v3186 = vpop.f32.mrb[0].mxu0
      %v3187 = vadd.f32 %v2740, %v3186
      %v3188 = vpop.f32.mrb[0].mxu0
      %3189 = vmatprep.mubr.bf16.mxu0 0
      %3190 = vmatmul.mubr.bf16.gmra.mrb[0].mxu0 %v2841
      %v3191 = vpop.f32.mrb[0].mxu0
      %v3192 = vadd.f32 %v2740, %v3191
      %v3193 = vpop.f32.mrb[0].mxu0
      %v3194 = vpop.f32.mrb[0].mxu0
      %v3195 = vadd.f32 %v2740, %v3194
      %v3196 = vpop.f32.mrb[0].mxu0
      %3197 = vmatprep.mubr.bf16.mxu0 0
      %3198 = vmatmul.mubr.bf16.gmra.mrb[0].mxu0 %v2844
      %v3199 = vpop.f32.mrb[0].mxu0
      %v3200 = vadd.f32 %v2740, %v3199
      %v3201 = vpop.f32.mrb[0].mxu0
      %v3202 = vpop.f32.mrb[0].mxu0
      %v3203 = vadd.f32 %v2740, %v3202
      %v3204 = vpop.f32.mrb[0].mxu0
      %3205 = vmatprep.mubr.bf16.mxu0 0
      %3206 = vmatmul.mubr.bf16.gmra.mrb[0].mxu0 %v2847
      %v3207 = vpop.f32.mrb[0].mxu0
      %v3208 = vadd.f32 %v2740, %v3207
      %v3209 = vpop.f32.mrb[0].mxu0
      %v3210 = vpop.f32.mrb[0].mxu0
      %v3211 = vadd.f32 %v2740, %v3210
      %v3212 = vpop.f32.mrb[0].mxu0
      %3213 = vmatprep.mubr.bf16.mxu0 0
      %3214 = vmatmul.mubr.bf16.gmra.mrb[0].mxu0 %v2850
      %v3215 = vpop.f32.mrb[0].mxu0
      %v3216 = vadd.f32 %v2740, %v3215
      %v3217 = vpop.f32.mrb[0].mxu0
      %v3218 = vpop.f32.mrb[0].mxu0
      %v3219 = vadd.f32 %v2740, %v3218
      %v3220 = vpop.f32.mrb[0].mxu0
      %3221 = vmatprep.mubr.bf16.mxu0 0
      %3222 = vmatmul.mubr.bf16.gmra.mrb[0].mxu0 %v2853
      %v3223 = vpop.f32.mrb[0].mxu0
      %v3224 = vadd.f32 %v2740, %v3223
      %v3225 = vpop.f32.mrb[0].mxu0
      %v3226 = vpop.f32.mrb[0].mxu0
      %v3227 = vadd.f32 %v2740, %v3226
      %v3228 = vpop.f32.mrb[0].mxu0
      %3229 = vmatprep.mubr.bf16.mxu0 0
      %3230 = vmatmul.mubr.bf16.gmra.mrb[0].mxu0 %v2856
      %v3231 = vpop.f32.mrb[0].mxu0
      %v3232 = vadd.f32 %v2740, %v3231
      %v3233 = vpop.f32.mrb[0].mxu0
      %v3234 = vpop.f32.mrb[0].mxu0
      %v3235 = vadd.f32 %v2740, %v3234
      %v3236 = vpop.f32.mrb[0].mxu0
      %3237 = vmatprep.mubr.bf16.mxu0 0
      %3238 = vmatmul.mubr.bf16.gmra.mrb[0].mxu0 %v2859
      %v3239 = vpop.f32.mrb[0].mxu0
      %v3240 = vadd.f32 %v2740, %v3239
      %v3241 = vpop.f32.mrb[0].mxu0
      %v3242 = vpop.f32.mrb[0].mxu0
      %v3243 = vadd.f32 %v2740, %v3242
      %v3244 = vpop.f32.mrb[0].mxu0
      %3245 = vmatprep.mubr.bf16.mxu0 0
      %3246 = vmatmul.mubr.bf16.gmra.mrb[0].mxu0 %v2862
      %v3247 = vpop.f32.mrb[0].mxu0
      %v3248 = vadd.f32 %v2740, %v3247
      %v3249 = vpop.f32.mrb[0].mxu0
      %v3250 = vpop.f32.mrb[0].mxu0
      %v3251 = vadd.f32 %v2740, %v3250
      %v3252 = vpop.f32.mrb[0].mxu0
      %3253 = vmatprep.mubr.bf16.mxu0 0
      %3254 = vmatmul.mubr.bf16.gmra.mrb[0].mxu0 %v2865
      %v3255 = vpop.f32.mrb[0].mxu0
      %v3256 = vadd.f32 %v2740, %v3255
      %v3257 = vpop.f32.mrb[0].mxu0
      %v3258 = vpop.f32.mrb[0].mxu0
      %v3259 = vadd.f32 %v2740, %v3258
      %v3260 = vpop.f32.mrb[0].mxu0
      %3261 = vmatprep.mubr.bf16.mxu0 0
      %3262 = vmatmul.mubr.bf16.gmra.mrb[0].mxu0 %v2868
      %v3263 = vpop.f32.mrb[0].mxu0
      %v3264 = vadd.f32 %v2740, %v3263
      %v3265 = vpop.f32.mrb[0].mxu0
      %v3266 = vpop.f32.mrb[0].mxu0
      %v3267 = vadd.f32 %v2740, %v3266
      %v3268 = vpop.f32.mrb[0].mxu0
      %3269 = vmatprep.mubr.bf16.mxu0 0
      %3270 = vmatmul.mubr.bf16.gmra.mrb[0].mxu0 %v2871
      %v3271 = vpop.f32.mrb[0].mxu0
      %v3272 = vadd.f32 %v2740, %v3271
      %v3273 = vpop.f32.mrb[0].mxu0
      %v3274 = vpop.f32.mrb[0].mxu0
      %v3275 = vadd.f32 %v2740, %v3274
      %v3276 = vpop.f32.mrb[0].mxu0
      %3277 = vmatprep.mubr.bf16.mxu0 0
      %3278 = vmatmul.mubr.bf16.gmra.mrb[0].mxu0 %v2874
      %v3279 = vpop.f32.mrb[0].mxu0
      %v3280 = vadd.f32 %v2740, %v3279
      %v3281 = vpop.f32.mrb[0].mxu0
      %v3282 = vpop.f32.mrb[0].mxu0
      %v3283 = vadd.f32 %v2740, %v3282
      %v3284 = vpop.f32.mrb[0].mxu0
      %3285 = vmatprep.mubr.bf16.mxu0 0
      %3286 = vmatmul.mubr.bf16.gmra.mrb[0].mxu0 %v2877
      %v3287 = vpop.f32.mrb[0].mxu0
      %v3288 = vadd.f32 %v2740, %v3287
      %v3289 = vpop.f32.mrb[0].mxu0
      %v3290 = vpop.f32.mrb[0].mxu0
      %v3291 = vadd.f32 %v2740, %v3290
      %v3292 = vpop.f32.mrb[0].mxu0
      %3293 = vmatprep.mubr.bf16.mxu0 0
      %3294 = vmatmul.mubr.bf16.gmra.mrb[0].mxu0 %v2880
      %v3295 = vpop.f32.mrb[0].mxu0
      %v3296 = vadd.f32 %v2740, %v3295
      %v3297 = vpop.f32.mrb[0].mxu0
      %v3298 = vpop.f32.mrb[0].mxu0
      %v3299 = vadd.f32 %v2740, %v3298
      %v3300 = vpop.f32.mrb[0].mxu0
      %3301 = vmatprep.mubr.bf16.mxu0 0
      %3302 = vmatmul.mubr.bf16.gmra.mrb[0].mxu0 %v2883
      %v3303 = vpop.f32.mrb[0].mxu0
      %v3304 = vadd.f32 %v2740, %v3303
      %v3305 = vpop.f32.mrb[0].mxu0
      %v3306 = vpop.f32.mrb[0].mxu0
      %v3307 = vadd.f32 %v2740, %v3306
      %v3308 = vpop.f32.mrb[0].mxu0
      %3309 = vmatprep.mubr.bf16.mxu0 0
      %3310 = vmatmul.mubr.bf16.gmra.mrb[0].mxu0 %v2886
      %v3311 = vpop.f32.mrb[0].mxu0
      %v3312 = vadd.f32 %v2740, %v3311
      %v3313 = vpop.f32.mrb[0].mxu0
      %v3314 = vpop.f32.mrb[0].mxu0
      %v3315 = vadd.f32 %v2740, %v3314
      %v3316 = vpop.f32.mrb[0].mxu0
      %3317 = vmatprep.mubr.bf16.mxu0 0
      %3318 = vmatmul.mubr.bf16.gmra.mrb[0].mxu0 %v2889
      %v3319 = vpop.f32.mrb[0].mxu0
      %v3320 = vadd.f32 %v2740, %v3319
      %v3321 = vpop.f32.mrb[0].mxu0
      %v3322 = vpop.f32.mrb[0].mxu0
      %v3323 = vadd.f32 %v2740, %v3322
      %v3324 = vpop.f32.mrb[0].mxu0
      %3325 = vmatprep.mubr.bf16.mxu0 0
      %3326 = vmatmul.mubr.bf16.gmra.mrb[0].mxu0 %v2892
      %v3327 = vpop.f32.mrb[0].mxu0
      %v3328 = vadd.f32 %v2740, %v3327
      %v3329 = vpop.f32.mrb[0].mxu0
      %v3330 = vpop.f32.mrb[0].mxu0
      %v3331 = vadd.f32 %v2740, %v3330
      %v3332 = vpop.f32.mrb[0].mxu0
      %3333 = vmatprep.mubr.bf16.mxu0 0
      %3334 = vmatmul.mubr.bf16.gmra.mrb[0].mxu0 %v2895
      %v3335 = vpop.f32.mrb[0].mxu0
      %v3336 = vadd.f32 %v2740, %v3335
      %v3337 = vpop.f32.mrb[0].mxu0
      %v3338 = vpop.f32.mrb[0].mxu0
      %v3339 = vadd.f32 %v2740, %v3338
      %v3340 = vpop.f32.mrb[0].mxu0
      %3341 = vmatprep.mubr.bf16.mxu0 0
      %3342 = vmatmul.mubr.bf16.gmra.mrb[0].mxu0 %v2898
      %v3343 = vpop.f32.mrb[0].mxu0
      %v3344 = vadd.f32 %v2740, %v3343
      %v3345 = vpop.f32.mrb[0].mxu0
      %v3346 = vpop.f32.mrb[0].mxu0
      %v3347 = vadd.f32 %v2740, %v3346
      %v3348 = vpop.f32.mrb[0].mxu0
      %3349 = vmatprep.mubr.bf16.mxu0 0
      %3350 = vmatmul.mubr.bf16.gmra.mrb[0].mxu0 %v2901
      %v3351 = vpop.f32.mrb[0].mxu0
      %v3352 = vadd.f32 %v2740, %v3351
      %v3353 = vpop.f32.mrb[0].mxu0
      %v3354 = vpop.f32.mrb[0].mxu0
      %v3355 = vadd.f32 %v2740, %v3354
      %v3356 = vpop.f32.mrb[0].mxu0
      %3357 = vmatprep.mubr.bf16.mxu0 0
      %3358 = vmatmul.mubr.bf16.gmra.mrb[0].mxu0 %v2904
      %v3359 = vpop.f32.mrb[0].mxu0
      %v3360 = vadd.f32 %v2740, %v3359
      %v3361 = vpop.f32.mrb[0].mxu0
      %v3362 = vpop.f32.mrb[0].mxu0
      %v3363 = vadd.f32 %v2740, %v3362
      %v3364 = vpop.f32.mrb[0].mxu0
      %3365 = vmatprep.mubr.bf16.mxu0 0
      %3366 = vmatmul.mubr.bf16.gmra.mrb[0].mxu0 %v2907
      %v3367 = vpop.f32.mrb[0].mxu0
      %v3368 = vadd.f32 %v2740, %v3367
      %v3369 = vpop.f32.mrb[0].mxu0
      %v3370 = vpop.f32.mrb[0].mxu0
      %v3371 = vadd.f32 %v2740, %v3370
      %v3372 = vpop.f32.mrb[0].mxu0
      %3373 = vmatprep.mubr.bf16.mxu0 0
      %3374 = vmatmul.mubr.bf16.gmra.mrb[0].mxu0 %v2910
      %v3375 = vpop.f32.mrb[0].mxu0
      %v3376 = vadd.f32 %v2740, %v3375
      %v3377 = vpop.f32.mrb[0].mxu0
      %v3378 = vpop.f32.mrb[0].mxu0
      %v3379 = vadd.f32 %v2740, %v3378
      %v3380 = vpop.f32.mrb[0].mxu0
      %3381 = vmatprep.mubr.bf16.mxu0 0
      %3382 = vmatmul.mubr.bf16.gmra.mrb[0].mxu0 %v2913
      %v3383 = vpop.f32.mrb[0].mxu0
      %v3384 = vadd.f32 %v2740, %v3383
      %v3385 = vpop.f32.mrb[0].mxu0
      %v3386 = vpop.f32.mrb[0].mxu0
      %v3387 = vadd.f32 %v2740, %v3386
      %v3388 = vpop.f32.mrb[0].mxu0
      %3389 = vmatprep.mubr.bf16.mxu0 0
      %3390 = vmatmul.mubr.bf16.gmra.mrb[0].mxu0 %v2916
      %v3391 = vpop.f32.mrb[0].mxu0
      %v3392 = vadd.f32 %v2740, %v3391
      %v3393 = vpop.f32.mrb[0].mxu0
      %v3394 = vpop.f32.mrb[0].mxu0
      %v3395 = vadd.f32 %v2740, %v3394
      %v3396 = vpop.f32.mrb[0].mxu0
      %3397 = vmatprep.mubr.bf16.mxu0 0
      %3398 = vmatmul.mubr.bf16.gmra.mrb[0].mxu0 %v2919
      %v3399 = vpop.f32.mrb[0].mxu0
      %v3400 = vadd.f32 %v2740, %v3399
      %v3401 = vpop.f32.mrb[0].mxu0
      %v3402 = vpop.f32.mrb[0].mxu0
      %v3403 = vadd.f32 %v2740, %v3402
      %v3404 = vpop.f32.mrb[0].mxu0
      %3405 = vmatprep.mubr.bf16.mxu0 0
      %3406 = vmatmul.mubr.bf16.gmra.mrb[0].mxu0 %v2922
      %v3407 = vpop.f32.mrb[0].mxu0
      %v3408 = vadd.f32 %v2740, %v3407
      %v3409 = vpop.f32.mrb[0].mxu0
      %v3410 = vpop.f32.mrb[0].mxu0
      %v3411 = vadd.f32 %v2740, %v3410
      %v3412 = vpop.f32.mrb[0].mxu0
      %3413 = vmatprep.mubr.bf16.mxu0 0
      %3414 = vmatmul.mubr.bf16.gmra.mrb[0].mxu0 %v2925
      %v3415 = vpop.f32.mrb[0].mxu0
      %v3416 = vadd.f32 %v2740, %v3415
      %v3417 = vpop.f32.mrb[0].mxu0
      %v3418 = vpop.f32.mrb[0].mxu0
      %v3419 = vadd.f32 %v2740, %v3418
      %v3420 = vpop.f32.mrb[0].mxu0
      %3421 = vmatprep.mubr.bf16.mxu0 0
      %3422 = vmatmul.mubr.bf16.gmra.mrb[0].mxu0 %v2928
      %v3423 = vpop.f32.mrb[0].mxu0
      %v3424 = vadd.f32 %v2740, %v3423
      %v3425 = vpop.f32.mrb[0].mxu0
      %v3426 = vpop.f32.mrb[0].mxu0
      %v3427 = vadd.f32 %v2740, %v3426
      %v3428 = vpop.f32.mrb[0].mxu0
      %3429 = vmatprep.mubr.bf16.mxu0 0
      %3430 = vmatmul.mubr.bf16.gmra.mrb[0].mxu0 %v2931
      %v3431 = vpop.f32.mrb[0].mxu0
      %v3432 = vadd.f32 %v2740, %v3431
      %v3433 = vpop.f32.mrb[0].mxu0
      %v3434 = vpop.f32.mrb[0].mxu0
      %v3435 = vadd.f32 %v2740, %v3434
      %v3436 = vpop.f32.mrb[0].mxu0
      %3437 = vmatprep.mubr.bf16.mxu0 0
      %3438 = vmatmul.mubr.bf16.gmra.mrb[0].mxu0 %v2934
      %v3439 = vpop.f32.mrb[0].mxu0
      %v3440 = vadd.f32 %v2740, %v3439
      %v3441 = vpop.f32.mrb[0].mxu0
      %v3442 = vpop.f32.mrb[0].mxu0
      %v3443 = vadd.f32 %v2740, %v3442
      %v3444 = vpop.f32.mrb[0].mxu0
      %3445 = vmatprep.mubr.bf16.mxu0 0
      %3446 = vmatmul.mubr.bf16.gmra.mrb[0].mxu0 %v2937
      %v3447 = vpop.f32.mrb[0].mxu0
      %v3448 = vadd.f32 %v2740, %v3447
      %v3449 = vpop.f32.mrb[0].mxu0
      %v3450 = vpop.f32.mrb[0].mxu0
      %v3451 = vadd.f32 %v2740, %v3450
      %v3452 = vpop.f32.mrb[0].mxu0
      %3453 = vmatprep.mubr.bf16.mxu0 0
      %3454 = vmatmul.mubr.bf16.gmra.mrb[0].mxu0 %v2940
      %v3455 = vpop.f32.mrb[0].mxu0
      %v3456 = vadd.f32 %v2740, %v3455
      %v3457 = vpop.f32.mrb[0].mxu0
      %v3458 = vpop.f32.mrb[0].mxu0
      %v3459 = vadd.f32 %v2740, %v3458
      %v3460 = vpop.f32.mrb[0].mxu0
      %3461 = vmatprep.mubr.bf16.mxu0 0
      %3462 = vmatmul.mubr.bf16.gmra.mrb[0].mxu0 %v2943
      %v3463 = vpop.f32.mrb[0].mxu0
      %v3464 = vadd.f32 %v2740, %v3463
      %v3465 = vpop.f32.mrb[0].mxu0
      %v3466 = vpop.f32.mrb[0].mxu0
      %v3467 = vadd.f32 %v2740, %v3466
      %v3468 = vpop.f32.mrb[0].mxu0
      %3469 = vmatprep.mubr.bf16.mxu0 0
      %3470 = vmatmul.mubr.bf16.gmra.mrb[0].mxu0 %v2946
      %v3471 = vpop.f32.mrb[0].mxu0
      %v3472 = vadd.f32 %v2740, %v3471
      %v3473 = vpop.f32.mrb[0].mxu0
      %v3474 = vpop.f32.mrb[0].mxu0
      %v3475 = vadd.f32 %v2740, %v3474
      %v3476 = vpop.f32.mrb[0].mxu0
      %3477 = vmatprep.mubr.bf16.mxu0 0
      %3478 = vmatmul.mubr.bf16.gmra.mrb[0].mxu0 %v2949
      %v3479 = vpop.f32.mrb[0].mxu0
      %v3480 = vadd.f32 %v2740, %v3479
      %v3481 = vpop.f32.mrb[0].mxu0
      %v3482 = vpop.f32.mrb[0].mxu0
      %v3483 = vadd.f32 %v2740, %v3482
      %v3484 = vpop.f32.mrb[0].mxu0
      %3485 = vmatprep.mubr.bf16.mxu0 0
      %3486 = vmatmul.mubr.bf16.gmra.mrb[0].mxu0 %v2952
      %v3487 = vpop.f32.mrb[0].mxu0
      %v3488 = vadd.f32 %v2740, %v3487
      %v3489 = vpop.f32.mrb[0].mxu0
      %v3490 = vpop.f32.mrb[0].mxu0
      %v3491 = vadd.f32 %v2740, %v3490
      %v3492 = vpop.f32.mrb[0].mxu0
      %3493 = vmatprep.mubr.bf16.mxu0 0
      %3494 = vmatmul.mubr.bf16.gmra.mrb[0].mxu0 %v2955
      %v3495 = vpop.f32.mrb[0].mxu0
      %v3496 = vadd.f32 %v2740, %v3495
      %v3497 = vpop.f32.mrb[0].mxu0
      %v3498 = vpop.f32.mrb[0].mxu0
      %v3499 = vadd.f32 %v2740, %v3498
      %v3500 = vpop.f32.mrb[0].mxu0
      %3501 = vdwg.mxu0
      %v3502 = vmax.f32 %v2992, 0.0
      %v3503 = vmax.f32 %v2995, 0.0
      %v3504 = vmax.f32 %v3000, 0.0
      %v3505 = vmax.f32 %v3003, 0.0
      %v3506 = vmax.f32 %v3008, 0.0
      %v3507 = vmax.f32 %v3011, 0.0
      %v3508 = vmax.f32 %v3016, 0.0
      %v3509 = vmax.f32 %v3019, 0.0
      %v3510 = vmax.f32 %v3024, 0.0
      %v3511 = vmax.f32 %v3027, 0.0
      %v3512 = vmax.f32 %v3032, 0.0
      %v3513 = vmax.f32 %v3035, 0.0
      %v3514 = vmax.f32 %v3040, 0.0
      %v3515 = vmax.f32 %v3043, 0.0
      %v3516 = vmax.f32 %v3048, 0.0
      %v3517 = vmax.f32 %v3051, 0.0
      %v3518 = vmax.f32 %v3056, 0.0
      %v3519 = vmax.f32 %v3059, 0.0
      %v3520 = vmax.f32 %v3064, 0.0
      %v3521 = vmax.f32 %v3067, 0.0
      %v3522 = vmax.f32 %v3072, 0.0
      %v3523 = vmax.f32 %v3075, 0.0
      %v3524 = vmax.f32 %v3080, 0.0
      %v3525 = vmax.f32 %v3083, 0.0
      %v3526 = vmax.f32 %v3088, 0.0
      %v3527 = vmax.f32 %v3091, 0.0
      %v3528 = vmax.f32 %v3096, 0.0
      %v3529 = vmax.f32 %v3099, 0.0
      %v3530 = vmax.f32 %v3104, 0.0
      %v3531 = vmax.f32 %v3107, 0.0
      %v3532 = vmax.f32 %v3112, 0.0
      %v3533 = vmax.f32 %v3115, 0.0
      %v3534 = vmax.f32 %v3120, 0.0
      %v3535 = vmax.f32 %v3123, 0.0
      %v3536 = vmax.f32 %v3128, 0.0
      %v3537 = vmax.f32 %v3131, 0.0
      %v3538 = vmax.f32 %v3136, 0.0
      %v3539 = vmax.f32 %v3139, 0.0
      %v3540 = vmax.f32 %v3144, 0.0
      %v3541 = vmax.f32 %v3147, 0.0
      %v3542 = vmax.f32 %v3152, 0.0
      %v3543 = vmax.f32 %v3155, 0.0
      %v3544 = vmax.f32 %v3160, 0.0
      %v3545 = vmax.f32 %v3163, 0.0
      %v3546 = vmax.f32 %v3168, 0.0
      %v3547 = vmax.f32 %v3171, 0.0
      %v3548 = vmax.f32 %v3176, 0.0
      %v3549 = vmax.f32 %v3179, 0.0
      %v3550 = vmax.f32 %v3184, 0.0
      %v3551 = vmax.f32 %v3187, 0.0
      %v3552 = vmax.f32 %v3192, 0.0
      %v3553 = vmax.f32 %v3195, 0.0
      %v3554 = vmax.f32 %v3200, 0.0
      %v3555 = vmax.f32 %v3203, 0.0
      %v3556 = vmax.f32 %v3208, 0.0
      %v3557 = vmax.f32 %v3211, 0.0
      %v3558 = vmax.f32 %v3216, 0.0
      %v3559 = vmax.f32 %v3219, 0.0
      %v3560 = vmax.f32 %v3224, 0.0
      %v3561 = vmax.f32 %v3227, 0.0
      %v3562 = vmax.f32 %v3232, 0.0
      %v3563 = vmax.f32 %v3235, 0.0
      %v3564 = vmax.f32 %v3240, 0.0
      %v3565 = vmax.f32 %v3243, 0.0
      %v3566 = vmax.f32 %v3248, 0.0
      %v3567 = vmax.f32 %v3251, 0.0
      %v3568 = vmax.f32 %v3256, 0.0
      %v3569 = vmax.f32 %v3259, 0.0
      %v3570 = vmax.f32 %v3264, 0.0
      %v3571 = vmax.f32 %v3267, 0.0
      %v3572 = vmax.f32 %v3272, 0.0
      %v3573 = vmax.f32 %v3275, 0.0
      %v3574 = vmax.f32 %v3280, 0.0
      %v3575 = vmax.f32 %v3283, 0.0
      %v3576 = vmax.f32 %v3288, 0.0
      %v3577 = vmax.f32 %v3291, 0.0
      %v3578 = vmax.f32 %v3296, 0.0
      %v3579 = vmax.f32 %v3299, 0.0
      %v3580 = vmax.f32 %v3304, 0.0
      %v3581 = vmax.f32 %v3307, 0.0
      %v3582 = vmax.f32 %v3312, 0.0
      %v3583 = vmax.f32 %v3315, 0.0
      %v3584 = vmax.f32 %v3320, 0.0
      %v3585 = vmax.f32 %v3323, 0.0
      %v3586 = vmax.f32 %v3328, 0.0
      %v3587 = vmax.f32 %v3331, 0.0
      %v3588 = vmax.f32 %v3336, 0.0
      %v3589 = vmax.f32 %v3339, 0.0
      %v3590 = vmax.f32 %v3344, 0.0
      %v3591 = vmax.f32 %v3347, 0.0
      %v3592 = vmax.f32 %v3352, 0.0
      %v3593 = vmax.f32 %v3355, 0.0
      %v3594 = vmax.f32 %v3360, 0.0
      %v3595 = vmax.f32 %v3363, 0.0
      %v3596 = vmax.f32 %v3368, 0.0
      %v3597 = vmax.f32 %v3371, 0.0
      %v3598 = vmax.f32 %v3376, 0.0
      %v3599 = vmax.f32 %v3379, 0.0
      %v3600 = vmax.f32 %v3384, 0.0
      %v3601 = vmax.f32 %v3387, 0.0
      %v3602 = vmax.f32 %v3392, 0.0
      %v3603 = vmax.f32 %v3395, 0.0
      %v3604 = vmax.f32 %v3400, 0.0
      %v3605 = vmax.f32 %v3403, 0.0
      %v3606 = vmax.f32 %v3408, 0.0
      %v3607 = vmax.f32 %v3411, 0.0
      %v3608 = vmax.f32 %v3416, 0.0
      %v3609 = vmax.f32 %v3419, 0.0
      %v3610 = vmax.f32 %v3424, 0.0
      %v3611 = vmax.f32 %v3427, 0.0
      %v3612 = vmax.f32 %v3432, 0.0
      %v3613 = vmax.f32 %v3435, 0.0
      %v3614 = vmax.f32 %v3440, 0.0
      %v3615 = vmax.f32 %v3443, 0.0
      %v3616 = vmax.f32 %v3448, 0.0
      %v3617 = vmax.f32 %v3451, 0.0
      %v3618 = vmax.f32 %v3456, 0.0
      %v3619 = vmax.f32 %v3459, 0.0
      %v3620 = vmax.f32 %v3464, 0.0
      %v3621 = vmax.f32 %v3467, 0.0
      %v3622 = vmax.f32 %v3472, 0.0
      %v3623 = vmax.f32 %v3475, 0.0
      %v3624 = vmax.f32 %v3480, 0.0
      %v3625 = vmax.f32 %v3483, 0.0
      %v3626 = vmax.f32 %v3488, 0.0
      %v3627 = vmax.f32 %v3491, 0.0
      %v3628 = vmax.f32 %v3496, 0.0
      %v3629 = vmax.f32 %v3499, 0.0
      %s3630 = scalar_lea.vmem %s2, 64
      %v3631 = vld [vmem:[%s3630] sm:$0xf]
      %v3632 = vld [vmem:[%s3630 + $0x4] sm:$0xf]
      %v3633 = vld [vmem:[%s3630 + $0x8] sm:$0xf]
      %v3634 = vld [vmem:[%s3630 + $0xc] sm:$0xf]
      %v3635 = vld [vmem:[%s3630 + $0x10] sm:$0xf]
      %v3636 = vld [vmem:[%s3630 + $0x14] sm:$0xf]
      %v3637 = vld [vmem:[%s3630 + $0x18] sm:$0xf]
      %v3638 = vld [vmem:[%s3630 + $0x1c] sm:$0xf]
      %v3639 = vpack.c.bf16 %v3503, %v3502
      %v3640 = vpack.c.bf16 %v3505, %v3504
      %v3641 = vpack.c.bf16 %v3507, %v3506
      %v3642 = vpack.c.bf16 %v3509, %v3508
      %v3643 = vpack.c.bf16 %v3511, %v3510
      %v3644 = vpack.c.bf16 %v3513, %v3512
      %v3645 = vpack.c.bf16 %v3515, %v3514
      %v3646 = vpack.c.bf16 %v3517, %v3516
      %v3647 = vpack.c.bf16 %v3519, %v3518
      %v3648 = vpack.c.bf16 %v3521, %v3520
      %v3649 = vpack.c.bf16 %v3523, %v3522
      %v3650 = vpack.c.bf16 %v3525, %v3524
      %v3651 = vpack.c.bf16 %v3527, %v3526
      %v3652 = vpack.c.bf16 %v3529, %v3528
      %v3653 = vpack.c.bf16 %v3531, %v3530
      %v3654 = vpack.c.bf16 %v3533, %v3532
      %v3655 = vpack.c.bf16 %v3535, %v3534
      %v3656 = vpack.c.bf16 %v3537, %v3536
      %v3657 = vpack.c.bf16 %v3539, %v3538
      %v3658 = vpack.c.bf16 %v3541, %v3540
      %v3659 = vpack.c.bf16 %v3543, %v3542
      %v3660 = vpack.c.bf16 %v3545, %v3544
      %v3661 = vpack.c.bf16 %v3547, %v3546
      %v3662 = vpack.c.bf16 %v3549, %v3548
      %v3663 = vpack.c.bf16 %v3551, %v3550
      %v3664 = vpack.c.bf16 %v3553, %v3552
      %v3665 = vpack.c.bf16 %v3555, %v3554
      %v3666 = vpack.c.bf16 %v3557, %v3556
      %v3667 = vpack.c.bf16 %v3559, %v3558
      %v3668 = vpack.c.bf16 %v3561, %v3560
      %v3669 = vpack.c.bf16 %v3563, %v3562
      %v3670 = vpack.c.bf16 %v3565, %v3564
      %v3671 = vpack.c.bf16 %v3567, %v3566
      %v3672 = vpack.c.bf16 %v3569, %v3568
      %v3673 = vpack.c.bf16 %v3571, %v3570
      %v3674 = vpack.c.bf16 %v3573, %v3572
      %v3675 = vpack.c.bf16 %v3575, %v3574
      %v3676 = vpack.c.bf16 %v3577, %v3576
      %v3677 = vpack.c.bf16 %v3579, %v3578
      %v3678 = vpack.c.bf16 %v3581, %v3580
      %v3679 = vpack.c.bf16 %v3583, %v3582
      %v3680 = vpack.c.bf16 %v3585, %v3584
      %v3681 = vpack.c.bf16 %v3587, %v3586
      %v3682 = vpack.c.bf16 %v3589, %v3588
      %v3683 = vpack.c.bf16 %v3591, %v3590
      %v3684 = vpack.c.bf16 %v3593, %v3592
      %v3685 = vpack.c.bf16 %v3595, %v3594
      %v3686 = vpack.c.bf16 %v3597, %v3596
      %v3687 = vpack.c.bf16 %v3599, %v3598
      %v3688 = vpack.c.bf16 %v3601, %v3600
      %v3689 = vpack.c.bf16 %v3603, %v3602
      %v3690 = vpack.c.bf16 %v3605, %v3604
      %v3691 = vpack.c.bf16 %v3607, %v3606
      %v3692 = vpack.c.bf16 %v3609, %v3608
      %v3693 = vpack.c.bf16 %v3611, %v3610
      %v3694 = vpack.c.bf16 %v3613, %v3612
      %v3695 = vpack.c.bf16 %v3615, %v3614
      %v3696 = vpack.c.bf16 %v3617, %v3616
      %v3697 = vpack.c.bf16 %v3619, %v3618
      %v3698 = vpack.c.bf16 %v3621, %v3620
      %v3699 = vpack.c.bf16 %v3623, %v3622
      %v3700 = vpack.c.bf16 %v3625, %v3624
      %v3701 = vpack.c.bf16 %v3627, %v3626
      %v3702 = vpack.c.bf16 %v3629, %v3628
      %v3703 = vld [vmem:[%s3 + $0x3] sm:$0x1]
      %v3704 = vlaneseq
      %v3705 = vshrl.u32 %v3704, 7
      %v3706 = vsub.s32 0, %v3705
      %v3707 = vrot.slane %v3703, %v3706
      %v3716 = vunpack.c.l.b16 %v3631
      %v3717 = vunpack.c.l.b16 %v3632
      %v3718 = vunpack.c.l.b16 %v3633
      %v3719 = vunpack.c.l.b16 %v3634
      %v3720 = vunpack.c.l.b16 %v3635
      %v3721 = vunpack.c.l.b16 %v3636
      %v3722 = vunpack.c.l.b16 %v3637
      %v3723 = vunpack.c.l.b16 %v3638
      %v3724 = vpack.c.b16 %v3717, %v3716
      %v3725 = vpack.c.b16 %v3719, %v3718
      %v3726 = vpack.c.b16 %v3721, %v3720
      %v3727 = vpack.c.b16 %v3723, %v3722
      %v3733 = vsel %vm1797, %v3639, 0
      %v3736 = vsel %vm1797, %v3640, 0
      %v3739 = vsel %vm1797, %v3641, 0
      %v3742 = vsel %vm1797, %v3642, 0
      %v3745 = vsel %vm1797, %v3643, 0
      %v3748 = vsel %vm1797, %v3644, 0
      %v3751 = vsel %vm1797, %v3645, 0
      %v3754 = vsel %vm1797, %v3646, 0
      %v3757 = vsel %vm1797, %v3647, 0
      %v3760 = vsel %vm1797, %v3648, 0
      %v3763 = vsel %vm1797, %v3649, 0
      %v3766 = vsel %vm1797, %v3650, 0
      %v3769 = vsel %vm1797, %v3651, 0
      %v3772 = vsel %vm1797, %v3652, 0
      %v3775 = vsel %vm1797, %v3653, 0
      %v3778 = vsel %vm1797, %v3654, 0
      %v3781 = vsel %vm1797, %v3655, 0
      %v3784 = vsel %vm1797, %v3656, 0
      %v3787 = vsel %vm1797, %v3657, 0
      %v3790 = vsel %vm1797, %v3658, 0
      %v3793 = vsel %vm1797, %v3659, 0
      %v3796 = vsel %vm1797, %v3660, 0
      %v3799 = vsel %vm1797, %v3661, 0
      %v3802 = vsel %vm1797, %v3662, 0
      %v3805 = vsel %vm1797, %v3663, 0
      %v3808 = vsel %vm1797, %v3664, 0
      %v3811 = vsel %vm1797, %v3665, 0
      %v3814 = vsel %vm1797, %v3666, 0
      %v3817 = vsel %vm1797, %v3667, 0
      %v3820 = vsel %vm1797, %v3668, 0
      %v3823 = vsel %vm1797, %v3669, 0
      %v3826 = vsel %vm1797, %v3670, 0
      %v3829 = vsel %vm1797, %v3671, 0
      %v3832 = vsel %vm1797, %v3672, 0
      %v3835 = vsel %vm1797, %v3673, 0
      %v3838 = vsel %vm1797, %v3674, 0
      %v3841 = vsel %vm1797, %v3675, 0
      %v3844 = vsel %vm1797, %v3676, 0
      %v3847 = vsel %vm1797, %v3677, 0
      %v3850 = vsel %vm1797, %v3678, 0
      %v3853 = vsel %vm1797, %v3679, 0
      %v3856 = vsel %vm1797, %v3680, 0
      %v3859 = vsel %vm1797, %v3681, 0
      %v3862 = vsel %vm1797, %v3682, 0
      %v3865 = vsel %vm1797, %v3683, 0
      %v3868 = vsel %vm1797, %v3684, 0
      %v3871 = vsel %vm1797, %v3685, 0
      %v3874 = vsel %vm1797, %v3686, 0
      %v3877 = vsel %vm1797, %v3687, 0
      %v3880 = vsel %vm1797, %v3688, 0
      %v3883 = vsel %vm1797, %v3689, 0
      %v3886 = vsel %vm1797, %v3690, 0
      %v3889 = vsel %vm1797, %v3691, 0
      %v3892 = vsel %vm1797, %v3692, 0
      %v3895 = vsel %vm1797, %v3693, 0
      %v3898 = vsel %vm1797, %v3694, 0
      %v3901 = vsel %vm1797, %v3695, 0
      %v3904 = vsel %vm1797, %v3696, 0
      %v3907 = vsel %vm1797, %v3697, 0
      %v3910 = vsel %vm1797, %v3698, 0
      %v3913 = vsel %vm1797, %v3699, 0
      %v3916 = vsel %vm1797, %v3700, 0
      %v3919 = vsel %vm1797, %v3701, 0
      %v3922 = vsel %vm1797, %v3702, 0
      %3924 = vmatprep.subr.bf16.mxu0 0
      %3925 = vmatpush1.bf16.msra.mxu0 %v3724
      %3926 = vmatprep.subr.bf16.mxu0 0
      %3927 = vmatpush1.bf16.msra.mxu0 %v3725
      %3928 = vmatprep.subr.bf16.mxu0 0
      %3929 = vmatpush1.bf16.msra.mxu0 %v3726
      %3930 = vmatprep.subr.bf16.mxu0 0
      %3931 = vmatpush1.bf16.msra.mxu0 %v3727
      %3932 = vmatprep.subr.bf16.mxu0 0
      %3933 = vmatpush1.bf16.msra.mxu0 0
      %3934 = vmatprep.subr.bf16.mxu0 0
      %3935 = vmatpush1.bf16.msra.mxu0 0
      %3936 = vmatprep.subr.bf16.mxu0 0
      %3937 = vmatpush1.bf16.msra.mxu0 0
      %3938 = vmatprep.subr.bf16.mxu0 0
      %3939 = vmatpush1.bf16.msra.mxu0 0
      %3940 = vmatprep.subr.bf16.mxu0 0
      %3941 = vmatpush1.bf16.msra.mxu0 0
      %3942 = vmatprep.subr.bf16.mxu0 0
      %3943 = vmatpush1.bf16.msra.mxu0 0
      %3944 = vmatprep.subr.bf16.mxu0 0
      %3945 = vmatpush1.bf16.msra.mxu0 0
      %3946 = vmatprep.subr.bf16.mxu0 0
      %3947 = vmatpush1.bf16.msra.mxu0 0
      %3948 = vmatprep.subr.bf16.mxu0 0
      %3949 = vmatpush1.bf16.msra.mxu0 0
      %3950 = vmatprep.subr.bf16.mxu0 0
      %3951 = vmatpush1.bf16.msra.mxu0 0
      %3952 = vmatprep.subr.bf16.mxu0 0
      %3953 = vmatpush1.bf16.msra.mxu0 0
      %3954 = vmatprep.subr.bf16.mxu0 0
      %3955 = vmatpush1.bf16.msra.mxu0 0
      %3956 = vmatprep.mubr.bf16.mxu0 0
      %3957 = vmatmul.mubr.bf16.gmra.mrb[0].mxu0 %v3733
      %v3958 = vpop.f32.mrb[0].mxu0
      %v3959 = vadd.f32 %v3707, %v3958
      %v3960 = vpop.f32.mrb[0].mxu0
      %v3961 = vpop.f32.mrb[0].mxu0
      %v3962 = vadd.f32 %v3707, %v3961
      %v3963 = vpop.f32.mrb[0].mxu0
      %3964 = vmatprep.mubr.bf16.mxu0 0
      %3965 = vmatmul.mubr.bf16.gmra.mrb[0].mxu0 %v3736
      %v3966 = vpop.f32.mrb[0].mxu0
      %v3967 = vadd.f32 %v3707, %v3966
      %v3968 = vpop.f32.mrb[0].mxu0
      %v3969 = vpop.f32.mrb[0].mxu0
      %v3970 = vadd.f32 %v3707, %v3969
      %v3971 = vpop.f32.mrb[0].mxu0
      %3972 = vmatprep.mubr.bf16.mxu0 0
      %3973 = vmatmul.mubr.bf16.gmra.mrb[0].mxu0 %v3739
      %v3974 = vpop.f32.mrb[0].mxu0
      %v3975 = vadd.f32 %v3707, %v3974
      %v3976 = vpop.f32.mrb[0].mxu0
      %v3977 = vpop.f32.mrb[0].mxu0
      %v3978 = vadd.f32 %v3707, %v3977
      %v3979 = vpop.f32.mrb[0].mxu0
      %3980 = vmatprep.mubr.bf16.mxu0 0
      %3981 = vmatmul.mubr.bf16.gmra.mrb[0].mxu0 %v3742
      %v3982 = vpop.f32.mrb[0].mxu0
      %v3983 = vadd.f32 %v3707, %v3982
      %v3984 = vpop.f32.mrb[0].mxu0
      %v3985 = vpop.f32.mrb[0].mxu0
      %v3986 = vadd.f32 %v3707, %v3985
      %v3987 = vpop.f32.mrb[0].mxu0
      %3988 = vmatprep.mubr.bf16.mxu0 0
      %3989 = vmatmul.mubr.bf16.gmra.mrb[0].mxu0 %v3745
      %v3990 = vpop.f32.mrb[0].mxu0
      %v3991 = vadd.f32 %v3707, %v3990
      %v3992 = vpop.f32.mrb[0].mxu0
      %v3993 = vpop.f32.mrb[0].mxu0
      %v3994 = vadd.f32 %v3707, %v3993
      %v3995 = vpop.f32.mrb[0].mxu0
      %3996 = vmatprep.mubr.bf16.mxu0 0
      %3997 = vmatmul.mubr.bf16.gmra.mrb[0].mxu0 %v3748
      %v3998 = vpop.f32.mrb[0].mxu0
      %v3999 = vadd.f32 %v3707, %v3998
      %v4000 = vpop.f32.mrb[0].mxu0
      %v4001 = vpop.f32.mrb[0].mxu0
      %v4002 = vadd.f32 %v3707, %v4001
      %v4003 = vpop.f32.mrb[0].mxu0
      %4004 = vmatprep.mubr.bf16.mxu0 0
      %4005 = vmatmul.mubr.bf16.gmra.mrb[0].mxu0 %v3751
      %v4006 = vpop.f32.mrb[0].mxu0
      %v4007 = vadd.f32 %v3707, %v4006
      %v4008 = vpop.f32.mrb[0].mxu0
      %v4009 = vpop.f32.mrb[0].mxu0
      %v4010 = vadd.f32 %v3707, %v4009
      %v4011 = vpop.f32.mrb[0].mxu0
      %4012 = vmatprep.mubr.bf16.mxu0 0
      %4013 = vmatmul.mubr.bf16.gmra.mrb[0].mxu0 %v3754
      %v4014 = vpop.f32.mrb[0].mxu0
      %v4015 = vadd.f32 %v3707, %v4014
      %v4016 = vpop.f32.mrb[0].mxu0
      %v4017 = vpop.f32.mrb[0].mxu0
      %v4018 = vadd.f32 %v3707, %v4017
      %v4019 = vpop.f32.mrb[0].mxu0
      %4020 = vmatprep.mubr.bf16.mxu0 0
      %4021 = vmatmul.mubr.bf16.gmra.mrb[0].mxu0 %v3757
      %v4022 = vpop.f32.mrb[0].mxu0
      %v4023 = vadd.f32 %v3707, %v4022
      %v4024 = vpop.f32.mrb[0].mxu0
      %v4025 = vpop.f32.mrb[0].mxu0
      %v4026 = vadd.f32 %v3707, %v4025
      %v4027 = vpop.f32.mrb[0].mxu0
      %4028 = vmatprep.mubr.bf16.mxu0 0
      %4029 = vmatmul.mubr.bf16.gmra.mrb[0].mxu0 %v3760
      %v4030 = vpop.f32.mrb[0].mxu0
      %v4031 = vadd.f32 %v3707, %v4030
      %v4032 = vpop.f32.mrb[0].mxu0
      %v4033 = vpop.f32.mrb[0].mxu0
      %v4034 = vadd.f32 %v3707, %v4033
      %v4035 = vpop.f32.mrb[0].mxu0
      %4036 = vmatprep.mubr.bf16.mxu0 0
      %4037 = vmatmul.mubr.bf16.gmra.mrb[0].mxu0 %v3763
      %v4038 = vpop.f32.mrb[0].mxu0
      %v4039 = vadd.f32 %v3707, %v4038
      %v4040 = vpop.f32.mrb[0].mxu0
      %v4041 = vpop.f32.mrb[0].mxu0
      %v4042 = vadd.f32 %v3707, %v4041
      %v4043 = vpop.f32.mrb[0].mxu0
      %4044 = vmatprep.mubr.bf16.mxu0 0
      %4045 = vmatmul.mubr.bf16.gmra.mrb[0].mxu0 %v3766
      %v4046 = vpop.f32.mrb[0].mxu0
      %v4047 = vadd.f32 %v3707, %v4046
      %v4048 = vpop.f32.mrb[0].mxu0
      %v4049 = vpop.f32.mrb[0].mxu0
      %v4050 = vadd.f32 %v3707, %v4049
      %v4051 = vpop.f32.mrb[0].mxu0
      %4052 = vmatprep.mubr.bf16.mxu0 0
      %4053 = vmatmul.mubr.bf16.gmra.mrb[0].mxu0 %v3769
      %v4054 = vpop.f32.mrb[0].mxu0
      %v4055 = vadd.f32 %v3707, %v4054
      %v4056 = vpop.f32.mrb[0].mxu0
      %v4057 = vpop.f32.mrb[0].mxu0
      %v4058 = vadd.f32 %v3707, %v4057
      %v4059 = vpop.f32.mrb[0].mxu0
      %4060 = vmatprep.mubr.bf16.mxu0 0
      %4061 = vmatmul.mubr.bf16.gmra.mrb[0].mxu0 %v3772
      %v4062 = vpop.f32.mrb[0].mxu0
      %v4063 = vadd.f32 %v3707, %v4062
      %v4064 = vpop.f32.mrb[0].mxu0
      %v4065 = vpop.f32.mrb[0].mxu0
      %v4066 = vadd.f32 %v3707, %v4065
      %v4067 = vpop.f32.mrb[0].mxu0
      %4068 = vmatprep.mubr.bf16.mxu0 0
      %4069 = vmatmul.mubr.bf16.gmra.mrb[0].mxu0 %v3775
      %v4070 = vpop.f32.mrb[0].mxu0
      %v4071 = vadd.f32 %v3707, %v4070
      %v4072 = vpop.f32.mrb[0].mxu0
      %v4073 = vpop.f32.mrb[0].mxu0
      %v4074 = vadd.f32 %v3707, %v4073
      %v4075 = vpop.f32.mrb[0].mxu0
      %4076 = vmatprep.mubr.bf16.mxu0 0
      %4077 = vmatmul.mubr.bf16.gmra.mrb[0].mxu0 %v3778
      %v4078 = vpop.f32.mrb[0].mxu0
      %v4079 = vadd.f32 %v3707, %v4078
      %v4080 = vpop.f32.mrb[0].mxu0
      %v4081 = vpop.f32.mrb[0].mxu0
      %v4082 = vadd.f32 %v3707, %v4081
      %v4083 = vpop.f32.mrb[0].mxu0
      %4084 = vmatprep.mubr.bf16.mxu0 0
      %4085 = vmatmul.mubr.bf16.gmra.mrb[0].mxu0 %v3781
      %v4086 = vpop.f32.mrb[0].mxu0
      %v4087 = vadd.f32 %v3707, %v4086
      %v4088 = vpop.f32.mrb[0].mxu0
      %v4089 = vpop.f32.mrb[0].mxu0
      %v4090 = vadd.f32 %v3707, %v4089
      %v4091 = vpop.f32.mrb[0].mxu0
      %4092 = vmatprep.mubr.bf16.mxu0 0
      %4093 = vmatmul.mubr.bf16.gmra.mrb[0].mxu0 %v3784
      %v4094 = vpop.f32.mrb[0].mxu0
      %v4095 = vadd.f32 %v3707, %v4094
      %v4096 = vpop.f32.mrb[0].mxu0
      %v4097 = vpop.f32.mrb[0].mxu0
      %v4098 = vadd.f32 %v3707, %v4097
      %v4099 = vpop.f32.mrb[0].mxu0
      %4100 = vmatprep.mubr.bf16.mxu0 0
      %4101 = vmatmul.mubr.bf16.gmra.mrb[0].mxu0 %v3787
      %v4102 = vpop.f32.mrb[0].mxu0
      %v4103 = vadd.f32 %v3707, %v4102
      %v4104 = vpop.f32.mrb[0].mxu0
      %v4105 = vpop.f32.mrb[0].mxu0
      %v4106 = vadd.f32 %v3707, %v4105
      %v4107 = vpop.f32.mrb[0].mxu0
      %4108 = vmatprep.mubr.bf16.mxu0 0
      %4109 = vmatmul.mubr.bf16.gmra.mrb[0].mxu0 %v3790
      %v4110 = vpop.f32.mrb[0].mxu0
      %v4111 = vadd.f32 %v3707, %v4110
      %v4112 = vpop.f32.mrb[0].mxu0
      %v4113 = vpop.f32.mrb[0].mxu0
      %v4114 = vadd.f32 %v3707, %v4113
      %v4115 = vpop.f32.mrb[0].mxu0
      %4116 = vmatprep.mubr.bf16.mxu0 0
      %4117 = vmatmul.mubr.bf16.gmra.mrb[0].mxu0 %v3793
      %v4118 = vpop.f32.mrb[0].mxu0
      %v4119 = vadd.f32 %v3707, %v4118
      %v4120 = vpop.f32.mrb[0].mxu0
      %v4121 = vpop.f32.mrb[0].mxu0
      %v4122 = vadd.f32 %v3707, %v4121
      %v4123 = vpop.f32.mrb[0].mxu0
      %4124 = vmatprep.mubr.bf16.mxu0 0
      %4125 = vmatmul.mubr.bf16.gmra.mrb[0].mxu0 %v3796
      %v4126 = vpop.f32.mrb[0].mxu0
      %v4127 = vadd.f32 %v3707, %v4126
      %v4128 = vpop.f32.mrb[0].mxu0
      %v4129 = vpop.f32.mrb[0].mxu0
      %v4130 = vadd.f32 %v3707, %v4129
      %v4131 = vpop.f32.mrb[0].mxu0
      %4132 = vmatprep.mubr.bf16.mxu0 0
      %4133 = vmatmul.mubr.bf16.gmra.mrb[0].mxu0 %v3799
      %v4134 = vpop.f32.mrb[0].mxu0
      %v4135 = vadd.f32 %v3707, %v4134
      %v4136 = vpop.f32.mrb[0].mxu0
      %v4137 = vpop.f32.mrb[0].mxu0
      %v4138 = vadd.f32 %v3707, %v4137
      %v4139 = vpop.f32.mrb[0].mxu0
      %4140 = vmatprep.mubr.bf16.mxu0 0
      %4141 = vmatmul.mubr.bf16.gmra.mrb[0].mxu0 %v3802
      %v4142 = vpop.f32.mrb[0].mxu0
      %v4143 = vadd.f32 %v3707, %v4142
      %v4144 = vpop.f32.mrb[0].mxu0
      %v4145 = vpop.f32.mrb[0].mxu0
      %v4146 = vadd.f32 %v3707, %v4145
      %v4147 = vpop.f32.mrb[0].mxu0
      %4148 = vmatprep.mubr.bf16.mxu0 0
      %4149 = vmatmul.mubr.bf16.gmra.mrb[0].mxu0 %v3805
      %v4150 = vpop.f32.mrb[0].mxu0
      %v4151 = vadd.f32 %v3707, %v4150
      %v4152 = vpop.f32.mrb[0].mxu0
      %v4153 = vpop.f32.mrb[0].mxu0
      %v4154 = vadd.f32 %v3707, %v4153
      %v4155 = vpop.f32.mrb[0].mxu0
      %4156 = vmatprep.mubr.bf16.mxu0 0
      %4157 = vmatmul.mubr.bf16.gmra.mrb[0].mxu0 %v3808
      %v4158 = vpop.f32.mrb[0].mxu0
      %v4159 = vadd.f32 %v3707, %v4158
      %v4160 = vpop.f32.mrb[0].mxu0
      %v4161 = vpop.f32.mrb[0].mxu0
      %v4162 = vadd.f32 %v3707, %v4161
      %v4163 = vpop.f32.mrb[0].mxu0
      %4164 = vmatprep.mubr.bf16.mxu0 0
      %4165 = vmatmul.mubr.bf16.gmra.mrb[0].mxu0 %v3811
      %v4166 = vpop.f32.mrb[0].mxu0
      %v4167 = vadd.f32 %v3707, %v4166
      %v4168 = vpop.f32.mrb[0].mxu0
      %v4169 = vpop.f32.mrb[0].mxu0
      %v4170 = vadd.f32 %v3707, %v4169
      %v4171 = vpop.f32.mrb[0].mxu0
      %4172 = vmatprep.mubr.bf16.mxu0 0
      %4173 = vmatmul.mubr.bf16.gmra.mrb[0].mxu0 %v3814
      %v4174 = vpop.f32.mrb[0].mxu0
      %v4175 = vadd.f32 %v3707, %v4174
      %v4176 = vpop.f32.mrb[0].mxu0
      %v4177 = vpop.f32.mrb[0].mxu0
      %v4178 = vadd.f32 %v3707, %v4177
      %v4179 = vpop.f32.mrb[0].mxu0
      %4180 = vmatprep.mubr.bf16.mxu0 0
      %4181 = vmatmul.mubr.bf16.gmra.mrb[0].mxu0 %v3817
      %v4182 = vpop.f32.mrb[0].mxu0
      %v4183 = vadd.f32 %v3707, %v4182
      %v4184 = vpop.f32.mrb[0].mxu0
      %v4185 = vpop.f32.mrb[0].mxu0
      %v4186 = vadd.f32 %v3707, %v4185
      %v4187 = vpop.f32.mrb[0].mxu0
      %4188 = vmatprep.mubr.bf16.mxu0 0
      %4189 = vmatmul.mubr.bf16.gmra.mrb[0].mxu0 %v3820
      %v4190 = vpop.f32.mrb[0].mxu0
      %v4191 = vadd.f32 %v3707, %v4190
      %v4192 = vpop.f32.mrb[0].mxu0
      %v4193 = vpop.f32.mrb[0].mxu0
      %v4194 = vadd.f32 %v3707, %v4193
      %v4195 = vpop.f32.mrb[0].mxu0
      %4196 = vmatprep.mubr.bf16.mxu0 0
      %4197 = vmatmul.mubr.bf16.gmra.mrb[0].mxu0 %v3823
      %v4198 = vpop.f32.mrb[0].mxu0
      %v4199 = vadd.f32 %v3707, %v4198
      %v4200 = vpop.f32.mrb[0].mxu0
      %v4201 = vpop.f32.mrb[0].mxu0
      %v4202 = vadd.f32 %v3707, %v4201
      %v4203 = vpop.f32.mrb[0].mxu0
      %4204 = vmatprep.mubr.bf16.mxu0 0
      %4205 = vmatmul.mubr.bf16.gmra.mrb[0].mxu0 %v3826
      %v4206 = vpop.f32.mrb[0].mxu0
      %v4207 = vadd.f32 %v3707, %v4206
      %v4208 = vpop.f32.mrb[0].mxu0
      %v4209 = vpop.f32.mrb[0].mxu0
      %v4210 = vadd.f32 %v3707, %v4209
      %v4211 = vpop.f32.mrb[0].mxu0
      %4212 = vmatprep.mubr.bf16.mxu0 0
      %4213 = vmatmul.mubr.bf16.gmra.mrb[0].mxu0 %v3829
      %v4214 = vpop.f32.mrb[0].mxu0
      %v4215 = vadd.f32 %v3707, %v4214
      %v4216 = vpop.f32.mrb[0].mxu0
      %v4217 = vpop.f32.mrb[0].mxu0
      %v4218 = vadd.f32 %v3707, %v4217
      %v4219 = vpop.f32.mrb[0].mxu0
      %4220 = vmatprep.mubr.bf16.mxu0 0
      %4221 = vmatmul.mubr.bf16.gmra.mrb[0].mxu0 %v3832
      %v4222 = vpop.f32.mrb[0].mxu0
      %v4223 = vadd.f32 %v3707, %v4222
      %v4224 = vpop.f32.mrb[0].mxu0
      %v4225 = vpop.f32.mrb[0].mxu0
      %v4226 = vadd.f32 %v3707, %v4225
      %v4227 = vpop.f32.mrb[0].mxu0
      %4228 = vmatprep.mubr.bf16.mxu0 0
      %4229 = vmatmul.mubr.bf16.gmra.mrb[0].mxu0 %v3835
      %v4230 = vpop.f32.mrb[0].mxu0
      %v4231 = vadd.f32 %v3707, %v4230
      %v4232 = vpop.f32.mrb[0].mxu0
      %v4233 = vpop.f32.mrb[0].mxu0
      %v4234 = vadd.f32 %v3707, %v4233
      %v4235 = vpop.f32.mrb[0].mxu0
      %4236 = vmatprep.mubr.bf16.mxu0 0
      %4237 = vmatmul.mubr.bf16.gmra.mrb[0].mxu0 %v3838
      %v4238 = vpop.f32.mrb[0].mxu0
      %v4239 = vadd.f32 %v3707, %v4238
      %v4240 = vpop.f32.mrb[0].mxu0
      %v4241 = vpop.f32.mrb[0].mxu0
      %v4242 = vadd.f32 %v3707, %v4241
      %v4243 = vpop.f32.mrb[0].mxu0
      %4244 = vmatprep.mubr.bf16.mxu0 0
      %4245 = vmatmul.mubr.bf16.gmra.mrb[0].mxu0 %v3841
      %v4246 = vpop.f32.mrb[0].mxu0
      %v4247 = vadd.f32 %v3707, %v4246
      %v4248 = vpop.f32.mrb[0].mxu0
      %v4249 = vpop.f32.mrb[0].mxu0
      %v4250 = vadd.f32 %v3707, %v4249
      %v4251 = vpop.f32.mrb[0].mxu0
      %4252 = vmatprep.mubr.bf16.mxu0 0
      %4253 = vmatmul.mubr.bf16.gmra.mrb[0].mxu0 %v3844
      %v4254 = vpop.f32.mrb[0].mxu0
      %v4255 = vadd.f32 %v3707, %v4254
      %v4256 = vpop.f32.mrb[0].mxu0
      %v4257 = vpop.f32.mrb[0].mxu0
      %v4258 = vadd.f32 %v3707, %v4257
      %v4259 = vpop.f32.mrb[0].mxu0
      %4260 = vmatprep.mubr.bf16.mxu0 0
      %4261 = vmatmul.mubr.bf16.gmra.mrb[0].mxu0 %v3847
      %v4262 = vpop.f32.mrb[0].mxu0
      %v4263 = vadd.f32 %v3707, %v4262
      %v4264 = vpop.f32.mrb[0].mxu0
      %v4265 = vpop.f32.mrb[0].mxu0
      %v4266 = vadd.f32 %v3707, %v4265
      %v4267 = vpop.f32.mrb[0].mxu0
      %4268 = vmatprep.mubr.bf16.mxu0 0
      %4269 = vmatmul.mubr.bf16.gmra.mrb[0].mxu0 %v3850
      %v4270 = vpop.f32.mrb[0].mxu0
      %v4271 = vadd.f32 %v3707, %v4270
      %v4272 = vpop.f32.mrb[0].mxu0
      %v4273 = vpop.f32.mrb[0].mxu0
      %v4274 = vadd.f32 %v3707, %v4273
      %v4275 = vpop.f32.mrb[0].mxu0
      %4276 = vmatprep.mubr.bf16.mxu0 0
      %4277 = vmatmul.mubr.bf16.gmra.mrb[0].mxu0 %v3853
      %v4278 = vpop.f32.mrb[0].mxu0
      %v4279 = vadd.f32 %v3707, %v4278
      %v4280 = vpop.f32.mrb[0].mxu0
      %v4281 = vpop.f32.mrb[0].mxu0
      %v4282 = vadd.f32 %v3707, %v4281
      %v4283 = vpop.f32.mrb[0].mxu0
      %4284 = vmatprep.mubr.bf16.mxu0 0
      %4285 = vmatmul.mubr.bf16.gmra.mrb[0].mxu0 %v3856
      %v4286 = vpop.f32.mrb[0].mxu0
      %v4287 = vadd.f32 %v3707, %v4286
      %v4288 = vpop.f32.mrb[0].mxu0
      %v4289 = vpop.f32.mrb[0].mxu0
      %v4290 = vadd.f32 %v3707, %v4289
      %v4291 = vpop.f32.mrb[0].mxu0
      %4292 = vmatprep.mubr.bf16.mxu0 0
      %4293 = vmatmul.mubr.bf16.gmra.mrb[0].mxu0 %v3859
      %v4294 = vpop.f32.mrb[0].mxu0
      %v4295 = vadd.f32 %v3707, %v4294
      %v4296 = vpop.f32.mrb[0].mxu0
      %v4297 = vpop.f32.mrb[0].mxu0
      %v4298 = vadd.f32 %v3707, %v4297
      %v4299 = vpop.f32.mrb[0].mxu0
      %4300 = vmatprep.mubr.bf16.mxu0 0
      %4301 = vmatmul.mubr.bf16.gmra.mrb[0].mxu0 %v3862
      %v4302 = vpop.f32.mrb[0].mxu0
      %v4303 = vadd.f32 %v3707, %v4302
      %v4304 = vpop.f32.mrb[0].mxu0
      %v4305 = vpop.f32.mrb[0].mxu0
      %v4306 = vadd.f32 %v3707, %v4305
      %v4307 = vpop.f32.mrb[0].mxu0
      %4308 = vmatprep.mubr.bf16.mxu0 0
      %4309 = vmatmul.mubr.bf16.gmra.mrb[0].mxu0 %v3865
      %v4310 = vpop.f32.mrb[0].mxu0
      %v4311 = vadd.f32 %v3707, %v4310
      %v4312 = vpop.f32.mrb[0].mxu0
      %v4313 = vpop.f32.mrb[0].mxu0
      %v4314 = vadd.f32 %v3707, %v4313
      %v4315 = vpop.f32.mrb[0].mxu0
      %4316 = vmatprep.mubr.bf16.mxu0 0
      %4317 = vmatmul.mubr.bf16.gmra.mrb[0].mxu0 %v3868
      %v4318 = vpop.f32.mrb[0].mxu0
      %v4319 = vadd.f32 %v3707, %v4318
      %v4320 = vpop.f32.mrb[0].mxu0
      %v4321 = vpop.f32.mrb[0].mxu0
      %v4322 = vadd.f32 %v3707, %v4321
      %v4323 = vpop.f32.mrb[0].mxu0
      %4324 = vmatprep.mubr.bf16.mxu0 0
      %4325 = vmatmul.mubr.bf16.gmra.mrb[0].mxu0 %v3871
      %v4326 = vpop.f32.mrb[0].mxu0
      %v4327 = vadd.f32 %v3707, %v4326
      %v4328 = vpop.f32.mrb[0].mxu0
      %v4329 = vpop.f32.mrb[0].mxu0
      %v4330 = vadd.f32 %v3707, %v4329
      %v4331 = vpop.f32.mrb[0].mxu0
      %4332 = vmatprep.mubr.bf16.mxu0 0
      %4333 = vmatmul.mubr.bf16.gmra.mrb[0].mxu0 %v3874
      %v4334 = vpop.f32.mrb[0].mxu0
      %v4335 = vadd.f32 %v3707, %v4334
      %v4336 = vpop.f32.mrb[0].mxu0
      %v4337 = vpop.f32.mrb[0].mxu0
      %v4338 = vadd.f32 %v3707, %v4337
      %v4339 = vpop.f32.mrb[0].mxu0
      %4340 = vmatprep.mubr.bf16.mxu0 0
      %4341 = vmatmul.mubr.bf16.gmra.mrb[0].mxu0 %v3877
      %v4342 = vpop.f32.mrb[0].mxu0
      %v4343 = vadd.f32 %v3707, %v4342
      %v4344 = vpop.f32.mrb[0].mxu0
      %v4345 = vpop.f32.mrb[0].mxu0
      %v4346 = vadd.f32 %v3707, %v4345
      %v4347 = vpop.f32.mrb[0].mxu0
      %4348 = vmatprep.mubr.bf16.mxu0 0
      %4349 = vmatmul.mubr.bf16.gmra.mrb[0].mxu0 %v3880
      %v4350 = vpop.f32.mrb[0].mxu0
      %v4351 = vadd.f32 %v3707, %v4350
      %v4352 = vpop.f32.mrb[0].mxu0
      %v4353 = vpop.f32.mrb[0].mxu0
      %v4354 = vadd.f32 %v3707, %v4353
      %v4355 = vpop.f32.mrb[0].mxu0
      %4356 = vmatprep.mubr.bf16.mxu0 0
      %4357 = vmatmul.mubr.bf16.gmra.mrb[0].mxu0 %v3883
      %v4358 = vpop.f32.mrb[0].mxu0
      %v4359 = vadd.f32 %v3707, %v4358
      %v4360 = vpop.f32.mrb[0].mxu0
      %v4361 = vpop.f32.mrb[0].mxu0
      %v4362 = vadd.f32 %v3707, %v4361
      %v4363 = vpop.f32.mrb[0].mxu0
      %4364 = vmatprep.mubr.bf16.mxu0 0
      %4365 = vmatmul.mubr.bf16.gmra.mrb[0].mxu0 %v3886
      %v4366 = vpop.f32.mrb[0].mxu0
      %v4367 = vadd.f32 %v3707, %v4366
      %v4368 = vpop.f32.mrb[0].mxu0
      %v4369 = vpop.f32.mrb[0].mxu0
      %v4370 = vadd.f32 %v3707, %v4369
      %v4371 = vpop.f32.mrb[0].mxu0
      %4372 = vmatprep.mubr.bf16.mxu0 0
      %4373 = vmatmul.mubr.bf16.gmra.mrb[0].mxu0 %v3889
      %v4374 = vpop.f32.mrb[0].mxu0
      %v4375 = vadd.f32 %v3707, %v4374
      %v4376 = vpop.f32.mrb[0].mxu0
      %v4377 = vpop.f32.mrb[0].mxu0
      %v4378 = vadd.f32 %v3707, %v4377
      %v4379 = vpop.f32.mrb[0].mxu0
      %4380 = vmatprep.mubr.bf16.mxu0 0
      %4381 = vmatmul.mubr.bf16.gmra.mrb[0].mxu0 %v3892
      %v4382 = vpop.f32.mrb[0].mxu0
      %v4383 = vadd.f32 %v3707, %v4382
      %v4384 = vpop.f32.mrb[0].mxu0
      %v4385 = vpop.f32.mrb[0].mxu0
      %v4386 = vadd.f32 %v3707, %v4385
      %v4387 = vpop.f32.mrb[0].mxu0
      %4388 = vmatprep.mubr.bf16.mxu0 0
      %4389 = vmatmul.mubr.bf16.gmra.mrb[0].mxu0 %v3895
      %v4390 = vpop.f32.mrb[0].mxu0
      %v4391 = vadd.f32 %v3707, %v4390
      %v4392 = vpop.f32.mrb[0].mxu0
      %v4393 = vpop.f32.mrb[0].mxu0
      %v4394 = vadd.f32 %v3707, %v4393
      %v4395 = vpop.f32.mrb[0].mxu0
      %4396 = vmatprep.mubr.bf16.mxu0 0
      %4397 = vmatmul.mubr.bf16.gmra.mrb[0].mxu0 %v3898
      %v4398 = vpop.f32.mrb[0].mxu0
      %v4399 = vadd.f32 %v3707, %v4398
      %v4400 = vpop.f32.mrb[0].mxu0
      %v4401 = vpop.f32.mrb[0].mxu0
      %v4402 = vadd.f32 %v3707, %v4401
      %v4403 = vpop.f32.mrb[0].mxu0
      %4404 = vmatprep.mubr.bf16.mxu0 0
      %4405 = vmatmul.mubr.bf16.gmra.mrb[0].mxu0 %v3901
      %v4406 = vpop.f32.mrb[0].mxu0
      %v4407 = vadd.f32 %v3707, %v4406
      %v4408 = vpop.f32.mrb[0].mxu0
      %v4409 = vpop.f32.mrb[0].mxu0
      %v4410 = vadd.f32 %v3707, %v4409
      %v4411 = vpop.f32.mrb[0].mxu0
      %4412 = vmatprep.mubr.bf16.mxu0 0
      %4413 = vmatmul.mubr.bf16.gmra.mrb[0].mxu0 %v3904
      %v4414 = vpop.f32.mrb[0].mxu0
      %v4415 = vadd.f32 %v3707, %v4414
      %v4416 = vpop.f32.mrb[0].mxu0
      %v4417 = vpop.f32.mrb[0].mxu0
      %v4418 = vadd.f32 %v3707, %v4417
      %v4419 = vpop.f32.mrb[0].mxu0
      %4420 = vmatprep.mubr.bf16.mxu0 0
      %4421 = vmatmul.mubr.bf16.gmra.mrb[0].mxu0 %v3907
      %v4422 = vpop.f32.mrb[0].mxu0
      %v4423 = vadd.f32 %v3707, %v4422
      %v4424 = vpop.f32.mrb[0].mxu0
      %v4425 = vpop.f32.mrb[0].mxu0
      %v4426 = vadd.f32 %v3707, %v4425
      %v4427 = vpop.f32.mrb[0].mxu0
      %4428 = vmatprep.mubr.bf16.mxu0 0
      %4429 = vmatmul.mubr.bf16.gmra.mrb[0].mxu0 %v3910
      %v4430 = vpop.f32.mrb[0].mxu0
      %v4431 = vadd.f32 %v3707, %v4430
      %v4432 = vpop.f32.mrb[0].mxu0
      %v4433 = vpop.f32.mrb[0].mxu0
      %v4434 = vadd.f32 %v3707, %v4433
      %v4435 = vpop.f32.mrb[0].mxu0
      %4436 = vmatprep.mubr.bf16.mxu0 0
      %4437 = vmatmul.mubr.bf16.gmra.mrb[0].mxu0 %v3913
      %v4438 = vpop.f32.mrb[0].mxu0
      %v4439 = vadd.f32 %v3707, %v4438
      %v4440 = vpop.f32.mrb[0].mxu0
      %v4441 = vpop.f32.mrb[0].mxu0
      %v4442 = vadd.f32 %v3707, %v4441
      %v4443 = vpop.f32.mrb[0].mxu0
      %4444 = vmatprep.mubr.bf16.mxu0 0
      %4445 = vmatmul.mubr.bf16.gmra.mrb[0].mxu0 %v3916
      %v4446 = vpop.f32.mrb[0].mxu0
      %v4447 = vadd.f32 %v3707, %v4446
      %v4448 = vpop.f32.mrb[0].mxu0
      %v4449 = vpop.f32.mrb[0].mxu0
      %v4450 = vadd.f32 %v3707, %v4449
      %v4451 = vpop.f32.mrb[0].mxu0
      %4452 = vmatprep.mubr.bf16.mxu0 0
      %4453 = vmatmul.mubr.bf16.gmra.mrb[0].mxu0 %v3919
      %v4454 = vpop.f32.mrb[0].mxu0
      %v4455 = vadd.f32 %v3707, %v4454
      %v4456 = vpop.f32.mrb[0].mxu0
      %v4457 = vpop.f32.mrb[0].mxu0
      %v4458 = vadd.f32 %v3707, %v4457
      %v4459 = vpop.f32.mrb[0].mxu0
      %4460 = vmatprep.mubr.bf16.mxu0 0
      %4461 = vmatmul.mubr.bf16.gmra.mrb[0].mxu0 %v3922
      %v4462 = vpop.f32.mrb[0].mxu0
      %v4463 = vadd.f32 %v3707, %v4462
      %v4464 = vpop.f32.mrb[0].mxu0
      %v4465 = vpop.f32.mrb[0].mxu0
      %v4466 = vadd.f32 %v3707, %v4465
      %v4467 = vpop.f32.mrb[0].mxu0
      %4468 = vdwg.mxu0
      %v4469 = vmax.f32 %v3959, 0.0
      %v4470 = vmax.f32 %v3962, 0.0
      %v4471 = vmax.f32 %v3967, 0.0
      %v4472 = vmax.f32 %v3970, 0.0
      %v4473 = vmax.f32 %v3975, 0.0
      %v4474 = vmax.f32 %v3978, 0.0
      %v4475 = vmax.f32 %v3983, 0.0
      %v4476 = vmax.f32 %v3986, 0.0
      %v4477 = vmax.f32 %v3991, 0.0
      %v4478 = vmax.f32 %v3994, 0.0
      %v4479 = vmax.f32 %v3999, 0.0
      %v4480 = vmax.f32 %v4002, 0.0
      %v4481 = vmax.f32 %v4007, 0.0
      %v4482 = vmax.f32 %v4010, 0.0
      %v4483 = vmax.f32 %v4015, 0.0
      %v4484 = vmax.f32 %v4018, 0.0
      %v4485 = vmax.f32 %v4023, 0.0
      %v4486 = vmax.f32 %v4026, 0.0
      %v4487 = vmax.f32 %v4031, 0.0
      %v4488 = vmax.f32 %v4034, 0.0
      %v4489 = vmax.f32 %v4039, 0.0
      %v4490 = vmax.f32 %v4042, 0.0
      %v4491 = vmax.f32 %v4047, 0.0
      %v4492 = vmax.f32 %v4050, 0.0
      %v4493 = vmax.f32 %v4055, 0.0
      %v4494 = vmax.f32 %v4058, 0.0
      %v4495 = vmax.f32 %v4063, 0.0
      %v4496 = vmax.f32 %v4066, 0.0
      %v4497 = vmax.f32 %v4071, 0.0
      %v4498 = vmax.f32 %v4074, 0.0
      %v4499 = vmax.f32 %v4079, 0.0
      %v4500 = vmax.f32 %v4082, 0.0
      %v4501 = vmax.f32 %v4087, 0.0
      %v4502 = vmax.f32 %v4090, 0.0
      %v4503 = vmax.f32 %v4095, 0.0
      %v4504 = vmax.f32 %v4098, 0.0
      %v4505 = vmax.f32 %v4103, 0.0
      %v4506 = vmax.f32 %v4106, 0.0
      %v4507 = vmax.f32 %v4111, 0.0
      %v4508 = vmax.f32 %v4114, 0.0
      %v4509 = vmax.f32 %v4119, 0.0
      %v4510 = vmax.f32 %v4122, 0.0
      %v4511 = vmax.f32 %v4127, 0.0
      %v4512 = vmax.f32 %v4130, 0.0
      %v4513 = vmax.f32 %v4135, 0.0
      %v4514 = vmax.f32 %v4138, 0.0
      %v4515 = vmax.f32 %v4143, 0.0
      %v4516 = vmax.f32 %v4146, 0.0
      %v4517 = vmax.f32 %v4151, 0.0
      %v4518 = vmax.f32 %v4154, 0.0
      %v4519 = vmax.f32 %v4159, 0.0
      %v4520 = vmax.f32 %v4162, 0.0
      %v4521 = vmax.f32 %v4167, 0.0
      %v4522 = vmax.f32 %v4170, 0.0
      %v4523 = vmax.f32 %v4175, 0.0
      %v4524 = vmax.f32 %v4178, 0.0
      %v4525 = vmax.f32 %v4183, 0.0
      %v4526 = vmax.f32 %v4186, 0.0
      %v4527 = vmax.f32 %v4191, 0.0
      %v4528 = vmax.f32 %v4194, 0.0
      %v4529 = vmax.f32 %v4199, 0.0
      %v4530 = vmax.f32 %v4202, 0.0
      %v4531 = vmax.f32 %v4207, 0.0
      %v4532 = vmax.f32 %v4210, 0.0
      %v4533 = vmax.f32 %v4215, 0.0
      %v4534 = vmax.f32 %v4218, 0.0
      %v4535 = vmax.f32 %v4223, 0.0
      %v4536 = vmax.f32 %v4226, 0.0
      %v4537 = vmax.f32 %v4231, 0.0
      %v4538 = vmax.f32 %v4234, 0.0
      %v4539 = vmax.f32 %v4239, 0.0
      %v4540 = vmax.f32 %v4242, 0.0
      %v4541 = vmax.f32 %v4247, 0.0
      %v4542 = vmax.f32 %v4250, 0.0
      %v4543 = vmax.f32 %v4255, 0.0
      %v4544 = vmax.f32 %v4258, 0.0
      %v4545 = vmax.f32 %v4263, 0.0
      %v4546 = vmax.f32 %v4266, 0.0
      %v4547 = vmax.f32 %v4271, 0.0
      %v4548 = vmax.f32 %v4274, 0.0
      %v4549 = vmax.f32 %v4279, 0.0
      %v4550 = vmax.f32 %v4282, 0.0
      %v4551 = vmax.f32 %v4287, 0.0
      %v4552 = vmax.f32 %v4290, 0.0
      %v4553 = vmax.f32 %v4295, 0.0
      %v4554 = vmax.f32 %v4298, 0.0
      %v4555 = vmax.f32 %v4303, 0.0
      %v4556 = vmax.f32 %v4306, 0.0
      %v4557 = vmax.f32 %v4311, 0.0
      %v4558 = vmax.f32 %v4314, 0.0
      %v4559 = vmax.f32 %v4319, 0.0
      %v4560 = vmax.f32 %v4322, 0.0
      %v4561 = vmax.f32 %v4327, 0.0
      %v4562 = vmax.f32 %v4330, 0.0
      %v4563 = vmax.f32 %v4335, 0.0
      %v4564 = vmax.f32 %v4338, 0.0
      %v4565 = vmax.f32 %v4343, 0.0
      %v4566 = vmax.f32 %v4346, 0.0
      %v4567 = vmax.f32 %v4351, 0.0
      %v4568 = vmax.f32 %v4354, 0.0
      %v4569 = vmax.f32 %v4359, 0.0
      %v4570 = vmax.f32 %v4362, 0.0
      %v4571 = vmax.f32 %v4367, 0.0
      %v4572 = vmax.f32 %v4370, 0.0
      %v4573 = vmax.f32 %v4375, 0.0
      %v4574 = vmax.f32 %v4378, 0.0
      %v4575 = vmax.f32 %v4383, 0.0
      %v4576 = vmax.f32 %v4386, 0.0
      %v4577 = vmax.f32 %v4391, 0.0
      %v4578 = vmax.f32 %v4394, 0.0
      %v4579 = vmax.f32 %v4399, 0.0
      %v4580 = vmax.f32 %v4402, 0.0
      %v4581 = vmax.f32 %v4407, 0.0
      %v4582 = vmax.f32 %v4410, 0.0
      %v4583 = vmax.f32 %v4415, 0.0
      %v4584 = vmax.f32 %v4418, 0.0
      %v4585 = vmax.f32 %v4423, 0.0
      %v4586 = vmax.f32 %v4426, 0.0
      %v4587 = vmax.f32 %v4431, 0.0
      %v4588 = vmax.f32 %v4434, 0.0
      %v4589 = vmax.f32 %v4439, 0.0
      %v4590 = vmax.f32 %v4442, 0.0
      %v4591 = vmax.f32 %v4447, 0.0
      %v4592 = vmax.f32 %v4450, 0.0
      %v4593 = vmax.f32 %v4455, 0.0
      %v4594 = vmax.f32 %v4458, 0.0
      %v4595 = vmax.f32 %v4463, 0.0
      %v4596 = vmax.f32 %v4466, 0.0
      %s4597 = scalar_lea.vmem %s2, 96
      %v4598 = vld [vmem:[%s4597] sm:$0xf]
      %v4599 = vld [vmem:[%s4597 + $0x4] sm:$0xf]
      %v4600 = vld [vmem:[%s4597 + $0x8] sm:$0xf]
      %v4601 = vld [vmem:[%s4597 + $0xc] sm:$0xf]
      %v4602 = vld [vmem:[%s4597 + $0x10] sm:$0xf]
      %v4603 = vld [vmem:[%s4597 + $0x14] sm:$0xf]
      %v4604 = vld [vmem:[%s4597 + $0x18] sm:$0xf]
      %v4605 = vld [vmem:[%s4597 + $0x1c] sm:$0xf]
      %v4606 = vpack.c.bf16 %v4470, %v4469
      %v4607 = vpack.c.bf16 %v4472, %v4471
      %v4608 = vpack.c.bf16 %v4474, %v4473
      %v4609 = vpack.c.bf16 %v4476, %v4475
      %v4610 = vpack.c.bf16 %v4478, %v4477
      %v4611 = vpack.c.bf16 %v4480, %v4479
      %v4612 = vpack.c.bf16 %v4482, %v4481
      %v4613 = vpack.c.bf16 %v4484, %v4483
      %v4614 = vpack.c.bf16 %v4486, %v4485
      %v4615 = vpack.c.bf16 %v4488, %v4487
      %v4616 = vpack.c.bf16 %v4490, %v4489
      %v4617 = vpack.c.bf16 %v4492, %v4491
      %v4618 = vpack.c.bf16 %v4494, %v4493
      %v4619 = vpack.c.bf16 %v4496, %v4495
      %v4620 = vpack.c.bf16 %v4498, %v4497
      %v4621 = vpack.c.bf16 %v4500, %v4499
      %v4622 = vpack.c.bf16 %v4502, %v4501
      %v4623 = vpack.c.bf16 %v4504, %v4503
      %v4624 = vpack.c.bf16 %v4506, %v4505
      %v4625 = vpack.c.bf16 %v4508, %v4507
      %v4626 = vpack.c.bf16 %v4510, %v4509
      %v4627 = vpack.c.bf16 %v4512, %v4511
      %v4628 = vpack.c.bf16 %v4514, %v4513
      %v4629 = vpack.c.bf16 %v4516, %v4515
      %v4630 = vpack.c.bf16 %v4518, %v4517
      %v4631 = vpack.c.bf16 %v4520, %v4519
      %v4632 = vpack.c.bf16 %v4522, %v4521
      %v4633 = vpack.c.bf16 %v4524, %v4523
      %v4634 = vpack.c.bf16 %v4526, %v4525
      %v4635 = vpack.c.bf16 %v4528, %v4527
      %v4636 = vpack.c.bf16 %v4530, %v4529
      %v4637 = vpack.c.bf16 %v4532, %v4531
      %v4638 = vpack.c.bf16 %v4534, %v4533
      %v4639 = vpack.c.bf16 %v4536, %v4535
      %v4640 = vpack.c.bf16 %v4538, %v4537
      %v4641 = vpack.c.bf16 %v4540, %v4539
      %v4642 = vpack.c.bf16 %v4542, %v4541
      %v4643 = vpack.c.bf16 %v4544, %v4543
      %v4644 = vpack.c.bf16 %v4546, %v4545
      %v4645 = vpack.c.bf16 %v4548, %v4547
      %v4646 = vpack.c.bf16 %v4550, %v4549
      %v4647 = vpack.c.bf16 %v4552, %v4551
      %v4648 = vpack.c.bf16 %v4554, %v4553
      %v4649 = vpack.c.bf16 %v4556, %v4555
      %v4650 = vpack.c.bf16 %v4558, %v4557
      %v4651 = vpack.c.bf16 %v4560, %v4559
      %v4652 = vpack.c.bf16 %v4562, %v4561
      %v4653 = vpack.c.bf16 %v4564, %v4563
      %v4654 = vpack.c.bf16 %v4566, %v4565
      %v4655 = vpack.c.bf16 %v4568, %v4567
      %v4656 = vpack.c.bf16 %v4570, %v4569
      %v4657 = vpack.c.bf16 %v4572, %v4571
      %v4658 = vpack.c.bf16 %v4574, %v4573
      %v4659 = vpack.c.bf16 %v4576, %v4575
      %v4660 = vpack.c.bf16 %v4578, %v4577
      %v4661 = vpack.c.bf16 %v4580, %v4579
      %v4662 = vpack.c.bf16 %v4582, %v4581
      %v4663 = vpack.c.bf16 %v4584, %v4583
      %v4664 = vpack.c.bf16 %v4586, %v4585
      %v4665 = vpack.c.bf16 %v4588, %v4587
      %v4666 = vpack.c.bf16 %v4590, %v4589
      %v4667 = vpack.c.bf16 %v4592, %v4591
      %v4668 = vpack.c.bf16 %v4594, %v4593
      %v4669 = vpack.c.bf16 %v4596, %v4595
      %v4670 = vld [vmem:[%s3 + $0x4] sm:$0x1]
      %v4671 = vlaneseq
      %v4672 = vshrl.u32 %v4671, 7
      %v4673 = vsub.s32 0, %v4672
      %v4674 = vrot.slane %v4670, %v4673
      %v4683 = vunpack.c.l.b16 %v4598
      %v4684 = vunpack.c.l.b16 %v4599
      %v4685 = vunpack.c.l.b16 %v4600
      %v4686 = vunpack.c.l.b16 %v4601
      %v4687 = vunpack.c.l.b16 %v4602
      %v4688 = vunpack.c.l.b16 %v4603
      %v4689 = vunpack.c.l.b16 %v4604
      %v4690 = vunpack.c.l.b16 %v4605
      %v4691 = vpack.c.b16 %v4684, %v4683
      %v4692 = vpack.c.b16 %v4686, %v4685
      %v4693 = vpack.c.b16 %v4688, %v4687
      %v4694 = vpack.c.b16 %v4690, %v4689
      %v4700 = vsel %vm1797, %v4606, 0
      %v4703 = vsel %vm1797, %v4607, 0
      %v4706 = vsel %vm1797, %v4608, 0
      %v4709 = vsel %vm1797, %v4609, 0
      %v4712 = vsel %vm1797, %v4610, 0
      %v4715 = vsel %vm1797, %v4611, 0
      %v4718 = vsel %vm1797, %v4612, 0
      %v4721 = vsel %vm1797, %v4613, 0
      %v4724 = vsel %vm1797, %v4614, 0
      %v4727 = vsel %vm1797, %v4615, 0
      %v4730 = vsel %vm1797, %v4616, 0
      %v4733 = vsel %vm1797, %v4617, 0
      %v4736 = vsel %vm1797, %v4618, 0
      %v4739 = vsel %vm1797, %v4619, 0
      %v4742 = vsel %vm1797, %v4620, 0
      %v4745 = vsel %vm1797, %v4621, 0
      %v4748 = vsel %vm1797, %v4622, 0
      %v4751 = vsel %vm1797, %v4623, 0
      %v4754 = vsel %vm1797, %v4624, 0
      %v4757 = vsel %vm1797, %v4625, 0
      %v4760 = vsel %vm1797, %v4626, 0
      %v4763 = vsel %vm1797, %v4627, 0
      %v4766 = vsel %vm1797, %v4628, 0
      %v4769 = vsel %vm1797, %v4629, 0
      %v4772 = vsel %vm1797, %v4630, 0
      %v4775 = vsel %vm1797, %v4631, 0
      %v4778 = vsel %vm1797, %v4632, 0
      %v4781 = vsel %vm1797, %v4633, 0
      %v4784 = vsel %vm1797, %v4634, 0
      %v4787 = vsel %vm1797, %v4635, 0
      %v4790 = vsel %vm1797, %v4636, 0
      %v4793 = vsel %vm1797, %v4637, 0
      %v4796 = vsel %vm1797, %v4638, 0
      %v4799 = vsel %vm1797, %v4639, 0
      %v4802 = vsel %vm1797, %v4640, 0
      %v4805 = vsel %vm1797, %v4641, 0
      %v4808 = vsel %vm1797, %v4642, 0
      %v4811 = vsel %vm1797, %v4643, 0
      %v4814 = vsel %vm1797, %v4644, 0
      %v4817 = vsel %vm1797, %v4645, 0
      %v4820 = vsel %vm1797, %v4646, 0
      %v4823 = vsel %vm1797, %v4647, 0
      %v4826 = vsel %vm1797, %v4648, 0
      %v4829 = vsel %vm1797, %v4649, 0
      %v4832 = vsel %vm1797, %v4650, 0
      %v4835 = vsel %vm1797, %v4651, 0
      %v4838 = vsel %vm1797, %v4652, 0
      %v4841 = vsel %vm1797, %v4653, 0
      %v4844 = vsel %vm1797, %v4654, 0
      %v4847 = vsel %vm1797, %v4655, 0
      %v4850 = vsel %vm1797, %v4656, 0
      %v4853 = vsel %vm1797, %v4657, 0
      %v4856 = vsel %vm1797, %v4658, 0
      %v4859 = vsel %vm1797, %v4659, 0
      %v4862 = vsel %vm1797, %v4660, 0
      %v4865 = vsel %vm1797, %v4661, 0
      %v4868 = vsel %vm1797, %v4662, 0
      %v4871 = vsel %vm1797, %v4663, 0
      %v4874 = vsel %vm1797, %v4664, 0
      %v4877 = vsel %vm1797, %v4665, 0
      %v4880 = vsel %vm1797, %v4666, 0
      %v4883 = vsel %vm1797, %v4667, 0
      %v4886 = vsel %vm1797, %v4668, 0
      %v4889 = vsel %vm1797, %v4669, 0
      %4891 = vmatprep.subr.bf16.mxu0 0
      %4892 = vmatpush1.bf16.msra.mxu0 %v4691
      %4893 = vmatprep.subr.bf16.mxu0 0
      %4894 = vmatpush1.bf16.msra.mxu0 %v4692
      %4895 = vmatprep.subr.bf16.mxu0 0
      %4896 = vmatpush1.bf16.msra.mxu0 %v4693
      %4897 = vmatprep.subr.bf16.mxu0 0
      %4898 = vmatpush1.bf16.msra.mxu0 %v4694
      %4899 = vmatprep.subr.bf16.mxu0 0
      %4900 = vmatpush1.bf16.msra.mxu0 0
      %4901 = vmatprep.subr.bf16.mxu0 0
      %4902 = vmatpush1.bf16.msra.mxu0 0
      %4903 = vmatprep.subr.bf16.mxu0 0
      %4904 = vmatpush1.bf16.msra.mxu0 0
      %4905 = vmatprep.subr.bf16.mxu0 0
      %4906 = vmatpush1.bf16.msra.mxu0 0
      %4907 = vmatprep.subr.bf16.mxu0 0
      %4908 = vmatpush1.bf16.msra.mxu0 0
      %4909 = vmatprep.subr.bf16.mxu0 0
      %4910 = vmatpush1.bf16.msra.mxu0 0
      %4911 = vmatprep.subr.bf16.mxu0 0
      %4912 = vmatpush1.bf16.msra.mxu0 0
      %4913 = vmatprep.subr.bf16.mxu0 0
      %4914 = vmatpush1.bf16.msra.mxu0 0
      %4915 = vmatprep.subr.bf16.mxu0 0
      %4916 = vmatpush1.bf16.msra.mxu0 0
      %4917 = vmatprep.subr.bf16.mxu0 0
      %4918 = vmatpush1.bf16.msra.mxu0 0
      %4919 = vmatprep.subr.bf16.mxu0 0
      %4920 = vmatpush1.bf16.msra.mxu0 0
      %4921 = vmatprep.subr.bf16.mxu0 0
      %4922 = vmatpush1.bf16.msra.mxu0 0
      %4923 = vmatprep.mubr.bf16.mxu0 0
      %4924 = vmatmul.mubr.bf16.gmra.mrb[0].mxu0 %v4700
      %v4925 = vpop.f32.mrb[0].mxu0
      %v4926 = vadd.f32 %v4674, %v4925
      %v4927 = vpop.f32.mrb[0].mxu0
      %v4928 = vpop.f32.mrb[0].mxu0
      %v4929 = vadd.f32 %v4674, %v4928
      %v4930 = vpop.f32.mrb[0].mxu0
      %4931 = vmatprep.mubr.bf16.mxu0 0
      %4932 = vmatmul.mubr.bf16.gmra.mrb[0].mxu0 %v4703
      %v4933 = vpop.f32.mrb[0].mxu0
      %v4934 = vadd.f32 %v4674, %v4933
      %v4935 = vpop.f32.mrb[0].mxu0
      %v4936 = vpop.f32.mrb[0].mxu0
      %v4937 = vadd.f32 %v4674, %v4936
      %v4938 = vpop.f32.mrb[0].mxu0
      %4939 = vmatprep.mubr.bf16.mxu0 0
      %4940 = vmatmul.mubr.bf16.gmra.mrb[0].mxu0 %v4706
      %v4941 = vpop.f32.mrb[0].mxu0
      %v4942 = vadd.f32 %v4674, %v4941
      %v4943 = vpop.f32.mrb[0].mxu0
      %v4944 = vpop.f32.mrb[0].mxu0
      %v4945 = vadd.f32 %v4674, %v4944
      %v4946 = vpop.f32.mrb[0].mxu0
      %4947 = vmatprep.mubr.bf16.mxu0 0
      %4948 = vmatmul.mubr.bf16.gmra.mrb[0].mxu0 %v4709
      %v4949 = vpop.f32.mrb[0].mxu0
      %v4950 = vadd.f32 %v4674, %v4949
      %v4951 = vpop.f32.mrb[0].mxu0
      %v4952 = vpop.f32.mrb[0].mxu0
      %v4953 = vadd.f32 %v4674, %v4952
      %v4954 = vpop.f32.mrb[0].mxu0
      %4955 = vmatprep.mubr.bf16.mxu0 0
      %4956 = vmatmul.mubr.bf16.gmra.mrb[0].mxu0 %v4712
      %v4957 = vpop.f32.mrb[0].mxu0
      %v4958 = vadd.f32 %v4674, %v4957
      %v4959 = vpop.f32.mrb[0].mxu0
      %v4960 = vpop.f32.mrb[0].mxu0
      %v4961 = vadd.f32 %v4674, %v4960
      %v4962 = vpop.f32.mrb[0].mxu0
      %4963 = vmatprep.mubr.bf16.mxu0 0
      %4964 = vmatmul.mubr.bf16.gmra.mrb[0].mxu0 %v4715
      %v4965 = vpop.f32.mrb[0].mxu0
      %v4966 = vadd.f32 %v4674, %v4965
      %v4967 = vpop.f32.mrb[0].mxu0
      %v4968 = vpop.f32.mrb[0].mxu0
      %v4969 = vadd.f32 %v4674, %v4968
      %v4970 = vpop.f32.mrb[0].mxu0
      %4971 = vmatprep.mubr.bf16.mxu0 0
      %4972 = vmatmul.mubr.bf16.gmra.mrb[0].mxu0 %v4718
      %v4973 = vpop.f32.mrb[0].mxu0
      %v4974 = vadd.f32 %v4674, %v4973
      %v4975 = vpop.f32.mrb[0].mxu0
      %v4976 = vpop.f32.mrb[0].mxu0
      %v4977 = vadd.f32 %v4674, %v4976
      %v4978 = vpop.f32.mrb[0].mxu0
      %4979 = vmatprep.mubr.bf16.mxu0 0
      %4980 = vmatmul.mubr.bf16.gmra.mrb[0].mxu0 %v4721
      %v4981 = vpop.f32.mrb[0].mxu0
      %v4982 = vadd.f32 %v4674, %v4981
      %v4983 = vpop.f32.mrb[0].mxu0
      %v4984 = vpop.f32.mrb[0].mxu0
      %v4985 = vadd.f32 %v4674, %v4984
      %v4986 = vpop.f32.mrb[0].mxu0
      %4987 = vmatprep.mubr.bf16.mxu0 0
      %4988 = vmatmul.mubr.bf16.gmra.mrb[0].mxu0 %v4724
      %v4989 = vpop.f32.mrb[0].mxu0
      %v4990 = vadd.f32 %v4674, %v4989
      %v4991 = vpop.f32.mrb[0].mxu0
      %v4992 = vpop.f32.mrb[0].mxu0
      %v4993 = vadd.f32 %v4674, %v4992
      %v4994 = vpop.f32.mrb[0].mxu0
      %4995 = vmatprep.mubr.bf16.mxu0 0
      %4996 = vmatmul.mubr.bf16.gmra.mrb[0].mxu0 %v4727
      %v4997 = vpop.f32.mrb[0].mxu0
      %v4998 = vadd.f32 %v4674, %v4997
      %v4999 = vpop.f32.mrb[0].mxu0
      %v5000 = vpop.f32.mrb[0].mxu0
      %v5001 = vadd.f32 %v4674, %v5000
      %v5002 = vpop.f32.mrb[0].mxu0
      %5003 = vmatprep.mubr.bf16.mxu0 0
      %5004 = vmatmul.mubr.bf16.gmra.mrb[0].mxu0 %v4730
      %v5005 = vpop.f32.mrb[0].mxu0
      %v5006 = vadd.f32 %v4674, %v5005
      %v5007 = vpop.f32.mrb[0].mxu0
      %v5008 = vpop.f32.mrb[0].mxu0
      %v5009 = vadd.f32 %v4674, %v5008
      %v5010 = vpop.f32.mrb[0].mxu0
      %5011 = vmatprep.mubr.bf16.mxu0 0
      %5012 = vmatmul.mubr.bf16.gmra.mrb[0].mxu0 %v4733
      %v5013 = vpop.f32.mrb[0].mxu0
      %v5014 = vadd.f32 %v4674, %v5013
      %v5015 = vpop.f32.mrb[0].mxu0
      %v5016 = vpop.f32.mrb[0].mxu0
      %v5017 = vadd.f32 %v4674, %v5016
      %v5018 = vpop.f32.mrb[0].mxu0
      %5019 = vmatprep.mubr.bf16.mxu0 0
      %5020 = vmatmul.mubr.bf16.gmra.mrb[0].mxu0 %v4736
      %v5021 = vpop.f32.mrb[0].mxu0
      %v5022 = vadd.f32 %v4674, %v5021
      %v5023 = vpop.f32.mrb[0].mxu0
      %v5024 = vpop.f32.mrb[0].mxu0
      %v5025 = vadd.f32 %v4674, %v5024
      %v5026 = vpop.f32.mrb[0].mxu0
      %5027 = vmatprep.mubr.bf16.mxu0 0
      %5028 = vmatmul.mubr.bf16.gmra.mrb[0].mxu0 %v4739
      %v5029 = vpop.f32.mrb[0].mxu0
      %v5030 = vadd.f32 %v4674, %v5029
      %v5031 = vpop.f32.mrb[0].mxu0
      %v5032 = vpop.f32.mrb[0].mxu0
      %v5033 = vadd.f32 %v4674, %v5032
      %v5034 = vpop.f32.mrb[0].mxu0
      %5035 = vmatprep.mubr.bf16.mxu0 0
      %5036 = vmatmul.mubr.bf16.gmra.mrb[0].mxu0 %v4742
      %v5037 = vpop.f32.mrb[0].mxu0
      %v5038 = vadd.f32 %v4674, %v5037
      %v5039 = vpop.f32.mrb[0].mxu0
      %v5040 = vpop.f32.mrb[0].mxu0
      %v5041 = vadd.f32 %v4674, %v5040
      %v5042 = vpop.f32.mrb[0].mxu0
      %5043 = vmatprep.mubr.bf16.mxu0 0
      %5044 = vmatmul.mubr.bf16.gmra.mrb[0].mxu0 %v4745
      %v5045 = vpop.f32.mrb[0].mxu0
      %v5046 = vadd.f32 %v4674, %v5045
      %v5047 = vpop.f32.mrb[0].mxu0
      %v5048 = vpop.f32.mrb[0].mxu0
      %v5049 = vadd.f32 %v4674, %v5048
      %v5050 = vpop.f32.mrb[0].mxu0
      %5051 = vmatprep.mubr.bf16.mxu0 0
      %5052 = vmatmul.mubr.bf16.gmra.mrb[0].mxu0 %v4748
      %v5053 = vpop.f32.mrb[0].mxu0
      %v5054 = vadd.f32 %v4674, %v5053
      %v5055 = vpop.f32.mrb[0].mxu0
      %v5056 = vpop.f32.mrb[0].mxu0
      %v5057 = vadd.f32 %v4674, %v5056
      %v5058 = vpop.f32.mrb[0].mxu0
      %5059 = vmatprep.mubr.bf16.mxu0 0
      %5060 = vmatmul.mubr.bf16.gmra.mrb[0].mxu0 %v4751
      %v5061 = vpop.f32.mrb[0].mxu0
      %v5062 = vadd.f32 %v4674, %v5061
      %v5063 = vpop.f32.mrb[0].mxu0
      %v5064 = vpop.f32.mrb[0].mxu0
      %v5065 = vadd.f32 %v4674, %v5064
      %v5066 = vpop.f32.mrb[0].mxu0
      %5067 = vmatprep.mubr.bf16.mxu0 0
      %5068 = vmatmul.mubr.bf16.gmra.mrb[0].mxu0 %v4754
      %v5069 = vpop.f32.mrb[0].mxu0
      %v5070 = vadd.f32 %v4674, %v5069
      %v5071 = vpop.f32.mrb[0].mxu0
      %v5072 = vpop.f32.mrb[0].mxu0
      %v5073 = vadd.f32 %v4674, %v5072
      %v5074 = vpop.f32.mrb[0].mxu0
      %5075 = vmatprep.mubr.bf16.mxu0 0
      %5076 = vmatmul.mubr.bf16.gmra.mrb[0].mxu0 %v4757
      %v5077 = vpop.f32.mrb[0].mxu0
      %v5078 = vadd.f32 %v4674, %v5077
      %v5079 = vpop.f32.mrb[0].mxu0
      %v5080 = vpop.f32.mrb[0].mxu0
      %v5081 = vadd.f32 %v4674, %v5080
      %v5082 = vpop.f32.mrb[0].mxu0
      %5083 = vmatprep.mubr.bf16.mxu0 0
      %5084 = vmatmul.mubr.bf16.gmra.mrb[0].mxu0 %v4760
      %v5085 = vpop.f32.mrb[0].mxu0
      %v5086 = vadd.f32 %v4674, %v5085
      %v5087 = vpop.f32.mrb[0].mxu0
      %v5088 = vpop.f32.mrb[0].mxu0
      %v5089 = vadd.f32 %v4674, %v5088
      %v5090 = vpop.f32.mrb[0].mxu0
      %5091 = vmatprep.mubr.bf16.mxu0 0
      %5092 = vmatmul.mubr.bf16.gmra.mrb[0].mxu0 %v4763
      %v5093 = vpop.f32.mrb[0].mxu0
      %v5094 = vadd.f32 %v4674, %v5093
      %v5095 = vpop.f32.mrb[0].mxu0
      %v5096 = vpop.f32.mrb[0].mxu0
      %v5097 = vadd.f32 %v4674, %v5096
      %v5098 = vpop.f32.mrb[0].mxu0
      %5099 = vmatprep.mubr.bf16.mxu0 0
      %5100 = vmatmul.mubr.bf16.gmra.mrb[0].mxu0 %v4766
      %v5101 = vpop.f32.mrb[0].mxu0
      %v5102 = vadd.f32 %v4674, %v5101
      %v5103 = vpop.f32.mrb[0].mxu0
      %v5104 = vpop.f32.mrb[0].mxu0
      %v5105 = vadd.f32 %v4674, %v5104
      %v5106 = vpop.f32.mrb[0].mxu0
      %5107 = vmatprep.mubr.bf16.mxu0 0
      %5108 = vmatmul.mubr.bf16.gmra.mrb[0].mxu0 %v4769
      %v5109 = vpop.f32.mrb[0].mxu0
      %v5110 = vadd.f32 %v4674, %v5109
      %v5111 = vpop.f32.mrb[0].mxu0
      %v5112 = vpop.f32.mrb[0].mxu0
      %v5113 = vadd.f32 %v4674, %v5112
      %v5114 = vpop.f32.mrb[0].mxu0
      %5115 = vmatprep.mubr.bf16.mxu0 0
      %5116 = vmatmul.mubr.bf16.gmra.mrb[0].mxu0 %v4772
      %v5117 = vpop.f32.mrb[0].mxu0
      %v5118 = vadd.f32 %v4674, %v5117
      %v5119 = vpop.f32.mrb[0].mxu0
      %v5120 = vpop.f32.mrb[0].mxu0
      %v5121 = vadd.f32 %v4674, %v5120
      %v5122 = vpop.f32.mrb[0].mxu0
      %5123 = vmatprep.mubr.bf16.mxu0 0
      %5124 = vmatmul.mubr.bf16.gmra.mrb[0].mxu0 %v4775
      %v5125 = vpop.f32.mrb[0].mxu0
      %v5126 = vadd.f32 %v4674, %v5125
      %v5127 = vpop.f32.mrb[0].mxu0
      %v5128 = vpop.f32.mrb[0].mxu0
      %v5129 = vadd.f32 %v4674, %v5128
      %v5130 = vpop.f32.mrb[0].mxu0
      %5131 = vmatprep.mubr.bf16.mxu0 0
      %5132 = vmatmul.mubr.bf16.gmra.mrb[0].mxu0 %v4778
      %v5133 = vpop.f32.mrb[0].mxu0
      %v5134 = vadd.f32 %v4674, %v5133
      %v5135 = vpop.f32.mrb[0].mxu0
      %v5136 = vpop.f32.mrb[0].mxu0
      %v5137 = vadd.f32 %v4674, %v5136
      %v5138 = vpop.f32.mrb[0].mxu0
      %5139 = vmatprep.mubr.bf16.mxu0 0
      %5140 = vmatmul.mubr.bf16.gmra.mrb[0].mxu0 %v4781
      %v5141 = vpop.f32.mrb[0].mxu0
      %v5142 = vadd.f32 %v4674, %v5141
      %v5143 = vpop.f32.mrb[0].mxu0
      %v5144 = vpop.f32.mrb[0].mxu0
      %v5145 = vadd.f32 %v4674, %v5144
      %v5146 = vpop.f32.mrb[0].mxu0
      %5147 = vmatprep.mubr.bf16.mxu0 0
      %5148 = vmatmul.mubr.bf16.gmra.mrb[0].mxu0 %v4784
      %v5149 = vpop.f32.mrb[0].mxu0
      %v5150 = vadd.f32 %v4674, %v5149
      %v5151 = vpop.f32.mrb[0].mxu0
      %v5152 = vpop.f32.mrb[0].mxu0
      %v5153 = vadd.f32 %v4674, %v5152
      %v5154 = vpop.f32.mrb[0].mxu0
      %5155 = vmatprep.mubr.bf16.mxu0 0
      %5156 = vmatmul.mubr.bf16.gmra.mrb[0].mxu0 %v4787
      %v5157 = vpop.f32.mrb[0].mxu0
      %v5158 = vadd.f32 %v4674, %v5157
      %v5159 = vpop.f32.mrb[0].mxu0
      %v5160 = vpop.f32.mrb[0].mxu0
      %v5161 = vadd.f32 %v4674, %v5160
      %v5162 = vpop.f32.mrb[0].mxu0
      %5163 = vmatprep.mubr.bf16.mxu0 0
      %5164 = vmatmul.mubr.bf16.gmra.mrb[0].mxu0 %v4790
      %v5165 = vpop.f32.mrb[0].mxu0
      %v5166 = vadd.f32 %v4674, %v5165
      %v5167 = vpop.f32.mrb[0].mxu0
      %v5168 = vpop.f32.mrb[0].mxu0
      %v5169 = vadd.f32 %v4674, %v5168
      %v5170 = vpop.f32.mrb[0].mxu0
      %5171 = vmatprep.mubr.bf16.mxu0 0
      %5172 = vmatmul.mubr.bf16.gmra.mrb[0].mxu0 %v4793
      %v5173 = vpop.f32.mrb[0].mxu0
      %v5174 = vadd.f32 %v4674, %v5173
      %v5175 = vpop.f32.mrb[0].mxu0
      %v5176 = vpop.f32.mrb[0].mxu0
      %v5177 = vadd.f32 %v4674, %v5176
      %v5178 = vpop.f32.mrb[0].mxu0
      %5179 = vmatprep.mubr.bf16.mxu0 0
      %5180 = vmatmul.mubr.bf16.gmra.mrb[0].mxu0 %v4796
      %v5181 = vpop.f32.mrb[0].mxu0
      %v5182 = vadd.f32 %v4674, %v5181
      %v5183 = vpop.f32.mrb[0].mxu0
      %v5184 = vpop.f32.mrb[0].mxu0
      %v5185 = vadd.f32 %v4674, %v5184
      %v5186 = vpop.f32.mrb[0].mxu0
      %5187 = vmatprep.mubr.bf16.mxu0 0
      %5188 = vmatmul.mubr.bf16.gmra.mrb[0].mxu0 %v4799
      %v5189 = vpop.f32.mrb[0].mxu0
      %v5190 = vadd.f32 %v4674, %v5189
      %v5191 = vpop.f32.mrb[0].mxu0
      %v5192 = vpop.f32.mrb[0].mxu0
      %v5193 = vadd.f32 %v4674, %v5192
      %v5194 = vpop.f32.mrb[0].mxu0
      %5195 = vmatprep.mubr.bf16.mxu0 0
      %5196 = vmatmul.mubr.bf16.gmra.mrb[0].mxu0 %v4802
      %v5197 = vpop.f32.mrb[0].mxu0
      %v5198 = vadd.f32 %v4674, %v5197
      %v5199 = vpop.f32.mrb[0].mxu0
      %v5200 = vpop.f32.mrb[0].mxu0
      %v5201 = vadd.f32 %v4674, %v5200
      %v5202 = vpop.f32.mrb[0].mxu0
      %5203 = vmatprep.mubr.bf16.mxu0 0
      %5204 = vmatmul.mubr.bf16.gmra.mrb[0].mxu0 %v4805
      %v5205 = vpop.f32.mrb[0].mxu0
      %v5206 = vadd.f32 %v4674, %v5205
      %v5207 = vpop.f32.mrb[0].mxu0
      %v5208 = vpop.f32.mrb[0].mxu0
      %v5209 = vadd.f32 %v4674, %v5208
      %v5210 = vpop.f32.mrb[0].mxu0
      %5211 = vmatprep.mubr.bf16.mxu0 0
      %5212 = vmatmul.mubr.bf16.gmra.mrb[0].mxu0 %v4808
      %v5213 = vpop.f32.mrb[0].mxu0
      %v5214 = vadd.f32 %v4674, %v5213
      %v5215 = vpop.f32.mrb[0].mxu0
      %v5216 = vpop.f32.mrb[0].mxu0
      %v5217 = vadd.f32 %v4674, %v5216
      %v5218 = vpop.f32.mrb[0].mxu0
      %5219 = vmatprep.mubr.bf16.mxu0 0
      %5220 = vmatmul.mubr.bf16.gmra.mrb[0].mxu0 %v4811
      %v5221 = vpop.f32.mrb[0].mxu0
      %v5222 = vadd.f32 %v4674, %v5221
      %v5223 = vpop.f32.mrb[0].mxu0
      %v5224 = vpop.f32.mrb[0].mxu0
      %v5225 = vadd.f32 %v4674, %v5224
      %v5226 = vpop.f32.mrb[0].mxu0
      %5227 = vmatprep.mubr.bf16.mxu0 0
      %5228 = vmatmul.mubr.bf16.gmra.mrb[0].mxu0 %v4814
      %v5229 = vpop.f32.mrb[0].mxu0
      %v5230 = vadd.f32 %v4674, %v5229
      %v5231 = vpop.f32.mrb[0].mxu0
      %v5232 = vpop.f32.mrb[0].mxu0
      %v5233 = vadd.f32 %v4674, %v5232
      %v5234 = vpop.f32.mrb[0].mxu0
      %5235 = vmatprep.mubr.bf16.mxu0 0
      %5236 = vmatmul.mubr.bf16.gmra.mrb[0].mxu0 %v4817
      %v5237 = vpop.f32.mrb[0].mxu0
      %v5238 = vadd.f32 %v4674, %v5237
      %v5239 = vpop.f32.mrb[0].mxu0
      %v5240 = vpop.f32.mrb[0].mxu0
      %v5241 = vadd.f32 %v4674, %v5240
      %v5242 = vpop.f32.mrb[0].mxu0
      %5243 = vmatprep.mubr.bf16.mxu0 0
      %5244 = vmatmul.mubr.bf16.gmra.mrb[0].mxu0 %v4820
      %v5245 = vpop.f32.mrb[0].mxu0
      %v5246 = vadd.f32 %v4674, %v5245
      %v5247 = vpop.f32.mrb[0].mxu0
      %v5248 = vpop.f32.mrb[0].mxu0
      %v5249 = vadd.f32 %v4674, %v5248
      %v5250 = vpop.f32.mrb[0].mxu0
      %5251 = vmatprep.mubr.bf16.mxu0 0
      %5252 = vmatmul.mubr.bf16.gmra.mrb[0].mxu0 %v4823
      %v5253 = vpop.f32.mrb[0].mxu0
      %v5254 = vadd.f32 %v4674, %v5253
      %v5255 = vpop.f32.mrb[0].mxu0
      %v5256 = vpop.f32.mrb[0].mxu0
      %v5257 = vadd.f32 %v4674, %v5256
      %v5258 = vpop.f32.mrb[0].mxu0
      %5259 = vmatprep.mubr.bf16.mxu0 0
      %5260 = vmatmul.mubr.bf16.gmra.mrb[0].mxu0 %v4826
      %v5261 = vpop.f32.mrb[0].mxu0
      %v5262 = vadd.f32 %v4674, %v5261
      %v5263 = vpop.f32.mrb[0].mxu0
      %v5264 = vpop.f32.mrb[0].mxu0
      %v5265 = vadd.f32 %v4674, %v5264
      %v5266 = vpop.f32.mrb[0].mxu0
      %5267 = vmatprep.mubr.bf16.mxu0 0
      %5268 = vmatmul.mubr.bf16.gmra.mrb[0].mxu0 %v4829
      %v5269 = vpop.f32.mrb[0].mxu0
      %v5270 = vadd.f32 %v4674, %v5269
      %v5271 = vpop.f32.mrb[0].mxu0
      %v5272 = vpop.f32.mrb[0].mxu0
      %v5273 = vadd.f32 %v4674, %v5272
      %v5274 = vpop.f32.mrb[0].mxu0
      %5275 = vmatprep.mubr.bf16.mxu0 0
      %5276 = vmatmul.mubr.bf16.gmra.mrb[0].mxu0 %v4832
      %v5277 = vpop.f32.mrb[0].mxu0
      %v5278 = vadd.f32 %v4674, %v5277
      %v5279 = vpop.f32.mrb[0].mxu0
      %v5280 = vpop.f32.mrb[0].mxu0
      %v5281 = vadd.f32 %v4674, %v5280
      %v5282 = vpop.f32.mrb[0].mxu0
      %5283 = vmatprep.mubr.bf16.mxu0 0
      %5284 = vmatmul.mubr.bf16.gmra.mrb[0].mxu0 %v4835
      %v5285 = vpop.f32.mrb[0].mxu0
      %v5286 = vadd.f32 %v4674, %v5285
      %v5287 = vpop.f32.mrb[0].mxu0
      %v5288 = vpop.f32.mrb[0].mxu0
      %v5289 = vadd.f32 %v4674, %v5288
      %v5290 = vpop.f32.mrb[0].mxu0
      %5291 = vmatprep.mubr.bf16.mxu0 0
      %5292 = vmatmul.mubr.bf16.gmra.mrb[0].mxu0 %v4838
      %v5293 = vpop.f32.mrb[0].mxu0
      %v5294 = vadd.f32 %v4674, %v5293
      %v5295 = vpop.f32.mrb[0].mxu0
      %v5296 = vpop.f32.mrb[0].mxu0
      %v5297 = vadd.f32 %v4674, %v5296
      %v5298 = vpop.f32.mrb[0].mxu0
      %5299 = vmatprep.mubr.bf16.mxu0 0
      %5300 = vmatmul.mubr.bf16.gmra.mrb[0].mxu0 %v4841
      %v5301 = vpop.f32.mrb[0].mxu0
      %v5302 = vadd.f32 %v4674, %v5301
      %v5303 = vpop.f32.mrb[0].mxu0
      %v5304 = vpop.f32.mrb[0].mxu0
      %v5305 = vadd.f32 %v4674, %v5304
      %v5306 = vpop.f32.mrb[0].mxu0
      %5307 = vmatprep.mubr.bf16.mxu0 0
      %5308 = vmatmul.mubr.bf16.gmra.mrb[0].mxu0 %v4844
      %v5309 = vpop.f32.mrb[0].mxu0
      %v5310 = vadd.f32 %v4674, %v5309
      %v5311 = vpop.f32.mrb[0].mxu0
      %v5312 = vpop.f32.mrb[0].mxu0
      %v5313 = vadd.f32 %v4674, %v5312
      %v5314 = vpop.f32.mrb[0].mxu0
      %5315 = vmatprep.mubr.bf16.mxu0 0
      %5316 = vmatmul.mubr.bf16.gmra.mrb[0].mxu0 %v4847
      %v5317 = vpop.f32.mrb[0].mxu0
      %v5318 = vadd.f32 %v4674, %v5317
      %v5319 = vpop.f32.mrb[0].mxu0
      %v5320 = vpop.f32.mrb[0].mxu0
      %v5321 = vadd.f32 %v4674, %v5320
      %v5322 = vpop.f32.mrb[0].mxu0
      %5323 = vmatprep.mubr.bf16.mxu0 0
      %5324 = vmatmul.mubr.bf16.gmra.mrb[0].mxu0 %v4850
      %v5325 = vpop.f32.mrb[0].mxu0
      %v5326 = vadd.f32 %v4674, %v5325
      %v5327 = vpop.f32.mrb[0].mxu0
      %v5328 = vpop.f32.mrb[0].mxu0
      %v5329 = vadd.f32 %v4674, %v5328
      %v5330 = vpop.f32.mrb[0].mxu0
      %5331 = vmatprep.mubr.bf16.mxu0 0
      %5332 = vmatmul.mubr.bf16.gmra.mrb[0].mxu0 %v4853
      %v5333 = vpop.f32.mrb[0].mxu0
      %v5334 = vadd.f32 %v4674, %v5333
      %v5335 = vpop.f32.mrb[0].mxu0
      %v5336 = vpop.f32.mrb[0].mxu0
      %v5337 = vadd.f32 %v4674, %v5336
      %v5338 = vpop.f32.mrb[0].mxu0
      %5339 = vmatprep.mubr.bf16.mxu0 0
      %5340 = vmatmul.mubr.bf16.gmra.mrb[0].mxu0 %v4856
      %v5341 = vpop.f32.mrb[0].mxu0
      %v5342 = vadd.f32 %v4674, %v5341
      %v5343 = vpop.f32.mrb[0].mxu0
      %v5344 = vpop.f32.mrb[0].mxu0
      %v5345 = vadd.f32 %v4674, %v5344
      %v5346 = vpop.f32.mrb[0].mxu0
      %5347 = vmatprep.mubr.bf16.mxu0 0
      %5348 = vmatmul.mubr.bf16.gmra.mrb[0].mxu0 %v4859
      %v5349 = vpop.f32.mrb[0].mxu0
      %v5350 = vadd.f32 %v4674, %v5349
      %v5351 = vpop.f32.mrb[0].mxu0
      %v5352 = vpop.f32.mrb[0].mxu0
      %v5353 = vadd.f32 %v4674, %v5352
      %v5354 = vpop.f32.mrb[0].mxu0
      %5355 = vmatprep.mubr.bf16.mxu0 0
      %5356 = vmatmul.mubr.bf16.gmra.mrb[0].mxu0 %v4862
      %v5357 = vpop.f32.mrb[0].mxu0
      %v5358 = vadd.f32 %v4674, %v5357
      %v5359 = vpop.f32.mrb[0].mxu0
      %v5360 = vpop.f32.mrb[0].mxu0
      %v5361 = vadd.f32 %v4674, %v5360
      %v5362 = vpop.f32.mrb[0].mxu0
      %5363 = vmatprep.mubr.bf16.mxu0 0
      %5364 = vmatmul.mubr.bf16.gmra.mrb[0].mxu0 %v4865
      %v5365 = vpop.f32.mrb[0].mxu0
      %v5366 = vadd.f32 %v4674, %v5365
      %v5367 = vpop.f32.mrb[0].mxu0
      %v5368 = vpop.f32.mrb[0].mxu0
      %v5369 = vadd.f32 %v4674, %v5368
      %v5370 = vpop.f32.mrb[0].mxu0
      %5371 = vmatprep.mubr.bf16.mxu0 0
      %5372 = vmatmul.mubr.bf16.gmra.mrb[0].mxu0 %v4868
      %v5373 = vpop.f32.mrb[0].mxu0
      %v5374 = vadd.f32 %v4674, %v5373
      %v5375 = vpop.f32.mrb[0].mxu0
      %v5376 = vpop.f32.mrb[0].mxu0
      %v5377 = vadd.f32 %v4674, %v5376
      %v5378 = vpop.f32.mrb[0].mxu0
      %5379 = vmatprep.mubr.bf16.mxu0 0
      %5380 = vmatmul.mubr.bf16.gmra.mrb[0].mxu0 %v4871
      %v5381 = vpop.f32.mrb[0].mxu0
      %v5382 = vadd.f32 %v4674, %v5381
      %v5383 = vpop.f32.mrb[0].mxu0
      %v5384 = vpop.f32.mrb[0].mxu0
      %v5385 = vadd.f32 %v4674, %v5384
      %v5386 = vpop.f32.mrb[0].mxu0
      %5387 = vmatprep.mubr.bf16.mxu0 0
      %5388 = vmatmul.mubr.bf16.gmra.mrb[0].mxu0 %v4874
      %v5389 = vpop.f32.mrb[0].mxu0
      %v5390 = vadd.f32 %v4674, %v5389
      %v5391 = vpop.f32.mrb[0].mxu0
      %v5392 = vpop.f32.mrb[0].mxu0
      %v5393 = vadd.f32 %v4674, %v5392
      %v5394 = vpop.f32.mrb[0].mxu0
      %5395 = vmatprep.mubr.bf16.mxu0 0
      %5396 = vmatmul.mubr.bf16.gmra.mrb[0].mxu0 %v4877
      %v5397 = vpop.f32.mrb[0].mxu0
      %v5398 = vadd.f32 %v4674, %v5397
      %v5399 = vpop.f32.mrb[0].mxu0
      %v5400 = vpop.f32.mrb[0].mxu0
      %v5401 = vadd.f32 %v4674, %v5400
      %v5402 = vpop.f32.mrb[0].mxu0
      %5403 = vmatprep.mubr.bf16.mxu0 0
      %5404 = vmatmul.mubr.bf16.gmra.mrb[0].mxu0 %v4880
      %v5405 = vpop.f32.mrb[0].mxu0
      %v5406 = vadd.f32 %v4674, %v5405
      %v5407 = vpop.f32.mrb[0].mxu0
      %v5408 = vpop.f32.mrb[0].mxu0
      %v5409 = vadd.f32 %v4674, %v5408
      %v5410 = vpop.f32.mrb[0].mxu0
      %5411 = vmatprep.mubr.bf16.mxu0 0
      %5412 = vmatmul.mubr.bf16.gmra.mrb[0].mxu0 %v4883
      %v5413 = vpop.f32.mrb[0].mxu0
      %v5414 = vadd.f32 %v4674, %v5413
      %v5415 = vpop.f32.mrb[0].mxu0
      %v5416 = vpop.f32.mrb[0].mxu0
      %v5417 = vadd.f32 %v4674, %v5416
      %v5418 = vpop.f32.mrb[0].mxu0
      %5419 = vmatprep.mubr.bf16.mxu0 0
      %5420 = vmatmul.mubr.bf16.gmra.mrb[0].mxu0 %v4886
      %v5421 = vpop.f32.mrb[0].mxu0
      %v5422 = vadd.f32 %v4674, %v5421
      %v5423 = vpop.f32.mrb[0].mxu0
      %v5424 = vpop.f32.mrb[0].mxu0
      %v5425 = vadd.f32 %v4674, %v5424
      %v5426 = vpop.f32.mrb[0].mxu0
      %5427 = vmatprep.mubr.bf16.mxu0 0
      %5428 = vmatmul.mubr.bf16.gmra.mrb[0].mxu0 %v4889
      %v5429 = vpop.f32.mrb[0].mxu0
      %v5430 = vadd.f32 %v4674, %v5429
      %v5431 = vpop.f32.mrb[0].mxu0
      %v5432 = vpop.f32.mrb[0].mxu0
      %v5433 = vadd.f32 %v4674, %v5432
      %v5434 = vpop.f32.mrb[0].mxu0
      %5435 = vdwg.mxu0
      %v5436 = vmax.f32 %v4926, 0.0
      %v5437 = vmax.f32 %v4929, 0.0
      %v5438 = vmax.f32 %v4934, 0.0
      %v5439 = vmax.f32 %v4937, 0.0
      %v5440 = vmax.f32 %v4942, 0.0
      %v5441 = vmax.f32 %v4945, 0.0
      %v5442 = vmax.f32 %v4950, 0.0
      %v5443 = vmax.f32 %v4953, 0.0
      %v5444 = vmax.f32 %v4958, 0.0
      %v5445 = vmax.f32 %v4961, 0.0
      %v5446 = vmax.f32 %v4966, 0.0
      %v5447 = vmax.f32 %v4969, 0.0
      %v5448 = vmax.f32 %v4974, 0.0
      %v5449 = vmax.f32 %v4977, 0.0
      %v5450 = vmax.f32 %v4982, 0.0
      %v5451 = vmax.f32 %v4985, 0.0
      %v5452 = vmax.f32 %v4990, 0.0
      %v5453 = vmax.f32 %v4993, 0.0
      %v5454 = vmax.f32 %v4998, 0.0
      %v5455 = vmax.f32 %v5001, 0.0
      %v5456 = vmax.f32 %v5006, 0.0
      %v5457 = vmax.f32 %v5009, 0.0
      %v5458 = vmax.f32 %v5014, 0.0
      %v5459 = vmax.f32 %v5017, 0.0
      %v5460 = vmax.f32 %v5022, 0.0
      %v5461 = vmax.f32 %v5025, 0.0
      %v5462 = vmax.f32 %v5030, 0.0
      %v5463 = vmax.f32 %v5033, 0.0
      %v5464 = vmax.f32 %v5038, 0.0
      %v5465 = vmax.f32 %v5041, 0.0
      %v5466 = vmax.f32 %v5046, 0.0
      %v5467 = vmax.f32 %v5049, 0.0
      %v5468 = vmax.f32 %v5054, 0.0
      %v5469 = vmax.f32 %v5057, 0.0
      %v5470 = vmax.f32 %v5062, 0.0
      %v5471 = vmax.f32 %v5065, 0.0
      %v5472 = vmax.f32 %v5070, 0.0
      %v5473 = vmax.f32 %v5073, 0.0
      %v5474 = vmax.f32 %v5078, 0.0
      %v5475 = vmax.f32 %v5081, 0.0
      %v5476 = vmax.f32 %v5086, 0.0
      %v5477 = vmax.f32 %v5089, 0.0
      %v5478 = vmax.f32 %v5094, 0.0
      %v5479 = vmax.f32 %v5097, 0.0
      %v5480 = vmax.f32 %v5102, 0.0
      %v5481 = vmax.f32 %v5105, 0.0
      %v5482 = vmax.f32 %v5110, 0.0
      %v5483 = vmax.f32 %v5113, 0.0
      %v5484 = vmax.f32 %v5118, 0.0
      %v5485 = vmax.f32 %v5121, 0.0
      %v5486 = vmax.f32 %v5126, 0.0
      %v5487 = vmax.f32 %v5129, 0.0
      %v5488 = vmax.f32 %v5134, 0.0
      %v5489 = vmax.f32 %v5137, 0.0
      %v5490 = vmax.f32 %v5142, 0.0
      %v5491 = vmax.f32 %v5145, 0.0
      %v5492 = vmax.f32 %v5150, 0.0
      %v5493 = vmax.f32 %v5153, 0.0
      %v5494 = vmax.f32 %v5158, 0.0
      %v5495 = vmax.f32 %v5161, 0.0
      %v5496 = vmax.f32 %v5166, 0.0
      %v5497 = vmax.f32 %v5169, 0.0
      %v5498 = vmax.f32 %v5174, 0.0
      %v5499 = vmax.f32 %v5177, 0.0
      %v5500 = vmax.f32 %v5182, 0.0
      %v5501 = vmax.f32 %v5185, 0.0
      %v5502 = vmax.f32 %v5190, 0.0
      %v5503 = vmax.f32 %v5193, 0.0
      %v5504 = vmax.f32 %v5198, 0.0
      %v5505 = vmax.f32 %v5201, 0.0
      %v5506 = vmax.f32 %v5206, 0.0
      %v5507 = vmax.f32 %v5209, 0.0
      %v5508 = vmax.f32 %v5214, 0.0
      %v5509 = vmax.f32 %v5217, 0.0
      %v5510 = vmax.f32 %v5222, 0.0
      %v5511 = vmax.f32 %v5225, 0.0
      %v5512 = vmax.f32 %v5230, 0.0
      %v5513 = vmax.f32 %v5233, 0.0
      %v5514 = vmax.f32 %v5238, 0.0
      %v5515 = vmax.f32 %v5241, 0.0
      %v5516 = vmax.f32 %v5246, 0.0
      %v5517 = vmax.f32 %v5249, 0.0
      %v5518 = vmax.f32 %v5254, 0.0
      %v5519 = vmax.f32 %v5257, 0.0
      %v5520 = vmax.f32 %v5262, 0.0
      %v5521 = vmax.f32 %v5265, 0.0
      %v5522 = vmax.f32 %v5270, 0.0
      %v5523 = vmax.f32 %v5273, 0.0
      %v5524 = vmax.f32 %v5278, 0.0
      %v5525 = vmax.f32 %v5281, 0.0
      %v5526 = vmax.f32 %v5286, 0.0
      %v5527 = vmax.f32 %v5289, 0.0
      %v5528 = vmax.f32 %v5294, 0.0
      %v5529 = vmax.f32 %v5297, 0.0
      %v5530 = vmax.f32 %v5302, 0.0
      %v5531 = vmax.f32 %v5305, 0.0
      %v5532 = vmax.f32 %v5310, 0.0
      %v5533 = vmax.f32 %v5313, 0.0
      %v5534 = vmax.f32 %v5318, 0.0
      %v5535 = vmax.f32 %v5321, 0.0
      %v5536 = vmax.f32 %v5326, 0.0
      %v5537 = vmax.f32 %v5329, 0.0
      %v5538 = vmax.f32 %v5334, 0.0
      %v5539 = vmax.f32 %v5337, 0.0
      %v5540 = vmax.f32 %v5342, 0.0
      %v5541 = vmax.f32 %v5345, 0.0
      %v5542 = vmax.f32 %v5350, 0.0
      %v5543 = vmax.f32 %v5353, 0.0
      %v5544 = vmax.f32 %v5358, 0.0
      %v5545 = vmax.f32 %v5361, 0.0
      %v5546 = vmax.f32 %v5366, 0.0
      %v5547 = vmax.f32 %v5369, 0.0
      %v5548 = vmax.f32 %v5374, 0.0
      %v5549 = vmax.f32 %v5377, 0.0
      %v5550 = vmax.f32 %v5382, 0.0
      %v5551 = vmax.f32 %v5385, 0.0
      %v5552 = vmax.f32 %v5390, 0.0
      %v5553 = vmax.f32 %v5393, 0.0
      %v5554 = vmax.f32 %v5398, 0.0
      %v5555 = vmax.f32 %v5401, 0.0
      %v5556 = vmax.f32 %v5406, 0.0
      %v5557 = vmax.f32 %v5409, 0.0
      %v5558 = vmax.f32 %v5414, 0.0
      %v5559 = vmax.f32 %v5417, 0.0
      %v5560 = vmax.f32 %v5422, 0.0
      %v5561 = vmax.f32 %v5425, 0.0
      %v5562 = vmax.f32 %v5430, 0.0
      %v5563 = vmax.f32 %v5433, 0.0
      %s5564 = scalar_lea.vmem %s2, 128
      %v5565 = vld [vmem:[%s5564] sm:$0xf]
      %v5566 = vld [vmem:[%s5564 + $0x4] sm:$0xf]
      %v5567 = vld [vmem:[%s5564 + $0x8] sm:$0xf]
      %v5568 = vld [vmem:[%s5564 + $0xc] sm:$0xf]
      %v5569 = vld [vmem:[%s5564 + $0x10] sm:$0xf]
      %v5570 = vld [vmem:[%s5564 + $0x14] sm:$0xf]
      %v5571 = vld [vmem:[%s5564 + $0x18] sm:$0xf]
      %v5572 = vld [vmem:[%s5564 + $0x1c] sm:$0xf]
      %v5573 = vpack.c.bf16 %v5437, %v5436
      %v5574 = vpack.c.bf16 %v5439, %v5438
      %v5575 = vpack.c.bf16 %v5441, %v5440
      %v5576 = vpack.c.bf16 %v5443, %v5442
      %v5577 = vpack.c.bf16 %v5445, %v5444
      %v5578 = vpack.c.bf16 %v5447, %v5446
      %v5579 = vpack.c.bf16 %v5449, %v5448
      %v5580 = vpack.c.bf16 %v5451, %v5450
      %v5581 = vpack.c.bf16 %v5453, %v5452
      %v5582 = vpack.c.bf16 %v5455, %v5454
      %v5583 = vpack.c.bf16 %v5457, %v5456
      %v5584 = vpack.c.bf16 %v5459, %v5458
      %v5585 = vpack.c.bf16 %v5461, %v5460
      %v5586 = vpack.c.bf16 %v5463, %v5462
      %v5587 = vpack.c.bf16 %v5465, %v5464
      %v5588 = vpack.c.bf16 %v5467, %v5466
      %v5589 = vpack.c.bf16 %v5469, %v5468
      %v5590 = vpack.c.bf16 %v5471, %v5470
      %v5591 = vpack.c.bf16 %v5473, %v5472
      %v5592 = vpack.c.bf16 %v5475, %v5474
      %v5593 = vpack.c.bf16 %v5477, %v5476
      %v5594 = vpack.c.bf16 %v5479, %v5478
      %v5595 = vpack.c.bf16 %v5481, %v5480
      %v5596 = vpack.c.bf16 %v5483, %v5482
      %v5597 = vpack.c.bf16 %v5485, %v5484
      %v5598 = vpack.c.bf16 %v5487, %v5486
      %v5599 = vpack.c.bf16 %v5489, %v5488
      %v5600 = vpack.c.bf16 %v5491, %v5490
      %v5601 = vpack.c.bf16 %v5493, %v5492
      %v5602 = vpack.c.bf16 %v5495, %v5494
      %v5603 = vpack.c.bf16 %v5497, %v5496
      %v5604 = vpack.c.bf16 %v5499, %v5498
      %v5605 = vpack.c.bf16 %v5501, %v5500
      %v5606 = vpack.c.bf16 %v5503, %v5502
      %v5607 = vpack.c.bf16 %v5505, %v5504
      %v5608 = vpack.c.bf16 %v5507, %v5506
      %v5609 = vpack.c.bf16 %v5509, %v5508
      %v5610 = vpack.c.bf16 %v5511, %v5510
      %v5611 = vpack.c.bf16 %v5513, %v5512
      %v5612 = vpack.c.bf16 %v5515, %v5514
      %v5613 = vpack.c.bf16 %v5517, %v5516
      %v5614 = vpack.c.bf16 %v5519, %v5518
      %v5615 = vpack.c.bf16 %v5521, %v5520
      %v5616 = vpack.c.bf16 %v5523, %v5522
      %v5617 = vpack.c.bf16 %v5525, %v5524
      %v5618 = vpack.c.bf16 %v5527, %v5526
      %v5619 = vpack.c.bf16 %v5529, %v5528
      %v5620 = vpack.c.bf16 %v5531, %v5530
      %v5621 = vpack.c.bf16 %v5533, %v5532
      %v5622 = vpack.c.bf16 %v5535, %v5534
      %v5623 = vpack.c.bf16 %v5537, %v5536
      %v5624 = vpack.c.bf16 %v5539, %v5538
      %v5625 = vpack.c.bf16 %v5541, %v5540
      %v5626 = vpack.c.bf16 %v5543, %v5542
      %v5627 = vpack.c.bf16 %v5545, %v5544
      %v5628 = vpack.c.bf16 %v5547, %v5546
      %v5629 = vpack.c.bf16 %v5549, %v5548
      %v5630 = vpack.c.bf16 %v5551, %v5550
      %v5631 = vpack.c.bf16 %v5553, %v5552
      %v5632 = vpack.c.bf16 %v5555, %v5554
      %v5633 = vpack.c.bf16 %v5557, %v5556
      %v5634 = vpack.c.bf16 %v5559, %v5558
      %v5635 = vpack.c.bf16 %v5561, %v5560
      %v5636 = vpack.c.bf16 %v5563, %v5562
      %v5645 = vunpack.c.l.b16 %v5565
      %v5646 = vunpack.c.l.b16 %v5566
      %v5647 = vunpack.c.l.b16 %v5567
      %v5648 = vunpack.c.l.b16 %v5568
      %v5649 = vunpack.c.l.b16 %v5569
      %v5650 = vunpack.c.l.b16 %v5570
      %v5651 = vunpack.c.l.b16 %v5571
      %v5652 = vunpack.c.l.b16 %v5572
      %v5653 = vpack.c.b16 %v5646, %v5645
      %v5654 = vpack.c.b16 %v5648, %v5647
      %v5655 = vpack.c.b16 %v5650, %v5649
      %v5656 = vpack.c.b16 %v5652, %v5651
      %v5662 = vsel %vm1797, %v5573, 0
      %v5665 = vsel %vm1797, %v5574, 0
      %v5668 = vsel %vm1797, %v5575, 0
      %v5671 = vsel %vm1797, %v5576, 0
      %v5674 = vsel %vm1797, %v5577, 0
      %v5677 = vsel %vm1797, %v5578, 0
      %v5680 = vsel %vm1797, %v5579, 0
      %v5683 = vsel %vm1797, %v5580, 0
      %v5686 = vsel %vm1797, %v5581, 0
      %v5689 = vsel %vm1797, %v5582, 0
      %v5692 = vsel %vm1797, %v5583, 0
      %v5695 = vsel %vm1797, %v5584, 0
      %v5698 = vsel %vm1797, %v5585, 0
      %v5701 = vsel %vm1797, %v5586, 0
      %v5704 = vsel %vm1797, %v5587, 0
      %v5707 = vsel %vm1797, %v5588, 0
      %v5710 = vsel %vm1797, %v5589, 0
      %v5713 = vsel %vm1797, %v5590, 0
      %v5716 = vsel %vm1797, %v5591, 0
      %v5719 = vsel %vm1797, %v5592, 0
      %v5722 = vsel %vm1797, %v5593, 0
      %v5725 = vsel %vm1797, %v5594, 0
      %v5728 = vsel %vm1797, %v5595, 0
      %v5731 = vsel %vm1797, %v5596, 0
      %v5734 = vsel %vm1797, %v5597, 0
      %v5737 = vsel %vm1797, %v5598, 0
      %v5740 = vsel %vm1797, %v5599, 0
      %v5743 = vsel %vm1797, %v5600, 0
      %v5746 = vsel %vm1797, %v5601, 0
      %v5749 = vsel %vm1797, %v5602, 0
      %v5752 = vsel %vm1797, %v5603, 0
      %v5755 = vsel %vm1797, %v5604, 0
      %v5758 = vsel %vm1797, %v5605, 0
      %v5761 = vsel %vm1797, %v5606, 0
      %v5764 = vsel %vm1797, %v5607, 0
      %v5767 = vsel %vm1797, %v5608, 0
      %v5770 = vsel %vm1797, %v5609, 0
      %v5773 = vsel %vm1797, %v5610, 0
      %v5776 = vsel %vm1797, %v5611, 0
      %v5779 = vsel %vm1797, %v5612, 0
      %v5782 = vsel %vm1797, %v5613, 0
      %v5785 = vsel %vm1797, %v5614, 0
      %v5788 = vsel %vm1797, %v5615, 0
      %v5791 = vsel %vm1797, %v5616, 0
      %v5794 = vsel %vm1797, %v5617, 0
      %v5797 = vsel %vm1797, %v5618, 0
      %v5800 = vsel %vm1797, %v5619, 0
      %v5803 = vsel %vm1797, %v5620, 0
      %v5806 = vsel %vm1797, %v5621, 0
      %v5809 = vsel %vm1797, %v5622, 0
      %v5812 = vsel %vm1797, %v5623, 0
      %v5815 = vsel %vm1797, %v5624, 0
      %v5818 = vsel %vm1797, %v5625, 0
      %v5821 = vsel %vm1797, %v5626, 0
      %v5824 = vsel %vm1797, %v5627, 0
      %v5827 = vsel %vm1797, %v5628, 0
      %v5830 = vsel %vm1797, %v5629, 0
      %v5833 = vsel %vm1797, %v5630, 0
      %v5836 = vsel %vm1797, %v5631, 0
      %v5839 = vsel %vm1797, %v5632, 0
      %v5842 = vsel %vm1797, %v5633, 0
      %v5845 = vsel %vm1797, %v5634, 0
      %v5848 = vsel %vm1797, %v5635, 0
      %v5851 = vsel %vm1797, %v5636, 0
      %5853 = vmatprep.subr.bf16.mxu0 0
      %5854 = vmatpush1.bf16.msra.mxu0 %v5653
      %5855 = vmatprep.subr.bf16.mxu0 0
      %5856 = vmatpush1.bf16.msra.mxu0 %v5654
      %5857 = vmatprep.subr.bf16.mxu0 0
      %5858 = vmatpush1.bf16.msra.mxu0 %v5655
      %5859 = vmatprep.subr.bf16.mxu0 0
      %5860 = vmatpush1.bf16.msra.mxu0 %v5656
      %5861 = vmatprep.subr.bf16.mxu0 0
      %5862 = vmatpush1.bf16.msra.mxu0 0
      %5863 = vmatprep.subr.bf16.mxu0 0
      %5864 = vmatpush1.bf16.msra.mxu0 0
      %5865 = vmatprep.subr.bf16.mxu0 0
      %5866 = vmatpush1.bf16.msra.mxu0 0
      %5867 = vmatprep.subr.bf16.mxu0 0
      %5868 = vmatpush1.bf16.msra.mxu0 0
      %5869 = vmatprep.subr.bf16.mxu0 0
      %5870 = vmatpush1.bf16.msra.mxu0 0
      %5871 = vmatprep.subr.bf16.mxu0 0
      %5872 = vmatpush1.bf16.msra.mxu0 0
      %5873 = vmatprep.subr.bf16.mxu0 0
      %5874 = vmatpush1.bf16.msra.mxu0 0
      %5875 = vmatprep.subr.bf16.mxu0 0
      %5876 = vmatpush1.bf16.msra.mxu0 0
      %5877 = vmatprep.subr.bf16.mxu0 0
      %5878 = vmatpush1.bf16.msra.mxu0 0
      %5879 = vmatprep.subr.bf16.mxu0 0
      %5880 = vmatpush1.bf16.msra.mxu0 0
      %5881 = vmatprep.subr.bf16.mxu0 0
      %5882 = vmatpush1.bf16.msra.mxu0 0
      %5883 = vmatprep.subr.bf16.mxu0 0
      %5884 = vmatpush1.bf16.msra.mxu0 0
      %5885 = vmatprep.mubr.bf16.mxu0 0
      %5886 = vmatmul.mubr.bf16.gmra.mrb[0].mxu0 %v5662
      %v5887 = vpop.f32.mrb[0].mxu0
      %v5888 = vadd.f32 0.0, %v5887
      %v5889 = vpop.f32.mrb[0].mxu0
      %v5890 = vpop.f32.mrb[0].mxu0
      %v5891 = vadd.f32 0.0, %v5890
      %v5892 = vpop.f32.mrb[0].mxu0
      %5893 = vmatprep.mubr.bf16.mxu0 0
      %5894 = vmatmul.mubr.bf16.gmra.mrb[0].mxu0 %v5665
      %v5895 = vpop.f32.mrb[0].mxu0
      %v5896 = vadd.f32 0.0, %v5895
      %v5897 = vpop.f32.mrb[0].mxu0
      %v5898 = vpop.f32.mrb[0].mxu0
      %v5899 = vadd.f32 0.0, %v5898
      %v5900 = vpop.f32.mrb[0].mxu0
      %5901 = vmatprep.mubr.bf16.mxu0 0
      %5902 = vmatmul.mubr.bf16.gmra.mrb[0].mxu0 %v5668
      %v5903 = vpop.f32.mrb[0].mxu0
      %v5904 = vadd.f32 0.0, %v5903
      %v5905 = vpop.f32.mrb[0].mxu0
      %v5906 = vpop.f32.mrb[0].mxu0
      %v5907 = vadd.f32 0.0, %v5906
      %v5908 = vpop.f32.mrb[0].mxu0
      %5909 = vmatprep.mubr.bf16.mxu0 0
      %5910 = vmatmul.mubr.bf16.gmra.mrb[0].mxu0 %v5671
      %v5911 = vpop.f32.mrb[0].mxu0
      %v5912 = vadd.f32 0.0, %v5911
      %v5913 = vpop.f32.mrb[0].mxu0
      %v5914 = vpop.f32.mrb[0].mxu0
      %v5915 = vadd.f32 0.0, %v5914
      %v5916 = vpop.f32.mrb[0].mxu0
      %5917 = vmatprep.mubr.bf16.mxu0 0
      %5918 = vmatmul.mubr.bf16.gmra.mrb[0].mxu0 %v5674
      %v5919 = vpop.f32.mrb[0].mxu0
      %v5920 = vadd.f32 0.0, %v5919
      %v5921 = vpop.f32.mrb[0].mxu0
      %v5922 = vpop.f32.mrb[0].mxu0
      %v5923 = vadd.f32 0.0, %v5922
      %v5924 = vpop.f32.mrb[0].mxu0
      %5925 = vmatprep.mubr.bf16.mxu0 0
      %5926 = vmatmul.mubr.bf16.gmra.mrb[0].mxu0 %v5677
      %v5927 = vpop.f32.mrb[0].mxu0
      %v5928 = vadd.f32 0.0, %v5927
      %v5929 = vpop.f32.mrb[0].mxu0
      %v5930 = vpop.f32.mrb[0].mxu0
      %v5931 = vadd.f32 0.0, %v5930
      %v5932 = vpop.f32.mrb[0].mxu0
      %5933 = vmatprep.mubr.bf16.mxu0 0
      %5934 = vmatmul.mubr.bf16.gmra.mrb[0].mxu0 %v5680
      %v5935 = vpop.f32.mrb[0].mxu0
      %v5936 = vadd.f32 0.0, %v5935
      %v5937 = vpop.f32.mrb[0].mxu0
      %v5938 = vpop.f32.mrb[0].mxu0
      %v5939 = vadd.f32 0.0, %v5938
      %v5940 = vpop.f32.mrb[0].mxu0
      %5941 = vmatprep.mubr.bf16.mxu0 0
      %5942 = vmatmul.mubr.bf16.gmra.mrb[0].mxu0 %v5683
      %v5943 = vpop.f32.mrb[0].mxu0
      %v5944 = vadd.f32 0.0, %v5943
      %v5945 = vpop.f32.mrb[0].mxu0
      %v5946 = vpop.f32.mrb[0].mxu0
      %v5947 = vadd.f32 0.0, %v5946
      %v5948 = vpop.f32.mrb[0].mxu0
      %5949 = vmatprep.mubr.bf16.mxu0 0
      %5950 = vmatmul.mubr.bf16.gmra.mrb[0].mxu0 %v5686
      %v5951 = vpop.f32.mrb[0].mxu0
      %v5952 = vadd.f32 0.0, %v5951
      %v5953 = vpop.f32.mrb[0].mxu0
      %v5954 = vpop.f32.mrb[0].mxu0
      %v5955 = vadd.f32 0.0, %v5954
      %v5956 = vpop.f32.mrb[0].mxu0
      %5957 = vmatprep.mubr.bf16.mxu0 0
      %5958 = vmatmul.mubr.bf16.gmra.mrb[0].mxu0 %v5689
      %v5959 = vpop.f32.mrb[0].mxu0
      %v5960 = vadd.f32 0.0, %v5959
      %v5961 = vpop.f32.mrb[0].mxu0
      %v5962 = vpop.f32.mrb[0].mxu0
      %v5963 = vadd.f32 0.0, %v5962
      %v5964 = vpop.f32.mrb[0].mxu0
      %5965 = vmatprep.mubr.bf16.mxu0 0
      %5966 = vmatmul.mubr.bf16.gmra.mrb[0].mxu0 %v5692
      %v5967 = vpop.f32.mrb[0].mxu0
      %v5968 = vadd.f32 0.0, %v5967
      %v5969 = vpop.f32.mrb[0].mxu0
      %v5970 = vpop.f32.mrb[0].mxu0
      %v5971 = vadd.f32 0.0, %v5970
      %v5972 = vpop.f32.mrb[0].mxu0
      %5973 = vmatprep.mubr.bf16.mxu0 0
      %5974 = vmatmul.mubr.bf16.gmra.mrb[0].mxu0 %v5695
      %v5975 = vpop.f32.mrb[0].mxu0
      %v5976 = vadd.f32 0.0, %v5975
      %v5977 = vpop.f32.mrb[0].mxu0
      %v5978 = vpop.f32.mrb[0].mxu0
      %v5979 = vadd.f32 0.0, %v5978
      %v5980 = vpop.f32.mrb[0].mxu0
      %5981 = vmatprep.mubr.bf16.mxu0 0
      %5982 = vmatmul.mubr.bf16.gmra.mrb[0].mxu0 %v5698
      %v5983 = vpop.f32.mrb[0].mxu0
      %v5984 = vadd.f32 0.0, %v5983
      %v5985 = vpop.f32.mrb[0].mxu0
      %v5986 = vpop.f32.mrb[0].mxu0
      %v5987 = vadd.f32 0.0, %v5986
      %v5988 = vpop.f32.mrb[0].mxu0
      %5989 = vmatprep.mubr.bf16.mxu0 0
      %5990 = vmatmul.mubr.bf16.gmra.mrb[0].mxu0 %v5701
      %v5991 = vpop.f32.mrb[0].mxu0
      %v5992 = vadd.f32 0.0, %v5991
      %v5993 = vpop.f32.mrb[0].mxu0
      %v5994 = vpop.f32.mrb[0].mxu0
      %v5995 = vadd.f32 0.0, %v5994
      %v5996 = vpop.f32.mrb[0].mxu0
      %5997 = vmatprep.mubr.bf16.mxu0 0
      %5998 = vmatmul.mubr.bf16.gmra.mrb[0].mxu0 %v5704
      %v5999 = vpop.f32.mrb[0].mxu0
      %v6000 = vadd.f32 0.0, %v5999
      %v6001 = vpop.f32.mrb[0].mxu0
      %v6002 = vpop.f32.mrb[0].mxu0
      %v6003 = vadd.f32 0.0, %v6002
      %v6004 = vpop.f32.mrb[0].mxu0
      %6005 = vmatprep.mubr.bf16.mxu0 0
      %6006 = vmatmul.mubr.bf16.gmra.mrb[0].mxu0 %v5707
      %v6007 = vpop.f32.mrb[0].mxu0
      %v6008 = vadd.f32 0.0, %v6007
      %v6009 = vpop.f32.mrb[0].mxu0
      %v6010 = vpop.f32.mrb[0].mxu0
      %v6011 = vadd.f32 0.0, %v6010
      %v6012 = vpop.f32.mrb[0].mxu0
      %6013 = vmatprep.mubr.bf16.mxu0 0
      %6014 = vmatmul.mubr.bf16.gmra.mrb[0].mxu0 %v5710
      %v6015 = vpop.f32.mrb[0].mxu0
      %v6016 = vadd.f32 0.0, %v6015
      %v6017 = vpop.f32.mrb[0].mxu0
      %v6018 = vpop.f32.mrb[0].mxu0
      %v6019 = vadd.f32 0.0, %v6018
      %v6020 = vpop.f32.mrb[0].mxu0
      %6021 = vmatprep.mubr.bf16.mxu0 0
      %6022 = vmatmul.mubr.bf16.gmra.mrb[0].mxu0 %v5713
      %v6023 = vpop.f32.mrb[0].mxu0
      %v6024 = vadd.f32 0.0, %v6023
      %v6025 = vpop.f32.mrb[0].mxu0
      %v6026 = vpop.f32.mrb[0].mxu0
      %v6027 = vadd.f32 0.0, %v6026
      %v6028 = vpop.f32.mrb[0].mxu0
      %6029 = vmatprep.mubr.bf16.mxu0 0
      %6030 = vmatmul.mubr.bf16.gmra.mrb[0].mxu0 %v5716
      %v6031 = vpop.f32.mrb[0].mxu0
      %v6032 = vadd.f32 0.0, %v6031
      %v6033 = vpop.f32.mrb[0].mxu0
      %v6034 = vpop.f32.mrb[0].mxu0
      %v6035 = vadd.f32 0.0, %v6034
      %v6036 = vpop.f32.mrb[0].mxu0
      %6037 = vmatprep.mubr.bf16.mxu0 0
      %6038 = vmatmul.mubr.bf16.gmra.mrb[0].mxu0 %v5719
      %v6039 = vpop.f32.mrb[0].mxu0
      %v6040 = vadd.f32 0.0, %v6039
      %v6041 = vpop.f32.mrb[0].mxu0
      %v6042 = vpop.f32.mrb[0].mxu0
      %v6043 = vadd.f32 0.0, %v6042
      %v6044 = vpop.f32.mrb[0].mxu0
      %6045 = vmatprep.mubr.bf16.mxu0 0
      %6046 = vmatmul.mubr.bf16.gmra.mrb[0].mxu0 %v5722
      %v6047 = vpop.f32.mrb[0].mxu0
      %v6048 = vadd.f32 0.0, %v6047
      %v6049 = vpop.f32.mrb[0].mxu0
      %v6050 = vpop.f32.mrb[0].mxu0
      %v6051 = vadd.f32 0.0, %v6050
      %v6052 = vpop.f32.mrb[0].mxu0
      %6053 = vmatprep.mubr.bf16.mxu0 0
      %6054 = vmatmul.mubr.bf16.gmra.mrb[0].mxu0 %v5725
      %v6055 = vpop.f32.mrb[0].mxu0
      %v6056 = vadd.f32 0.0, %v6055
      %v6057 = vpop.f32.mrb[0].mxu0
      %v6058 = vpop.f32.mrb[0].mxu0
      %v6059 = vadd.f32 0.0, %v6058
      %v6060 = vpop.f32.mrb[0].mxu0
      %6061 = vmatprep.mubr.bf16.mxu0 0
      %6062 = vmatmul.mubr.bf16.gmra.mrb[0].mxu0 %v5728
      %v6063 = vpop.f32.mrb[0].mxu0
      %v6064 = vadd.f32 0.0, %v6063
      %v6065 = vpop.f32.mrb[0].mxu0
      %v6066 = vpop.f32.mrb[0].mxu0
      %v6067 = vadd.f32 0.0, %v6066
      %v6068 = vpop.f32.mrb[0].mxu0
      %6069 = vmatprep.mubr.bf16.mxu0 0
      %6070 = vmatmul.mubr.bf16.gmra.mrb[0].mxu0 %v5731
      %v6071 = vpop.f32.mrb[0].mxu0
      %v6072 = vadd.f32 0.0, %v6071
      %v6073 = vpop.f32.mrb[0].mxu0
      %v6074 = vpop.f32.mrb[0].mxu0
      %v6075 = vadd.f32 0.0, %v6074
      %v6076 = vpop.f32.mrb[0].mxu0
      %6077 = vmatprep.mubr.bf16.mxu0 0
      %6078 = vmatmul.mubr.bf16.gmra.mrb[0].mxu0 %v5734
      %v6079 = vpop.f32.mrb[0].mxu0
      %v6080 = vadd.f32 0.0, %v6079
      %v6081 = vpop.f32.mrb[0].mxu0
      %v6082 = vpop.f32.mrb[0].mxu0
      %v6083 = vadd.f32 0.0, %v6082
      %v6084 = vpop.f32.mrb[0].mxu0
      %6085 = vmatprep.mubr.bf16.mxu0 0
      %6086 = vmatmul.mubr.bf16.gmra.mrb[0].mxu0 %v5737
      %v6087 = vpop.f32.mrb[0].mxu0
      %v6088 = vadd.f32 0.0, %v6087
      %v6089 = vpop.f32.mrb[0].mxu0
      %v6090 = vpop.f32.mrb[0].mxu0
      %v6091 = vadd.f32 0.0, %v6090
      %v6092 = vpop.f32.mrb[0].mxu0
      %6093 = vmatprep.mubr.bf16.mxu0 0
      %6094 = vmatmul.mubr.bf16.gmra.mrb[0].mxu0 %v5740
      %v6095 = vpop.f32.mrb[0].mxu0
      %v6096 = vadd.f32 0.0, %v6095
      %v6097 = vpop.f32.mrb[0].mxu0
      %v6098 = vpop.f32.mrb[0].mxu0
      %v6099 = vadd.f32 0.0, %v6098
      %v6100 = vpop.f32.mrb[0].mxu0
      %6101 = vmatprep.mubr.bf16.mxu0 0
      %6102 = vmatmul.mubr.bf16.gmra.mrb[0].mxu0 %v5743
      %v6103 = vpop.f32.mrb[0].mxu0
      %v6104 = vadd.f32 0.0, %v6103
      %v6105 = vpop.f32.mrb[0].mxu0
      %v6106 = vpop.f32.mrb[0].mxu0
      %v6107 = vadd.f32 0.0, %v6106
      %v6108 = vpop.f32.mrb[0].mxu0
      %6109 = vmatprep.mubr.bf16.mxu0 0
      %6110 = vmatmul.mubr.bf16.gmra.mrb[0].mxu0 %v5746
      %v6111 = vpop.f32.mrb[0].mxu0
      %v6112 = vadd.f32 0.0, %v6111
      %v6113 = vpop.f32.mrb[0].mxu0
      %v6114 = vpop.f32.mrb[0].mxu0
      %v6115 = vadd.f32 0.0, %v6114
      %v6116 = vpop.f32.mrb[0].mxu0
      %6117 = vmatprep.mubr.bf16.mxu0 0
      %6118 = vmatmul.mubr.bf16.gmra.mrb[0].mxu0 %v5749
      %v6119 = vpop.f32.mrb[0].mxu0
      %v6120 = vadd.f32 0.0, %v6119
      %v6121 = vpop.f32.mrb[0].mxu0
      %v6122 = vpop.f32.mrb[0].mxu0
      %v6123 = vadd.f32 0.0, %v6122
      %v6124 = vpop.f32.mrb[0].mxu0
      %6125 = vmatprep.mubr.bf16.mxu0 0
      %6126 = vmatmul.mubr.bf16.gmra.mrb[0].mxu0 %v5752
      %v6127 = vpop.f32.mrb[0].mxu0
      %v6128 = vadd.f32 0.0, %v6127
      %v6129 = vpop.f32.mrb[0].mxu0
      %v6130 = vpop.f32.mrb[0].mxu0
      %v6131 = vadd.f32 0.0, %v6130
      %v6132 = vpop.f32.mrb[0].mxu0
      %6133 = vmatprep.mubr.bf16.mxu0 0
      %6134 = vmatmul.mubr.bf16.gmra.mrb[0].mxu0 %v5755
      %v6135 = vpop.f32.mrb[0].mxu0
      %v6136 = vadd.f32 0.0, %v6135
      %v6137 = vpop.f32.mrb[0].mxu0
      %v6138 = vpop.f32.mrb[0].mxu0
      %v6139 = vadd.f32 0.0, %v6138
      %v6140 = vpop.f32.mrb[0].mxu0
      %6141 = vmatprep.mubr.bf16.mxu0 0
      %6142 = vmatmul.mubr.bf16.gmra.mrb[0].mxu0 %v5758
      %v6143 = vpop.f32.mrb[0].mxu0
      %v6144 = vadd.f32 0.0, %v6143
      %v6145 = vpop.f32.mrb[0].mxu0
      %v6146 = vpop.f32.mrb[0].mxu0
      %v6147 = vadd.f32 0.0, %v6146
      %v6148 = vpop.f32.mrb[0].mxu0
      %6149 = vmatprep.mubr.bf16.mxu0 0
      %6150 = vmatmul.mubr.bf16.gmra.mrb[0].mxu0 %v5761
      %v6151 = vpop.f32.mrb[0].mxu0
      %v6152 = vadd.f32 0.0, %v6151
      %v6153 = vpop.f32.mrb[0].mxu0
      %v6154 = vpop.f32.mrb[0].mxu0
      %v6155 = vadd.f32 0.0, %v6154
      %v6156 = vpop.f32.mrb[0].mxu0
      %6157 = vmatprep.mubr.bf16.mxu0 0
      %6158 = vmatmul.mubr.bf16.gmra.mrb[0].mxu0 %v5764
      %v6159 = vpop.f32.mrb[0].mxu0
      %v6160 = vadd.f32 0.0, %v6159
      %v6161 = vpop.f32.mrb[0].mxu0
      %v6162 = vpop.f32.mrb[0].mxu0
      %v6163 = vadd.f32 0.0, %v6162
      %v6164 = vpop.f32.mrb[0].mxu0
      %6165 = vmatprep.mubr.bf16.mxu0 0
      %6166 = vmatmul.mubr.bf16.gmra.mrb[0].mxu0 %v5767
      %v6167 = vpop.f32.mrb[0].mxu0
      %v6168 = vadd.f32 0.0, %v6167
      %v6169 = vpop.f32.mrb[0].mxu0
      %v6170 = vpop.f32.mrb[0].mxu0
      %v6171 = vadd.f32 0.0, %v6170
      %v6172 = vpop.f32.mrb[0].mxu0
      %6173 = vmatprep.mubr.bf16.mxu0 0
      %6174 = vmatmul.mubr.bf16.gmra.mrb[0].mxu0 %v5770
      %v6175 = vpop.f32.mrb[0].mxu0
      %v6176 = vadd.f32 0.0, %v6175
      %v6177 = vpop.f32.mrb[0].mxu0
      %v6178 = vpop.f32.mrb[0].mxu0
      %v6179 = vadd.f32 0.0, %v6178
      %v6180 = vpop.f32.mrb[0].mxu0
      %6181 = vmatprep.mubr.bf16.mxu0 0
      %6182 = vmatmul.mubr.bf16.gmra.mrb[0].mxu0 %v5773
      %v6183 = vpop.f32.mrb[0].mxu0
      %v6184 = vadd.f32 0.0, %v6183
      %v6185 = vpop.f32.mrb[0].mxu0
      %v6186 = vpop.f32.mrb[0].mxu0
      %v6187 = vadd.f32 0.0, %v6186
      %v6188 = vpop.f32.mrb[0].mxu0
      %6189 = vmatprep.mubr.bf16.mxu0 0
      %6190 = vmatmul.mubr.bf16.gmra.mrb[0].mxu0 %v5776
      %v6191 = vpop.f32.mrb[0].mxu0
      %v6192 = vadd.f32 0.0, %v6191
      %v6193 = vpop.f32.mrb[0].mxu0
      %v6194 = vpop.f32.mrb[0].mxu0
      %v6195 = vadd.f32 0.0, %v6194
      %v6196 = vpop.f32.mrb[0].mxu0
      %6197 = vmatprep.mubr.bf16.mxu0 0
      %6198 = vmatmul.mubr.bf16.gmra.mrb[0].mxu0 %v5779
      %v6199 = vpop.f32.mrb[0].mxu0
      %v6200 = vadd.f32 0.0, %v6199
      %v6201 = vpop.f32.mrb[0].mxu0
      %v6202 = vpop.f32.mrb[0].mxu0
      %v6203 = vadd.f32 0.0, %v6202
      %v6204 = vpop.f32.mrb[0].mxu0
      %6205 = vmatprep.mubr.bf16.mxu0 0
      %6206 = vmatmul.mubr.bf16.gmra.mrb[0].mxu0 %v5782
      %v6207 = vpop.f32.mrb[0].mxu0
      %v6208 = vadd.f32 0.0, %v6207
      %v6209 = vpop.f32.mrb[0].mxu0
      %v6210 = vpop.f32.mrb[0].mxu0
      %v6211 = vadd.f32 0.0, %v6210
      %v6212 = vpop.f32.mrb[0].mxu0
      %6213 = vmatprep.mubr.bf16.mxu0 0
      %6214 = vmatmul.mubr.bf16.gmra.mrb[0].mxu0 %v5785
      %v6215 = vpop.f32.mrb[0].mxu0
      %v6216 = vadd.f32 0.0, %v6215
      %v6217 = vpop.f32.mrb[0].mxu0
      %v6218 = vpop.f32.mrb[0].mxu0
      %v6219 = vadd.f32 0.0, %v6218
      %v6220 = vpop.f32.mrb[0].mxu0
      %6221 = vmatprep.mubr.bf16.mxu0 0
      %6222 = vmatmul.mubr.bf16.gmra.mrb[0].mxu0 %v5788
      %v6223 = vpop.f32.mrb[0].mxu0
      %v6224 = vadd.f32 0.0, %v6223
      %v6225 = vpop.f32.mrb[0].mxu0
      %v6226 = vpop.f32.mrb[0].mxu0
      %v6227 = vadd.f32 0.0, %v6226
      %v6228 = vpop.f32.mrb[0].mxu0
      %6229 = vmatprep.mubr.bf16.mxu0 0
      %6230 = vmatmul.mubr.bf16.gmra.mrb[0].mxu0 %v5791
      %v6231 = vpop.f32.mrb[0].mxu0
      %v6232 = vadd.f32 0.0, %v6231
      %v6233 = vpop.f32.mrb[0].mxu0
      %v6234 = vpop.f32.mrb[0].mxu0
      %v6235 = vadd.f32 0.0, %v6234
      %v6236 = vpop.f32.mrb[0].mxu0
      %6237 = vmatprep.mubr.bf16.mxu0 0
      %6238 = vmatmul.mubr.bf16.gmra.mrb[0].mxu0 %v5794
      %v6239 = vpop.f32.mrb[0].mxu0
      %v6240 = vadd.f32 0.0, %v6239
      %v6241 = vpop.f32.mrb[0].mxu0
      %v6242 = vpop.f32.mrb[0].mxu0
      %v6243 = vadd.f32 0.0, %v6242
      %v6244 = vpop.f32.mrb[0].mxu0
      %6245 = vmatprep.mubr.bf16.mxu0 0
      %6246 = vmatmul.mubr.bf16.gmra.mrb[0].mxu0 %v5797
      %v6247 = vpop.f32.mrb[0].mxu0
      %v6248 = vadd.f32 0.0, %v6247
      %v6249 = vpop.f32.mrb[0].mxu0
      %v6250 = vpop.f32.mrb[0].mxu0
      %v6251 = vadd.f32 0.0, %v6250
      %v6252 = vpop.f32.mrb[0].mxu0
      %6253 = vmatprep.mubr.bf16.mxu0 0
      %6254 = vmatmul.mubr.bf16.gmra.mrb[0].mxu0 %v5800
      %v6255 = vpop.f32.mrb[0].mxu0
      %v6256 = vadd.f32 0.0, %v6255
      %v6257 = vpop.f32.mrb[0].mxu0
      %v6258 = vpop.f32.mrb[0].mxu0
      %v6259 = vadd.f32 0.0, %v6258
      %v6260 = vpop.f32.mrb[0].mxu0
      %6261 = vmatprep.mubr.bf16.mxu0 0
      %6262 = vmatmul.mubr.bf16.gmra.mrb[0].mxu0 %v5803
      %v6263 = vpop.f32.mrb[0].mxu0
      %v6264 = vadd.f32 0.0, %v6263
      %v6265 = vpop.f32.mrb[0].mxu0
      %v6266 = vpop.f32.mrb[0].mxu0
      %v6267 = vadd.f32 0.0, %v6266
      %v6268 = vpop.f32.mrb[0].mxu0
      %6269 = vmatprep.mubr.bf16.mxu0 0
      %6270 = vmatmul.mubr.bf16.gmra.mrb[0].mxu0 %v5806
      %v6271 = vpop.f32.mrb[0].mxu0
      %v6272 = vadd.f32 0.0, %v6271
      %v6273 = vpop.f32.mrb[0].mxu0
      %v6274 = vpop.f32.mrb[0].mxu0
      %v6275 = vadd.f32 0.0, %v6274
      %v6276 = vpop.f32.mrb[0].mxu0
      %6277 = vmatprep.mubr.bf16.mxu0 0
      %6278 = vmatmul.mubr.bf16.gmra.mrb[0].mxu0 %v5809
      %v6279 = vpop.f32.mrb[0].mxu0
      %v6280 = vadd.f32 0.0, %v6279
      %v6281 = vpop.f32.mrb[0].mxu0
      %v6282 = vpop.f32.mrb[0].mxu0
      %v6283 = vadd.f32 0.0, %v6282
      %v6284 = vpop.f32.mrb[0].mxu0
      %6285 = vmatprep.mubr.bf16.mxu0 0
      %6286 = vmatmul.mubr.bf16.gmra.mrb[0].mxu0 %v5812
      %v6287 = vpop.f32.mrb[0].mxu0
      %v6288 = vadd.f32 0.0, %v6287
      %v6289 = vpop.f32.mrb[0].mxu0
      %v6290 = vpop.f32.mrb[0].mxu0
      %v6291 = vadd.f32 0.0, %v6290
      %v6292 = vpop.f32.mrb[0].mxu0
      %6293 = vmatprep.mubr.bf16.mxu0 0
      %6294 = vmatmul.mubr.bf16.gmra.mrb[0].mxu0 %v5815
      %v6295 = vpop.f32.mrb[0].mxu0
      %v6296 = vadd.f32 0.0, %v6295
      %v6297 = vpop.f32.mrb[0].mxu0
      %v6298 = vpop.f32.mrb[0].mxu0
      %v6299 = vadd.f32 0.0, %v6298
      %v6300 = vpop.f32.mrb[0].mxu0
      %6301 = vmatprep.mubr.bf16.mxu0 0
      %6302 = vmatmul.mubr.bf16.gmra.mrb[0].mxu0 %v5818
      %v6303 = vpop.f32.mrb[0].mxu0
      %v6304 = vadd.f32 0.0, %v6303
      %v6305 = vpop.f32.mrb[0].mxu0
      %v6306 = vpop.f32.mrb[0].mxu0
      %v6307 = vadd.f32 0.0, %v6306
      %v6308 = vpop.f32.mrb[0].mxu0
      %6309 = vmatprep.mubr.bf16.mxu0 0
      %6310 = vmatmul.mubr.bf16.gmra.mrb[0].mxu0 %v5821
      %v6311 = vpop.f32.mrb[0].mxu0
      %v6312 = vadd.f32 0.0, %v6311
      %v6313 = vpop.f32.mrb[0].mxu0
      %v6314 = vpop.f32.mrb[0].mxu0
      %v6315 = vadd.f32 0.0, %v6314
      %v6316 = vpop.f32.mrb[0].mxu0
      %6317 = vmatprep.mubr.bf16.mxu0 0
      %6318 = vmatmul.mubr.bf16.gmra.mrb[0].mxu0 %v5824
      %v6319 = vpop.f32.mrb[0].mxu0
      %v6320 = vadd.f32 0.0, %v6319
      %v6321 = vpop.f32.mrb[0].mxu0
      %v6322 = vpop.f32.mrb[0].mxu0
      %v6323 = vadd.f32 0.0, %v6322
      %v6324 = vpop.f32.mrb[0].mxu0
      %6325 = vmatprep.mubr.bf16.mxu0 0
      %6326 = vmatmul.mubr.bf16.gmra.mrb[0].mxu0 %v5827
      %v6327 = vpop.f32.mrb[0].mxu0
      %v6328 = vadd.f32 0.0, %v6327
      %v6329 = vpop.f32.mrb[0].mxu0
      %v6330 = vpop.f32.mrb[0].mxu0
      %v6331 = vadd.f32 0.0, %v6330
      %v6332 = vpop.f32.mrb[0].mxu0
      %6333 = vmatprep.mubr.bf16.mxu0 0
      %6334 = vmatmul.mubr.bf16.gmra.mrb[0].mxu0 %v5830
      %v6335 = vpop.f32.mrb[0].mxu0
      %v6336 = vadd.f32 0.0, %v6335
      %v6337 = vpop.f32.mrb[0].mxu0
      %v6338 = vpop.f32.mrb[0].mxu0
      %v6339 = vadd.f32 0.0, %v6338
      %v6340 = vpop.f32.mrb[0].mxu0
      %6341 = vmatprep.mubr.bf16.mxu0 0
      %6342 = vmatmul.mubr.bf16.gmra.mrb[0].mxu0 %v5833
      %v6343 = vpop.f32.mrb[0].mxu0
      %v6344 = vadd.f32 0.0, %v6343
      %v6345 = vpop.f32.mrb[0].mxu0
      %v6346 = vpop.f32.mrb[0].mxu0
      %v6347 = vadd.f32 0.0, %v6346
      %v6348 = vpop.f32.mrb[0].mxu0
      %6349 = vmatprep.mubr.bf16.mxu0 0
      %6350 = vmatmul.mubr.bf16.gmra.mrb[0].mxu0 %v5836
      %v6351 = vpop.f32.mrb[0].mxu0
      %v6352 = vadd.f32 0.0, %v6351
      %v6353 = vpop.f32.mrb[0].mxu0
      %v6354 = vpop.f32.mrb[0].mxu0
      %v6355 = vadd.f32 0.0, %v6354
      %v6356 = vpop.f32.mrb[0].mxu0
      %6357 = vmatprep.mubr.bf16.mxu0 0
      %6358 = vmatmul.mubr.bf16.gmra.mrb[0].mxu0 %v5839
      %v6359 = vpop.f32.mrb[0].mxu0
      %v6360 = vadd.f32 0.0, %v6359
      %v6361 = vpop.f32.mrb[0].mxu0
      %v6362 = vpop.f32.mrb[0].mxu0
      %v6363 = vadd.f32 0.0, %v6362
      %v6364 = vpop.f32.mrb[0].mxu0
      %6365 = vmatprep.mubr.bf16.mxu0 0
      %6366 = vmatmul.mubr.bf16.gmra.mrb[0].mxu0 %v5842
      %v6367 = vpop.f32.mrb[0].mxu0
      %v6368 = vadd.f32 0.0, %v6367
      %v6369 = vpop.f32.mrb[0].mxu0
      %v6370 = vpop.f32.mrb[0].mxu0
      %v6371 = vadd.f32 0.0, %v6370
      %v6372 = vpop.f32.mrb[0].mxu0
      %6373 = vmatprep.mubr.bf16.mxu0 0
      %6374 = vmatmul.mubr.bf16.gmra.mrb[0].mxu0 %v5845
      %v6375 = vpop.f32.mrb[0].mxu0
      %v6376 = vadd.f32 0.0, %v6375
      %v6377 = vpop.f32.mrb[0].mxu0
      %v6378 = vpop.f32.mrb[0].mxu0
      %v6379 = vadd.f32 0.0, %v6378
      %v6380 = vpop.f32.mrb[0].mxu0
      %6381 = vmatprep.mubr.bf16.mxu0 0
      %6382 = vmatmul.mubr.bf16.gmra.mrb[0].mxu0 %v5848
      %v6383 = vpop.f32.mrb[0].mxu0
      %v6384 = vadd.f32 0.0, %v6383
      %v6385 = vpop.f32.mrb[0].mxu0
      %v6386 = vpop.f32.mrb[0].mxu0
      %v6387 = vadd.f32 0.0, %v6386
      %v6388 = vpop.f32.mrb[0].mxu0
      %6389 = vmatprep.mubr.bf16.mxu0 0
      %6390 = vmatmul.mubr.bf16.gmra.mrb[0].mxu0 %v5851
      %v6391 = vpop.f32.mrb[0].mxu0
      %v6392 = vadd.f32 0.0, %v6391
      %v6393 = vpop.f32.mrb[0].mxu0
      %v6394 = vpop.f32.mrb[0].mxu0
      %v6395 = vadd.f32 0.0, %v6394
      %v6396 = vpop.f32.mrb[0].mxu0
      %6397 = vdwg.mxu0
      %6526 = vrot.lane.b32.xlu0 %v5888, 64
      %v6527 = vpop.permute.xlu0 %6526
      %6528 = vrot.lane.b32.xlu0 %v5891, 64
      %v6529 = vpop.permute.xlu0 %6528
      %6530 = vrot.lane.b32.xlu0 %v5896, 64
      %v6531 = vpop.permute.xlu0 %6530
      %6532 = vrot.lane.b32.xlu0 %v5899, 64
      %v6533 = vpop.permute.xlu0 %6532
      %6534 = vrot.lane.b32.xlu0 %v5904, 64
      %v6535 = vpop.permute.xlu0 %6534
      %6536 = vrot.lane.b32.xlu0 %v5907, 64
      %v6537 = vpop.permute.xlu0 %6536
      %6538 = vrot.lane.b32.xlu0 %v5912, 64
      %v6539 = vpop.permute.xlu0 %6538
      %6540 = vrot.lane.b32.xlu0 %v5915, 64
      %v6541 = vpop.permute.xlu0 %6540
      %6542 = vrot.lane.b32.xlu0 %v5920, 64
      %v6543 = vpop.permute.xlu0 %6542
      %6544 = vrot.lane.b32.xlu0 %v5923, 64
      %v6545 = vpop.permute.xlu0 %6544
      %6546 = vrot.lane.b32.xlu0 %v5928, 64
      %v6547 = vpop.permute.xlu0 %6546
      %6548 = vrot.lane.b32.xlu0 %v5931, 64
      %v6549 = vpop.permute.xlu0 %6548
      %6550 = vrot.lane.b32.xlu0 %v5936, 64
      %v6551 = vpop.permute.xlu0 %6550
      %6552 = vrot.lane.b32.xlu0 %v5939, 64
      %v6553 = vpop.permute.xlu0 %6552
      %6554 = vrot.lane.b32.xlu0 %v5944, 64
      %v6555 = vpop.permute.xlu0 %6554
      %6556 = vrot.lane.b32.xlu0 %v5947, 64
      %v6557 = vpop.permute.xlu0 %6556
      %6558 = vrot.lane.b32.xlu0 %v5952, 64
      %v6559 = vpop.permute.xlu0 %6558
      %6560 = vrot.lane.b32.xlu0 %v5955, 64
      %v6561 = vpop.permute.xlu0 %6560
      %6562 = vrot.lane.b32.xlu0 %v5960, 64
      %v6563 = vpop.permute.xlu0 %6562
      %6564 = vrot.lane.b32.xlu0 %v5963, 64
      %v6565 = vpop.permute.xlu0 %6564
      %6566 = vrot.lane.b32.xlu0 %v5968, 64
      %v6567 = vpop.permute.xlu0 %6566
      %6568 = vrot.lane.b32.xlu0 %v5971, 64
      %v6569 = vpop.permute.xlu0 %6568
      %6570 = vrot.lane.b32.xlu0 %v5976, 64
      %v6571 = vpop.permute.xlu0 %6570
      %6572 = vrot.lane.b32.xlu0 %v5979, 64
      %v6573 = vpop.permute.xlu0 %6572
      %6574 = vrot.lane.b32.xlu0 %v5984, 64
      %v6575 = vpop.permute.xlu0 %6574
      %6576 = vrot.lane.b32.xlu0 %v5987, 64
      %v6577 = vpop.permute.xlu0 %6576
      %6578 = vrot.lane.b32.xlu0 %v5992, 64
      %v6579 = vpop.permute.xlu0 %6578
      %6580 = vrot.lane.b32.xlu0 %v5995, 64
      %v6581 = vpop.permute.xlu0 %6580
      %6582 = vrot.lane.b32.xlu0 %v6000, 64
      %v6583 = vpop.permute.xlu0 %6582
      %6584 = vrot.lane.b32.xlu0 %v6003, 64
      %v6585 = vpop.permute.xlu0 %6584
      %6586 = vrot.lane.b32.xlu0 %v6008, 64
      %v6587 = vpop.permute.xlu0 %6586
      %6588 = vrot.lane.b32.xlu0 %v6011, 64
      %v6589 = vpop.permute.xlu0 %6588
      %6590 = vrot.lane.b32.xlu0 %v6016, 64
      %v6591 = vpop.permute.xlu0 %6590
      %6592 = vrot.lane.b32.xlu0 %v6019, 64
      %v6593 = vpop.permute.xlu0 %6592
      %6594 = vrot.lane.b32.xlu0 %v6024, 64
      %v6595 = vpop.permute.xlu0 %6594
      %6596 = vrot.lane.b32.xlu0 %v6027, 64
      %v6597 = vpop.permute.xlu0 %6596
      %6598 = vrot.lane.b32.xlu0 %v6032, 64
      %v6599 = vpop.permute.xlu0 %6598
      %6600 = vrot.lane.b32.xlu0 %v6035, 64
      %v6601 = vpop.permute.xlu0 %6600
      %6602 = vrot.lane.b32.xlu0 %v6040, 64
      %v6603 = vpop.permute.xlu0 %6602
      %6604 = vrot.lane.b32.xlu0 %v6043, 64
      %v6605 = vpop.permute.xlu0 %6604
      %6606 = vrot.lane.b32.xlu0 %v6048, 64
      %v6607 = vpop.permute.xlu0 %6606
      %6608 = vrot.lane.b32.xlu0 %v6051, 64
      %v6609 = vpop.permute.xlu0 %6608
      %6610 = vrot.lane.b32.xlu0 %v6056, 64
      %v6611 = vpop.permute.xlu0 %6610
      %6612 = vrot.lane.b32.xlu0 %v6059, 64
      %v6613 = vpop.permute.xlu0 %6612
      %6614 = vrot.lane.b32.xlu0 %v6064, 64
      %v6615 = vpop.permute.xlu0 %6614
      %6616 = vrot.lane.b32.xlu0 %v6067, 64
      %v6617 = vpop.permute.xlu0 %6616
      %6618 = vrot.lane.b32.xlu0 %v6072, 64
      %v6619 = vpop.permute.xlu0 %6618
      %6620 = vrot.lane.b32.xlu0 %v6075, 64
      %v6621 = vpop.permute.xlu0 %6620
      %6622 = vrot.lane.b32.xlu0 %v6080, 64
      %v6623 = vpop.permute.xlu0 %6622
      %6624 = vrot.lane.b32.xlu0 %v6083, 64
      %v6625 = vpop.permute.xlu0 %6624
      %6626 = vrot.lane.b32.xlu0 %v6088, 64
      %v6627 = vpop.permute.xlu0 %6626
      %6628 = vrot.lane.b32.xlu0 %v6091, 64
      %v6629 = vpop.permute.xlu0 %6628
      %6630 = vrot.lane.b32.xlu0 %v6096, 64
      %v6631 = vpop.permute.xlu0 %6630
      %6632 = vrot.lane.b32.xlu0 %v6099, 64
      %v6633 = vpop.permute.xlu0 %6632
      %6634 = vrot.lane.b32.xlu0 %v6104, 64
      %v6635 = vpop.permute.xlu0 %6634
      %6636 = vrot.lane.b32.xlu0 %v6107, 64
      %v6637 = vpop.permute.xlu0 %6636
      %6638 = vrot.lane.b32.xlu0 %v6112, 64
      %v6639 = vpop.permute.xlu0 %6638
      %6640 = vrot.lane.b32.xlu0 %v6115, 64
      %v6641 = vpop.permute.xlu0 %6640
      %6642 = vrot.lane.b32.xlu0 %v6120, 64
      %v6643 = vpop.permute.xlu0 %6642
      %6644 = vrot.lane.b32.xlu0 %v6123, 64
      %v6645 = vpop.permute.xlu0 %6644
      %6646 = vrot.lane.b32.xlu0 %v6128, 64
      %v6647 = vpop.permute.xlu0 %6646
      %6648 = vrot.lane.b32.xlu0 %v6131, 64
      %v6649 = vpop.permute.xlu0 %6648
      %6650 = vrot.lane.b32.xlu0 %v6136, 64
      %v6651 = vpop.permute.xlu0 %6650
      %6652 = vrot.lane.b32.xlu0 %v6139, 64
      %v6653 = vpop.permute.xlu0 %6652
      %6654 = vrot.lane.b32.xlu0 %v6144, 64
      %v6655 = vpop.permute.xlu0 %6654
      %6656 = vrot.lane.b32.xlu0 %v6147, 64
      %v6657 = vpop.permute.xlu0 %6656
      %6658 = vrot.lane.b32.xlu0 %v6152, 64
      %v6659 = vpop.permute.xlu0 %6658
      %6660 = vrot.lane.b32.xlu0 %v6155, 64
      %v6661 = vpop.permute.xlu0 %6660
      %6662 = vrot.lane.b32.xlu0 %v6160, 64
      %v6663 = vpop.permute.xlu0 %6662
      %6664 = vrot.lane.b32.xlu0 %v6163, 64
      %v6665 = vpop.permute.xlu0 %6664
      %6666 = vrot.lane.b32.xlu0 %v6168, 64
      %v6667 = vpop.permute.xlu0 %6666
      %6668 = vrot.lane.b32.xlu0 %v6171, 64
      %v6669 = vpop.permute.xlu0 %6668
      %6670 = vrot.lane.b32.xlu0 %v6176, 64
      %v6671 = vpop.permute.xlu0 %6670
      %6672 = vrot.lane.b32.xlu0 %v6179, 64
      %v6673 = vpop.permute.xlu0 %6672
      %6674 = vrot.lane.b32.xlu0 %v6184, 64
      %v6675 = vpop.permute.xlu0 %6674
      %6676 = vrot.lane.b32.xlu0 %v6187, 64
      %v6677 = vpop.permute.xlu0 %6676
      %6678 = vrot.lane.b32.xlu0 %v6192, 64
      %v6679 = vpop.permute.xlu0 %6678
      %6680 = vrot.lane.b32.xlu0 %v6195, 64
      %v6681 = vpop.permute.xlu0 %6680
      %6682 = vrot.lane.b32.xlu0 %v6200, 64
      %v6683 = vpop.permute.xlu0 %6682
      %6684 = vrot.lane.b32.xlu0 %v6203, 64
      %v6685 = vpop.permute.xlu0 %6684
      %6686 = vrot.lane.b32.xlu0 %v6208, 64
      %v6687 = vpop.permute.xlu0 %6686
      %6688 = vrot.lane.b32.xlu0 %v6211, 64
      %v6689 = vpop.permute.xlu0 %6688
      %6690 = vrot.lane.b32.xlu0 %v6216, 64
      %v6691 = vpop.permute.xlu0 %6690
      %6692 = vrot.lane.b32.xlu0 %v6219, 64
      %v6693 = vpop.permute.xlu0 %6692
      %6694 = vrot.lane.b32.xlu0 %v6224, 64
      %v6695 = vpop.permute.xlu0 %6694
      %6696 = vrot.lane.b32.xlu0 %v6227, 64
      %v6697 = vpop.permute.xlu0 %6696
      %6698 = vrot.lane.b32.xlu0 %v6232, 64
      %v6699 = vpop.permute.xlu0 %6698
      %6700 = vrot.lane.b32.xlu0 %v6235, 64
      %v6701 = vpop.permute.xlu0 %6700
      %6702 = vrot.lane.b32.xlu0 %v6240, 64
      %v6703 = vpop.permute.xlu0 %6702
      %6704 = vrot.lane.b32.xlu0 %v6243, 64
      %v6705 = vpop.permute.xlu0 %6704
      %6706 = vrot.lane.b32.xlu0 %v6248, 64
      %v6707 = vpop.permute.xlu0 %6706
      %6708 = vrot.lane.b32.xlu0 %v6251, 64
      %v6709 = vpop.permute.xlu0 %6708
      %6710 = vrot.lane.b32.xlu0 %v6256, 64
      %v6711 = vpop.permute.xlu0 %6710
      %6712 = vrot.lane.b32.xlu0 %v6259, 64
      %v6713 = vpop.permute.xlu0 %6712
      %6714 = vrot.lane.b32.xlu0 %v6264, 64
      %v6715 = vpop.permute.xlu0 %6714
      %6716 = vrot.lane.b32.xlu0 %v6267, 64
      %v6717 = vpop.permute.xlu0 %6716
      %6718 = vrot.lane.b32.xlu0 %v6272, 64
      %v6719 = vpop.permute.xlu0 %6718
      %6720 = vrot.lane.b32.xlu0 %v6275, 64
      %v6721 = vpop.permute.xlu0 %6720
      %6722 = vrot.lane.b32.xlu0 %v6280, 64
      %v6723 = vpop.permute.xlu0 %6722
      %6724 = vrot.lane.b32.xlu0 %v6283, 64
      %v6725 = vpop.permute.xlu0 %6724
      %6726 = vrot.lane.b32.xlu0 %v6288, 64
      %v6727 = vpop.permute.xlu0 %6726
      %6728 = vrot.lane.b32.xlu0 %v6291, 64
      %v6729 = vpop.permute.xlu0 %6728
      %6730 = vrot.lane.b32.xlu0 %v6296, 64
      %v6731 = vpop.permute.xlu0 %6730
      %6732 = vrot.lane.b32.xlu0 %v6299, 64
      %v6733 = vpop.permute.xlu0 %6732
      %6734 = vrot.lane.b32.xlu0 %v6304, 64
      %v6735 = vpop.permute.xlu0 %6734
      %6736 = vrot.lane.b32.xlu0 %v6307, 64
      %v6737 = vpop.permute.xlu0 %6736
      %6738 = vrot.lane.b32.xlu0 %v6312, 64
      %v6739 = vpop.permute.xlu0 %6738
      %6740 = vrot.lane.b32.xlu0 %v6315, 64
      %v6741 = vpop.permute.xlu0 %6740
      %6742 = vrot.lane.b32.xlu0 %v6320, 64
      %v6743 = vpop.permute.xlu0 %6742
      %6744 = vrot.lane.b32.xlu0 %v6323, 64
      %v6745 = vpop.permute.xlu0 %6744
      %6746 = vrot.lane.b32.xlu0 %v6328, 64
      %v6747 = vpop.permute.xlu0 %6746
      %6748 = vrot.lane.b32.xlu0 %v6331, 64
      %v6749 = vpop.permute.xlu0 %6748
      %6750 = vrot.lane.b32.xlu0 %v6336, 64
      %v6751 = vpop.permute.xlu0 %6750
      %6752 = vrot.lane.b32.xlu0 %v6339, 64
      %v6753 = vpop.permute.xlu0 %6752
      %6754 = vrot.lane.b32.xlu0 %v6344, 64
      %v6755 = vpop.permute.xlu0 %6754
      %6756 = vrot.lane.b32.xlu0 %v6347, 64
      %v6757 = vpop.permute.xlu0 %6756
      %6758 = vrot.lane.b32.xlu0 %v6352, 64
      %v6759 = vpop.permute.xlu0 %6758
      %6760 = vrot.lane.b32.xlu0 %v6355, 64
      %v6761 = vpop.permute.xlu0 %6760
      %6762 = vrot.lane.b32.xlu0 %v6360, 64
      %v6763 = vpop.permute.xlu0 %6762
      %6764 = vrot.lane.b32.xlu0 %v6363, 64
      %v6765 = vpop.permute.xlu0 %6764
      %6766 = vrot.lane.b32.xlu0 %v6368, 64
      %v6767 = vpop.permute.xlu0 %6766
      %6768 = vrot.lane.b32.xlu0 %v6371, 64
      %v6769 = vpop.permute.xlu0 %6768
      %6770 = vrot.lane.b32.xlu0 %v6376, 64
      %v6771 = vpop.permute.xlu0 %6770
      %6772 = vrot.lane.b32.xlu0 %v6379, 64
      %v6773 = vpop.permute.xlu0 %6772
      %6774 = vrot.lane.b32.xlu0 %v6384, 64
      %v6775 = vpop.permute.xlu0 %6774
      %6776 = vrot.lane.b32.xlu0 %v6387, 64
      %v6777 = vpop.permute.xlu0 %6776
      %6778 = vrot.lane.b32.xlu0 %v6392, 64
      %v6779 = vpop.permute.xlu0 %6778
      %6780 = vrot.lane.b32.xlu0 %v6395, 64
      %v6781 = vpop.permute.xlu0 %6780
      %v6910 = vadd.f32 %v797, %v6527
      %v6911 = vadd.f32 %v801, %v6529
      %v6912 = vadd.f32 %v807, %v6531
      %v6913 = vadd.f32 %v811, %v6533
      %v6914 = vadd.f32 %v817, %v6535
      %v6915 = vadd.f32 %v821, %v6537
      %v6916 = vadd.f32 %v827, %v6539
      %v6917 = vadd.f32 %v831, %v6541
      %v6918 = vadd.f32 %v837, %v6543
      %v6919 = vadd.f32 %v841, %v6545
      %v6920 = vadd.f32 %v847, %v6547
      %v6921 = vadd.f32 %v851, %v6549
      %v6922 = vadd.f32 %v857, %v6551
      %v6923 = vadd.f32 %v861, %v6553
      %v6924 = vadd.f32 %v867, %v6555
      %v6925 = vadd.f32 %v871, %v6557
      %v6926 = vadd.f32 %v877, %v6559
      %v6927 = vadd.f32 %v881, %v6561
      %v6928 = vadd.f32 %v887, %v6563
      %v6929 = vadd.f32 %v891, %v6565
      %v6930 = vadd.f32 %v897, %v6567
      %v6931 = vadd.f32 %v901, %v6569
      %v6932 = vadd.f32 %v907, %v6571
      %v6933 = vadd.f32 %v911, %v6573
      %v6934 = vadd.f32 %v917, %v6575
      %v6935 = vadd.f32 %v921, %v6577
      %v6936 = vadd.f32 %v927, %v6579
      %v6937 = vadd.f32 %v931, %v6581
      %v6938 = vadd.f32 %v937, %v6583
      %v6939 = vadd.f32 %v941, %v6585
      %v6940 = vadd.f32 %v947, %v6587
      %v6941 = vadd.f32 %v951, %v6589
      %v6942 = vadd.f32 %v957, %v6591
      %v6943 = vadd.f32 %v961, %v6593
      %v6944 = vadd.f32 %v967, %v6595
      %v6945 = vadd.f32 %v971, %v6597
      %v6946 = vadd.f32 %v977, %v6599
      %v6947 = vadd.f32 %v981, %v6601
      %v6948 = vadd.f32 %v987, %v6603
      %v6949 = vadd.f32 %v991, %v6605
      %v6950 = vadd.f32 %v997, %v6607
      %v6951 = vadd.f32 %v1001, %v6609
      %v6952 = vadd.f32 %v1007, %v6611
      %v6953 = vadd.f32 %v1011, %v6613
      %v6954 = vadd.f32 %v1017, %v6615
      %v6955 = vadd.f32 %v1021, %v6617
      %v6956 = vadd.f32 %v1027, %v6619
      %v6957 = vadd.f32 %v1031, %v6621
      %v6958 = vadd.f32 %v1037, %v6623
      %v6959 = vadd.f32 %v1041, %v6625
      %v6960 = vadd.f32 %v1047, %v6627
      %v6961 = vadd.f32 %v1051, %v6629
      %v6962 = vadd.f32 %v1057, %v6631
      %v6963 = vadd.f32 %v1061, %v6633
      %v6964 = vadd.f32 %v1067, %v6635
      %v6965 = vadd.f32 %v1071, %v6637
      %v6966 = vadd.f32 %v1077, %v6639
      %v6967 = vadd.f32 %v1081, %v6641
      %v6968 = vadd.f32 %v1087, %v6643
      %v6969 = vadd.f32 %v1091, %v6645
      %v6970 = vadd.f32 %v1097, %v6647
      %v6971 = vadd.f32 %v1101, %v6649
      %v6972 = vadd.f32 %v1107, %v6651
      %v6973 = vadd.f32 %v1111, %v6653
      %v6974 = vadd.f32 %v1117, %v6655
      %v6975 = vadd.f32 %v1121, %v6657
      %v6976 = vadd.f32 %v1127, %v6659
      %v6977 = vadd.f32 %v1131, %v6661
      %v6978 = vadd.f32 %v1137, %v6663
      %v6979 = vadd.f32 %v1141, %v6665
      %v6980 = vadd.f32 %v1147, %v6667
      %v6981 = vadd.f32 %v1151, %v6669
      %v6982 = vadd.f32 %v1157, %v6671
      %v6983 = vadd.f32 %v1161, %v6673
      %v6984 = vadd.f32 %v1167, %v6675
      %v6985 = vadd.f32 %v1171, %v6677
      %v6986 = vadd.f32 %v1177, %v6679
      %v6987 = vadd.f32 %v1181, %v6681
      %v6988 = vadd.f32 %v1187, %v6683
      %v6989 = vadd.f32 %v1191, %v6685
      %v6990 = vadd.f32 %v1197, %v6687
      %v6991 = vadd.f32 %v1201, %v6689
      %v6992 = vadd.f32 %v1207, %v6691
      %v6993 = vadd.f32 %v1211, %v6693
      %v6994 = vadd.f32 %v1217, %v6695
      %v6995 = vadd.f32 %v1221, %v6697
      %v6996 = vadd.f32 %v1227, %v6699
      %v6997 = vadd.f32 %v1231, %v6701
      %v6998 = vadd.f32 %v1237, %v6703
      %v6999 = vadd.f32 %v1241, %v6705
      %v7000 = vadd.f32 %v1247, %v6707
      %v7001 = vadd.f32 %v1251, %v6709
      %v7002 = vadd.f32 %v1257, %v6711
      %v7003 = vadd.f32 %v1261, %v6713
      %v7004 = vadd.f32 %v1267, %v6715
      %v7005 = vadd.f32 %v1271, %v6717
      %v7006 = vadd.f32 %v1277, %v6719
      %v7007 = vadd.f32 %v1281, %v6721
      %v7008 = vadd.f32 %v1287, %v6723
      %v7009 = vadd.f32 %v1291, %v6725
      %v7010 = vadd.f32 %v1297, %v6727
      %v7011 = vadd.f32 %v1301, %v6729
      %v7012 = vadd.f32 %v1307, %v6731
      %v7013 = vadd.f32 %v1311, %v6733
      %v7014 = vadd.f32 %v1317, %v6735
      %v7015 = vadd.f32 %v1321, %v6737
      %v7016 = vadd.f32 %v1327, %v6739
      %v7017 = vadd.f32 %v1331, %v6741
      %v7018 = vadd.f32 %v1337, %v6743
      %v7019 = vadd.f32 %v1341, %v6745
      %v7020 = vadd.f32 %v1347, %v6747
      %v7021 = vadd.f32 %v1351, %v6749
      %v7022 = vadd.f32 %v1357, %v6751
      %v7023 = vadd.f32 %v1361, %v6753
      %v7024 = vadd.f32 %v1367, %v6755
      %v7025 = vadd.f32 %v1371, %v6757
      %v7026 = vadd.f32 %v1377, %v6759
      %v7027 = vadd.f32 %v1381, %v6761
      %v7028 = vadd.f32 %v1387, %v6763
      %v7029 = vadd.f32 %v1391, %v6765
      %v7030 = vadd.f32 %v1397, %v6767
      %v7031 = vadd.f32 %v1401, %v6769
      %v7032 = vadd.f32 %v1407, %v6771
      %v7033 = vadd.f32 %v1411, %v6773
      %v7034 = vadd.f32 %v1417, %v6775
      %v7035 = vadd.f32 %v1421, %v6777
      %v7036 = vadd.f32 %v1427, %v6779
      %v7037 = vadd.f32 %v1431, %v6781
      %v7038 = vld [vmem:[%s3 + $0x5] sm:$0x1]
      %v7039 = vlaneseq
      %v7040 = vshrl.u32 %v7039, 7
      %v7041 = vsub.s32 0, %v7040
      %v7042 = vrot.slane %v7038, %v7041
      %7044 = vrot.lane.b32.xlu0 %v7042, 64
      %v7045 = vpop.permute.xlu0 %7044
      %v7047 = vadd.f32 %v6910, %v7045
      %v7048 = vadd.f32 %v6911, %v7045
      %v7049 = vadd.f32 %v6912, %v7045
      %v7050 = vadd.f32 %v6913, %v7045
      %v7051 = vadd.f32 %v6914, %v7045
      %v7052 = vadd.f32 %v6915, %v7045
      %v7053 = vadd.f32 %v6916, %v7045
      %v7054 = vadd.f32 %v6917, %v7045
      %v7055 = vadd.f32 %v6918, %v7045
      %v7056 = vadd.f32 %v6919, %v7045
      %v7057 = vadd.f32 %v6920, %v7045
      %v7058 = vadd.f32 %v6921, %v7045
      %v7059 = vadd.f32 %v6922, %v7045
      %v7060 = vadd.f32 %v6923, %v7045
      %v7061 = vadd.f32 %v6924, %v7045
      %v7062 = vadd.f32 %v6925, %v7045
      %v7063 = vadd.f32 %v6926, %v7045
      %v7064 = vadd.f32 %v6927, %v7045
      %v7065 = vadd.f32 %v6928, %v7045
      %v7066 = vadd.f32 %v6929, %v7045
      %v7067 = vadd.f32 %v6930, %v7045
      %v7068 = vadd.f32 %v6931, %v7045
      %v7069 = vadd.f32 %v6932, %v7045
      %v7070 = vadd.f32 %v6933, %v7045
      %v7071 = vadd.f32 %v6934, %v7045
      %v7072 = vadd.f32 %v6935, %v7045
      %v7073 = vadd.f32 %v6936, %v7045
      %v7074 = vadd.f32 %v6937, %v7045
      %v7075 = vadd.f32 %v6938, %v7045
      %v7076 = vadd.f32 %v6939, %v7045
      %v7077 = vadd.f32 %v6940, %v7045
      %v7078 = vadd.f32 %v6941, %v7045
      %v7079 = vadd.f32 %v6942, %v7045
      %v7080 = vadd.f32 %v6943, %v7045
      %v7081 = vadd.f32 %v6944, %v7045
      %v7082 = vadd.f32 %v6945, %v7045
      %v7083 = vadd.f32 %v6946, %v7045
      %v7084 = vadd.f32 %v6947, %v7045
      %v7085 = vadd.f32 %v6948, %v7045
      %v7086 = vadd.f32 %v6949, %v7045
      %v7087 = vadd.f32 %v6950, %v7045
      %v7088 = vadd.f32 %v6951, %v7045
      %v7089 = vadd.f32 %v6952, %v7045
      %v7090 = vadd.f32 %v6953, %v7045
      %v7091 = vadd.f32 %v6954, %v7045
      %v7092 = vadd.f32 %v6955, %v7045
      %v7093 = vadd.f32 %v6956, %v7045
      %v7094 = vadd.f32 %v6957, %v7045
      %v7095 = vadd.f32 %v6958, %v7045
      %v7096 = vadd.f32 %v6959, %v7045
      %v7097 = vadd.f32 %v6960, %v7045
      %v7098 = vadd.f32 %v6961, %v7045
      %v7099 = vadd.f32 %v6962, %v7045
      %v7100 = vadd.f32 %v6963, %v7045
      %v7101 = vadd.f32 %v6964, %v7045
      %v7102 = vadd.f32 %v6965, %v7045
      %v7103 = vadd.f32 %v6966, %v7045
      %v7104 = vadd.f32 %v6967, %v7045
      %v7105 = vadd.f32 %v6968, %v7045
      %v7106 = vadd.f32 %v6969, %v7045
      %v7107 = vadd.f32 %v6970, %v7045
      %v7108 = vadd.f32 %v6971, %v7045
      %v7109 = vadd.f32 %v6972, %v7045
      %v7110 = vadd.f32 %v6973, %v7045
      %v7111 = vadd.f32 %v6974, %v7045
      %v7112 = vadd.f32 %v6975, %v7045
      %v7113 = vadd.f32 %v6976, %v7045
      %v7114 = vadd.f32 %v6977, %v7045
      %v7115 = vadd.f32 %v6978, %v7045
      %v7116 = vadd.f32 %v6979, %v7045
      %v7117 = vadd.f32 %v6980, %v7045
      %v7118 = vadd.f32 %v6981, %v7045
      %v7119 = vadd.f32 %v6982, %v7045
      %v7120 = vadd.f32 %v6983, %v7045
      %v7121 = vadd.f32 %v6984, %v7045
      %v7122 = vadd.f32 %v6985, %v7045
      %v7123 = vadd.f32 %v6986, %v7045
      %v7124 = vadd.f32 %v6987, %v7045
      %v7125 = vadd.f32 %v6988, %v7045
      %v7126 = vadd.f32 %v6989, %v7045
      %v7127 = vadd.f32 %v6990, %v7045
      %v7128 = vadd.f32 %v6991, %v7045
      %v7129 = vadd.f32 %v6992, %v7045
      %v7130 = vadd.f32 %v6993, %v7045
      %v7131 = vadd.f32 %v6994, %v7045
      %v7132 = vadd.f32 %v6995, %v7045
      %v7133 = vadd.f32 %v6996, %v7045
      %v7134 = vadd.f32 %v6997, %v7045
      %v7135 = vadd.f32 %v6998, %v7045
      %v7136 = vadd.f32 %v6999, %v7045
      %v7137 = vadd.f32 %v7000, %v7045
      %v7138 = vadd.f32 %v7001, %v7045
      %v7139 = vadd.f32 %v7002, %v7045
      %v7140 = vadd.f32 %v7003, %v7045
      %v7141 = vadd.f32 %v7004, %v7045
      %v7142 = vadd.f32 %v7005, %v7045
      %v7143 = vadd.f32 %v7006, %v7045
      %v7144 = vadd.f32 %v7007, %v7045
      %v7145 = vadd.f32 %v7008, %v7045
      %v7146 = vadd.f32 %v7009, %v7045
      %v7147 = vadd.f32 %v7010, %v7045
      %v7148 = vadd.f32 %v7011, %v7045
      %v7149 = vadd.f32 %v7012, %v7045
      %v7150 = vadd.f32 %v7013, %v7045
      %v7151 = vadd.f32 %v7014, %v7045
      %v7152 = vadd.f32 %v7015, %v7045
      %v7153 = vadd.f32 %v7016, %v7045
      %v7154 = vadd.f32 %v7017, %v7045
      %v7155 = vadd.f32 %v7018, %v7045
      %v7156 = vadd.f32 %v7019, %v7045
      %v7157 = vadd.f32 %v7020, %v7045
      %v7158 = vadd.f32 %v7021, %v7045
      %v7159 = vadd.f32 %v7022, %v7045
      %v7160 = vadd.f32 %v7023, %v7045
      %v7161 = vadd.f32 %v7024, %v7045
      %v7162 = vadd.f32 %v7025, %v7045
      %v7163 = vadd.f32 %v7026, %v7045
      %v7164 = vadd.f32 %v7027, %v7045
      %v7165 = vadd.f32 %v7028, %v7045
      %v7166 = vadd.f32 %v7029, %v7045
      %v7167 = vadd.f32 %v7030, %v7045
      %v7168 = vadd.f32 %v7031, %v7045
      %v7169 = vadd.f32 %v7032, %v7045
      %v7170 = vadd.f32 %v7033, %v7045
      %v7171 = vadd.f32 %v7034, %v7045
      %v7172 = vadd.f32 %v7035, %v7045
      %v7173 = vadd.f32 %v7036, %v7045
      %v7174 = vadd.f32 %v7037, %v7045
      %v7175 = vmax.f32 %v7047, 0.0
      %v7176 = vmax.f32 %v7048, 0.0
      %v7177 = vmax.f32 %v7049, 0.0
      %v7178 = vmax.f32 %v7050, 0.0
      %v7179 = vmax.f32 %v7051, 0.0
      %v7180 = vmax.f32 %v7052, 0.0
      %v7181 = vmax.f32 %v7053, 0.0
      %v7182 = vmax.f32 %v7054, 0.0
      %v7183 = vmax.f32 %v7055, 0.0
      %v7184 = vmax.f32 %v7056, 0.0
      %v7185 = vmax.f32 %v7057, 0.0
      %v7186 = vmax.f32 %v7058, 0.0
      %v7187 = vmax.f32 %v7059, 0.0
      %v7188 = vmax.f32 %v7060, 0.0
      %v7189 = vmax.f32 %v7061, 0.0
      %v7190 = vmax.f32 %v7062, 0.0
      %v7191 = vmax.f32 %v7063, 0.0
      %v7192 = vmax.f32 %v7064, 0.0
      %v7193 = vmax.f32 %v7065, 0.0
      %v7194 = vmax.f32 %v7066, 0.0
      %v7195 = vmax.f32 %v7067, 0.0
      %v7196 = vmax.f32 %v7068, 0.0
      %v7197 = vmax.f32 %v7069, 0.0
      %v7198 = vmax.f32 %v7070, 0.0
      %v7199 = vmax.f32 %v7071, 0.0
      %v7200 = vmax.f32 %v7072, 0.0
      %v7201 = vmax.f32 %v7073, 0.0
      %v7202 = vmax.f32 %v7074, 0.0
      %v7203 = vmax.f32 %v7075, 0.0
      %v7204 = vmax.f32 %v7076, 0.0
      %v7205 = vmax.f32 %v7077, 0.0
      %v7206 = vmax.f32 %v7078, 0.0
      %v7207 = vmax.f32 %v7079, 0.0
      %v7208 = vmax.f32 %v7080, 0.0
      %v7209 = vmax.f32 %v7081, 0.0
      %v7210 = vmax.f32 %v7082, 0.0
      %v7211 = vmax.f32 %v7083, 0.0
      %v7212 = vmax.f32 %v7084, 0.0
      %v7213 = vmax.f32 %v7085, 0.0
      %v7214 = vmax.f32 %v7086, 0.0
      %v7215 = vmax.f32 %v7087, 0.0
      %v7216 = vmax.f32 %v7088, 0.0
      %v7217 = vmax.f32 %v7089, 0.0
      %v7218 = vmax.f32 %v7090, 0.0
      %v7219 = vmax.f32 %v7091, 0.0
      %v7220 = vmax.f32 %v7092, 0.0
      %v7221 = vmax.f32 %v7093, 0.0
      %v7222 = vmax.f32 %v7094, 0.0
      %v7223 = vmax.f32 %v7095, 0.0
      %v7224 = vmax.f32 %v7096, 0.0
      %v7225 = vmax.f32 %v7097, 0.0
      %v7226 = vmax.f32 %v7098, 0.0
      %v7227 = vmax.f32 %v7099, 0.0
      %v7228 = vmax.f32 %v7100, 0.0
      %v7229 = vmax.f32 %v7101, 0.0
      %v7230 = vmax.f32 %v7102, 0.0
      %v7231 = vmax.f32 %v7103, 0.0
      %v7232 = vmax.f32 %v7104, 0.0
      %v7233 = vmax.f32 %v7105, 0.0
      %v7234 = vmax.f32 %v7106, 0.0
      %v7235 = vmax.f32 %v7107, 0.0
      %v7236 = vmax.f32 %v7108, 0.0
      %v7237 = vmax.f32 %v7109, 0.0
      %v7238 = vmax.f32 %v7110, 0.0
      %v7239 = vmax.f32 %v7111, 0.0
      %v7240 = vmax.f32 %v7112, 0.0
      %v7241 = vmax.f32 %v7113, 0.0
      %v7242 = vmax.f32 %v7114, 0.0
      %v7243 = vmax.f32 %v7115, 0.0
      %v7244 = vmax.f32 %v7116, 0.0
      %v7245 = vmax.f32 %v7117, 0.0
      %v7246 = vmax.f32 %v7118, 0.0
      %v7247 = vmax.f32 %v7119, 0.0
      %v7248 = vmax.f32 %v7120, 0.0
      %v7249 = vmax.f32 %v7121, 0.0
      %v7250 = vmax.f32 %v7122, 0.0
      %v7251 = vmax.f32 %v7123, 0.0
      %v7252 = vmax.f32 %v7124, 0.0
      %v7253 = vmax.f32 %v7125, 0.0
      %v7254 = vmax.f32 %v7126, 0.0
      %v7255 = vmax.f32 %v7127, 0.0
      %v7256 = vmax.f32 %v7128, 0.0
      %v7257 = vmax.f32 %v7129, 0.0
      %v7258 = vmax.f32 %v7130, 0.0
      %v7259 = vmax.f32 %v7131, 0.0
      %v7260 = vmax.f32 %v7132, 0.0
      %v7261 = vmax.f32 %v7133, 0.0
      %v7262 = vmax.f32 %v7134, 0.0
      %v7263 = vmax.f32 %v7135, 0.0
      %v7264 = vmax.f32 %v7136, 0.0
      %v7265 = vmax.f32 %v7137, 0.0
      %v7266 = vmax.f32 %v7138, 0.0
      %v7267 = vmax.f32 %v7139, 0.0
      %v7268 = vmax.f32 %v7140, 0.0
      %v7269 = vmax.f32 %v7141, 0.0
      %v7270 = vmax.f32 %v7142, 0.0
      %v7271 = vmax.f32 %v7143, 0.0
      %v7272 = vmax.f32 %v7144, 0.0
      %v7273 = vmax.f32 %v7145, 0.0
      %v7274 = vmax.f32 %v7146, 0.0
      %v7275 = vmax.f32 %v7147, 0.0
      %v7276 = vmax.f32 %v7148, 0.0
      %v7277 = vmax.f32 %v7149, 0.0
      %v7278 = vmax.f32 %v7150, 0.0
      %v7279 = vmax.f32 %v7151, 0.0
      %v7280 = vmax.f32 %v7152, 0.0
      %v7281 = vmax.f32 %v7153, 0.0
      %v7282 = vmax.f32 %v7154, 0.0
      %v7283 = vmax.f32 %v7155, 0.0
      %v7284 = vmax.f32 %v7156, 0.0
      %v7285 = vmax.f32 %v7157, 0.0
      %v7286 = vmax.f32 %v7158, 0.0
      %v7287 = vmax.f32 %v7159, 0.0
      %v7288 = vmax.f32 %v7160, 0.0
      %v7289 = vmax.f32 %v7161, 0.0
      %v7290 = vmax.f32 %v7162, 0.0
      %v7291 = vmax.f32 %v7163, 0.0
      %v7292 = vmax.f32 %v7164, 0.0
      %v7293 = vmax.f32 %v7165, 0.0
      %v7294 = vmax.f32 %v7166, 0.0
      %v7295 = vmax.f32 %v7167, 0.0
      %v7296 = vmax.f32 %v7168, 0.0
      %v7297 = vmax.f32 %v7169, 0.0
      %v7298 = vmax.f32 %v7170, 0.0
      %v7299 = vmax.f32 %v7171, 0.0
      %v7300 = vmax.f32 %v7172, 0.0
      %v7301 = vmax.f32 %v7173, 0.0
      %v7302 = vmax.f32 %v7174, 0.0
      %s7303 = scalar_lea.vmem %s2, 160
      %v7304 = vld [vmem:[%s7303] sm:$0xf]
      %v7305 = vld [vmem:[%s7303 + $0x4] sm:$0xf]
      %v7306 = vld [vmem:[%s7303 + $0x8] sm:$0xf]
      %v7307 = vld [vmem:[%s7303 + $0xc] sm:$0xf]
      %v7308 = vld [vmem:[%s7303 + $0x10] sm:$0xf]
      %v7309 = vld [vmem:[%s7303 + $0x14] sm:$0xf]
      %v7310 = vld [vmem:[%s7303 + $0x18] sm:$0xf]
      %v7311 = vld [vmem:[%s7303 + $0x1c] sm:$0xf]
      %v7312 = vpack.c.bf16 %v7176, %v7175
      %v7313 = vpack.c.bf16 %v7178, %v7177
      %v7314 = vpack.c.bf16 %v7180, %v7179
      %v7315 = vpack.c.bf16 %v7182, %v7181
      %v7316 = vpack.c.bf16 %v7184, %v7183
      %v7317 = vpack.c.bf16 %v7186, %v7185
      %v7318 = vpack.c.bf16 %v7188, %v7187
      %v7319 = vpack.c.bf16 %v7190, %v7189
      %v7320 = vpack.c.bf16 %v7192, %v7191
      %v7321 = vpack.c.bf16 %v7194, %v7193
      %v7322 = vpack.c.bf16 %v7196, %v7195
      %v7323 = vpack.c.bf16 %v7198, %v7197
      %v7324 = vpack.c.bf16 %v7200, %v7199
      %v7325 = vpack.c.bf16 %v7202, %v7201
      %v7326 = vpack.c.bf16 %v7204, %v7203
      %v7327 = vpack.c.bf16 %v7206, %v7205
      %v7328 = vpack.c.bf16 %v7208, %v7207
      %v7329 = vpack.c.bf16 %v7210, %v7209
      %v7330 = vpack.c.bf16 %v7212, %v7211
      %v7331 = vpack.c.bf16 %v7214, %v7213
      %v7332 = vpack.c.bf16 %v7216, %v7215
      %v7333 = vpack.c.bf16 %v7218, %v7217
      %v7334 = vpack.c.bf16 %v7220, %v7219
      %v7335 = vpack.c.bf16 %v7222, %v7221
      %v7336 = vpack.c.bf16 %v7224, %v7223
      %v7337 = vpack.c.bf16 %v7226, %v7225
      %v7338 = vpack.c.bf16 %v7228, %v7227
      %v7339 = vpack.c.bf16 %v7230, %v7229
      %v7340 = vpack.c.bf16 %v7232, %v7231
      %v7341 = vpack.c.bf16 %v7234, %v7233
      %v7342 = vpack.c.bf16 %v7236, %v7235
      %v7343 = vpack.c.bf16 %v7238, %v7237
      %v7344 = vpack.c.bf16 %v7240, %v7239
      %v7345 = vpack.c.bf16 %v7242, %v7241
      %v7346 = vpack.c.bf16 %v7244, %v7243
      %v7347 = vpack.c.bf16 %v7246, %v7245
      %v7348 = vpack.c.bf16 %v7248, %v7247
      %v7349 = vpack.c.bf16 %v7250, %v7249
      %v7350 = vpack.c.bf16 %v7252, %v7251
      %v7351 = vpack.c.bf16 %v7254, %v7253
      %v7352 = vpack.c.bf16 %v7256, %v7255
      %v7353 = vpack.c.bf16 %v7258, %v7257
      %v7354 = vpack.c.bf16 %v7260, %v7259
      %v7355 = vpack.c.bf16 %v7262, %v7261
      %v7356 = vpack.c.bf16 %v7264, %v7263
      %v7357 = vpack.c.bf16 %v7266, %v7265
      %v7358 = vpack.c.bf16 %v7268, %v7267
      %v7359 = vpack.c.bf16 %v7270, %v7269
      %v7360 = vpack.c.bf16 %v7272, %v7271
      %v7361 = vpack.c.bf16 %v7274, %v7273
      %v7362 = vpack.c.bf16 %v7276, %v7275
      %v7363 = vpack.c.bf16 %v7278, %v7277
      %v7364 = vpack.c.bf16 %v7280, %v7279
      %v7365 = vpack.c.bf16 %v7282, %v7281
      %v7366 = vpack.c.bf16 %v7284, %v7283
      %v7367 = vpack.c.bf16 %v7286, %v7285
      %v7368 = vpack.c.bf16 %v7288, %v7287
      %v7369 = vpack.c.bf16 %v7290, %v7289
      %v7370 = vpack.c.bf16 %v7292, %v7291
      %v7371 = vpack.c.bf16 %v7294, %v7293
      %v7372 = vpack.c.bf16 %v7296, %v7295
      %v7373 = vpack.c.bf16 %v7298, %v7297
      %v7374 = vpack.c.bf16 %v7300, %v7299
      %v7375 = vpack.c.bf16 %v7302, %v7301
      %v7376 = vld [vmem:[%s3 + $0x6] sm:$0x1]
      %v7377 = vlaneseq
      %v7378 = vshrl.u32 %v7377, 7
      %v7379 = vsub.s32 0, %v7378
      %v7380 = vrot.slane %v7376, %v7379
      %7445 = vrot.lane.b32.xlu0 %v7312, 64
      %v7446 = vpop.permute.xlu0 %7445
      %7447 = vrot.lane.b32.xlu0 %v7313, 64
      %v7448 = vpop.permute.xlu0 %7447
      %7449 = vrot.lane.b32.xlu0 %v7314, 64
      %v7450 = vpop.permute.xlu0 %7449
      %7451 = vrot.lane.b32.xlu0 %v7315, 64
      %v7452 = vpop.permute.xlu0 %7451
      %7453 = vrot.lane.b32.xlu0 %v7316, 64
      %v7454 = vpop.permute.xlu0 %7453
      %7455 = vrot.lane.b32.xlu0 %v7317, 64
      %v7456 = vpop.permute.xlu0 %7455
      %7457 = vrot.lane.b32.xlu0 %v7318, 64
      %v7458 = vpop.permute.xlu0 %7457
      %7459 = vrot.lane.b32.xlu0 %v7319, 64
      %v7460 = vpop.permute.xlu0 %7459
      %7461 = vrot.lane.b32.xlu0 %v7320, 64
      %v7462 = vpop.permute.xlu0 %7461
      %7463 = vrot.lane.b32.xlu0 %v7321, 64
      %v7464 = vpop.permute.xlu0 %7463
      %7465 = vrot.lane.b32.xlu0 %v7322, 64
      %v7466 = vpop.permute.xlu0 %7465
      %7467 = vrot.lane.b32.xlu0 %v7323, 64
      %v7468 = vpop.permute.xlu0 %7467
      %7469 = vrot.lane.b32.xlu0 %v7324, 64
      %v7470 = vpop.permute.xlu0 %7469
      %7471 = vrot.lane.b32.xlu0 %v7325, 64
      %v7472 = vpop.permute.xlu0 %7471
      %7473 = vrot.lane.b32.xlu0 %v7326, 64
      %v7474 = vpop.permute.xlu0 %7473
      %7475 = vrot.lane.b32.xlu0 %v7327, 64
      %v7476 = vpop.permute.xlu0 %7475
      %7477 = vrot.lane.b32.xlu0 %v7328, 64
      %v7478 = vpop.permute.xlu0 %7477
      %7479 = vrot.lane.b32.xlu0 %v7329, 64
      %v7480 = vpop.permute.xlu0 %7479
      %7481 = vrot.lane.b32.xlu0 %v7330, 64
      %v7482 = vpop.permute.xlu0 %7481
      %7483 = vrot.lane.b32.xlu0 %v7331, 64
      %v7484 = vpop.permute.xlu0 %7483
      %7485 = vrot.lane.b32.xlu0 %v7332, 64
      %v7486 = vpop.permute.xlu0 %7485
      %7487 = vrot.lane.b32.xlu0 %v7333, 64
      %v7488 = vpop.permute.xlu0 %7487
      %7489 = vrot.lane.b32.xlu0 %v7334, 64
      %v7490 = vpop.permute.xlu0 %7489
      %7491 = vrot.lane.b32.xlu0 %v7335, 64
      %v7492 = vpop.permute.xlu0 %7491
      %7493 = vrot.lane.b32.xlu0 %v7336, 64
      %v7494 = vpop.permute.xlu0 %7493
      %7495 = vrot.lane.b32.xlu0 %v7337, 64
      %v7496 = vpop.permute.xlu0 %7495
      %7497 = vrot.lane.b32.xlu0 %v7338, 64
      %v7498 = vpop.permute.xlu0 %7497
      %7499 = vrot.lane.b32.xlu0 %v7339, 64
      %v7500 = vpop.permute.xlu0 %7499
      %7501 = vrot.lane.b32.xlu0 %v7340, 64
      %v7502 = vpop.permute.xlu0 %7501
      %7503 = vrot.lane.b32.xlu0 %v7341, 64
      %v7504 = vpop.permute.xlu0 %7503
      %7505 = vrot.lane.b32.xlu0 %v7342, 64
      %v7506 = vpop.permute.xlu0 %7505
      %7507 = vrot.lane.b32.xlu0 %v7343, 64
      %v7508 = vpop.permute.xlu0 %7507
      %7509 = vrot.lane.b32.xlu0 %v7344, 64
      %v7510 = vpop.permute.xlu0 %7509
      %7511 = vrot.lane.b32.xlu0 %v7345, 64
      %v7512 = vpop.permute.xlu0 %7511
      %7513 = vrot.lane.b32.xlu0 %v7346, 64
      %v7514 = vpop.permute.xlu0 %7513
      %7515 = vrot.lane.b32.xlu0 %v7347, 64
      %v7516 = vpop.permute.xlu0 %7515
      %7517 = vrot.lane.b32.xlu0 %v7348, 64
      %v7518 = vpop.permute.xlu0 %7517
      %7519 = vrot.lane.b32.xlu0 %v7349, 64
      %v7520 = vpop.permute.xlu0 %7519
      %7521 = vrot.lane.b32.xlu0 %v7350, 64
      %v7522 = vpop.permute.xlu0 %7521
      %7523 = vrot.lane.b32.xlu0 %v7351, 64
      %v7524 = vpop.permute.xlu0 %7523
      %7525 = vrot.lane.b32.xlu0 %v7352, 64
      %v7526 = vpop.permute.xlu0 %7525
      %7527 = vrot.lane.b32.xlu0 %v7353, 64
      %v7528 = vpop.permute.xlu0 %7527
      %7529 = vrot.lane.b32.xlu0 %v7354, 64
      %v7530 = vpop.permute.xlu0 %7529
      %7531 = vrot.lane.b32.xlu0 %v7355, 64
      %v7532 = vpop.permute.xlu0 %7531
      %7533 = vrot.lane.b32.xlu0 %v7356, 64
      %v7534 = vpop.permute.xlu0 %7533
      %7535 = vrot.lane.b32.xlu0 %v7357, 64
      %v7536 = vpop.permute.xlu0 %7535
      %7537 = vrot.lane.b32.xlu0 %v7358, 64
      %v7538 = vpop.permute.xlu0 %7537
      %7539 = vrot.lane.b32.xlu0 %v7359, 64
      %v7540 = vpop.permute.xlu0 %7539
      %7541 = vrot.lane.b32.xlu0 %v7360, 64
      %v7542 = vpop.permute.xlu0 %7541
      %7543 = vrot.lane.b32.xlu0 %v7361, 64
      %v7544 = vpop.permute.xlu0 %7543
      %7545 = vrot.lane.b32.xlu0 %v7362, 64
      %v7546 = vpop.permute.xlu0 %7545
      %7547 = vrot.lane.b32.xlu0 %v7363, 64
      %v7548 = vpop.permute.xlu0 %7547
      %7549 = vrot.lane.b32.xlu0 %v7364, 64
      %v7550 = vpop.permute.xlu0 %7549
      %7551 = vrot.lane.b32.xlu0 %v7365, 64
      %v7552 = vpop.permute.xlu0 %7551
      %7553 = vrot.lane.b32.xlu0 %v7366, 64
      %v7554 = vpop.permute.xlu0 %7553
      %7555 = vrot.lane.b32.xlu0 %v7367, 64
      %v7556 = vpop.permute.xlu0 %7555
      %7557 = vrot.lane.b32.xlu0 %v7368, 64
      %v7558 = vpop.permute.xlu0 %7557
      %7559 = vrot.lane.b32.xlu0 %v7369, 64
      %v7560 = vpop.permute.xlu0 %7559
      %7561 = vrot.lane.b32.xlu0 %v7370, 64
      %v7562 = vpop.permute.xlu0 %7561
      %7563 = vrot.lane.b32.xlu0 %v7371, 64
      %v7564 = vpop.permute.xlu0 %7563
      %7565 = vrot.lane.b32.xlu0 %v7372, 64
      %v7566 = vpop.permute.xlu0 %7565
      %7567 = vrot.lane.b32.xlu0 %v7373, 64
      %v7568 = vpop.permute.xlu0 %7567
      %7569 = vrot.lane.b32.xlu0 %v7374, 64
      %v7570 = vpop.permute.xlu0 %7569
      %7571 = vrot.lane.b32.xlu0 %v7375, 64
      %v7572 = vpop.permute.xlu0 %7571
      %v7581 = vunpack.c.l.b16 %v7304
      %v7582 = vunpack.c.l.b16 %v7305
      %v7583 = vunpack.c.l.b16 %v7306
      %v7584 = vunpack.c.l.b16 %v7307
      %v7585 = vunpack.c.l.b16 %v7308
      %v7586 = vunpack.c.l.b16 %v7309
      %v7587 = vunpack.c.l.b16 %v7310
      %v7588 = vunpack.c.l.b16 %v7311
      %v7589 = vpack.c.b16 %v7582, %v7581
      %v7590 = vpack.c.b16 %v7584, %v7583
      %v7591 = vpack.c.b16 %v7586, %v7585
      %v7592 = vpack.c.b16 %v7588, %v7587
      %v7598 = vsel %vm1797, %v7446, 0
      %v7601 = vsel %vm1797, %v7448, 0
      %v7604 = vsel %vm1797, %v7450, 0
      %v7607 = vsel %vm1797, %v7452, 0
      %v7610 = vsel %vm1797, %v7454, 0
      %v7613 = vsel %vm1797, %v7456, 0
      %v7616 = vsel %vm1797, %v7458, 0
      %v7619 = vsel %vm1797, %v7460, 0
      %v7622 = vsel %vm1797, %v7462, 0
      %v7625 = vsel %vm1797, %v7464, 0
      %v7628 = vsel %vm1797, %v7466, 0
      %v7631 = vsel %vm1797, %v7468, 0
      %v7634 = vsel %vm1797, %v7470, 0
      %v7637 = vsel %vm1797, %v7472, 0
      %v7640 = vsel %vm1797, %v7474, 0
      %v7643 = vsel %vm1797, %v7476, 0
      %v7646 = vsel %vm1797, %v7478, 0
      %v7649 = vsel %vm1797, %v7480, 0
      %v7652 = vsel %vm1797, %v7482, 0
      %v7655 = vsel %vm1797, %v7484, 0
      %v7658 = vsel %vm1797, %v7486, 0
      %v7661 = vsel %vm1797, %v7488, 0
      %v7664 = vsel %vm1797, %v7490, 0
      %v7667 = vsel %vm1797, %v7492, 0
      %v7670 = vsel %vm1797, %v7494, 0
      %v7673 = vsel %vm1797, %v7496, 0
      %v7676 = vsel %vm1797, %v7498, 0
      %v7679 = vsel %vm1797, %v7500, 0
      %v7682 = vsel %vm1797, %v7502, 0
      %v7685 = vsel %vm1797, %v7504, 0
      %v7688 = vsel %vm1797, %v7506, 0
      %v7691 = vsel %vm1797, %v7508, 0
      %v7694 = vsel %vm1797, %v7510, 0
      %v7697 = vsel %vm1797, %v7512, 0
      %v7700 = vsel %vm1797, %v7514, 0
      %v7703 = vsel %vm1797, %v7516, 0
      %v7706 = vsel %vm1797, %v7518, 0
      %v7709 = vsel %vm1797, %v7520, 0
      %v7712 = vsel %vm1797, %v7522, 0
      %v7715 = vsel %vm1797, %v7524, 0
      %v7718 = vsel %vm1797, %v7526, 0
      %v7721 = vsel %vm1797, %v7528, 0
      %v7724 = vsel %vm1797, %v7530, 0
      %v7727 = vsel %vm1797, %v7532, 0
      %v7730 = vsel %vm1797, %v7534, 0
      %v7733 = vsel %vm1797, %v7536, 0
      %v7736 = vsel %vm1797, %v7538, 0
      %v7739 = vsel %vm1797, %v7540, 0
      %v7742 = vsel %vm1797, %v7542, 0
      %v7745 = vsel %vm1797, %v7544, 0
      %v7748 = vsel %vm1797, %v7546, 0
      %v7751 = vsel %vm1797, %v7548, 0
      %v7754 = vsel %vm1797, %v7550, 0
      %v7757 = vsel %vm1797, %v7552, 0
      %v7760 = vsel %vm1797, %v7554, 0
      %v7763 = vsel %vm1797, %v7556, 0
      %v7766 = vsel %vm1797, %v7558, 0
      %v7769 = vsel %vm1797, %v7560, 0
      %v7772 = vsel %vm1797, %v7562, 0
      %v7775 = vsel %vm1797, %v7564, 0
      %v7778 = vsel %vm1797, %v7566, 0
      %v7781 = vsel %vm1797, %v7568, 0
      %v7784 = vsel %vm1797, %v7570, 0
      %v7787 = vsel %vm1797, %v7572, 0
      %7789 = vmatprep.subr.bf16.mxu0 0
      %7790 = vmatpush1.bf16.msra.mxu0 %v7589
      %7791 = vmatprep.subr.bf16.mxu0 0
      %7792 = vmatpush1.bf16.msra.mxu0 %v7590
      %7793 = vmatprep.subr.bf16.mxu0 0
      %7794 = vmatpush1.bf16.msra.mxu0 %v7591
      %7795 = vmatprep.subr.bf16.mxu0 0
      %7796 = vmatpush1.bf16.msra.mxu0 %v7592
      %7797 = vmatprep.subr.bf16.mxu0 0
      %7798 = vmatpush1.bf16.msra.mxu0 0
      %7799 = vmatprep.subr.bf16.mxu0 0
      %7800 = vmatpush1.bf16.msra.mxu0 0
      %7801 = vmatprep.subr.bf16.mxu0 0
      %7802 = vmatpush1.bf16.msra.mxu0 0
      %7803 = vmatprep.subr.bf16.mxu0 0
      %7804 = vmatpush1.bf16.msra.mxu0 0
      %7805 = vmatprep.subr.bf16.mxu0 0
      %7806 = vmatpush1.bf16.msra.mxu0 0
      %7807 = vmatprep.subr.bf16.mxu0 0
      %7808 = vmatpush1.bf16.msra.mxu0 0
      %7809 = vmatprep.subr.bf16.mxu0 0
      %7810 = vmatpush1.bf16.msra.mxu0 0
      %7811 = vmatprep.subr.bf16.mxu0 0
      %7812 = vmatpush1.bf16.msra.mxu0 0
      %7813 = vmatprep.subr.bf16.mxu0 0
      %7814 = vmatpush1.bf16.msra.mxu0 0
      %7815 = vmatprep.subr.bf16.mxu0 0
      %7816 = vmatpush1.bf16.msra.mxu0 0
      %7817 = vmatprep.subr.bf16.mxu0 0
      %7818 = vmatpush1.bf16.msra.mxu0 0
      %7819 = vmatprep.subr.bf16.mxu0 0
      %7820 = vmatpush1.bf16.msra.mxu0 0
      %7821 = vmatprep.mubr.bf16.mxu0 0
      %7822 = vmatmul.mubr.bf16.gmra.mrb[0].mxu0 %v7598
      %v7823 = vpop.f32.mrb[0].mxu0
      %v7824 = vadd.f32 %v7380, %v7823
      %v7825 = vpop.f32.mrb[0].mxu0
      %v7826 = vpop.f32.mrb[0].mxu0
      %v7827 = vadd.f32 %v7380, %v7826
      %v7828 = vpop.f32.mrb[0].mxu0
      %7829 = vmatprep.mubr.bf16.mxu0 0
      %7830 = vmatmul.mubr.bf16.gmra.mrb[0].mxu0 %v7601
      %v7831 = vpop.f32.mrb[0].mxu0
      %v7832 = vadd.f32 %v7380, %v7831
      %v7833 = vpop.f32.mrb[0].mxu0
      %v7834 = vpop.f32.mrb[0].mxu0
      %v7835 = vadd.f32 %v7380, %v7834
      %v7836 = vpop.f32.mrb[0].mxu0
      %7837 = vmatprep.mubr.bf16.mxu0 0
      %7838 = vmatmul.mubr.bf16.gmra.mrb[0].mxu0 %v7604
      %v7839 = vpop.f32.mrb[0].mxu0
      %v7840 = vadd.f32 %v7380, %v7839
      %v7841 = vpop.f32.mrb[0].mxu0
      %v7842 = vpop.f32.mrb[0].mxu0
      %v7843 = vadd.f32 %v7380, %v7842
      %v7844 = vpop.f32.mrb[0].mxu0
      %7845 = vmatprep.mubr.bf16.mxu0 0
      %7846 = vmatmul.mubr.bf16.gmra.mrb[0].mxu0 %v7607
      %v7847 = vpop.f32.mrb[0].mxu0
      %v7848 = vadd.f32 %v7380, %v7847
      %v7849 = vpop.f32.mrb[0].mxu0
      %v7850 = vpop.f32.mrb[0].mxu0
      %v7851 = vadd.f32 %v7380, %v7850
      %v7852 = vpop.f32.mrb[0].mxu0
      %7853 = vmatprep.mubr.bf16.mxu0 0
      %7854 = vmatmul.mubr.bf16.gmra.mrb[0].mxu0 %v7610
      %v7855 = vpop.f32.mrb[0].mxu0
      %v7856 = vadd.f32 %v7380, %v7855
      %v7857 = vpop.f32.mrb[0].mxu0
      %v7858 = vpop.f32.mrb[0].mxu0
      %v7859 = vadd.f32 %v7380, %v7858
      %v7860 = vpop.f32.mrb[0].mxu0
      %7861 = vmatprep.mubr.bf16.mxu0 0
      %7862 = vmatmul.mubr.bf16.gmra.mrb[0].mxu0 %v7613
      %v7863 = vpop.f32.mrb[0].mxu0
      %v7864 = vadd.f32 %v7380, %v7863
      %v7865 = vpop.f32.mrb[0].mxu0
      %v7866 = vpop.f32.mrb[0].mxu0
      %v7867 = vadd.f32 %v7380, %v7866
      %v7868 = vpop.f32.mrb[0].mxu0
      %7869 = vmatprep.mubr.bf16.mxu0 0
      %7870 = vmatmul.mubr.bf16.gmra.mrb[0].mxu0 %v7616
      %v7871 = vpop.f32.mrb[0].mxu0
      %v7872 = vadd.f32 %v7380, %v7871
      %v7873 = vpop.f32.mrb[0].mxu0
      %v7874 = vpop.f32.mrb[0].mxu0
      %v7875 = vadd.f32 %v7380, %v7874
      %v7876 = vpop.f32.mrb[0].mxu0
      %7877 = vmatprep.mubr.bf16.mxu0 0
      %7878 = vmatmul.mubr.bf16.gmra.mrb[0].mxu0 %v7619
      %v7879 = vpop.f32.mrb[0].mxu0
      %v7880 = vadd.f32 %v7380, %v7879
      %v7881 = vpop.f32.mrb[0].mxu0
      %v7882 = vpop.f32.mrb[0].mxu0
      %v7883 = vadd.f32 %v7380, %v7882
      %v7884 = vpop.f32.mrb[0].mxu0
      %7885 = vmatprep.mubr.bf16.mxu0 0
      %7886 = vmatmul.mubr.bf16.gmra.mrb[0].mxu0 %v7622
      %v7887 = vpop.f32.mrb[0].mxu0
      %v7888 = vadd.f32 %v7380, %v7887
      %v7889 = vpop.f32.mrb[0].mxu0
      %v7890 = vpop.f32.mrb[0].mxu0
      %v7891 = vadd.f32 %v7380, %v7890
      %v7892 = vpop.f32.mrb[0].mxu0
      %7893 = vmatprep.mubr.bf16.mxu0 0
      %7894 = vmatmul.mubr.bf16.gmra.mrb[0].mxu0 %v7625
      %v7895 = vpop.f32.mrb[0].mxu0
      %v7896 = vadd.f32 %v7380, %v7895
      %v7897 = vpop.f32.mrb[0].mxu0
      %v7898 = vpop.f32.mrb[0].mxu0
      %v7899 = vadd.f32 %v7380, %v7898
      %v7900 = vpop.f32.mrb[0].mxu0
      %7901 = vmatprep.mubr.bf16.mxu0 0
      %7902 = vmatmul.mubr.bf16.gmra.mrb[0].mxu0 %v7628
      %v7903 = vpop.f32.mrb[0].mxu0
      %v7904 = vadd.f32 %v7380, %v7903
      %v7905 = vpop.f32.mrb[0].mxu0
      %v7906 = vpop.f32.mrb[0].mxu0
      %v7907 = vadd.f32 %v7380, %v7906
      %v7908 = vpop.f32.mrb[0].mxu0
      %7909 = vmatprep.mubr.bf16.mxu0 0
      %7910 = vmatmul.mubr.bf16.gmra.mrb[0].mxu0 %v7631
      %v7911 = vpop.f32.mrb[0].mxu0
      %v7912 = vadd.f32 %v7380, %v7911
      %v7913 = vpop.f32.mrb[0].mxu0
      %v7914 = vpop.f32.mrb[0].mxu0
      %v7915 = vadd.f32 %v7380, %v7914
      %v7916 = vpop.f32.mrb[0].mxu0
      %7917 = vmatprep.mubr.bf16.mxu0 0
      %7918 = vmatmul.mubr.bf16.gmra.mrb[0].mxu0 %v7634
      %v7919 = vpop.f32.mrb[0].mxu0
      %v7920 = vadd.f32 %v7380, %v7919
      %v7921 = vpop.f32.mrb[0].mxu0
      %v7922 = vpop.f32.mrb[0].mxu0
      %v7923 = vadd.f32 %v7380, %v7922
      %v7924 = vpop.f32.mrb[0].mxu0
      %7925 = vmatprep.mubr.bf16.mxu0 0
      %7926 = vmatmul.mubr.bf16.gmra.mrb[0].mxu0 %v7637
      %v7927 = vpop.f32.mrb[0].mxu0
      %v7928 = vadd.f32 %v7380, %v7927
      %v7929 = vpop.f32.mrb[0].mxu0
      %v7930 = vpop.f32.mrb[0].mxu0
      %v7931 = vadd.f32 %v7380, %v7930
      %v7932 = vpop.f32.mrb[0].mxu0
      %7933 = vmatprep.mubr.bf16.mxu0 0
      %7934 = vmatmul.mubr.bf16.gmra.mrb[0].mxu0 %v7640
      %v7935 = vpop.f32.mrb[0].mxu0
      %v7936 = vadd.f32 %v7380, %v7935
      %v7937 = vpop.f32.mrb[0].mxu0
      %v7938 = vpop.f32.mrb[0].mxu0
      %v7939 = vadd.f32 %v7380, %v7938
      %v7940 = vpop.f32.mrb[0].mxu0
      %7941 = vmatprep.mubr.bf16.mxu0 0
      %7942 = vmatmul.mubr.bf16.gmra.mrb[0].mxu0 %v7643
      %v7943 = vpop.f32.mrb[0].mxu0
      %v7944 = vadd.f32 %v7380, %v7943
      %v7945 = vpop.f32.mrb[0].mxu0
      %v7946 = vpop.f32.mrb[0].mxu0
      %v7947 = vadd.f32 %v7380, %v7946
      %v7948 = vpop.f32.mrb[0].mxu0
      %7949 = vmatprep.mubr.bf16.mxu0 0
      %7950 = vmatmul.mubr.bf16.gmra.mrb[0].mxu0 %v7646
      %v7951 = vpop.f32.mrb[0].mxu0
      %v7952 = vadd.f32 %v7380, %v7951
      %v7953 = vpop.f32.mrb[0].mxu0
      %v7954 = vpop.f32.mrb[0].mxu0
      %v7955 = vadd.f32 %v7380, %v7954
      %v7956 = vpop.f32.mrb[0].mxu0
      %7957 = vmatprep.mubr.bf16.mxu0 0
      %7958 = vmatmul.mubr.bf16.gmra.mrb[0].mxu0 %v7649
      %v7959 = vpop.f32.mrb[0].mxu0
      %v7960 = vadd.f32 %v7380, %v7959
      %v7961 = vpop.f32.mrb[0].mxu0
      %v7962 = vpop.f32.mrb[0].mxu0
      %v7963 = vadd.f32 %v7380, %v7962
      %v7964 = vpop.f32.mrb[0].mxu0
      %7965 = vmatprep.mubr.bf16.mxu0 0
      %7966 = vmatmul.mubr.bf16.gmra.mrb[0].mxu0 %v7652
      %v7967 = vpop.f32.mrb[0].mxu0
      %v7968 = vadd.f32 %v7380, %v7967
      %v7969 = vpop.f32.mrb[0].mxu0
      %v7970 = vpop.f32.mrb[0].mxu0
      %v7971 = vadd.f32 %v7380, %v7970
      %v7972 = vpop.f32.mrb[0].mxu0
      %7973 = vmatprep.mubr.bf16.mxu0 0
      %7974 = vmatmul.mubr.bf16.gmra.mrb[0].mxu0 %v7655
      %v7975 = vpop.f32.mrb[0].mxu0
      %v7976 = vadd.f32 %v7380, %v7975
      %v7977 = vpop.f32.mrb[0].mxu0
      %v7978 = vpop.f32.mrb[0].mxu0
      %v7979 = vadd.f32 %v7380, %v7978
      %v7980 = vpop.f32.mrb[0].mxu0
      %7981 = vmatprep.mubr.bf16.mxu0 0
      %7982 = vmatmul.mubr.bf16.gmra.mrb[0].mxu0 %v7658
      %v7983 = vpop.f32.mrb[0].mxu0
      %v7984 = vadd.f32 %v7380, %v7983
      %v7985 = vpop.f32.mrb[0].mxu0
      %v7986 = vpop.f32.mrb[0].mxu0
      %v7987 = vadd.f32 %v7380, %v7986
      %v7988 = vpop.f32.mrb[0].mxu0
      %7989 = vmatprep.mubr.bf16.mxu0 0
      %7990 = vmatmul.mubr.bf16.gmra.mrb[0].mxu0 %v7661
      %v7991 = vpop.f32.mrb[0].mxu0
      %v7992 = vadd.f32 %v7380, %v7991
      %v7993 = vpop.f32.mrb[0].mxu0
      %v7994 = vpop.f32.mrb[0].mxu0
      %v7995 = vadd.f32 %v7380, %v7994
      %v7996 = vpop.f32.mrb[0].mxu0
      %7997 = vmatprep.mubr.bf16.mxu0 0
      %7998 = vmatmul.mubr.bf16.gmra.mrb[0].mxu0 %v7664
      %v7999 = vpop.f32.mrb[0].mxu0
      %v8000 = vadd.f32 %v7380, %v7999
      %v8001 = vpop.f32.mrb[0].mxu0
      %v8002 = vpop.f32.mrb[0].mxu0
      %v8003 = vadd.f32 %v7380, %v8002
      %v8004 = vpop.f32.mrb[0].mxu0
      %8005 = vmatprep.mubr.bf16.mxu0 0
      %8006 = vmatmul.mubr.bf16.gmra.mrb[0].mxu0 %v7667
      %v8007 = vpop.f32.mrb[0].mxu0
      %v8008 = vadd.f32 %v7380, %v8007
      %v8009 = vpop.f32.mrb[0].mxu0
      %v8010 = vpop.f32.mrb[0].mxu0
      %v8011 = vadd.f32 %v7380, %v8010
      %v8012 = vpop.f32.mrb[0].mxu0
      %8013 = vmatprep.mubr.bf16.mxu0 0
      %8014 = vmatmul.mubr.bf16.gmra.mrb[0].mxu0 %v7670
      %v8015 = vpop.f32.mrb[0].mxu0
      %v8016 = vadd.f32 %v7380, %v8015
      %v8017 = vpop.f32.mrb[0].mxu0
      %v8018 = vpop.f32.mrb[0].mxu0
      %v8019 = vadd.f32 %v7380, %v8018
      %v8020 = vpop.f32.mrb[0].mxu0
      %8021 = vmatprep.mubr.bf16.mxu0 0
      %8022 = vmatmul.mubr.bf16.gmra.mrb[0].mxu0 %v7673
      %v8023 = vpop.f32.mrb[0].mxu0
      %v8024 = vadd.f32 %v7380, %v8023
      %v8025 = vpop.f32.mrb[0].mxu0
      %v8026 = vpop.f32.mrb[0].mxu0
      %v8027 = vadd.f32 %v7380, %v8026
      %v8028 = vpop.f32.mrb[0].mxu0
      %8029 = vmatprep.mubr.bf16.mxu0 0
      %8030 = vmatmul.mubr.bf16.gmra.mrb[0].mxu0 %v7676
      %v8031 = vpop.f32.mrb[0].mxu0
      %v8032 = vadd.f32 %v7380, %v8031
      %v8033 = vpop.f32.mrb[0].mxu0
      %v8034 = vpop.f32.mrb[0].mxu0
      %v8035 = vadd.f32 %v7380, %v8034
      %v8036 = vpop.f32.mrb[0].mxu0
      %8037 = vmatprep.mubr.bf16.mxu0 0
      %8038 = vmatmul.mubr.bf16.gmra.mrb[0].mxu0 %v7679
      %v8039 = vpop.f32.mrb[0].mxu0
      %v8040 = vadd.f32 %v7380, %v8039
      %v8041 = vpop.f32.mrb[0].mxu0
      %v8042 = vpop.f32.mrb[0].mxu0
      %v8043 = vadd.f32 %v7380, %v8042
      %v8044 = vpop.f32.mrb[0].mxu0
      %8045 = vmatprep.mubr.bf16.mxu0 0
      %8046 = vmatmul.mubr.bf16.gmra.mrb[0].mxu0 %v7682
      %v8047 = vpop.f32.mrb[0].mxu0
      %v8048 = vadd.f32 %v7380, %v8047
      %v8049 = vpop.f32.mrb[0].mxu0
      %v8050 = vpop.f32.mrb[0].mxu0
      %v8051 = vadd.f32 %v7380, %v8050
      %v8052 = vpop.f32.mrb[0].mxu0
      %8053 = vmatprep.mubr.bf16.mxu0 0
      %8054 = vmatmul.mubr.bf16.gmra.mrb[0].mxu0 %v7685
      %v8055 = vpop.f32.mrb[0].mxu0
      %v8056 = vadd.f32 %v7380, %v8055
      %v8057 = vpop.f32.mrb[0].mxu0
      %v8058 = vpop.f32.mrb[0].mxu0
      %v8059 = vadd.f32 %v7380, %v8058
      %v8060 = vpop.f32.mrb[0].mxu0
      %8061 = vmatprep.mubr.bf16.mxu0 0
      %8062 = vmatmul.mubr.bf16.gmra.mrb[0].mxu0 %v7688
      %v8063 = vpop.f32.mrb[0].mxu0
      %v8064 = vadd.f32 %v7380, %v8063
      %v8065 = vpop.f32.mrb[0].mxu0
      %v8066 = vpop.f32.mrb[0].mxu0
      %v8067 = vadd.f32 %v7380, %v8066
      %v8068 = vpop.f32.mrb[0].mxu0
      %8069 = vmatprep.mubr.bf16.mxu0 0
      %8070 = vmatmul.mubr.bf16.gmra.mrb[0].mxu0 %v7691
      %v8071 = vpop.f32.mrb[0].mxu0
      %v8072 = vadd.f32 %v7380, %v8071
      %v8073 = vpop.f32.mrb[0].mxu0
      %v8074 = vpop.f32.mrb[0].mxu0
      %v8075 = vadd.f32 %v7380, %v8074
      %v8076 = vpop.f32.mrb[0].mxu0
      %8077 = vmatprep.mubr.bf16.mxu0 0
      %8078 = vmatmul.mubr.bf16.gmra.mrb[0].mxu0 %v7694
      %v8079 = vpop.f32.mrb[0].mxu0
      %v8080 = vadd.f32 %v7380, %v8079
      %v8081 = vpop.f32.mrb[0].mxu0
      %v8082 = vpop.f32.mrb[0].mxu0
      %v8083 = vadd.f32 %v7380, %v8082
      %v8084 = vpop.f32.mrb[0].mxu0
      %8085 = vmatprep.mubr.bf16.mxu0 0
      %8086 = vmatmul.mubr.bf16.gmra.mrb[0].mxu0 %v7697
      %v8087 = vpop.f32.mrb[0].mxu0
      %v8088 = vadd.f32 %v7380, %v8087
      %v8089 = vpop.f32.mrb[0].mxu0
      %v8090 = vpop.f32.mrb[0].mxu0
      %v8091 = vadd.f32 %v7380, %v8090
      %v8092 = vpop.f32.mrb[0].mxu0
      %8093 = vmatprep.mubr.bf16.mxu0 0
      %8094 = vmatmul.mubr.bf16.gmra.mrb[0].mxu0 %v7700
      %v8095 = vpop.f32.mrb[0].mxu0
      %v8096 = vadd.f32 %v7380, %v8095
      %v8097 = vpop.f32.mrb[0].mxu0
      %v8098 = vpop.f32.mrb[0].mxu0
      %v8099 = vadd.f32 %v7380, %v8098
      %v8100 = vpop.f32.mrb[0].mxu0
      %8101 = vmatprep.mubr.bf16.mxu0 0
      %8102 = vmatmul.mubr.bf16.gmra.mrb[0].mxu0 %v7703
      %v8103 = vpop.f32.mrb[0].mxu0
      %v8104 = vadd.f32 %v7380, %v8103
      %v8105 = vpop.f32.mrb[0].mxu0
      %v8106 = vpop.f32.mrb[0].mxu0
      %v8107 = vadd.f32 %v7380, %v8106
      %v8108 = vpop.f32.mrb[0].mxu0
      %8109 = vmatprep.mubr.bf16.mxu0 0
      %8110 = vmatmul.mubr.bf16.gmra.mrb[0].mxu0 %v7706
      %v8111 = vpop.f32.mrb[0].mxu0
      %v8112 = vadd.f32 %v7380, %v8111
      %v8113 = vpop.f32.mrb[0].mxu0
      %v8114 = vpop.f32.mrb[0].mxu0
      %v8115 = vadd.f32 %v7380, %v8114
      %v8116 = vpop.f32.mrb[0].mxu0
      %8117 = vmatprep.mubr.bf16.mxu0 0
      %8118 = vmatmul.mubr.bf16.gmra.mrb[0].mxu0 %v7709
      %v8119 = vpop.f32.mrb[0].mxu0
      %v8120 = vadd.f32 %v7380, %v8119
      %v8121 = vpop.f32.mrb[0].mxu0
      %v8122 = vpop.f32.mrb[0].mxu0
      %v8123 = vadd.f32 %v7380, %v8122
      %v8124 = vpop.f32.mrb[0].mxu0
      %8125 = vmatprep.mubr.bf16.mxu0 0
      %8126 = vmatmul.mubr.bf16.gmra.mrb[0].mxu0 %v7712
      %v8127 = vpop.f32.mrb[0].mxu0
      %v8128 = vadd.f32 %v7380, %v8127
      %v8129 = vpop.f32.mrb[0].mxu0
      %v8130 = vpop.f32.mrb[0].mxu0
      %v8131 = vadd.f32 %v7380, %v8130
      %v8132 = vpop.f32.mrb[0].mxu0
      %8133 = vmatprep.mubr.bf16.mxu0 0
      %8134 = vmatmul.mubr.bf16.gmra.mrb[0].mxu0 %v7715
      %v8135 = vpop.f32.mrb[0].mxu0
      %v8136 = vadd.f32 %v7380, %v8135
      %v8137 = vpop.f32.mrb[0].mxu0
      %v8138 = vpop.f32.mrb[0].mxu0
      %v8139 = vadd.f32 %v7380, %v8138
      %v8140 = vpop.f32.mrb[0].mxu0
      %8141 = vmatprep.mubr.bf16.mxu0 0
      %8142 = vmatmul.mubr.bf16.gmra.mrb[0].mxu0 %v7718
      %v8143 = vpop.f32.mrb[0].mxu0
      %v8144 = vadd.f32 %v7380, %v8143
      %v8145 = vpop.f32.mrb[0].mxu0
      %v8146 = vpop.f32.mrb[0].mxu0
      %v8147 = vadd.f32 %v7380, %v8146
      %v8148 = vpop.f32.mrb[0].mxu0
      %8149 = vmatprep.mubr.bf16.mxu0 0
      %8150 = vmatmul.mubr.bf16.gmra.mrb[0].mxu0 %v7721
      %v8151 = vpop.f32.mrb[0].mxu0
      %v8152 = vadd.f32 %v7380, %v8151
      %v8153 = vpop.f32.mrb[0].mxu0
      %v8154 = vpop.f32.mrb[0].mxu0
      %v8155 = vadd.f32 %v7380, %v8154
      %v8156 = vpop.f32.mrb[0].mxu0
      %8157 = vmatprep.mubr.bf16.mxu0 0
      %8158 = vmatmul.mubr.bf16.gmra.mrb[0].mxu0 %v7724
      %v8159 = vpop.f32.mrb[0].mxu0
      %v8160 = vadd.f32 %v7380, %v8159
      %v8161 = vpop.f32.mrb[0].mxu0
      %v8162 = vpop.f32.mrb[0].mxu0
      %v8163 = vadd.f32 %v7380, %v8162
      %v8164 = vpop.f32.mrb[0].mxu0
      %8165 = vmatprep.mubr.bf16.mxu0 0
      %8166 = vmatmul.mubr.bf16.gmra.mrb[0].mxu0 %v7727
      %v8167 = vpop.f32.mrb[0].mxu0
      %v8168 = vadd.f32 %v7380, %v8167
      %v8169 = vpop.f32.mrb[0].mxu0
      %v8170 = vpop.f32.mrb[0].mxu0
      %v8171 = vadd.f32 %v7380, %v8170
      %v8172 = vpop.f32.mrb[0].mxu0
      %8173 = vmatprep.mubr.bf16.mxu0 0
      %8174 = vmatmul.mubr.bf16.gmra.mrb[0].mxu0 %v7730
      %v8175 = vpop.f32.mrb[0].mxu0
      %v8176 = vadd.f32 %v7380, %v8175
      %v8177 = vpop.f32.mrb[0].mxu0
      %v8178 = vpop.f32.mrb[0].mxu0
      %v8179 = vadd.f32 %v7380, %v8178
      %v8180 = vpop.f32.mrb[0].mxu0
      %8181 = vmatprep.mubr.bf16.mxu0 0
      %8182 = vmatmul.mubr.bf16.gmra.mrb[0].mxu0 %v7733
      %v8183 = vpop.f32.mrb[0].mxu0
      %v8184 = vadd.f32 %v7380, %v8183
      %v8185 = vpop.f32.mrb[0].mxu0
      %v8186 = vpop.f32.mrb[0].mxu0
      %v8187 = vadd.f32 %v7380, %v8186
      %v8188 = vpop.f32.mrb[0].mxu0
      %8189 = vmatprep.mubr.bf16.mxu0 0
      %8190 = vmatmul.mubr.bf16.gmra.mrb[0].mxu0 %v7736
      %v8191 = vpop.f32.mrb[0].mxu0
      %v8192 = vadd.f32 %v7380, %v8191
      %v8193 = vpop.f32.mrb[0].mxu0
      %v8194 = vpop.f32.mrb[0].mxu0
      %v8195 = vadd.f32 %v7380, %v8194
      %v8196 = vpop.f32.mrb[0].mxu0
      %8197 = vmatprep.mubr.bf16.mxu0 0
      %8198 = vmatmul.mubr.bf16.gmra.mrb[0].mxu0 %v7739
      %v8199 = vpop.f32.mrb[0].mxu0
      %v8200 = vadd.f32 %v7380, %v8199
      %v8201 = vpop.f32.mrb[0].mxu0
      %v8202 = vpop.f32.mrb[0].mxu0
      %v8203 = vadd.f32 %v7380, %v8202
      %v8204 = vpop.f32.mrb[0].mxu0
      %8205 = vmatprep.mubr.bf16.mxu0 0
      %8206 = vmatmul.mubr.bf16.gmra.mrb[0].mxu0 %v7742
      %v8207 = vpop.f32.mrb[0].mxu0
      %v8208 = vadd.f32 %v7380, %v8207
      %v8209 = vpop.f32.mrb[0].mxu0
      %v8210 = vpop.f32.mrb[0].mxu0
      %v8211 = vadd.f32 %v7380, %v8210
      %v8212 = vpop.f32.mrb[0].mxu0
      %8213 = vmatprep.mubr.bf16.mxu0 0
      %8214 = vmatmul.mubr.bf16.gmra.mrb[0].mxu0 %v7745
      %v8215 = vpop.f32.mrb[0].mxu0
      %v8216 = vadd.f32 %v7380, %v8215
      %v8217 = vpop.f32.mrb[0].mxu0
      %v8218 = vpop.f32.mrb[0].mxu0
      %v8219 = vadd.f32 %v7380, %v8218
      %v8220 = vpop.f32.mrb[0].mxu0
      %8221 = vmatprep.mubr.bf16.mxu0 0
      %8222 = vmatmul.mubr.bf16.gmra.mrb[0].mxu0 %v7748
      %v8223 = vpop.f32.mrb[0].mxu0
      %v8224 = vadd.f32 %v7380, %v8223
      %v8225 = vpop.f32.mrb[0].mxu0
      %v8226 = vpop.f32.mrb[0].mxu0
      %v8227 = vadd.f32 %v7380, %v8226
      %v8228 = vpop.f32.mrb[0].mxu0
      %8229 = vmatprep.mubr.bf16.mxu0 0
      %8230 = vmatmul.mubr.bf16.gmra.mrb[0].mxu0 %v7751
      %v8231 = vpop.f32.mrb[0].mxu0
      %v8232 = vadd.f32 %v7380, %v8231
      %v8233 = vpop.f32.mrb[0].mxu0
      %v8234 = vpop.f32.mrb[0].mxu0
      %v8235 = vadd.f32 %v7380, %v8234
      %v8236 = vpop.f32.mrb[0].mxu0
      %8237 = vmatprep.mubr.bf16.mxu0 0
      %8238 = vmatmul.mubr.bf16.gmra.mrb[0].mxu0 %v7754
      %v8239 = vpop.f32.mrb[0].mxu0
      %v8240 = vadd.f32 %v7380, %v8239
      %v8241 = vpop.f32.mrb[0].mxu0
      %v8242 = vpop.f32.mrb[0].mxu0
      %v8243 = vadd.f32 %v7380, %v8242
      %v8244 = vpop.f32.mrb[0].mxu0
      %8245 = vmatprep.mubr.bf16.mxu0 0
      %8246 = vmatmul.mubr.bf16.gmra.mrb[0].mxu0 %v7757
      %v8247 = vpop.f32.mrb[0].mxu0
      %v8248 = vadd.f32 %v7380, %v8247
      %v8249 = vpop.f32.mrb[0].mxu0
      %v8250 = vpop.f32.mrb[0].mxu0
      %v8251 = vadd.f32 %v7380, %v8250
      %v8252 = vpop.f32.mrb[0].mxu0
      %8253 = vmatprep.mubr.bf16.mxu0 0
      %8254 = vmatmul.mubr.bf16.gmra.mrb[0].mxu0 %v7760
      %v8255 = vpop.f32.mrb[0].mxu0
      %v8256 = vadd.f32 %v7380, %v8255
      %v8257 = vpop.f32.mrb[0].mxu0
      %v8258 = vpop.f32.mrb[0].mxu0
      %v8259 = vadd.f32 %v7380, %v8258
      %v8260 = vpop.f32.mrb[0].mxu0
      %8261 = vmatprep.mubr.bf16.mxu0 0
      %8262 = vmatmul.mubr.bf16.gmra.mrb[0].mxu0 %v7763
      %v8263 = vpop.f32.mrb[0].mxu0
      %v8264 = vadd.f32 %v7380, %v8263
      %v8265 = vpop.f32.mrb[0].mxu0
      %v8266 = vpop.f32.mrb[0].mxu0
      %v8267 = vadd.f32 %v7380, %v8266
      %v8268 = vpop.f32.mrb[0].mxu0
      %8269 = vmatprep.mubr.bf16.mxu0 0
      %8270 = vmatmul.mubr.bf16.gmra.mrb[0].mxu0 %v7766
      %v8271 = vpop.f32.mrb[0].mxu0
      %v8272 = vadd.f32 %v7380, %v8271
      %v8273 = vpop.f32.mrb[0].mxu0
      %v8274 = vpop.f32.mrb[0].mxu0
      %v8275 = vadd.f32 %v7380, %v8274
      %v8276 = vpop.f32.mrb[0].mxu0
      %8277 = vmatprep.mubr.bf16.mxu0 0
      %8278 = vmatmul.mubr.bf16.gmra.mrb[0].mxu0 %v7769
      %v8279 = vpop.f32.mrb[0].mxu0
      %v8280 = vadd.f32 %v7380, %v8279
      %v8281 = vpop.f32.mrb[0].mxu0
      %v8282 = vpop.f32.mrb[0].mxu0
      %v8283 = vadd.f32 %v7380, %v8282
      %v8284 = vpop.f32.mrb[0].mxu0
      %8285 = vmatprep.mubr.bf16.mxu0 0
      %8286 = vmatmul.mubr.bf16.gmra.mrb[0].mxu0 %v7772
      %v8287 = vpop.f32.mrb[0].mxu0
      %v8288 = vadd.f32 %v7380, %v8287
      %v8289 = vpop.f32.mrb[0].mxu0
      %v8290 = vpop.f32.mrb[0].mxu0
      %v8291 = vadd.f32 %v7380, %v8290
      %v8292 = vpop.f32.mrb[0].mxu0
      %8293 = vmatprep.mubr.bf16.mxu0 0
      %8294 = vmatmul.mubr.bf16.gmra.mrb[0].mxu0 %v7775
      %v8295 = vpop.f32.mrb[0].mxu0
      %v8296 = vadd.f32 %v7380, %v8295
      %v8297 = vpop.f32.mrb[0].mxu0
      %v8298 = vpop.f32.mrb[0].mxu0
      %v8299 = vadd.f32 %v7380, %v8298
      %v8300 = vpop.f32.mrb[0].mxu0
      %8301 = vmatprep.mubr.bf16.mxu0 0
      %8302 = vmatmul.mubr.bf16.gmra.mrb[0].mxu0 %v7778
      %v8303 = vpop.f32.mrb[0].mxu0
      %v8304 = vadd.f32 %v7380, %v8303
      %v8305 = vpop.f32.mrb[0].mxu0
      %v8306 = vpop.f32.mrb[0].mxu0
      %v8307 = vadd.f32 %v7380, %v8306
      %v8308 = vpop.f32.mrb[0].mxu0
      %8309 = vmatprep.mubr.bf16.mxu0 0
      %8310 = vmatmul.mubr.bf16.gmra.mrb[0].mxu0 %v7781
      %v8311 = vpop.f32.mrb[0].mxu0
      %v8312 = vadd.f32 %v7380, %v8311
      %v8313 = vpop.f32.mrb[0].mxu0
      %v8314 = vpop.f32.mrb[0].mxu0
      %v8315 = vadd.f32 %v7380, %v8314
      %v8316 = vpop.f32.mrb[0].mxu0
      %8317 = vmatprep.mubr.bf16.mxu0 0
      %8318 = vmatmul.mubr.bf16.gmra.mrb[0].mxu0 %v7784
      %v8319 = vpop.f32.mrb[0].mxu0
      %v8320 = vadd.f32 %v7380, %v8319
      %v8321 = vpop.f32.mrb[0].mxu0
      %v8322 = vpop.f32.mrb[0].mxu0
      %v8323 = vadd.f32 %v7380, %v8322
      %v8324 = vpop.f32.mrb[0].mxu0
      %8325 = vmatprep.mubr.bf16.mxu0 0
      %8326 = vmatmul.mubr.bf16.gmra.mrb[0].mxu0 %v7787
      %v8327 = vpop.f32.mrb[0].mxu0
      %v8328 = vadd.f32 %v7380, %v8327
      %v8329 = vpop.f32.mrb[0].mxu0
      %v8330 = vpop.f32.mrb[0].mxu0
      %v8331 = vadd.f32 %v7380, %v8330
      %v8332 = vpop.f32.mrb[0].mxu0
      %8333 = vdwg.mxu0
      %v8334 = vmax.f32 %v7824, 0.0
      %v8335 = vmax.f32 %v7827, 0.0
      %v8336 = vmax.f32 %v7832, 0.0
      %v8337 = vmax.f32 %v7835, 0.0
      %v8338 = vmax.f32 %v7840, 0.0
      %v8339 = vmax.f32 %v7843, 0.0
      %v8340 = vmax.f32 %v7848, 0.0
      %v8341 = vmax.f32 %v7851, 0.0
      %v8342 = vmax.f32 %v7856, 0.0
      %v8343 = vmax.f32 %v7859, 0.0
      %v8344 = vmax.f32 %v7864, 0.0
      %v8345 = vmax.f32 %v7867, 0.0
      %v8346 = vmax.f32 %v7872, 0.0
      %v8347 = vmax.f32 %v7875, 0.0
      %v8348 = vmax.f32 %v7880, 0.0
      %v8349 = vmax.f32 %v7883, 0.0
      %v8350 = vmax.f32 %v7888, 0.0
      %v8351 = vmax.f32 %v7891, 0.0
      %v8352 = vmax.f32 %v7896, 0.0
      %v8353 = vmax.f32 %v7899, 0.0
      %v8354 = vmax.f32 %v7904, 0.0
      %v8355 = vmax.f32 %v7907, 0.0
      %v8356 = vmax.f32 %v7912, 0.0
      %v8357 = vmax.f32 %v7915, 0.0
      %v8358 = vmax.f32 %v7920, 0.0
      %v8359 = vmax.f32 %v7923, 0.0
      %v8360 = vmax.f32 %v7928, 0.0
      %v8361 = vmax.f32 %v7931, 0.0
      %v8362 = vmax.f32 %v7936, 0.0
      %v8363 = vmax.f32 %v7939, 0.0
      %v8364 = vmax.f32 %v7944, 0.0
      %v8365 = vmax.f32 %v7947, 0.0
      %v8366 = vmax.f32 %v7952, 0.0
      %v8367 = vmax.f32 %v7955, 0.0
      %v8368 = vmax.f32 %v7960, 0.0
      %v8369 = vmax.f32 %v7963, 0.0
      %v8370 = vmax.f32 %v7968, 0.0
      %v8371 = vmax.f32 %v7971, 0.0
      %v8372 = vmax.f32 %v7976, 0.0
      %v8373 = vmax.f32 %v7979, 0.0
      %v8374 = vmax.f32 %v7984, 0.0
      %v8375 = vmax.f32 %v7987, 0.0
      %v8376 = vmax.f32 %v7992, 0.0
      %v8377 = vmax.f32 %v7995, 0.0
      %v8378 = vmax.f32 %v8000, 0.0
      %v8379 = vmax.f32 %v8003, 0.0
      %v8380 = vmax.f32 %v8008, 0.0
      %v8381 = vmax.f32 %v8011, 0.0
      %v8382 = vmax.f32 %v8016, 0.0
      %v8383 = vmax.f32 %v8019, 0.0
      %v8384 = vmax.f32 %v8024, 0.0
      %v8385 = vmax.f32 %v8027, 0.0
      %v8386 = vmax.f32 %v8032, 0.0
      %v8387 = vmax.f32 %v8035, 0.0
      %v8388 = vmax.f32 %v8040, 0.0
      %v8389 = vmax.f32 %v8043, 0.0
      %v8390 = vmax.f32 %v8048, 0.0
      %v8391 = vmax.f32 %v8051, 0.0
      %v8392 = vmax.f32 %v8056, 0.0
      %v8393 = vmax.f32 %v8059, 0.0
      %v8394 = vmax.f32 %v8064, 0.0
      %v8395 = vmax.f32 %v8067, 0.0
      %v8396 = vmax.f32 %v8072, 0.0
      %v8397 = vmax.f32 %v8075, 0.0
      %v8398 = vmax.f32 %v8080, 0.0
      %v8399 = vmax.f32 %v8083, 0.0
      %v8400 = vmax.f32 %v8088, 0.0
      %v8401 = vmax.f32 %v8091, 0.0
      %v8402 = vmax.f32 %v8096, 0.0
      %v8403 = vmax.f32 %v8099, 0.0
      %v8404 = vmax.f32 %v8104, 0.0
      %v8405 = vmax.f32 %v8107, 0.0
      %v8406 = vmax.f32 %v8112, 0.0
      %v8407 = vmax.f32 %v8115, 0.0
      %v8408 = vmax.f32 %v8120, 0.0
      %v8409 = vmax.f32 %v8123, 0.0
      %v8410 = vmax.f32 %v8128, 0.0
      %v8411 = vmax.f32 %v8131, 0.0
      %v8412 = vmax.f32 %v8136, 0.0
      %v8413 = vmax.f32 %v8139, 0.0
      %v8414 = vmax.f32 %v8144, 0.0
      %v8415 = vmax.f32 %v8147, 0.0
      %v8416 = vmax.f32 %v8152, 0.0
      %v8417 = vmax.f32 %v8155, 0.0
      %v8418 = vmax.f32 %v8160, 0.0
      %v8419 = vmax.f32 %v8163, 0.0
      %v8420 = vmax.f32 %v8168, 0.0
      %v8421 = vmax.f32 %v8171, 0.0
      %v8422 = vmax.f32 %v8176, 0.0
      %v8423 = vmax.f32 %v8179, 0.0
      %v8424 = vmax.f32 %v8184, 0.0
      %v8425 = vmax.f32 %v8187, 0.0
      %v8426 = vmax.f32 %v8192, 0.0
      %v8427 = vmax.f32 %v8195, 0.0
      %v8428 = vmax.f32 %v8200, 0.0
      %v8429 = vmax.f32 %v8203, 0.0
      %v8430 = vmax.f32 %v8208, 0.0
      %v8431 = vmax.f32 %v8211, 0.0
      %v8432 = vmax.f32 %v8216, 0.0
      %v8433 = vmax.f32 %v8219, 0.0
      %v8434 = vmax.f32 %v8224, 0.0
      %v8435 = vmax.f32 %v8227, 0.0
      %v8436 = vmax.f32 %v8232, 0.0
      %v8437 = vmax.f32 %v8235, 0.0
      %v8438 = vmax.f32 %v8240, 0.0
      %v8439 = vmax.f32 %v8243, 0.0
      %v8440 = vmax.f32 %v8248, 0.0
      %v8441 = vmax.f32 %v8251, 0.0
      %v8442 = vmax.f32 %v8256, 0.0
      %v8443 = vmax.f32 %v8259, 0.0
      %v8444 = vmax.f32 %v8264, 0.0
      %v8445 = vmax.f32 %v8267, 0.0
      %v8446 = vmax.f32 %v8272, 0.0
      %v8447 = vmax.f32 %v8275, 0.0
      %v8448 = vmax.f32 %v8280, 0.0
      %v8449 = vmax.f32 %v8283, 0.0
      %v8450 = vmax.f32 %v8288, 0.0
      %v8451 = vmax.f32 %v8291, 0.0
      %v8452 = vmax.f32 %v8296, 0.0
      %v8453 = vmax.f32 %v8299, 0.0
      %v8454 = vmax.f32 %v8304, 0.0
      %v8455 = vmax.f32 %v8307, 0.0
      %v8456 = vmax.f32 %v8312, 0.0
      %v8457 = vmax.f32 %v8315, 0.0
      %v8458 = vmax.f32 %v8320, 0.0
      %v8459 = vmax.f32 %v8323, 0.0
      %v8460 = vmax.f32 %v8328, 0.0
      %v8461 = vmax.f32 %v8331, 0.0
      %s8462 = scalar_lea.vmem %s2, 192
      %v8463 = vld [vmem:[%s8462] sm:$0xf]
      %v8464 = vld [vmem:[%s8462 + $0x4] sm:$0xf]
      %v8465 = vld [vmem:[%s8462 + $0x8] sm:$0xf]
      %v8466 = vld [vmem:[%s8462 + $0xc] sm:$0xf]
      %v8467 = vld [vmem:[%s8462 + $0x10] sm:$0xf]
      %v8468 = vld [vmem:[%s8462 + $0x14] sm:$0xf]
      %v8469 = vld [vmem:[%s8462 + $0x18] sm:$0xf]
      %v8470 = vld [vmem:[%s8462 + $0x1c] sm:$0xf]
      %v8471 = vpack.c.bf16 %v8335, %v8334
      %v8472 = vpack.c.bf16 %v8337, %v8336
      %v8473 = vpack.c.bf16 %v8339, %v8338
      %v8474 = vpack.c.bf16 %v8341, %v8340
      %v8475 = vpack.c.bf16 %v8343, %v8342
      %v8476 = vpack.c.bf16 %v8345, %v8344
      %v8477 = vpack.c.bf16 %v8347, %v8346
      %v8478 = vpack.c.bf16 %v8349, %v8348
      %v8479 = vpack.c.bf16 %v8351, %v8350
      %v8480 = vpack.c.bf16 %v8353, %v8352
      %v8481 = vpack.c.bf16 %v8355, %v8354
      %v8482 = vpack.c.bf16 %v8357, %v8356
      %v8483 = vpack.c.bf16 %v8359, %v8358
      %v8484 = vpack.c.bf16 %v8361, %v8360
      %v8485 = vpack.c.bf16 %v8363, %v8362
      %v8486 = vpack.c.bf16 %v8365, %v8364
      %v8487 = vpack.c.bf16 %v8367, %v8366
      %v8488 = vpack.c.bf16 %v8369, %v8368
      %v8489 = vpack.c.bf16 %v8371, %v8370
      %v8490 = vpack.c.bf16 %v8373, %v8372
      %v8491 = vpack.c.bf16 %v8375, %v8374
      %v8492 = vpack.c.bf16 %v8377, %v8376
      %v8493 = vpack.c.bf16 %v8379, %v8378
      %v8494 = vpack.c.bf16 %v8381, %v8380
      %v8495 = vpack.c.bf16 %v8383, %v8382
      %v8496 = vpack.c.bf16 %v8385, %v8384
      %v8497 = vpack.c.bf16 %v8387, %v8386
      %v8498 = vpack.c.bf16 %v8389, %v8388
      %v8499 = vpack.c.bf16 %v8391, %v8390
      %v8500 = vpack.c.bf16 %v8393, %v8392
      %v8501 = vpack.c.bf16 %v8395, %v8394
      %v8502 = vpack.c.bf16 %v8397, %v8396
      %v8503 = vpack.c.bf16 %v8399, %v8398
      %v8504 = vpack.c.bf16 %v8401, %v8400
      %v8505 = vpack.c.bf16 %v8403, %v8402
      %v8506 = vpack.c.bf16 %v8405, %v8404
      %v8507 = vpack.c.bf16 %v8407, %v8406
      %v8508 = vpack.c.bf16 %v8409, %v8408
      %v8509 = vpack.c.bf16 %v8411, %v8410
      %v8510 = vpack.c.bf16 %v8413, %v8412
      %v8511 = vpack.c.bf16 %v8415, %v8414
      %v8512 = vpack.c.bf16 %v8417, %v8416
      %v8513 = vpack.c.bf16 %v8419, %v8418
      %v8514 = vpack.c.bf16 %v8421, %v8420
      %v8515 = vpack.c.bf16 %v8423, %v8422
      %v8516 = vpack.c.bf16 %v8425, %v8424
      %v8517 = vpack.c.bf16 %v8427, %v8426
      %v8518 = vpack.c.bf16 %v8429, %v8428
      %v8519 = vpack.c.bf16 %v8431, %v8430
      %v8520 = vpack.c.bf16 %v8433, %v8432
      %v8521 = vpack.c.bf16 %v8435, %v8434
      %v8522 = vpack.c.bf16 %v8437, %v8436
      %v8523 = vpack.c.bf16 %v8439, %v8438
      %v8524 = vpack.c.bf16 %v8441, %v8440
      %v8525 = vpack.c.bf16 %v8443, %v8442
      %v8526 = vpack.c.bf16 %v8445, %v8444
      %v8527 = vpack.c.bf16 %v8447, %v8446
      %v8528 = vpack.c.bf16 %v8449, %v8448
      %v8529 = vpack.c.bf16 %v8451, %v8450
      %v8530 = vpack.c.bf16 %v8453, %v8452
      %v8531 = vpack.c.bf16 %v8455, %v8454
      %v8532 = vpack.c.bf16 %v8457, %v8456
      %v8533 = vpack.c.bf16 %v8459, %v8458
      %v8534 = vpack.c.bf16 %v8461, %v8460
      %v8535 = vld [vmem:[%s3 + $0x7] sm:$0x1]
      %v8536 = vlaneseq
      %v8537 = vshrl.u32 %v8536, 7
      %v8538 = vsub.s32 0, %v8537
      %v8539 = vrot.slane %v8535, %v8538
      %v8548 = vunpack.c.l.b16 %v8463
      %v8549 = vunpack.c.l.b16 %v8464
      %v8550 = vunpack.c.l.b16 %v8465
      %v8551 = vunpack.c.l.b16 %v8466
      %v8552 = vunpack.c.l.b16 %v8467
      %v8553 = vunpack.c.l.b16 %v8468
      %v8554 = vunpack.c.l.b16 %v8469
      %v8555 = vunpack.c.l.b16 %v8470
      %v8556 = vpack.c.b16 %v8549, %v8548
      %v8557 = vpack.c.b16 %v8551, %v8550
      %v8558 = vpack.c.b16 %v8553, %v8552
      %v8559 = vpack.c.b16 %v8555, %v8554
      %v8565 = vsel %vm1797, %v8471, 0
      %v8568 = vsel %vm1797, %v8472, 0
      %v8571 = vsel %vm1797, %v8473, 0
      %v8574 = vsel %vm1797, %v8474, 0
      %v8577 = vsel %vm1797, %v8475, 0
      %v8580 = vsel %vm1797, %v8476, 0
      %v8583 = vsel %vm1797, %v8477, 0
      %v8586 = vsel %vm1797, %v8478, 0
      %v8589 = vsel %vm1797, %v8479, 0
      %v8592 = vsel %vm1797, %v8480, 0
      %v8595 = vsel %vm1797, %v8481, 0
      %v8598 = vsel %vm1797, %v8482, 0
      %v8601 = vsel %vm1797, %v8483, 0
      %v8604 = vsel %vm1797, %v8484, 0
      %v8607 = vsel %vm1797, %v8485, 0
      %v8610 = vsel %vm1797, %v8486, 0
      %v8613 = vsel %vm1797, %v8487, 0
      %v8616 = vsel %vm1797, %v8488, 0
      %v8619 = vsel %vm1797, %v8489, 0
      %v8622 = vsel %vm1797, %v8490, 0
      %v8625 = vsel %vm1797, %v8491, 0
      %v8628 = vsel %vm1797, %v8492, 0
      %v8631 = vsel %vm1797, %v8493, 0
      %v8634 = vsel %vm1797, %v8494, 0
      %v8637 = vsel %vm1797, %v8495, 0
      %v8640 = vsel %vm1797, %v8496, 0
      %v8643 = vsel %vm1797, %v8497, 0
      %v8646 = vsel %vm1797, %v8498, 0
      %v8649 = vsel %vm1797, %v8499, 0
      %v8652 = vsel %vm1797, %v8500, 0
      %v8655 = vsel %vm1797, %v8501, 0
      %v8658 = vsel %vm1797, %v8502, 0
      %v8661 = vsel %vm1797, %v8503, 0
      %v8664 = vsel %vm1797, %v8504, 0
      %v8667 = vsel %vm1797, %v8505, 0
      %v8670 = vsel %vm1797, %v8506, 0
      %v8673 = vsel %vm1797, %v8507, 0
      %v8676 = vsel %vm1797, %v8508, 0
      %v8679 = vsel %vm1797, %v8509, 0
      %v8682 = vsel %vm1797, %v8510, 0
      %v8685 = vsel %vm1797, %v8511, 0
      %v8688 = vsel %vm1797, %v8512, 0
      %v8691 = vsel %vm1797, %v8513, 0
      %v8694 = vsel %vm1797, %v8514, 0
      %v8697 = vsel %vm1797, %v8515, 0
      %v8700 = vsel %vm1797, %v8516, 0
      %v8703 = vsel %vm1797, %v8517, 0
      %v8706 = vsel %vm1797, %v8518, 0
      %v8709 = vsel %vm1797, %v8519, 0
      %v8712 = vsel %vm1797, %v8520, 0
      %v8715 = vsel %vm1797, %v8521, 0
      %v8718 = vsel %vm1797, %v8522, 0
      %v8721 = vsel %vm1797, %v8523, 0
      %v8724 = vsel %vm1797, %v8524, 0
      %v8727 = vsel %vm1797, %v8525, 0
      %v8730 = vsel %vm1797, %v8526, 0
      %v8733 = vsel %vm1797, %v8527, 0
      %v8736 = vsel %vm1797, %v8528, 0
      %v8739 = vsel %vm1797, %v8529, 0
      %v8742 = vsel %vm1797, %v8530, 0
      %v8745 = vsel %vm1797, %v8531, 0
      %v8748 = vsel %vm1797, %v8532, 0
      %v8751 = vsel %vm1797, %v8533, 0
      %v8754 = vsel %vm1797, %v8534, 0
      %8756 = vmatprep.subr.bf16.mxu0 0
      %8757 = vmatpush1.bf16.msra.mxu0 %v8556
      %8758 = vmatprep.subr.bf16.mxu0 0
      %8759 = vmatpush1.bf16.msra.mxu0 %v8557
      %8760 = vmatprep.subr.bf16.mxu0 0
      %8761 = vmatpush1.bf16.msra.mxu0 %v8558
      %8762 = vmatprep.subr.bf16.mxu0 0
      %8763 = vmatpush1.bf16.msra.mxu0 %v8559
      %8764 = vmatprep.subr.bf16.mxu0 0
      %8765 = vmatpush1.bf16.msra.mxu0 0
      %8766 = vmatprep.subr.bf16.mxu0 0
      %8767 = vmatpush1.bf16.msra.mxu0 0
      %8768 = vmatprep.subr.bf16.mxu0 0
      %8769 = vmatpush1.bf16.msra.mxu0 0
      %8770 = vmatprep.subr.bf16.mxu0 0
      %8771 = vmatpush1.bf16.msra.mxu0 0
      %8772 = vmatprep.subr.bf16.mxu0 0
      %8773 = vmatpush1.bf16.msra.mxu0 0
      %8774 = vmatprep.subr.bf16.mxu0 0
      %8775 = vmatpush1.bf16.msra.mxu0 0
      %8776 = vmatprep.subr.bf16.mxu0 0
      %8777 = vmatpush1.bf16.msra.mxu0 0
      %8778 = vmatprep.subr.bf16.mxu0 0
      %8779 = vmatpush1.bf16.msra.mxu0 0
      %8780 = vmatprep.subr.bf16.mxu0 0
      %8781 = vmatpush1.bf16.msra.mxu0 0
      %8782 = vmatprep.subr.bf16.mxu0 0
      %8783 = vmatpush1.bf16.msra.mxu0 0
      %8784 = vmatprep.subr.bf16.mxu0 0
      %8785 = vmatpush1.bf16.msra.mxu0 0
      %8786 = vmatprep.subr.bf16.mxu0 0
      %8787 = vmatpush1.bf16.msra.mxu0 0
      %8788 = vmatprep.mubr.bf16.mxu0 0
      %8789 = vmatmul.mubr.bf16.gmra.mrb[0].mxu0 %v8565
      %v8790 = vpop.f32.mrb[0].mxu0
      %v8791 = vadd.f32 %v8539, %v8790
      %v8792 = vpop.f32.mrb[0].mxu0
      %v8793 = vpop.f32.mrb[0].mxu0
      %v8794 = vadd.f32 %v8539, %v8793
      %v8795 = vpop.f32.mrb[0].mxu0
      %8796 = vmatprep.mubr.bf16.mxu0 0
      %8797 = vmatmul.mubr.bf16.gmra.mrb[0].mxu0 %v8568
      %v8798 = vpop.f32.mrb[0].mxu0
      %v8799 = vadd.f32 %v8539, %v8798
      %v8800 = vpop.f32.mrb[0].mxu0
      %v8801 = vpop.f32.mrb[0].mxu0
      %v8802 = vadd.f32 %v8539, %v8801
      %v8803 = vpop.f32.mrb[0].mxu0
      %8804 = vmatprep.mubr.bf16.mxu0 0
      %8805 = vmatmul.mubr.bf16.gmra.mrb[0].mxu0 %v8571
      %v8806 = vpop.f32.mrb[0].mxu0
      %v8807 = vadd.f32 %v8539, %v8806
      %v8808 = vpop.f32.mrb[0].mxu0
      %v8809 = vpop.f32.mrb[0].mxu0
      %v8810 = vadd.f32 %v8539, %v8809
      %v8811 = vpop.f32.mrb[0].mxu0
      %8812 = vmatprep.mubr.bf16.mxu0 0
      %8813 = vmatmul.mubr.bf16.gmra.mrb[0].mxu0 %v8574
      %v8814 = vpop.f32.mrb[0].mxu0
      %v8815 = vadd.f32 %v8539, %v8814
      %v8816 = vpop.f32.mrb[0].mxu0
      %v8817 = vpop.f32.mrb[0].mxu0
      %v8818 = vadd.f32 %v8539, %v8817
      %v8819 = vpop.f32.mrb[0].mxu0
      %8820 = vmatprep.mubr.bf16.mxu0 0
      %8821 = vmatmul.mubr.bf16.gmra.mrb[0].mxu0 %v8577
      %v8822 = vpop.f32.mrb[0].mxu0
      %v8823 = vadd.f32 %v8539, %v8822
      %v8824 = vpop.f32.mrb[0].mxu0
      %v8825 = vpop.f32.mrb[0].mxu0
      %v8826 = vadd.f32 %v8539, %v8825
      %v8827 = vpop.f32.mrb[0].mxu0
      %8828 = vmatprep.mubr.bf16.mxu0 0
      %8829 = vmatmul.mubr.bf16.gmra.mrb[0].mxu0 %v8580
      %v8830 = vpop.f32.mrb[0].mxu0
      %v8831 = vadd.f32 %v8539, %v8830
      %v8832 = vpop.f32.mrb[0].mxu0
      %v8833 = vpop.f32.mrb[0].mxu0
      %v8834 = vadd.f32 %v8539, %v8833
      %v8835 = vpop.f32.mrb[0].mxu0
      %8836 = vmatprep.mubr.bf16.mxu0 0
      %8837 = vmatmul.mubr.bf16.gmra.mrb[0].mxu0 %v8583
      %v8838 = vpop.f32.mrb[0].mxu0
      %v8839 = vadd.f32 %v8539, %v8838
      %v8840 = vpop.f32.mrb[0].mxu0
      %v8841 = vpop.f32.mrb[0].mxu0
      %v8842 = vadd.f32 %v8539, %v8841
      %v8843 = vpop.f32.mrb[0].mxu0
      %8844 = vmatprep.mubr.bf16.mxu0 0
      %8845 = vmatmul.mubr.bf16.gmra.mrb[0].mxu0 %v8586
      %v8846 = vpop.f32.mrb[0].mxu0
      %v8847 = vadd.f32 %v8539, %v8846
      %v8848 = vpop.f32.mrb[0].mxu0
      %v8849 = vpop.f32.mrb[0].mxu0
      %v8850 = vadd.f32 %v8539, %v8849
      %v8851 = vpop.f32.mrb[0].mxu0
      %8852 = vmatprep.mubr.bf16.mxu0 0
      %8853 = vmatmul.mubr.bf16.gmra.mrb[0].mxu0 %v8589
      %v8854 = vpop.f32.mrb[0].mxu0
      %v8855 = vadd.f32 %v8539, %v8854
      %v8856 = vpop.f32.mrb[0].mxu0
      %v8857 = vpop.f32.mrb[0].mxu0
      %v8858 = vadd.f32 %v8539, %v8857
      %v8859 = vpop.f32.mrb[0].mxu0
      %8860 = vmatprep.mubr.bf16.mxu0 0
      %8861 = vmatmul.mubr.bf16.gmra.mrb[0].mxu0 %v8592
      %v8862 = vpop.f32.mrb[0].mxu0
      %v8863 = vadd.f32 %v8539, %v8862
      %v8864 = vpop.f32.mrb[0].mxu0
      %v8865 = vpop.f32.mrb[0].mxu0
      %v8866 = vadd.f32 %v8539, %v8865
      %v8867 = vpop.f32.mrb[0].mxu0
      %8868 = vmatprep.mubr.bf16.mxu0 0
      %8869 = vmatmul.mubr.bf16.gmra.mrb[0].mxu0 %v8595
      %v8870 = vpop.f32.mrb[0].mxu0
      %v8871 = vadd.f32 %v8539, %v8870
      %v8872 = vpop.f32.mrb[0].mxu0
      %v8873 = vpop.f32.mrb[0].mxu0
      %v8874 = vadd.f32 %v8539, %v8873
      %v8875 = vpop.f32.mrb[0].mxu0
      %8876 = vmatprep.mubr.bf16.mxu0 0
      %8877 = vmatmul.mubr.bf16.gmra.mrb[0].mxu0 %v8598
      %v8878 = vpop.f32.mrb[0].mxu0
      %v8879 = vadd.f32 %v8539, %v8878
      %v8880 = vpop.f32.mrb[0].mxu0
      %v8881 = vpop.f32.mrb[0].mxu0
      %v8882 = vadd.f32 %v8539, %v8881
      %v8883 = vpop.f32.mrb[0].mxu0
      %8884 = vmatprep.mubr.bf16.mxu0 0
      %8885 = vmatmul.mubr.bf16.gmra.mrb[0].mxu0 %v8601
      %v8886 = vpop.f32.mrb[0].mxu0
      %v8887 = vadd.f32 %v8539, %v8886
      %v8888 = vpop.f32.mrb[0].mxu0
      %v8889 = vpop.f32.mrb[0].mxu0
      %v8890 = vadd.f32 %v8539, %v8889
      %v8891 = vpop.f32.mrb[0].mxu0
      %8892 = vmatprep.mubr.bf16.mxu0 0
      %8893 = vmatmul.mubr.bf16.gmra.mrb[0].mxu0 %v8604
      %v8894 = vpop.f32.mrb[0].mxu0
      %v8895 = vadd.f32 %v8539, %v8894
      %v8896 = vpop.f32.mrb[0].mxu0
      %v8897 = vpop.f32.mrb[0].mxu0
      %v8898 = vadd.f32 %v8539, %v8897
      %v8899 = vpop.f32.mrb[0].mxu0
      %8900 = vmatprep.mubr.bf16.mxu0 0
      %8901 = vmatmul.mubr.bf16.gmra.mrb[0].mxu0 %v8607
      %v8902 = vpop.f32.mrb[0].mxu0
      %v8903 = vadd.f32 %v8539, %v8902
      %v8904 = vpop.f32.mrb[0].mxu0
      %v8905 = vpop.f32.mrb[0].mxu0
      %v8906 = vadd.f32 %v8539, %v8905
      %v8907 = vpop.f32.mrb[0].mxu0
      %8908 = vmatprep.mubr.bf16.mxu0 0
      %8909 = vmatmul.mubr.bf16.gmra.mrb[0].mxu0 %v8610
      %v8910 = vpop.f32.mrb[0].mxu0
      %v8911 = vadd.f32 %v8539, %v8910
      %v8912 = vpop.f32.mrb[0].mxu0
      %v8913 = vpop.f32.mrb[0].mxu0
      %v8914 = vadd.f32 %v8539, %v8913
      %v8915 = vpop.f32.mrb[0].mxu0
      %8916 = vmatprep.mubr.bf16.mxu0 0
      %8917 = vmatmul.mubr.bf16.gmra.mrb[0].mxu0 %v8613
      %v8918 = vpop.f32.mrb[0].mxu0
      %v8919 = vadd.f32 %v8539, %v8918
      %v8920 = vpop.f32.mrb[0].mxu0
      %v8921 = vpop.f32.mrb[0].mxu0
      %v8922 = vadd.f32 %v8539, %v8921
      %v8923 = vpop.f32.mrb[0].mxu0
      %8924 = vmatprep.mubr.bf16.mxu0 0
      %8925 = vmatmul.mubr.bf16.gmra.mrb[0].mxu0 %v8616
      %v8926 = vpop.f32.mrb[0].mxu0
      %v8927 = vadd.f32 %v8539, %v8926
      %v8928 = vpop.f32.mrb[0].mxu0
      %v8929 = vpop.f32.mrb[0].mxu0
      %v8930 = vadd.f32 %v8539, %v8929
      %v8931 = vpop.f32.mrb[0].mxu0
      %8932 = vmatprep.mubr.bf16.mxu0 0
      %8933 = vmatmul.mubr.bf16.gmra.mrb[0].mxu0 %v8619
      %v8934 = vpop.f32.mrb[0].mxu0
      %v8935 = vadd.f32 %v8539, %v8934
      %v8936 = vpop.f32.mrb[0].mxu0
      %v8937 = vpop.f32.mrb[0].mxu0
      %v8938 = vadd.f32 %v8539, %v8937
      %v8939 = vpop.f32.mrb[0].mxu0
      %8940 = vmatprep.mubr.bf16.mxu0 0
      %8941 = vmatmul.mubr.bf16.gmra.mrb[0].mxu0 %v8622
      %v8942 = vpop.f32.mrb[0].mxu0
      %v8943 = vadd.f32 %v8539, %v8942
      %v8944 = vpop.f32.mrb[0].mxu0
      %v8945 = vpop.f32.mrb[0].mxu0
      %v8946 = vadd.f32 %v8539, %v8945
      %v8947 = vpop.f32.mrb[0].mxu0
      %8948 = vmatprep.mubr.bf16.mxu0 0
      %8949 = vmatmul.mubr.bf16.gmra.mrb[0].mxu0 %v8625
      %v8950 = vpop.f32.mrb[0].mxu0
      %v8951 = vadd.f32 %v8539, %v8950
      %v8952 = vpop.f32.mrb[0].mxu0
      %v8953 = vpop.f32.mrb[0].mxu0
      %v8954 = vadd.f32 %v8539, %v8953
      %v8955 = vpop.f32.mrb[0].mxu0
      %8956 = vmatprep.mubr.bf16.mxu0 0
      %8957 = vmatmul.mubr.bf16.gmra.mrb[0].mxu0 %v8628
      %v8958 = vpop.f32.mrb[0].mxu0
      %v8959 = vadd.f32 %v8539, %v8958
      %v8960 = vpop.f32.mrb[0].mxu0
      %v8961 = vpop.f32.mrb[0].mxu0
      %v8962 = vadd.f32 %v8539, %v8961
      %v8963 = vpop.f32.mrb[0].mxu0
      %8964 = vmatprep.mubr.bf16.mxu0 0
      %8965 = vmatmul.mubr.bf16.gmra.mrb[0].mxu0 %v8631
      %v8966 = vpop.f32.mrb[0].mxu0
      %v8967 = vadd.f32 %v8539, %v8966
      %v8968 = vpop.f32.mrb[0].mxu0
      %v8969 = vpop.f32.mrb[0].mxu0
      %v8970 = vadd.f32 %v8539, %v8969
      %v8971 = vpop.f32.mrb[0].mxu0
      %8972 = vmatprep.mubr.bf16.mxu0 0
      %8973 = vmatmul.mubr.bf16.gmra.mrb[0].mxu0 %v8634
      %v8974 = vpop.f32.mrb[0].mxu0
      %v8975 = vadd.f32 %v8539, %v8974
      %v8976 = vpop.f32.mrb[0].mxu0
      %v8977 = vpop.f32.mrb[0].mxu0
      %v8978 = vadd.f32 %v8539, %v8977
      %v8979 = vpop.f32.mrb[0].mxu0
      %8980 = vmatprep.mubr.bf16.mxu0 0
      %8981 = vmatmul.mubr.bf16.gmra.mrb[0].mxu0 %v8637
      %v8982 = vpop.f32.mrb[0].mxu0
      %v8983 = vadd.f32 %v8539, %v8982
      %v8984 = vpop.f32.mrb[0].mxu0
      %v8985 = vpop.f32.mrb[0].mxu0
      %v8986 = vadd.f32 %v8539, %v8985
      %v8987 = vpop.f32.mrb[0].mxu0
      %8988 = vmatprep.mubr.bf16.mxu0 0
      %8989 = vmatmul.mubr.bf16.gmra.mrb[0].mxu0 %v8640
      %v8990 = vpop.f32.mrb[0].mxu0
      %v8991 = vadd.f32 %v8539, %v8990
      %v8992 = vpop.f32.mrb[0].mxu0
      %v8993 = vpop.f32.mrb[0].mxu0
      %v8994 = vadd.f32 %v8539, %v8993
      %v8995 = vpop.f32.mrb[0].mxu0
      %8996 = vmatprep.mubr.bf16.mxu0 0
      %8997 = vmatmul.mubr.bf16.gmra.mrb[0].mxu0 %v8643
      %v8998 = vpop.f32.mrb[0].mxu0
      %v8999 = vadd.f32 %v8539, %v8998
      %v9000 = vpop.f32.mrb[0].mxu0
      %v9001 = vpop.f32.mrb[0].mxu0
      %v9002 = vadd.f32 %v8539, %v9001
      %v9003 = vpop.f32.mrb[0].mxu0
      %9004 = vmatprep.mubr.bf16.mxu0 0
      %9005 = vmatmul.mubr.bf16.gmra.mrb[0].mxu0 %v8646
      %v9006 = vpop.f32.mrb[0].mxu0
      %v9007 = vadd.f32 %v8539, %v9006
      %v9008 = vpop.f32.mrb[0].mxu0
      %v9009 = vpop.f32.mrb[0].mxu0
      %v9010 = vadd.f32 %v8539, %v9009
      %v9011 = vpop.f32.mrb[0].mxu0
      %9012 = vmatprep.mubr.bf16.mxu0 0
      %9013 = vmatmul.mubr.bf16.gmra.mrb[0].mxu0 %v8649
      %v9014 = vpop.f32.mrb[0].mxu0
      %v9015 = vadd.f32 %v8539, %v9014
      %v9016 = vpop.f32.mrb[0].mxu0
      %v9017 = vpop.f32.mrb[0].mxu0
      %v9018 = vadd.f32 %v8539, %v9017
      %v9019 = vpop.f32.mrb[0].mxu0
      %9020 = vmatprep.mubr.bf16.mxu0 0
      %9021 = vmatmul.mubr.bf16.gmra.mrb[0].mxu0 %v8652
      %v9022 = vpop.f32.mrb[0].mxu0
      %v9023 = vadd.f32 %v8539, %v9022
      %v9024 = vpop.f32.mrb[0].mxu0
      %v9025 = vpop.f32.mrb[0].mxu0
      %v9026 = vadd.f32 %v8539, %v9025
      %v9027 = vpop.f32.mrb[0].mxu0
      %9028 = vmatprep.mubr.bf16.mxu0 0
      %9029 = vmatmul.mubr.bf16.gmra.mrb[0].mxu0 %v8655
      %v9030 = vpop.f32.mrb[0].mxu0
      %v9031 = vadd.f32 %v8539, %v9030
      %v9032 = vpop.f32.mrb[0].mxu0
      %v9033 = vpop.f32.mrb[0].mxu0
      %v9034 = vadd.f32 %v8539, %v9033
      %v9035 = vpop.f32.mrb[0].mxu0
      %9036 = vmatprep.mubr.bf16.mxu0 0
      %9037 = vmatmul.mubr.bf16.gmra.mrb[0].mxu0 %v8658
      %v9038 = vpop.f32.mrb[0].mxu0
      %v9039 = vadd.f32 %v8539, %v9038
      %v9040 = vpop.f32.mrb[0].mxu0
      %v9041 = vpop.f32.mrb[0].mxu0
      %v9042 = vadd.f32 %v8539, %v9041
      %v9043 = vpop.f32.mrb[0].mxu0
      %9044 = vmatprep.mubr.bf16.mxu0 0
      %9045 = vmatmul.mubr.bf16.gmra.mrb[0].mxu0 %v8661
      %v9046 = vpop.f32.mrb[0].mxu0
      %v9047 = vadd.f32 %v8539, %v9046
      %v9048 = vpop.f32.mrb[0].mxu0
      %v9049 = vpop.f32.mrb[0].mxu0
      %v9050 = vadd.f32 %v8539, %v9049
      %v9051 = vpop.f32.mrb[0].mxu0
      %9052 = vmatprep.mubr.bf16.mxu0 0
      %9053 = vmatmul.mubr.bf16.gmra.mrb[0].mxu0 %v8664
      %v9054 = vpop.f32.mrb[0].mxu0
      %v9055 = vadd.f32 %v8539, %v9054
      %v9056 = vpop.f32.mrb[0].mxu0
      %v9057 = vpop.f32.mrb[0].mxu0
      %v9058 = vadd.f32 %v8539, %v9057
      %v9059 = vpop.f32.mrb[0].mxu0
      %9060 = vmatprep.mubr.bf16.mxu0 0
      %9061 = vmatmul.mubr.bf16.gmra.mrb[0].mxu0 %v8667
      %v9062 = vpop.f32.mrb[0].mxu0
      %v9063 = vadd.f32 %v8539, %v9062
      %v9064 = vpop.f32.mrb[0].mxu0
      %v9065 = vpop.f32.mrb[0].mxu0
      %v9066 = vadd.f32 %v8539, %v9065
      %v9067 = vpop.f32.mrb[0].mxu0
      %9068 = vmatprep.mubr.bf16.mxu0 0
      %9069 = vmatmul.mubr.bf16.gmra.mrb[0].mxu0 %v8670
      %v9070 = vpop.f32.mrb[0].mxu0
      %v9071 = vadd.f32 %v8539, %v9070
      %v9072 = vpop.f32.mrb[0].mxu0
      %v9073 = vpop.f32.mrb[0].mxu0
      %v9074 = vadd.f32 %v8539, %v9073
      %v9075 = vpop.f32.mrb[0].mxu0
      %9076 = vmatprep.mubr.bf16.mxu0 0
      %9077 = vmatmul.mubr.bf16.gmra.mrb[0].mxu0 %v8673
      %v9078 = vpop.f32.mrb[0].mxu0
      %v9079 = vadd.f32 %v8539, %v9078
      %v9080 = vpop.f32.mrb[0].mxu0
      %v9081 = vpop.f32.mrb[0].mxu0
      %v9082 = vadd.f32 %v8539, %v9081
      %v9083 = vpop.f32.mrb[0].mxu0
      %9084 = vmatprep.mubr.bf16.mxu0 0
      %9085 = vmatmul.mubr.bf16.gmra.mrb[0].mxu0 %v8676
      %v9086 = vpop.f32.mrb[0].mxu0
      %v9087 = vadd.f32 %v8539, %v9086
      %v9088 = vpop.f32.mrb[0].mxu0
      %v9089 = vpop.f32.mrb[0].mxu0
      %v9090 = vadd.f32 %v8539, %v9089
      %v9091 = vpop.f32.mrb[0].mxu0
      %9092 = vmatprep.mubr.bf16.mxu0 0
      %9093 = vmatmul.mubr.bf16.gmra.mrb[0].mxu0 %v8679
      %v9094 = vpop.f32.mrb[0].mxu0
      %v9095 = vadd.f32 %v8539, %v9094
      %v9096 = vpop.f32.mrb[0].mxu0
      %v9097 = vpop.f32.mrb[0].mxu0
      %v9098 = vadd.f32 %v8539, %v9097
      %v9099 = vpop.f32.mrb[0].mxu0
      %9100 = vmatprep.mubr.bf16.mxu0 0
      %9101 = vmatmul.mubr.bf16.gmra.mrb[0].mxu0 %v8682
      %v9102 = vpop.f32.mrb[0].mxu0
      %v9103 = vadd.f32 %v8539, %v9102
      %v9104 = vpop.f32.mrb[0].mxu0
      %v9105 = vpop.f32.mrb[0].mxu0
      %v9106 = vadd.f32 %v8539, %v9105
      %v9107 = vpop.f32.mrb[0].mxu0
      %9108 = vmatprep.mubr.bf16.mxu0 0
      %9109 = vmatmul.mubr.bf16.gmra.mrb[0].mxu0 %v8685
      %v9110 = vpop.f32.mrb[0].mxu0
      %v9111 = vadd.f32 %v8539, %v9110
      %v9112 = vpop.f32.mrb[0].mxu0
      %v9113 = vpop.f32.mrb[0].mxu0
      %v9114 = vadd.f32 %v8539, %v9113
      %v9115 = vpop.f32.mrb[0].mxu0
      %9116 = vmatprep.mubr.bf16.mxu0 0
      %9117 = vmatmul.mubr.bf16.gmra.mrb[0].mxu0 %v8688
      %v9118 = vpop.f32.mrb[0].mxu0
      %v9119 = vadd.f32 %v8539, %v9118
      %v9120 = vpop.f32.mrb[0].mxu0
      %v9121 = vpop.f32.mrb[0].mxu0
      %v9122 = vadd.f32 %v8539, %v9121
      %v9123 = vpop.f32.mrb[0].mxu0
      %9124 = vmatprep.mubr.bf16.mxu0 0
      %9125 = vmatmul.mubr.bf16.gmra.mrb[0].mxu0 %v8691
      %v9126 = vpop.f32.mrb[0].mxu0
      %v9127 = vadd.f32 %v8539, %v9126
      %v9128 = vpop.f32.mrb[0].mxu0
      %v9129 = vpop.f32.mrb[0].mxu0
      %v9130 = vadd.f32 %v8539, %v9129
      %v9131 = vpop.f32.mrb[0].mxu0
      %9132 = vmatprep.mubr.bf16.mxu0 0
      %9133 = vmatmul.mubr.bf16.gmra.mrb[0].mxu0 %v8694
      %v9134 = vpop.f32.mrb[0].mxu0
      %v9135 = vadd.f32 %v8539, %v9134
      %v9136 = vpop.f32.mrb[0].mxu0
      %v9137 = vpop.f32.mrb[0].mxu0
      %v9138 = vadd.f32 %v8539, %v9137
      %v9139 = vpop.f32.mrb[0].mxu0
      %9140 = vmatprep.mubr.bf16.mxu0 0
      %9141 = vmatmul.mubr.bf16.gmra.mrb[0].mxu0 %v8697
      %v9142 = vpop.f32.mrb[0].mxu0
      %v9143 = vadd.f32 %v8539, %v9142
      %v9144 = vpop.f32.mrb[0].mxu0
      %v9145 = vpop.f32.mrb[0].mxu0
      %v9146 = vadd.f32 %v8539, %v9145
      %v9147 = vpop.f32.mrb[0].mxu0
      %9148 = vmatprep.mubr.bf16.mxu0 0
      %9149 = vmatmul.mubr.bf16.gmra.mrb[0].mxu0 %v8700
      %v9150 = vpop.f32.mrb[0].mxu0
      %v9151 = vadd.f32 %v8539, %v9150
      %v9152 = vpop.f32.mrb[0].mxu0
      %v9153 = vpop.f32.mrb[0].mxu0
      %v9154 = vadd.f32 %v8539, %v9153
      %v9155 = vpop.f32.mrb[0].mxu0
      %9156 = vmatprep.mubr.bf16.mxu0 0
      %9157 = vmatmul.mubr.bf16.gmra.mrb[0].mxu0 %v8703
      %v9158 = vpop.f32.mrb[0].mxu0
      %v9159 = vadd.f32 %v8539, %v9158
      %v9160 = vpop.f32.mrb[0].mxu0
      %v9161 = vpop.f32.mrb[0].mxu0
      %v9162 = vadd.f32 %v8539, %v9161
      %v9163 = vpop.f32.mrb[0].mxu0
      %9164 = vmatprep.mubr.bf16.mxu0 0
      %9165 = vmatmul.mubr.bf16.gmra.mrb[0].mxu0 %v8706
      %v9166 = vpop.f32.mrb[0].mxu0
      %v9167 = vadd.f32 %v8539, %v9166
      %v9168 = vpop.f32.mrb[0].mxu0
      %v9169 = vpop.f32.mrb[0].mxu0
      %v9170 = vadd.f32 %v8539, %v9169
      %v9171 = vpop.f32.mrb[0].mxu0
      %9172 = vmatprep.mubr.bf16.mxu0 0
      %9173 = vmatmul.mubr.bf16.gmra.mrb[0].mxu0 %v8709
      %v9174 = vpop.f32.mrb[0].mxu0
      %v9175 = vadd.f32 %v8539, %v9174
      %v9176 = vpop.f32.mrb[0].mxu0
      %v9177 = vpop.f32.mrb[0].mxu0
      %v9178 = vadd.f32 %v8539, %v9177
      %v9179 = vpop.f32.mrb[0].mxu0
      %9180 = vmatprep.mubr.bf16.mxu0 0
      %9181 = vmatmul.mubr.bf16.gmra.mrb[0].mxu0 %v8712
      %v9182 = vpop.f32.mrb[0].mxu0
      %v9183 = vadd.f32 %v8539, %v9182
      %v9184 = vpop.f32.mrb[0].mxu0
      %v9185 = vpop.f32.mrb[0].mxu0
      %v9186 = vadd.f32 %v8539, %v9185
      %v9187 = vpop.f32.mrb[0].mxu0
      %9188 = vmatprep.mubr.bf16.mxu0 0
      %9189 = vmatmul.mubr.bf16.gmra.mrb[0].mxu0 %v8715
      %v9190 = vpop.f32.mrb[0].mxu0
      %v9191 = vadd.f32 %v8539, %v9190
      %v9192 = vpop.f32.mrb[0].mxu0
      %v9193 = vpop.f32.mrb[0].mxu0
      %v9194 = vadd.f32 %v8539, %v9193
      %v9195 = vpop.f32.mrb[0].mxu0
      %9196 = vmatprep.mubr.bf16.mxu0 0
      %9197 = vmatmul.mubr.bf16.gmra.mrb[0].mxu0 %v8718
      %v9198 = vpop.f32.mrb[0].mxu0
      %v9199 = vadd.f32 %v8539, %v9198
      %v9200 = vpop.f32.mrb[0].mxu0
      %v9201 = vpop.f32.mrb[0].mxu0
      %v9202 = vadd.f32 %v8539, %v9201
      %v9203 = vpop.f32.mrb[0].mxu0
      %9204 = vmatprep.mubr.bf16.mxu0 0
      %9205 = vmatmul.mubr.bf16.gmra.mrb[0].mxu0 %v8721
      %v9206 = vpop.f32.mrb[0].mxu0
      %v9207 = vadd.f32 %v8539, %v9206
      %v9208 = vpop.f32.mrb[0].mxu0
      %v9209 = vpop.f32.mrb[0].mxu0
      %v9210 = vadd.f32 %v8539, %v9209
      %v9211 = vpop.f32.mrb[0].mxu0
      %9212 = vmatprep.mubr.bf16.mxu0 0
      %9213 = vmatmul.mubr.bf16.gmra.mrb[0].mxu0 %v8724
      %v9214 = vpop.f32.mrb[0].mxu0
      %v9215 = vadd.f32 %v8539, %v9214
      %v9216 = vpop.f32.mrb[0].mxu0
      %v9217 = vpop.f32.mrb[0].mxu0
      %v9218 = vadd.f32 %v8539, %v9217
      %v9219 = vpop.f32.mrb[0].mxu0
      %9220 = vmatprep.mubr.bf16.mxu0 0
      %9221 = vmatmul.mubr.bf16.gmra.mrb[0].mxu0 %v8727
      %v9222 = vpop.f32.mrb[0].mxu0
      %v9223 = vadd.f32 %v8539, %v9222
      %v9224 = vpop.f32.mrb[0].mxu0
      %v9225 = vpop.f32.mrb[0].mxu0
      %v9226 = vadd.f32 %v8539, %v9225
      %v9227 = vpop.f32.mrb[0].mxu0
      %9228 = vmatprep.mubr.bf16.mxu0 0
      %9229 = vmatmul.mubr.bf16.gmra.mrb[0].mxu0 %v8730
      %v9230 = vpop.f32.mrb[0].mxu0
      %v9231 = vadd.f32 %v8539, %v9230
      %v9232 = vpop.f32.mrb[0].mxu0
      %v9233 = vpop.f32.mrb[0].mxu0
      %v9234 = vadd.f32 %v8539, %v9233
      %v9235 = vpop.f32.mrb[0].mxu0
      %9236 = vmatprep.mubr.bf16.mxu0 0
      %9237 = vmatmul.mubr.bf16.gmra.mrb[0].mxu0 %v8733
      %v9238 = vpop.f32.mrb[0].mxu0
      %v9239 = vadd.f32 %v8539, %v9238
      %v9240 = vpop.f32.mrb[0].mxu0
      %v9241 = vpop.f32.mrb[0].mxu0
      %v9242 = vadd.f32 %v8539, %v9241
      %v9243 = vpop.f32.mrb[0].mxu0
      %9244 = vmatprep.mubr.bf16.mxu0 0
      %9245 = vmatmul.mubr.bf16.gmra.mrb[0].mxu0 %v8736
      %v9246 = vpop.f32.mrb[0].mxu0
      %v9247 = vadd.f32 %v8539, %v9246
      %v9248 = vpop.f32.mrb[0].mxu0
      %v9249 = vpop.f32.mrb[0].mxu0
      %v9250 = vadd.f32 %v8539, %v9249
      %v9251 = vpop.f32.mrb[0].mxu0
      %9252 = vmatprep.mubr.bf16.mxu0 0
      %9253 = vmatmul.mubr.bf16.gmra.mrb[0].mxu0 %v8739
      %v9254 = vpop.f32.mrb[0].mxu0
      %v9255 = vadd.f32 %v8539, %v9254
      %v9256 = vpop.f32.mrb[0].mxu0
      %v9257 = vpop.f32.mrb[0].mxu0
      %v9258 = vadd.f32 %v8539, %v9257
      %v9259 = vpop.f32.mrb[0].mxu0
      %9260 = vmatprep.mubr.bf16.mxu0 0
      %9261 = vmatmul.mubr.bf16.gmra.mrb[0].mxu0 %v8742
      %v9262 = vpop.f32.mrb[0].mxu0
      %v9263 = vadd.f32 %v8539, %v9262
      %v9264 = vpop.f32.mrb[0].mxu0
      %v9265 = vpop.f32.mrb[0].mxu0
      %v9266 = vadd.f32 %v8539, %v9265
      %v9267 = vpop.f32.mrb[0].mxu0
      %9268 = vmatprep.mubr.bf16.mxu0 0
      %9269 = vmatmul.mubr.bf16.gmra.mrb[0].mxu0 %v8745
      %v9270 = vpop.f32.mrb[0].mxu0
      %v9271 = vadd.f32 %v8539, %v9270
      %v9272 = vpop.f32.mrb[0].mxu0
      %v9273 = vpop.f32.mrb[0].mxu0
      %v9274 = vadd.f32 %v8539, %v9273
      %v9275 = vpop.f32.mrb[0].mxu0
      %9276 = vmatprep.mubr.bf16.mxu0 0
      %9277 = vmatmul.mubr.bf16.gmra.mrb[0].mxu0 %v8748
      %v9278 = vpop.f32.mrb[0].mxu0
      %v9279 = vadd.f32 %v8539, %v9278
      %v9280 = vpop.f32.mrb[0].mxu0
      %v9281 = vpop.f32.mrb[0].mxu0
      %v9282 = vadd.f32 %v8539, %v9281
      %v9283 = vpop.f32.mrb[0].mxu0
      %9284 = vmatprep.mubr.bf16.mxu0 0
      %9285 = vmatmul.mubr.bf16.gmra.mrb[0].mxu0 %v8751
      %v9286 = vpop.f32.mrb[0].mxu0
      %v9287 = vadd.f32 %v8539, %v9286
      %v9288 = vpop.f32.mrb[0].mxu0
      %v9289 = vpop.f32.mrb[0].mxu0
      %v9290 = vadd.f32 %v8539, %v9289
      %v9291 = vpop.f32.mrb[0].mxu0
      %9292 = vmatprep.mubr.bf16.mxu0 0
      %9293 = vmatmul.mubr.bf16.gmra.mrb[0].mxu0 %v8754
      %v9294 = vpop.f32.mrb[0].mxu0
      %v9295 = vadd.f32 %v8539, %v9294
      %v9296 = vpop.f32.mrb[0].mxu0
      %v9297 = vpop.f32.mrb[0].mxu0
      %v9298 = vadd.f32 %v8539, %v9297
      %v9299 = vpop.f32.mrb[0].mxu0
      %9300 = vdwg.mxu0
      %v9301 = vmax.f32 %v8791, 0.0
      %v9302 = vmax.f32 %v8794, 0.0
      %v9303 = vmax.f32 %v8799, 0.0
      %v9304 = vmax.f32 %v8802, 0.0
      %v9305 = vmax.f32 %v8807, 0.0
      %v9306 = vmax.f32 %v8810, 0.0
      %v9307 = vmax.f32 %v8815, 0.0
      %v9308 = vmax.f32 %v8818, 0.0
      %v9309 = vmax.f32 %v8823, 0.0
      %v9310 = vmax.f32 %v8826, 0.0
      %v9311 = vmax.f32 %v8831, 0.0
      %v9312 = vmax.f32 %v8834, 0.0
      %v9313 = vmax.f32 %v8839, 0.0
      %v9314 = vmax.f32 %v8842, 0.0
      %v9315 = vmax.f32 %v8847, 0.0
      %v9316 = vmax.f32 %v8850, 0.0
      %v9317 = vmax.f32 %v8855, 0.0
      %v9318 = vmax.f32 %v8858, 0.0
      %v9319 = vmax.f32 %v8863, 0.0
      %v9320 = vmax.f32 %v8866, 0.0
      %v9321 = vmax.f32 %v8871, 0.0
      %v9322 = vmax.f32 %v8874, 0.0
      %v9323 = vmax.f32 %v8879, 0.0
      %v9324 = vmax.f32 %v8882, 0.0
      %v9325 = vmax.f32 %v8887, 0.0
      %v9326 = vmax.f32 %v8890, 0.0
      %v9327 = vmax.f32 %v8895, 0.0
      %v9328 = vmax.f32 %v8898, 0.0
      %v9329 = vmax.f32 %v8903, 0.0
      %v9330 = vmax.f32 %v8906, 0.0
      %v9331 = vmax.f32 %v8911, 0.0
      %v9332 = vmax.f32 %v8914, 0.0
      %v9333 = vmax.f32 %v8919, 0.0
      %v9334 = vmax.f32 %v8922, 0.0
      %v9335 = vmax.f32 %v8927, 0.0
      %v9336 = vmax.f32 %v8930, 0.0
      %v9337 = vmax.f32 %v8935, 0.0
      %v9338 = vmax.f32 %v8938, 0.0
      %v9339 = vmax.f32 %v8943, 0.0
      %v9340 = vmax.f32 %v8946, 0.0
      %v9341 = vmax.f32 %v8951, 0.0
      %v9342 = vmax.f32 %v8954, 0.0
      %v9343 = vmax.f32 %v8959, 0.0
      %v9344 = vmax.f32 %v8962, 0.0
      %v9345 = vmax.f32 %v8967, 0.0
      %v9346 = vmax.f32 %v8970, 0.0
      %v9347 = vmax.f32 %v8975, 0.0
      %v9348 = vmax.f32 %v8978, 0.0
      %v9349 = vmax.f32 %v8983, 0.0
      %v9350 = vmax.f32 %v8986, 0.0
      %v9351 = vmax.f32 %v8991, 0.0
      %v9352 = vmax.f32 %v8994, 0.0
      %v9353 = vmax.f32 %v8999, 0.0
      %v9354 = vmax.f32 %v9002, 0.0
      %v9355 = vmax.f32 %v9007, 0.0
      %v9356 = vmax.f32 %v9010, 0.0
      %v9357 = vmax.f32 %v9015, 0.0
      %v9358 = vmax.f32 %v9018, 0.0
      %v9359 = vmax.f32 %v9023, 0.0
      %v9360 = vmax.f32 %v9026, 0.0
      %v9361 = vmax.f32 %v9031, 0.0
      %v9362 = vmax.f32 %v9034, 0.0
      %v9363 = vmax.f32 %v9039, 0.0
      %v9364 = vmax.f32 %v9042, 0.0
      %v9365 = vmax.f32 %v9047, 0.0
      %v9366 = vmax.f32 %v9050, 0.0
      %v9367 = vmax.f32 %v9055, 0.0
      %v9368 = vmax.f32 %v9058, 0.0
      %v9369 = vmax.f32 %v9063, 0.0
      %v9370 = vmax.f32 %v9066, 0.0
      %v9371 = vmax.f32 %v9071, 0.0
      %v9372 = vmax.f32 %v9074, 0.0
      %v9373 = vmax.f32 %v9079, 0.0
      %v9374 = vmax.f32 %v9082, 0.0
      %v9375 = vmax.f32 %v9087, 0.0
      %v9376 = vmax.f32 %v9090, 0.0
      %v9377 = vmax.f32 %v9095, 0.0
      %v9378 = vmax.f32 %v9098, 0.0
      %v9379 = vmax.f32 %v9103, 0.0
      %v9380 = vmax.f32 %v9106, 0.0
      %v9381 = vmax.f32 %v9111, 0.0
      %v9382 = vmax.f32 %v9114, 0.0
      %v9383 = vmax.f32 %v9119, 0.0
      %v9384 = vmax.f32 %v9122, 0.0
      %v9385 = vmax.f32 %v9127, 0.0
      %v9386 = vmax.f32 %v9130, 0.0
      %v9387 = vmax.f32 %v9135, 0.0
      %v9388 = vmax.f32 %v9138, 0.0
      %v9389 = vmax.f32 %v9143, 0.0
      %v9390 = vmax.f32 %v9146, 0.0
      %v9391 = vmax.f32 %v9151, 0.0
      %v9392 = vmax.f32 %v9154, 0.0
      %v9393 = vmax.f32 %v9159, 0.0
      %v9394 = vmax.f32 %v9162, 0.0
      %v9395 = vmax.f32 %v9167, 0.0
      %v9396 = vmax.f32 %v9170, 0.0
      %v9397 = vmax.f32 %v9175, 0.0
      %v9398 = vmax.f32 %v9178, 0.0
      %v9399 = vmax.f32 %v9183, 0.0
      %v9400 = vmax.f32 %v9186, 0.0
      %v9401 = vmax.f32 %v9191, 0.0
      %v9402 = vmax.f32 %v9194, 0.0
      %v9403 = vmax.f32 %v9199, 0.0
      %v9404 = vmax.f32 %v9202, 0.0
      %v9405 = vmax.f32 %v9207, 0.0
      %v9406 = vmax.f32 %v9210, 0.0
      %v9407 = vmax.f32 %v9215, 0.0
      %v9408 = vmax.f32 %v9218, 0.0
      %v9409 = vmax.f32 %v9223, 0.0
      %v9410 = vmax.f32 %v9226, 0.0
      %v9411 = vmax.f32 %v9231, 0.0
      %v9412 = vmax.f32 %v9234, 0.0
      %v9413 = vmax.f32 %v9239, 0.0
      %v9414 = vmax.f32 %v9242, 0.0
      %v9415 = vmax.f32 %v9247, 0.0
      %v9416 = vmax.f32 %v9250, 0.0
      %v9417 = vmax.f32 %v9255, 0.0
      %v9418 = vmax.f32 %v9258, 0.0
      %v9419 = vmax.f32 %v9263, 0.0
      %v9420 = vmax.f32 %v9266, 0.0
      %v9421 = vmax.f32 %v9271, 0.0
      %v9422 = vmax.f32 %v9274, 0.0
      %v9423 = vmax.f32 %v9279, 0.0
      %v9424 = vmax.f32 %v9282, 0.0
      %v9425 = vmax.f32 %v9287, 0.0
      %v9426 = vmax.f32 %v9290, 0.0
      %v9427 = vmax.f32 %v9295, 0.0
      %v9428 = vmax.f32 %v9298, 0.0
      %v9429 = vld [vmem:[%s4] sm:$0xf]
      %v9430 = vld [vmem:[%s4 + $0x4] sm:$0xf]
      %v9431 = vld [vmem:[%s4 + $0x8] sm:$0xf]
      %v9432 = vld [vmem:[%s4 + $0xc] sm:$0xf]
      %v9433 = vld [vmem:[%s4 + $0x10] sm:$0xf]
      %v9434 = vld [vmem:[%s4 + $0x14] sm:$0xf]
      %v9435 = vld [vmem:[%s4 + $0x18] sm:$0xf]
      %v9436 = vld [vmem:[%s4 + $0x1c] sm:$0xf]
      %v9437 = vpack.c.bf16 %v9302, %v9301
      %v9438 = vpack.c.bf16 %v9304, %v9303
      %v9439 = vpack.c.bf16 %v9306, %v9305
      %v9440 = vpack.c.bf16 %v9308, %v9307
      %v9441 = vpack.c.bf16 %v9310, %v9309
      %v9442 = vpack.c.bf16 %v9312, %v9311
      %v9443 = vpack.c.bf16 %v9314, %v9313
      %v9444 = vpack.c.bf16 %v9316, %v9315
      %v9445 = vpack.c.bf16 %v9318, %v9317
      %v9446 = vpack.c.bf16 %v9320, %v9319
      %v9447 = vpack.c.bf16 %v9322, %v9321
      %v9448 = vpack.c.bf16 %v9324, %v9323
      %v9449 = vpack.c.bf16 %v9326, %v9325
      %v9450 = vpack.c.bf16 %v9328, %v9327
      %v9451 = vpack.c.bf16 %v9330, %v9329
      %v9452 = vpack.c.bf16 %v9332, %v9331
      %v9453 = vpack.c.bf16 %v9334, %v9333
      %v9454 = vpack.c.bf16 %v9336, %v9335
      %v9455 = vpack.c.bf16 %v9338, %v9337
      %v9456 = vpack.c.bf16 %v9340, %v9339
      %v9457 = vpack.c.bf16 %v9342, %v9341
      %v9458 = vpack.c.bf16 %v9344, %v9343
      %v9459 = vpack.c.bf16 %v9346, %v9345
      %v9460 = vpack.c.bf16 %v9348, %v9347
      %v9461 = vpack.c.bf16 %v9350, %v9349
      %v9462 = vpack.c.bf16 %v9352, %v9351
      %v9463 = vpack.c.bf16 %v9354, %v9353
      %v9464 = vpack.c.bf16 %v9356, %v9355
      %v9465 = vpack.c.bf16 %v9358, %v9357
      %v9466 = vpack.c.bf16 %v9360, %v9359
      %v9467 = vpack.c.bf16 %v9362, %v9361
      %v9468 = vpack.c.bf16 %v9364, %v9363
      %v9469 = vpack.c.bf16 %v9366, %v9365
      %v9470 = vpack.c.bf16 %v9368, %v9367
      %v9471 = vpack.c.bf16 %v9370, %v9369
      %v9472 = vpack.c.bf16 %v9372, %v9371
      %v9473 = vpack.c.bf16 %v9374, %v9373
      %v9474 = vpack.c.bf16 %v9376, %v9375
      %v9475 = vpack.c.bf16 %v9378, %v9377
      %v9476 = vpack.c.bf16 %v9380, %v9379
      %v9477 = vpack.c.bf16 %v9382, %v9381
      %v9478 = vpack.c.bf16 %v9384, %v9383
      %v9479 = vpack.c.bf16 %v9386, %v9385
      %v9480 = vpack.c.bf16 %v9388, %v9387
      %v9481 = vpack.c.bf16 %v9390, %v9389
      %v9482 = vpack.c.bf16 %v9392, %v9391
      %v9483 = vpack.c.bf16 %v9394, %v9393
      %v9484 = vpack.c.bf16 %v9396, %v9395
      %v9485 = vpack.c.bf16 %v9398, %v9397
      %v9486 = vpack.c.bf16 %v9400, %v9399
      %v9487 = vpack.c.bf16 %v9402, %v9401
      %v9488 = vpack.c.bf16 %v9404, %v9403
      %v9489 = vpack.c.bf16 %v9406, %v9405
      %v9490 = vpack.c.bf16 %v9408, %v9407
      %v9491 = vpack.c.bf16 %v9410, %v9409
      %v9492 = vpack.c.bf16 %v9412, %v9411
      %v9493 = vpack.c.bf16 %v9414, %v9413
      %v9494 = vpack.c.bf16 %v9416, %v9415
      %v9495 = vpack.c.bf16 %v9418, %v9417
      %v9496 = vpack.c.bf16 %v9420, %v9419
      %v9497 = vpack.c.bf16 %v9422, %v9421
      %v9498 = vpack.c.bf16 %v9424, %v9423
      %v9499 = vpack.c.bf16 %v9426, %v9425
      %v9500 = vpack.c.bf16 %v9428, %v9427
      %v9501 = vld [vmem:[%s5] sm:$0x1]
      %v9503 = vlaneseq
      %v9504 = vshrl.u32 %v9503, 7
      %v9505 = vsub.s32 0, %v9504
      %v9506 = vrot.slane %v9501, %v9505
      %v9516 = vunpack.c.l.b16 %v9429
      %v9517 = vunpack.c.l.b16 %v9430
      %v9518 = vunpack.c.l.b16 %v9431
      %v9519 = vunpack.c.l.b16 %v9432
      %v9520 = vunpack.c.l.b16 %v9433
      %v9521 = vunpack.c.l.b16 %v9434
      %v9522 = vunpack.c.l.b16 %v9435
      %v9523 = vunpack.c.l.b16 %v9436
      %v9524 = vpack.c.b16 %v9517, %v9516
      %v9525 = vpack.c.b16 %v9519, %v9518
      %v9526 = vpack.c.b16 %v9521, %v9520
      %v9527 = vpack.c.b16 %v9523, %v9522
      %v9533 = vsel %vm1797, %v9437, 0
      %v9536 = vsel %vm1797, %v9438, 0
      %v9539 = vsel %vm1797, %v9439, 0
      %v9542 = vsel %vm1797, %v9440, 0
      %v9545 = vsel %vm1797, %v9441, 0
      %v9548 = vsel %vm1797, %v9442, 0
      %v9551 = vsel %vm1797, %v9443, 0
      %v9554 = vsel %vm1797, %v9444, 0
      %v9557 = vsel %vm1797, %v9445, 0
      %v9560 = vsel %vm1797, %v9446, 0
      %v9563 = vsel %vm1797, %v9447, 0
      %v9566 = vsel %vm1797, %v9448, 0
      %v9569 = vsel %vm1797, %v9449, 0
      %v9572 = vsel %vm1797, %v9450, 0
      %v9575 = vsel %vm1797, %v9451, 0
      %v9578 = vsel %vm1797, %v9452, 0
      %v9581 = vsel %vm1797, %v9453, 0
      %v9584 = vsel %vm1797, %v9454, 0
      %v9587 = vsel %vm1797, %v9455, 0
      %v9590 = vsel %vm1797, %v9456, 0
      %v9593 = vsel %vm1797, %v9457, 0
      %v9596 = vsel %vm1797, %v9458, 0
      %v9599 = vsel %vm1797, %v9459, 0
      %v9602 = vsel %vm1797, %v9460, 0
      %v9605 = vsel %vm1797, %v9461, 0
      %v9608 = vsel %vm1797, %v9462, 0
      %v9611 = vsel %vm1797, %v9463, 0
      %v9614 = vsel %vm1797, %v9464, 0
      %v9617 = vsel %vm1797, %v9465, 0
      %v9620 = vsel %vm1797, %v9466, 0
      %v9623 = vsel %vm1797, %v9467, 0
      %v9626 = vsel %vm1797, %v9468, 0
      %v9629 = vsel %vm1797, %v9469, 0
      %v9632 = vsel %vm1797, %v9470, 0
      %v9635 = vsel %vm1797, %v9471, 0
      %v9638 = vsel %vm1797, %v9472, 0
      %v9641 = vsel %vm1797, %v9473, 0
      %v9644 = vsel %vm1797, %v9474, 0
      %v9647 = vsel %vm1797, %v9475, 0
      %v9650 = vsel %vm1797, %v9476, 0
      %v9653 = vsel %vm1797, %v9477, 0
      %v9656 = vsel %vm1797, %v9478, 0
      %v9659 = vsel %vm1797, %v9479, 0
      %v9662 = vsel %vm1797, %v9480, 0
      %v9665 = vsel %vm1797, %v9481, 0
      %v9668 = vsel %vm1797, %v9482, 0
      %v9671 = vsel %vm1797, %v9483, 0
      %v9674 = vsel %vm1797, %v9484, 0
      %v9677 = vsel %vm1797, %v9485, 0
      %v9680 = vsel %vm1797, %v9486, 0
      %v9683 = vsel %vm1797, %v9487, 0
      %v9686 = vsel %vm1797, %v9488, 0
      %v9689 = vsel %vm1797, %v9489, 0
      %v9692 = vsel %vm1797, %v9490, 0
      %v9695 = vsel %vm1797, %v9491, 0
      %v9698 = vsel %vm1797, %v9492, 0
      %v9701 = vsel %vm1797, %v9493, 0
      %v9704 = vsel %vm1797, %v9494, 0
      %v9707 = vsel %vm1797, %v9495, 0
      %v9710 = vsel %vm1797, %v9496, 0
      %v9713 = vsel %vm1797, %v9497, 0
      %v9716 = vsel %vm1797, %v9498, 0
      %v9719 = vsel %vm1797, %v9499, 0
      %v9722 = vsel %vm1797, %v9500, 0
      %9724 = vmatprep.subr.bf16.mxu0 0
      %9725 = vmatpush1.bf16.msra.mxu0 %v9524
      %9726 = vmatprep.subr.bf16.mxu0 0
      %9727 = vmatpush1.bf16.msra.mxu0 %v9525
      %9728 = vmatprep.subr.bf16.mxu0 0
      %9729 = vmatpush1.bf16.msra.mxu0 %v9526
      %9730 = vmatprep.subr.bf16.mxu0 0
      %9731 = vmatpush1.bf16.msra.mxu0 %v9527
      %9732 = vmatprep.subr.bf16.mxu0 0
      %9733 = vmatpush1.bf16.msra.mxu0 0
      %9734 = vmatprep.subr.bf16.mxu0 0
      %9735 = vmatpush1.bf16.msra.mxu0 0
      %9736 = vmatprep.subr.bf16.mxu0 0
      %9737 = vmatpush1.bf16.msra.mxu0 0
      %9738 = vmatprep.subr.bf16.mxu0 0
      %9739 = vmatpush1.bf16.msra.mxu0 0
      %9740 = vmatprep.subr.bf16.mxu0 0
      %9741 = vmatpush1.bf16.msra.mxu0 0
      %9742 = vmatprep.subr.bf16.mxu0 0
      %9743 = vmatpush1.bf16.msra.mxu0 0
      %9744 = vmatprep.subr.bf16.mxu0 0
      %9745 = vmatpush1.bf16.msra.mxu0 0
      %9746 = vmatprep.subr.bf16.mxu0 0
      %9747 = vmatpush1.bf16.msra.mxu0 0
      %9748 = vmatprep.subr.bf16.mxu0 0
      %9749 = vmatpush1.bf16.msra.mxu0 0
      %9750 = vmatprep.subr.bf16.mxu0 0
      %9751 = vmatpush1.bf16.msra.mxu0 0
      %9752 = vmatprep.subr.bf16.mxu0 0
      %9753 = vmatpush1.bf16.msra.mxu0 0
      %9754 = vmatprep.subr.bf16.mxu0 0
      %9755 = vmatpush1.bf16.msra.mxu0 0
      %9756 = vmatprep.mubr.bf16.mxu0 0
      %9757 = vmatmul.mubr.bf16.gmra.mrb[0].mxu0 %v9533
      %v9758 = vpop.f32.mrb[0].mxu0
      %v9759 = vadd.f32 %v9506, %v9758
      %v9760 = vpop.f32.mrb[0].mxu0
      %v9761 = vpop.f32.mrb[0].mxu0
      %v9762 = vadd.f32 %v9506, %v9761
      %v9763 = vpop.f32.mrb[0].mxu0
      %9764 = vmatprep.mubr.bf16.mxu0 0
      %9765 = vmatmul.mubr.bf16.gmra.mrb[0].mxu0 %v9536
      %v9766 = vpop.f32.mrb[0].mxu0
      %v9767 = vadd.f32 %v9506, %v9766
      %v9768 = vpop.f32.mrb[0].mxu0
      %v9769 = vpop.f32.mrb[0].mxu0
      %v9770 = vadd.f32 %v9506, %v9769
      %v9771 = vpop.f32.mrb[0].mxu0
      %9772 = vmatprep.mubr.bf16.mxu0 0
      %9773 = vmatmul.mubr.bf16.gmra.mrb[0].mxu0 %v9539
      %v9774 = vpop.f32.mrb[0].mxu0
      %v9775 = vadd.f32 %v9506, %v9774
      %v9776 = vpop.f32.mrb[0].mxu0
      %v9777 = vpop.f32.mrb[0].mxu0
      %v9778 = vadd.f32 %v9506, %v9777
      %v9779 = vpop.f32.mrb[0].mxu0
      %9780 = vmatprep.mubr.bf16.mxu0 0
      %9781 = vmatmul.mubr.bf16.gmra.mrb[0].mxu0 %v9542
      %v9782 = vpop.f32.mrb[0].mxu0
      %v9783 = vadd.f32 %v9506, %v9782
      %v9784 = vpop.f32.mrb[0].mxu0
      %v9785 = vpop.f32.mrb[0].mxu0
      %v9786 = vadd.f32 %v9506, %v9785
      %v9787 = vpop.f32.mrb[0].mxu0
      %9788 = vmatprep.mubr.bf16.mxu0 0
      %9789 = vmatmul.mubr.bf16.gmra.mrb[0].mxu0 %v9545
      %v9790 = vpop.f32.mrb[0].mxu0
      %v9791 = vadd.f32 %v9506, %v9790
      %v9792 = vpop.f32.mrb[0].mxu0
      %v9793 = vpop.f32.mrb[0].mxu0
      %v9794 = vadd.f32 %v9506, %v9793
      %v9795 = vpop.f32.mrb[0].mxu0
      %9796 = vmatprep.mubr.bf16.mxu0 0
      %9797 = vmatmul.mubr.bf16.gmra.mrb[0].mxu0 %v9548
      %v9798 = vpop.f32.mrb[0].mxu0
      %v9799 = vadd.f32 %v9506, %v9798
      %v9800 = vpop.f32.mrb[0].mxu0
      %v9801 = vpop.f32.mrb[0].mxu0
      %v9802 = vadd.f32 %v9506, %v9801
      %v9803 = vpop.f32.mrb[0].mxu0
      %9804 = vmatprep.mubr.bf16.mxu0 0
      %9805 = vmatmul.mubr.bf16.gmra.mrb[0].mxu0 %v9551
      %v9806 = vpop.f32.mrb[0].mxu0
      %v9807 = vadd.f32 %v9506, %v9806
      %v9808 = vpop.f32.mrb[0].mxu0
      %v9809 = vpop.f32.mrb[0].mxu0
      %v9810 = vadd.f32 %v9506, %v9809
      %v9811 = vpop.f32.mrb[0].mxu0
      %9812 = vmatprep.mubr.bf16.mxu0 0
      %9813 = vmatmul.mubr.bf16.gmra.mrb[0].mxu0 %v9554
      %v9814 = vpop.f32.mrb[0].mxu0
      %v9815 = vadd.f32 %v9506, %v9814
      %v9816 = vpop.f32.mrb[0].mxu0
      %v9817 = vpop.f32.mrb[0].mxu0
      %v9818 = vadd.f32 %v9506, %v9817
      %v9819 = vpop.f32.mrb[0].mxu0
      %9820 = vmatprep.mubr.bf16.mxu0 0
      %9821 = vmatmul.mubr.bf16.gmra.mrb[0].mxu0 %v9557
      %v9822 = vpop.f32.mrb[0].mxu0
      %v9823 = vadd.f32 %v9506, %v9822
      %v9824 = vpop.f32.mrb[0].mxu0
      %v9825 = vpop.f32.mrb[0].mxu0
      %v9826 = vadd.f32 %v9506, %v9825
      %v9827 = vpop.f32.mrb[0].mxu0
      %9828 = vmatprep.mubr.bf16.mxu0 0
      %9829 = vmatmul.mubr.bf16.gmra.mrb[0].mxu0 %v9560
      %v9830 = vpop.f32.mrb[0].mxu0
      %v9831 = vadd.f32 %v9506, %v9830
      %v9832 = vpop.f32.mrb[0].mxu0
      %v9833 = vpop.f32.mrb[0].mxu0
      %v9834 = vadd.f32 %v9506, %v9833
      %v9835 = vpop.f32.mrb[0].mxu0
      %9836 = vmatprep.mubr.bf16.mxu0 0
      %9837 = vmatmul.mubr.bf16.gmra.mrb[0].mxu0 %v9563
      %v9838 = vpop.f32.mrb[0].mxu0
      %v9839 = vadd.f32 %v9506, %v9838
      %v9840 = vpop.f32.mrb[0].mxu0
      %v9841 = vpop.f32.mrb[0].mxu0
      %v9842 = vadd.f32 %v9506, %v9841
      %v9843 = vpop.f32.mrb[0].mxu0
      %9844 = vmatprep.mubr.bf16.mxu0 0
      %9845 = vmatmul.mubr.bf16.gmra.mrb[0].mxu0 %v9566
      %v9846 = vpop.f32.mrb[0].mxu0
      %v9847 = vadd.f32 %v9506, %v9846
      %v9848 = vpop.f32.mrb[0].mxu0
      %v9849 = vpop.f32.mrb[0].mxu0
      %v9850 = vadd.f32 %v9506, %v9849
      %v9851 = vpop.f32.mrb[0].mxu0
      %9852 = vmatprep.mubr.bf16.mxu0 0
      %9853 = vmatmul.mubr.bf16.gmra.mrb[0].mxu0 %v9569
      %v9854 = vpop.f32.mrb[0].mxu0
      %v9855 = vadd.f32 %v9506, %v9854
      %v9856 = vpop.f32.mrb[0].mxu0
      %v9857 = vpop.f32.mrb[0].mxu0
      %v9858 = vadd.f32 %v9506, %v9857
      %v9859 = vpop.f32.mrb[0].mxu0
      %9860 = vmatprep.mubr.bf16.mxu0 0
      %9861 = vmatmul.mubr.bf16.gmra.mrb[0].mxu0 %v9572
      %v9862 = vpop.f32.mrb[0].mxu0
      %v9863 = vadd.f32 %v9506, %v9862
      %v9864 = vpop.f32.mrb[0].mxu0
      %v9865 = vpop.f32.mrb[0].mxu0
      %v9866 = vadd.f32 %v9506, %v9865
      %v9867 = vpop.f32.mrb[0].mxu0
      %9868 = vmatprep.mubr.bf16.mxu0 0
      %9869 = vmatmul.mubr.bf16.gmra.mrb[0].mxu0 %v9575
      %v9870 = vpop.f32.mrb[0].mxu0
      %v9871 = vadd.f32 %v9506, %v9870
      %v9872 = vpop.f32.mrb[0].mxu0
      %v9873 = vpop.f32.mrb[0].mxu0
      %v9874 = vadd.f32 %v9506, %v9873
      %v9875 = vpop.f32.mrb[0].mxu0
      %9876 = vmatprep.mubr.bf16.mxu0 0
      %9877 = vmatmul.mubr.bf16.gmra.mrb[0].mxu0 %v9578
      %v9878 = vpop.f32.mrb[0].mxu0
      %v9879 = vadd.f32 %v9506, %v9878
      %v9880 = vpop.f32.mrb[0].mxu0
      %v9881 = vpop.f32.mrb[0].mxu0
      %v9882 = vadd.f32 %v9506, %v9881
      %v9883 = vpop.f32.mrb[0].mxu0
      %9884 = vmatprep.mubr.bf16.mxu0 0
      %9885 = vmatmul.mubr.bf16.gmra.mrb[0].mxu0 %v9581
      %v9886 = vpop.f32.mrb[0].mxu0
      %v9887 = vadd.f32 %v9506, %v9886
      %v9888 = vpop.f32.mrb[0].mxu0
      %v9889 = vpop.f32.mrb[0].mxu0
      %v9890 = vadd.f32 %v9506, %v9889
      %v9891 = vpop.f32.mrb[0].mxu0
      %9892 = vmatprep.mubr.bf16.mxu0 0
      %9893 = vmatmul.mubr.bf16.gmra.mrb[0].mxu0 %v9584
      %v9894 = vpop.f32.mrb[0].mxu0
      %v9895 = vadd.f32 %v9506, %v9894
      %v9896 = vpop.f32.mrb[0].mxu0
      %v9897 = vpop.f32.mrb[0].mxu0
      %v9898 = vadd.f32 %v9506, %v9897
      %v9899 = vpop.f32.mrb[0].mxu0
      %9900 = vmatprep.mubr.bf16.mxu0 0
      %9901 = vmatmul.mubr.bf16.gmra.mrb[0].mxu0 %v9587
      %v9902 = vpop.f32.mrb[0].mxu0
      %v9903 = vadd.f32 %v9506, %v9902
      %v9904 = vpop.f32.mrb[0].mxu0
      %v9905 = vpop.f32.mrb[0].mxu0
      %v9906 = vadd.f32 %v9506, %v9905
      %v9907 = vpop.f32.mrb[0].mxu0
      %9908 = vmatprep.mubr.bf16.mxu0 0
      %9909 = vmatmul.mubr.bf16.gmra.mrb[0].mxu0 %v9590
      %v9910 = vpop.f32.mrb[0].mxu0
      %v9911 = vadd.f32 %v9506, %v9910
      %v9912 = vpop.f32.mrb[0].mxu0
      %v9913 = vpop.f32.mrb[0].mxu0
      %v9914 = vadd.f32 %v9506, %v9913
      %v9915 = vpop.f32.mrb[0].mxu0
      %9916 = vmatprep.mubr.bf16.mxu0 0
      %9917 = vmatmul.mubr.bf16.gmra.mrb[0].mxu0 %v9593
      %v9918 = vpop.f32.mrb[0].mxu0
      %v9919 = vadd.f32 %v9506, %v9918
      %v9920 = vpop.f32.mrb[0].mxu0
      %v9921 = vpop.f32.mrb[0].mxu0
      %v9922 = vadd.f32 %v9506, %v9921
      %v9923 = vpop.f32.mrb[0].mxu0
      %9924 = vmatprep.mubr.bf16.mxu0 0
      %9925 = vmatmul.mubr.bf16.gmra.mrb[0].mxu0 %v9596
      %v9926 = vpop.f32.mrb[0].mxu0
      %v9927 = vadd.f32 %v9506, %v9926
      %v9928 = vpop.f32.mrb[0].mxu0
      %v9929 = vpop.f32.mrb[0].mxu0
      %v9930 = vadd.f32 %v9506, %v9929
      %v9931 = vpop.f32.mrb[0].mxu0
      %9932 = vmatprep.mubr.bf16.mxu0 0
      %9933 = vmatmul.mubr.bf16.gmra.mrb[0].mxu0 %v9599
      %v9934 = vpop.f32.mrb[0].mxu0
      %v9935 = vadd.f32 %v9506, %v9934
      %v9936 = vpop.f32.mrb[0].mxu0
      %v9937 = vpop.f32.mrb[0].mxu0
      %v9938 = vadd.f32 %v9506, %v9937
      %v9939 = vpop.f32.mrb[0].mxu0
      %9940 = vmatprep.mubr.bf16.mxu0 0
      %9941 = vmatmul.mubr.bf16.gmra.mrb[0].mxu0 %v9602
      %v9942 = vpop.f32.mrb[0].mxu0
      %v9943 = vadd.f32 %v9506, %v9942
      %v9944 = vpop.f32.mrb[0].mxu0
      %v9945 = vpop.f32.mrb[0].mxu0
      %v9946 = vadd.f32 %v9506, %v9945
      %v9947 = vpop.f32.mrb[0].mxu0
      %9948 = vmatprep.mubr.bf16.mxu0 0
      %9949 = vmatmul.mubr.bf16.gmra.mrb[0].mxu0 %v9605
      %v9950 = vpop.f32.mrb[0].mxu0
      %v9951 = vadd.f32 %v9506, %v9950
      %v9952 = vpop.f32.mrb[0].mxu0
      %v9953 = vpop.f32.mrb[0].mxu0
      %v9954 = vadd.f32 %v9506, %v9953
      %v9955 = vpop.f32.mrb[0].mxu0
      %9956 = vmatprep.mubr.bf16.mxu0 0
      %9957 = vmatmul.mubr.bf16.gmra.mrb[0].mxu0 %v9608
      %v9958 = vpop.f32.mrb[0].mxu0
      %v9959 = vadd.f32 %v9506, %v9958
      %v9960 = vpop.f32.mrb[0].mxu0
      %v9961 = vpop.f32.mrb[0].mxu0
      %v9962 = vadd.f32 %v9506, %v9961
      %v9963 = vpop.f32.mrb[0].mxu0
      %9964 = vmatprep.mubr.bf16.mxu0 0
      %9965 = vmatmul.mubr.bf16.gmra.mrb[0].mxu0 %v9611
      %v9966 = vpop.f32.mrb[0].mxu0
      %v9967 = vadd.f32 %v9506, %v9966
      %v9968 = vpop.f32.mrb[0].mxu0
      %v9969 = vpop.f32.mrb[0].mxu0
      %v9970 = vadd.f32 %v9506, %v9969
      %v9971 = vpop.f32.mrb[0].mxu0
      %9972 = vmatprep.mubr.bf16.mxu0 0
      %9973 = vmatmul.mubr.bf16.gmra.mrb[0].mxu0 %v9614
      %v9974 = vpop.f32.mrb[0].mxu0
      %v9975 = vadd.f32 %v9506, %v9974
      %v9976 = vpop.f32.mrb[0].mxu0
      %v9977 = vpop.f32.mrb[0].mxu0
      %v9978 = vadd.f32 %v9506, %v9977
      %v9979 = vpop.f32.mrb[0].mxu0
      %9980 = vmatprep.mubr.bf16.mxu0 0
      %9981 = vmatmul.mubr.bf16.gmra.mrb[0].mxu0 %v9617
      %v9982 = vpop.f32.mrb[0].mxu0
      %v9983 = vadd.f32 %v9506, %v9982
      %v9984 = vpop.f32.mrb[0].mxu0
      %v9985 = vpop.f32.mrb[0].mxu0
      %v9986 = vadd.f32 %v9506, %v9985
      %v9987 = vpop.f32.mrb[0].mxu0
      %9988 = vmatprep.mubr.bf16.mxu0 0
      %9989 = vmatmul.mubr.bf16.gmra.mrb[0].mxu0 %v9620
      %v9990 = vpop.f32.mrb[0].mxu0
      %v9991 = vadd.f32 %v9506, %v9990
      %v9992 = vpop.f32.mrb[0].mxu0
      %v9993 = vpop.f32.mrb[0].mxu0
      %v9994 = vadd.f32 %v9506, %v9993
      %v9995 = vpop.f32.mrb[0].mxu0
      %9996 = vmatprep.mubr.bf16.mxu0 0
      %9997 = vmatmul.mubr.bf16.gmra.mrb[0].mxu0 %v9623
      %v9998 = vpop.f32.mrb[0].mxu0
      %v9999 = vadd.f32 %v9506, %v9998
      %v10000 = vpop.f32.mrb[0].mxu0
      %v10001 = vpop.f32.mrb[0].mxu0
      %v10002 = vadd.f32 %v9506, %v10001
      %v10003 = vpop.f32.mrb[0].mxu0
      %10004 = vmatprep.mubr.bf16.mxu0 0
      %10005 = vmatmul.mubr.bf16.gmra.mrb[0].mxu0 %v9626
      %v10006 = vpop.f32.mrb[0].mxu0
      %v10007 = vadd.f32 %v9506, %v10006
      %v10008 = vpop.f32.mrb[0].mxu0
      %v10009 = vpop.f32.mrb[0].mxu0
      %v10010 = vadd.f32 %v9506, %v10009
      %v10011 = vpop.f32.mrb[0].mxu0
      %10012 = vmatprep.mubr.bf16.mxu0 0
      %10013 = vmatmul.mubr.bf16.gmra.mrb[0].mxu0 %v9629
      %v10014 = vpop.f32.mrb[0].mxu0
      %v10015 = vadd.f32 %v9506, %v10014
      %v10016 = vpop.f32.mrb[0].mxu0
      %v10017 = vpop.f32.mrb[0].mxu0
      %v10018 = vadd.f32 %v9506, %v10017
      %v10019 = vpop.f32.mrb[0].mxu0
      %10020 = vmatprep.mubr.bf16.mxu0 0
      %10021 = vmatmul.mubr.bf16.gmra.mrb[0].mxu0 %v9632
      %v10022 = vpop.f32.mrb[0].mxu0
      %v10023 = vadd.f32 %v9506, %v10022
      %v10024 = vpop.f32.mrb[0].mxu0
      %v10025 = vpop.f32.mrb[0].mxu0
      %v10026 = vadd.f32 %v9506, %v10025
      %v10027 = vpop.f32.mrb[0].mxu0
      %10028 = vmatprep.mubr.bf16.mxu0 0
      %10029 = vmatmul.mubr.bf16.gmra.mrb[0].mxu0 %v9635
      %v10030 = vpop.f32.mrb[0].mxu0
      %v10031 = vadd.f32 %v9506, %v10030
      %v10032 = vpop.f32.mrb[0].mxu0
      %v10033 = vpop.f32.mrb[0].mxu0
      %v10034 = vadd.f32 %v9506, %v10033
      %v10035 = vpop.f32.mrb[0].mxu0
      %10036 = vmatprep.mubr.bf16.mxu0 0
      %10037 = vmatmul.mubr.bf16.gmra.mrb[0].mxu0 %v9638
      %v10038 = vpop.f32.mrb[0].mxu0
      %v10039 = vadd.f32 %v9506, %v10038
      %v10040 = vpop.f32.mrb[0].mxu0
      %v10041 = vpop.f32.mrb[0].mxu0
      %v10042 = vadd.f32 %v9506, %v10041
      %v10043 = vpop.f32.mrb[0].mxu0
      %10044 = vmatprep.mubr.bf16.mxu0 0
      %10045 = vmatmul.mubr.bf16.gmra.mrb[0].mxu0 %v9641
      %v10046 = vpop.f32.mrb[0].mxu0
      %v10047 = vadd.f32 %v9506, %v10046
      %v10048 = vpop.f32.mrb[0].mxu0
      %v10049 = vpop.f32.mrb[0].mxu0
      %v10050 = vadd.f32 %v9506, %v10049
      %v10051 = vpop.f32.mrb[0].mxu0
      %10052 = vmatprep.mubr.bf16.mxu0 0
      %10053 = vmatmul.mubr.bf16.gmra.mrb[0].mxu0 %v9644
      %v10054 = vpop.f32.mrb[0].mxu0
      %v10055 = vadd.f32 %v9506, %v10054
      %v10056 = vpop.f32.mrb[0].mxu0
      %v10057 = vpop.f32.mrb[0].mxu0
      %v10058 = vadd.f32 %v9506, %v10057
      %v10059 = vpop.f32.mrb[0].mxu0
      %10060 = vmatprep.mubr.bf16.mxu0 0
      %10061 = vmatmul.mubr.bf16.gmra.mrb[0].mxu0 %v9647
      %v10062 = vpop.f32.mrb[0].mxu0
      %v10063 = vadd.f32 %v9506, %v10062
      %v10064 = vpop.f32.mrb[0].mxu0
      %v10065 = vpop.f32.mrb[0].mxu0
      %v10066 = vadd.f32 %v9506, %v10065
      %v10067 = vpop.f32.mrb[0].mxu0
      %10068 = vmatprep.mubr.bf16.mxu0 0
      %10069 = vmatmul.mubr.bf16.gmra.mrb[0].mxu0 %v9650
      %v10070 = vpop.f32.mrb[0].mxu0
      %v10071 = vadd.f32 %v9506, %v10070
      %v10072 = vpop.f32.mrb[0].mxu0
      %v10073 = vpop.f32.mrb[0].mxu0
      %v10074 = vadd.f32 %v9506, %v10073
      %v10075 = vpop.f32.mrb[0].mxu0
      %10076 = vmatprep.mubr.bf16.mxu0 0
      %10077 = vmatmul.mubr.bf16.gmra.mrb[0].mxu0 %v9653
      %v10078 = vpop.f32.mrb[0].mxu0
      %v10079 = vadd.f32 %v9506, %v10078
      %v10080 = vpop.f32.mrb[0].mxu0
      %v10081 = vpop.f32.mrb[0].mxu0
      %v10082 = vadd.f32 %v9506, %v10081
      %v10083 = vpop.f32.mrb[0].mxu0
      %10084 = vmatprep.mubr.bf16.mxu0 0
      %10085 = vmatmul.mubr.bf16.gmra.mrb[0].mxu0 %v9656
      %v10086 = vpop.f32.mrb[0].mxu0
      %v10087 = vadd.f32 %v9506, %v10086
      %v10088 = vpop.f32.mrb[0].mxu0
      %v10089 = vpop.f32.mrb[0].mxu0
      %v10090 = vadd.f32 %v9506, %v10089
      %v10091 = vpop.f32.mrb[0].mxu0
      %10092 = vmatprep.mubr.bf16.mxu0 0
      %10093 = vmatmul.mubr.bf16.gmra.mrb[0].mxu0 %v9659
      %v10094 = vpop.f32.mrb[0].mxu0
      %v10095 = vadd.f32 %v9506, %v10094
      %v10096 = vpop.f32.mrb[0].mxu0
      %v10097 = vpop.f32.mrb[0].mxu0
      %v10098 = vadd.f32 %v9506, %v10097
      %v10099 = vpop.f32.mrb[0].mxu0
      %10100 = vmatprep.mubr.bf16.mxu0 0
      %10101 = vmatmul.mubr.bf16.gmra.mrb[0].mxu0 %v9662
      %v10102 = vpop.f32.mrb[0].mxu0
      %v10103 = vadd.f32 %v9506, %v10102
      %v10104 = vpop.f32.mrb[0].mxu0
      %v10105 = vpop.f32.mrb[0].mxu0
      %v10106 = vadd.f32 %v9506, %v10105
      %v10107 = vpop.f32.mrb[0].mxu0
      %10108 = vmatprep.mubr.bf16.mxu0 0
      %10109 = vmatmul.mubr.bf16.gmra.mrb[0].mxu0 %v9665
      %v10110 = vpop.f32.mrb[0].mxu0
      %v10111 = vadd.f32 %v9506, %v10110
      %v10112 = vpop.f32.mrb[0].mxu0
      %v10113 = vpop.f32.mrb[0].mxu0
      %v10114 = vadd.f32 %v9506, %v10113
      %v10115 = vpop.f32.mrb[0].mxu0
      %10116 = vmatprep.mubr.bf16.mxu0 0
      %10117 = vmatmul.mubr.bf16.gmra.mrb[0].mxu0 %v9668
      %v10118 = vpop.f32.mrb[0].mxu0
      %v10119 = vadd.f32 %v9506, %v10118
      %v10120 = vpop.f32.mrb[0].mxu0
      %v10121 = vpop.f32.mrb[0].mxu0
      %v10122 = vadd.f32 %v9506, %v10121
      %v10123 = vpop.f32.mrb[0].mxu0
      %10124 = vmatprep.mubr.bf16.mxu0 0
      %10125 = vmatmul.mubr.bf16.gmra.mrb[0].mxu0 %v9671
      %v10126 = vpop.f32.mrb[0].mxu0
      %v10127 = vadd.f32 %v9506, %v10126
      %v10128 = vpop.f32.mrb[0].mxu0
      %v10129 = vpop.f32.mrb[0].mxu0
      %v10130 = vadd.f32 %v9506, %v10129
      %v10131 = vpop.f32.mrb[0].mxu0
      %10132 = vmatprep.mubr.bf16.mxu0 0
      %10133 = vmatmul.mubr.bf16.gmra.mrb[0].mxu0 %v9674
      %v10134 = vpop.f32.mrb[0].mxu0
      %v10135 = vadd.f32 %v9506, %v10134
      %v10136 = vpop.f32.mrb[0].mxu0
      %v10137 = vpop.f32.mrb[0].mxu0
      %v10138 = vadd.f32 %v9506, %v10137
      %v10139 = vpop.f32.mrb[0].mxu0
      %10140 = vmatprep.mubr.bf16.mxu0 0
      %10141 = vmatmul.mubr.bf16.gmra.mrb[0].mxu0 %v9677
      %v10142 = vpop.f32.mrb[0].mxu0
      %v10143 = vadd.f32 %v9506, %v10142
      %v10144 = vpop.f32.mrb[0].mxu0
      %v10145 = vpop.f32.mrb[0].mxu0
      %v10146 = vadd.f32 %v9506, %v10145
      %v10147 = vpop.f32.mrb[0].mxu0
      %10148 = vmatprep.mubr.bf16.mxu0 0
      %10149 = vmatmul.mubr.bf16.gmra.mrb[0].mxu0 %v9680
      %v10150 = vpop.f32.mrb[0].mxu0
      %v10151 = vadd.f32 %v9506, %v10150
      %v10152 = vpop.f32.mrb[0].mxu0
      %v10153 = vpop.f32.mrb[0].mxu0
      %v10154 = vadd.f32 %v9506, %v10153
      %v10155 = vpop.f32.mrb[0].mxu0
      %10156 = vmatprep.mubr.bf16.mxu0 0
      %10157 = vmatmul.mubr.bf16.gmra.mrb[0].mxu0 %v9683
      %v10158 = vpop.f32.mrb[0].mxu0
      %v10159 = vadd.f32 %v9506, %v10158
      %v10160 = vpop.f32.mrb[0].mxu0
      %v10161 = vpop.f32.mrb[0].mxu0
      %v10162 = vadd.f32 %v9506, %v10161
      %v10163 = vpop.f32.mrb[0].mxu0
      %10164 = vmatprep.mubr.bf16.mxu0 0
      %10165 = vmatmul.mubr.bf16.gmra.mrb[0].mxu0 %v9686
      %v10166 = vpop.f32.mrb[0].mxu0
      %v10167 = vadd.f32 %v9506, %v10166
      %v10168 = vpop.f32.mrb[0].mxu0
      %v10169 = vpop.f32.mrb[0].mxu0
      %v10170 = vadd.f32 %v9506, %v10169
      %v10171 = vpop.f32.mrb[0].mxu0
      %10172 = vmatprep.mubr.bf16.mxu0 0
      %10173 = vmatmul.mubr.bf16.gmra.mrb[0].mxu0 %v9689
      %v10174 = vpop.f32.mrb[0].mxu0
      %v10175 = vadd.f32 %v9506, %v10174
      %v10176 = vpop.f32.mrb[0].mxu0
      %v10177 = vpop.f32.mrb[0].mxu0
      %v10178 = vadd.f32 %v9506, %v10177
      %v10179 = vpop.f32.mrb[0].mxu0
      %10180 = vmatprep.mubr.bf16.mxu0 0
      %10181 = vmatmul.mubr.bf16.gmra.mrb[0].mxu0 %v9692
      %v10182 = vpop.f32.mrb[0].mxu0
      %v10183 = vadd.f32 %v9506, %v10182
      %v10184 = vpop.f32.mrb[0].mxu0
      %v10185 = vpop.f32.mrb[0].mxu0
      %v10186 = vadd.f32 %v9506, %v10185
      %v10187 = vpop.f32.mrb[0].mxu0
      %10188 = vmatprep.mubr.bf16.mxu0 0
      %10189 = vmatmul.mubr.bf16.gmra.mrb[0].mxu0 %v9695
      %v10190 = vpop.f32.mrb[0].mxu0
      %v10191 = vadd.f32 %v9506, %v10190
      %v10192 = vpop.f32.mrb[0].mxu0
      %v10193 = vpop.f32.mrb[0].mxu0
      %v10194 = vadd.f32 %v9506, %v10193
      %v10195 = vpop.f32.mrb[0].mxu0
      %10196 = vmatprep.mubr.bf16.mxu0 0
      %10197 = vmatmul.mubr.bf16.gmra.mrb[0].mxu0 %v9698
      %v10198 = vpop.f32.mrb[0].mxu0
      %v10199 = vadd.f32 %v9506, %v10198
      %v10200 = vpop.f32.mrb[0].mxu0
      %v10201 = vpop.f32.mrb[0].mxu0
      %v10202 = vadd.f32 %v9506, %v10201
      %v10203 = vpop.f32.mrb[0].mxu0
      %10204 = vmatprep.mubr.bf16.mxu0 0
      %10205 = vmatmul.mubr.bf16.gmra.mrb[0].mxu0 %v9701
      %v10206 = vpop.f32.mrb[0].mxu0
      %v10207 = vadd.f32 %v9506, %v10206
      %v10208 = vpop.f32.mrb[0].mxu0
      %v10209 = vpop.f32.mrb[0].mxu0
      %v10210 = vadd.f32 %v9506, %v10209
      %v10211 = vpop.f32.mrb[0].mxu0
      %10212 = vmatprep.mubr.bf16.mxu0 0
      %10213 = vmatmul.mubr.bf16.gmra.mrb[0].mxu0 %v9704
      %v10214 = vpop.f32.mrb[0].mxu0
      %v10215 = vadd.f32 %v9506, %v10214
      %v10216 = vpop.f32.mrb[0].mxu0
      %v10217 = vpop.f32.mrb[0].mxu0
      %v10218 = vadd.f32 %v9506, %v10217
      %v10219 = vpop.f32.mrb[0].mxu0
      %10220 = vmatprep.mubr.bf16.mxu0 0
      %10221 = vmatmul.mubr.bf16.gmra.mrb[0].mxu0 %v9707
      %v10222 = vpop.f32.mrb[0].mxu0
      %v10223 = vadd.f32 %v9506, %v10222
      %v10224 = vpop.f32.mrb[0].mxu0
      %v10225 = vpop.f32.mrb[0].mxu0
      %v10226 = vadd.f32 %v9506, %v10225
      %v10227 = vpop.f32.mrb[0].mxu0
      %10228 = vmatprep.mubr.bf16.mxu0 0
      %10229 = vmatmul.mubr.bf16.gmra.mrb[0].mxu0 %v9710
      %v10230 = vpop.f32.mrb[0].mxu0
      %v10231 = vadd.f32 %v9506, %v10230
      %v10232 = vpop.f32.mrb[0].mxu0
      %v10233 = vpop.f32.mrb[0].mxu0
      %v10234 = vadd.f32 %v9506, %v10233
      %v10235 = vpop.f32.mrb[0].mxu0
      %10236 = vmatprep.mubr.bf16.mxu0 0
      %10237 = vmatmul.mubr.bf16.gmra.mrb[0].mxu0 %v9713
      %v10238 = vpop.f32.mrb[0].mxu0
      %v10239 = vadd.f32 %v9506, %v10238
      %v10240 = vpop.f32.mrb[0].mxu0
      %v10241 = vpop.f32.mrb[0].mxu0
      %v10242 = vadd.f32 %v9506, %v10241
      %v10243 = vpop.f32.mrb[0].mxu0
      %10244 = vmatprep.mubr.bf16.mxu0 0
      %10245 = vmatmul.mubr.bf16.gmra.mrb[0].mxu0 %v9716
      %v10246 = vpop.f32.mrb[0].mxu0
      %v10247 = vadd.f32 %v9506, %v10246
      %v10248 = vpop.f32.mrb[0].mxu0
      %v10249 = vpop.f32.mrb[0].mxu0
      %v10250 = vadd.f32 %v9506, %v10249
      %v10251 = vpop.f32.mrb[0].mxu0
      %10252 = vmatprep.mubr.bf16.mxu0 0
      %10253 = vmatmul.mubr.bf16.gmra.mrb[0].mxu0 %v9719
      %v10254 = vpop.f32.mrb[0].mxu0
      %v10255 = vadd.f32 %v9506, %v10254
      %v10256 = vpop.f32.mrb[0].mxu0
      %v10257 = vpop.f32.mrb[0].mxu0
      %v10258 = vadd.f32 %v9506, %v10257
      %v10259 = vpop.f32.mrb[0].mxu0
      %10260 = vmatprep.mubr.bf16.mxu0 0
      %10261 = vmatmul.mubr.bf16.gmra.mrb[0].mxu0 %v9722
      %v10262 = vpop.f32.mrb[0].mxu0
      %v10263 = vadd.f32 %v9506, %v10262
      %v10264 = vpop.f32.mrb[0].mxu0
      %v10265 = vpop.f32.mrb[0].mxu0
      %v10266 = vadd.f32 %v9506, %v10265
      %v10267 = vpop.f32.mrb[0].mxu0
      %10268 = vdwg.mxu0
      %v10269 = vld [vmem:[%s6] sm:$0xf]
      %v10270 = vld [vmem:[%s6 + $0x4] sm:$0xf]
      %v10271 = vld [vmem:[%s6 + $0x8] sm:$0xf]
      %v10272 = vld [vmem:[%s6 + $0xc] sm:$0xf]
      %v10273 = vld [vmem:[%s6 + $0x10] sm:$0xf]
      %v10274 = vld [vmem:[%s6 + $0x14] sm:$0xf]
      %v10275 = vld [vmem:[%s6 + $0x18] sm:$0xf]
      %v10276 = vld [vmem:[%s6 + $0x1c] sm:$0xf]
      %v10277 = vpack.c.bf16 %v9762, %v9759
      %v10278 = vpack.c.bf16 %v9770, %v9767
      %v10279 = vpack.c.bf16 %v9778, %v9775
      %v10280 = vpack.c.bf16 %v9786, %v9783
      %v10281 = vpack.c.bf16 %v9794, %v9791
      %v10282 = vpack.c.bf16 %v9802, %v9799
      %v10283 = vpack.c.bf16 %v9810, %v9807
      %v10284 = vpack.c.bf16 %v9818, %v9815
      %v10285 = vpack.c.bf16 %v9826, %v9823
      %v10286 = vpack.c.bf16 %v9834, %v9831
      %v10287 = vpack.c.bf16 %v9842, %v9839
      %v10288 = vpack.c.bf16 %v9850, %v9847
      %v10289 = vpack.c.bf16 %v9858, %v9855
      %v10290 = vpack.c.bf16 %v9866, %v9863
      %v10291 = vpack.c.bf16 %v9874, %v9871
      %v10292 = vpack.c.bf16 %v9882, %v9879
      %v10293 = vpack.c.bf16 %v9890, %v9887
      %v10294 = vpack.c.bf16 %v9898, %v9895
      %v10295 = vpack.c.bf16 %v9906, %v9903
      %v10296 = vpack.c.bf16 %v9914, %v9911
      %v10297 = vpack.c.bf16 %v9922, %v9919
      %v10298 = vpack.c.bf16 %v9930, %v9927
      %v10299 = vpack.c.bf16 %v9938, %v9935
      %v10300 = vpack.c.bf16 %v9946, %v9943
      %v10301 = vpack.c.bf16 %v9954, %v9951
      %v10302 = vpack.c.bf16 %v9962, %v9959
      %v10303 = vpack.c.bf16 %v9970, %v9967
      %v10304 = vpack.c.bf16 %v9978, %v9975
      %v10305 = vpack.c.bf16 %v9986, %v9983
      %v10306 = vpack.c.bf16 %v9994, %v9991
      %v10307 = vpack.c.bf16 %v10002, %v9999
      %v10308 = vpack.c.bf16 %v10010, %v10007
      %v10309 = vpack.c.bf16 %v10018, %v10015
      %v10310 = vpack.c.bf16 %v10026, %v10023
      %v10311 = vpack.c.bf16 %v10034, %v10031
      %v10312 = vpack.c.bf16 %v10042, %v10039
      %v10313 = vpack.c.bf16 %v10050, %v10047
      %v10314 = vpack.c.bf16 %v10058, %v10055
      %v10315 = vpack.c.bf16 %v10066, %v10063
      %v10316 = vpack.c.bf16 %v10074, %v10071
      %v10317 = vpack.c.bf16 %v10082, %v10079
      %v10318 = vpack.c.bf16 %v10090, %v10087
      %v10319 = vpack.c.bf16 %v10098, %v10095
      %v10320 = vpack.c.bf16 %v10106, %v10103
      %v10321 = vpack.c.bf16 %v10114, %v10111
      %v10322 = vpack.c.bf16 %v10122, %v10119
      %v10323 = vpack.c.bf16 %v10130, %v10127
      %v10324 = vpack.c.bf16 %v10138, %v10135
      %v10325 = vpack.c.bf16 %v10146, %v10143
      %v10326 = vpack.c.bf16 %v10154, %v10151
      %v10327 = vpack.c.bf16 %v10162, %v10159
      %v10328 = vpack.c.bf16 %v10170, %v10167
      %v10329 = vpack.c.bf16 %v10178, %v10175
      %v10330 = vpack.c.bf16 %v10186, %v10183
      %v10331 = vpack.c.bf16 %v10194, %v10191
      %v10332 = vpack.c.bf16 %v10202, %v10199
      %v10333 = vpack.c.bf16 %v10210, %v10207
      %v10334 = vpack.c.bf16 %v10218, %v10215
      %v10335 = vpack.c.bf16 %v10226, %v10223
      %v10336 = vpack.c.bf16 %v10234, %v10231
      %v10337 = vpack.c.bf16 %v10242, %v10239
      %v10338 = vpack.c.bf16 %v10250, %v10247
      %v10339 = vpack.c.bf16 %v10258, %v10255
      %v10340 = vpack.c.bf16 %v10266, %v10263
      %v10349 = vunpack.c.l.b16 %v10269
      %v10350 = vunpack.c.l.b16 %v10270
      %v10351 = vunpack.c.l.b16 %v10271
      %v10352 = vunpack.c.l.b16 %v10272
      %v10353 = vunpack.c.l.b16 %v10273
      %v10354 = vunpack.c.l.b16 %v10274
      %v10355 = vunpack.c.l.b16 %v10275
      %v10356 = vunpack.c.l.b16 %v10276
      %v10357 = vpack.c.b16 %v10350, %v10349
      %v10358 = vpack.c.b16 %v10352, %v10351
      %v10359 = vpack.c.b16 %v10354, %v10353
      %v10360 = vpack.c.b16 %v10356, %v10355
      %v10366 = vsel %vm1797, %v10277, 0
      %v10369 = vsel %vm1797, %v10278, 0
      %v10372 = vsel %vm1797, %v10279, 0
      %v10375 = vsel %vm1797, %v10280, 0
      %v10378 = vsel %vm1797, %v10281, 0
      %v10381 = vsel %vm1797, %v10282, 0
      %v10384 = vsel %vm1797, %v10283, 0
      %v10387 = vsel %vm1797, %v10284, 0
      %v10390 = vsel %vm1797, %v10285, 0
      %v10393 = vsel %vm1797, %v10286, 0
      %v10396 = vsel %vm1797, %v10287, 0
      %v10399 = vsel %vm1797, %v10288, 0
      %v10402 = vsel %vm1797, %v10289, 0
      %v10405 = vsel %vm1797, %v10290, 0
      %v10408 = vsel %vm1797, %v10291, 0
      %v10411 = vsel %vm1797, %v10292, 0
      %v10414 = vsel %vm1797, %v10293, 0
      %v10417 = vsel %vm1797, %v10294, 0
      %v10420 = vsel %vm1797, %v10295, 0
      %v10423 = vsel %vm1797, %v10296, 0
      %v10426 = vsel %vm1797, %v10297, 0
      %v10429 = vsel %vm1797, %v10298, 0
      %v10432 = vsel %vm1797, %v10299, 0
      %v10435 = vsel %vm1797, %v10300, 0
      %v10438 = vsel %vm1797, %v10301, 0
      %v10441 = vsel %vm1797, %v10302, 0
      %v10444 = vsel %vm1797, %v10303, 0
      %v10447 = vsel %vm1797, %v10304, 0
      %v10450 = vsel %vm1797, %v10305, 0
      %v10453 = vsel %vm1797, %v10306, 0
      %v10456 = vsel %vm1797, %v10307, 0
      %v10459 = vsel %vm1797, %v10308, 0
      %v10462 = vsel %vm1797, %v10309, 0
      %v10465 = vsel %vm1797, %v10310, 0
      %v10468 = vsel %vm1797, %v10311, 0
      %v10471 = vsel %vm1797, %v10312, 0
      %v10474 = vsel %vm1797, %v10313, 0
      %v10477 = vsel %vm1797, %v10314, 0
      %v10480 = vsel %vm1797, %v10315, 0
      %v10483 = vsel %vm1797, %v10316, 0
      %v10486 = vsel %vm1797, %v10317, 0
      %v10489 = vsel %vm1797, %v10318, 0
      %v10492 = vsel %vm1797, %v10319, 0
      %v10495 = vsel %vm1797, %v10320, 0
      %v10498 = vsel %vm1797, %v10321, 0
      %v10501 = vsel %vm1797, %v10322, 0
      %v10504 = vsel %vm1797, %v10323, 0
      %v10507 = vsel %vm1797, %v10324, 0
      %v10510 = vsel %vm1797, %v10325, 0
      %v10513 = vsel %vm1797, %v10326, 0
      %v10516 = vsel %vm1797, %v10327, 0
      %v10519 = vsel %vm1797, %v10328, 0
      %v10522 = vsel %vm1797, %v10329, 0
      %v10525 = vsel %vm1797, %v10330, 0
      %v10528 = vsel %vm1797, %v10331, 0
      %v10531 = vsel %vm1797, %v10332, 0
      %v10534 = vsel %vm1797, %v10333, 0
      %v10537 = vsel %vm1797, %v10334, 0
      %v10540 = vsel %vm1797, %v10335, 0
      %v10543 = vsel %vm1797, %v10336, 0
      %v10546 = vsel %vm1797, %v10337, 0
      %v10549 = vsel %vm1797, %v10338, 0
      %v10552 = vsel %vm1797, %v10339, 0
      %v10555 = vsel %vm1797, %v10340, 0
      %10557 = vmatprep.subr.bf16.mxu0 0
      %10558 = vmatpush1.bf16.msra.mxu0 %v10357
      %10559 = vmatprep.subr.bf16.mxu0 0
      %10560 = vmatpush1.bf16.msra.mxu0 %v10358
      %10561 = vmatprep.subr.bf16.mxu0 0
      %10562 = vmatpush1.bf16.msra.mxu0 %v10359
      %10563 = vmatprep.subr.bf16.mxu0 0
      %10564 = vmatpush1.bf16.msra.mxu0 %v10360
      %10565 = vmatprep.subr.bf16.mxu0 0
      %10566 = vmatpush1.bf16.msra.mxu0 0
      %10567 = vmatprep.subr.bf16.mxu0 0
      %10568 = vmatpush1.bf16.msra.mxu0 0
      %10569 = vmatprep.subr.bf16.mxu0 0
      %10570 = vmatpush1.bf16.msra.mxu0 0
      %10571 = vmatprep.subr.bf16.mxu0 0
      %10572 = vmatpush1.bf16.msra.mxu0 0
      %10573 = vmatprep.subr.bf16.mxu0 0
      %10574 = vmatpush1.bf16.msra.mxu0 0
      %10575 = vmatprep.subr.bf16.mxu0 0
      %10576 = vmatpush1.bf16.msra.mxu0 0
      %10577 = vmatprep.subr.bf16.mxu0 0
      %10578 = vmatpush1.bf16.msra.mxu0 0
      %10579 = vmatprep.subr.bf16.mxu0 0
      %10580 = vmatpush1.bf16.msra.mxu0 0
      %10581 = vmatprep.subr.bf16.mxu0 0
      %10582 = vmatpush1.bf16.msra.mxu0 0
      %10583 = vmatprep.subr.bf16.mxu0 0
      %10584 = vmatpush1.bf16.msra.mxu0 0
      %10585 = vmatprep.subr.bf16.mxu0 0
      %10586 = vmatpush1.bf16.msra.mxu0 0
      %10587 = vmatprep.subr.bf16.mxu0 0
      %10588 = vmatpush1.bf16.msra.mxu0 0
      %10589 = vmatprep.mubr.bf16.mxu0 0
      %10590 = vmatmul.mubr.bf16.gmra.mrb[0].mxu0 %v10366
      %v10591 = vpop.f32.mrb[0].mxu0
      %v10592 = vadd.f32 %v799, %v10591
      %v10593 = vpop.f32.mrb[0].mxu0
      %v10594 = vpop.f32.mrb[0].mxu0
      %v10595 = vadd.f32 %v803, %v10594
      %v10596 = vpop.f32.mrb[0].mxu0
      %10597 = vmatprep.mubr.bf16.mxu0 0
      %10598 = vmatmul.mubr.bf16.gmra.mrb[0].mxu0 %v10369
      %v10599 = vpop.f32.mrb[0].mxu0
      %v10600 = vadd.f32 %v809, %v10599
      %v10601 = vpop.f32.mrb[0].mxu0
      %v10602 = vpop.f32.mrb[0].mxu0
      %v10603 = vadd.f32 %v813, %v10602
      %v10604 = vpop.f32.mrb[0].mxu0
      %10605 = vmatprep.mubr.bf16.mxu0 0
      %10606 = vmatmul.mubr.bf16.gmra.mrb[0].mxu0 %v10372
      %v10607 = vpop.f32.mrb[0].mxu0
      %v10608 = vadd.f32 %v819, %v10607
      %v10609 = vpop.f32.mrb[0].mxu0
      %v10610 = vpop.f32.mrb[0].mxu0
      %v10611 = vadd.f32 %v823, %v10610
      %v10612 = vpop.f32.mrb[0].mxu0
      %10613 = vmatprep.mubr.bf16.mxu0 0
      %10614 = vmatmul.mubr.bf16.gmra.mrb[0].mxu0 %v10375
      %v10615 = vpop.f32.mrb[0].mxu0
      %v10616 = vadd.f32 %v829, %v10615
      %v10617 = vpop.f32.mrb[0].mxu0
      %v10618 = vpop.f32.mrb[0].mxu0
      %v10619 = vadd.f32 %v833, %v10618
      %v10620 = vpop.f32.mrb[0].mxu0
      %10621 = vmatprep.mubr.bf16.mxu0 0
      %10622 = vmatmul.mubr.bf16.gmra.mrb[0].mxu0 %v10378
      %v10623 = vpop.f32.mrb[0].mxu0
      %v10624 = vadd.f32 %v839, %v10623
      %v10625 = vpop.f32.mrb[0].mxu0
      %v10626 = vpop.f32.mrb[0].mxu0
      %v10627 = vadd.f32 %v843, %v10626
      %v10628 = vpop.f32.mrb[0].mxu0
      %10629 = vmatprep.mubr.bf16.mxu0 0
      %10630 = vmatmul.mubr.bf16.gmra.mrb[0].mxu0 %v10381
      %v10631 = vpop.f32.mrb[0].mxu0
      %v10632 = vadd.f32 %v849, %v10631
      %v10633 = vpop.f32.mrb[0].mxu0
      %v10634 = vpop.f32.mrb[0].mxu0
      %v10635 = vadd.f32 %v853, %v10634
      %v10636 = vpop.f32.mrb[0].mxu0
      %10637 = vmatprep.mubr.bf16.mxu0 0
      %10638 = vmatmul.mubr.bf16.gmra.mrb[0].mxu0 %v10384
      %v10639 = vpop.f32.mrb[0].mxu0
      %v10640 = vadd.f32 %v859, %v10639
      %v10641 = vpop.f32.mrb[0].mxu0
      %v10642 = vpop.f32.mrb[0].mxu0
      %v10643 = vadd.f32 %v863, %v10642
      %v10644 = vpop.f32.mrb[0].mxu0
      %10645 = vmatprep.mubr.bf16.mxu0 0
      %10646 = vmatmul.mubr.bf16.gmra.mrb[0].mxu0 %v10387
      %v10647 = vpop.f32.mrb[0].mxu0
      %v10648 = vadd.f32 %v869, %v10647
      %v10649 = vpop.f32.mrb[0].mxu0
      %v10650 = vpop.f32.mrb[0].mxu0
      %v10651 = vadd.f32 %v873, %v10650
      %v10652 = vpop.f32.mrb[0].mxu0
      %10653 = vmatprep.mubr.bf16.mxu0 0
      %10654 = vmatmul.mubr.bf16.gmra.mrb[0].mxu0 %v10390
      %v10655 = vpop.f32.mrb[0].mxu0
      %v10656 = vadd.f32 %v879, %v10655
      %v10657 = vpop.f32.mrb[0].mxu0
      %v10658 = vpop.f32.mrb[0].mxu0
      %v10659 = vadd.f32 %v883, %v10658
      %v10660 = vpop.f32.mrb[0].mxu0
      %10661 = vmatprep.mubr.bf16.mxu0 0
      %10662 = vmatmul.mubr.bf16.gmra.mrb[0].mxu0 %v10393
      %v10663 = vpop.f32.mrb[0].mxu0
      %v10664 = vadd.f32 %v889, %v10663
      %v10665 = vpop.f32.mrb[0].mxu0
      %v10666 = vpop.f32.mrb[0].mxu0
      %v10667 = vadd.f32 %v893, %v10666
      %v10668 = vpop.f32.mrb[0].mxu0
      %10669 = vmatprep.mubr.bf16.mxu0 0
      %10670 = vmatmul.mubr.bf16.gmra.mrb[0].mxu0 %v10396
      %v10671 = vpop.f32.mrb[0].mxu0
      %v10672 = vadd.f32 %v899, %v10671
      %v10673 = vpop.f32.mrb[0].mxu0
      %v10674 = vpop.f32.mrb[0].mxu0
      %v10675 = vadd.f32 %v903, %v10674
      %v10676 = vpop.f32.mrb[0].mxu0
      %10677 = vmatprep.mubr.bf16.mxu0 0
      %10678 = vmatmul.mubr.bf16.gmra.mrb[0].mxu0 %v10399
      %v10679 = vpop.f32.mrb[0].mxu0
      %v10680 = vadd.f32 %v909, %v10679
      %v10681 = vpop.f32.mrb[0].mxu0
      %v10682 = vpop.f32.mrb[0].mxu0
      %v10683 = vadd.f32 %v913, %v10682
      %v10684 = vpop.f32.mrb[0].mxu0
      %10685 = vmatprep.mubr.bf16.mxu0 0
      %10686 = vmatmul.mubr.bf16.gmra.mrb[0].mxu0 %v10402
      %v10687 = vpop.f32.mrb[0].mxu0
      %v10688 = vadd.f32 %v919, %v10687
      %v10689 = vpop.f32.mrb[0].mxu0
      %v10690 = vpop.f32.mrb[0].mxu0
      %v10691 = vadd.f32 %v923, %v10690
      %v10692 = vpop.f32.mrb[0].mxu0
      %10693 = vmatprep.mubr.bf16.mxu0 0
      %10694 = vmatmul.mubr.bf16.gmra.mrb[0].mxu0 %v10405
      %v10695 = vpop.f32.mrb[0].mxu0
      %v10696 = vadd.f32 %v929, %v10695
      %v10697 = vpop.f32.mrb[0].mxu0
      %v10698 = vpop.f32.mrb[0].mxu0
      %v10699 = vadd.f32 %v933, %v10698
      %v10700 = vpop.f32.mrb[0].mxu0
      %10701 = vmatprep.mubr.bf16.mxu0 0
      %10702 = vmatmul.mubr.bf16.gmra.mrb[0].mxu0 %v10408
      %v10703 = vpop.f32.mrb[0].mxu0
      %v10704 = vadd.f32 %v939, %v10703
      %v10705 = vpop.f32.mrb[0].mxu0
      %v10706 = vpop.f32.mrb[0].mxu0
      %v10707 = vadd.f32 %v943, %v10706
      %v10708 = vpop.f32.mrb[0].mxu0
      %10709 = vmatprep.mubr.bf16.mxu0 0
      %10710 = vmatmul.mubr.bf16.gmra.mrb[0].mxu0 %v10411
      %v10711 = vpop.f32.mrb[0].mxu0
      %v10712 = vadd.f32 %v949, %v10711
      %v10713 = vpop.f32.mrb[0].mxu0
      %v10714 = vpop.f32.mrb[0].mxu0
      %v10715 = vadd.f32 %v953, %v10714
      %v10716 = vpop.f32.mrb[0].mxu0
      %10717 = vmatprep.mubr.bf16.mxu0 0
      %10718 = vmatmul.mubr.bf16.gmra.mrb[0].mxu0 %v10414
      %v10719 = vpop.f32.mrb[0].mxu0
      %v10720 = vadd.f32 %v959, %v10719
      %v10721 = vpop.f32.mrb[0].mxu0
      %v10722 = vpop.f32.mrb[0].mxu0
      %v10723 = vadd.f32 %v963, %v10722
      %v10724 = vpop.f32.mrb[0].mxu0
      %10725 = vmatprep.mubr.bf16.mxu0 0
      %10726 = vmatmul.mubr.bf16.gmra.mrb[0].mxu0 %v10417
      %v10727 = vpop.f32.mrb[0].mxu0
      %v10728 = vadd.f32 %v969, %v10727
      %v10729 = vpop.f32.mrb[0].mxu0
      %v10730 = vpop.f32.mrb[0].mxu0
      %v10731 = vadd.f32 %v973, %v10730
      %v10732 = vpop.f32.mrb[0].mxu0
      %10733 = vmatprep.mubr.bf16.mxu0 0
      %10734 = vmatmul.mubr.bf16.gmra.mrb[0].mxu0 %v10420
      %v10735 = vpop.f32.mrb[0].mxu0
      %v10736 = vadd.f32 %v979, %v10735
      %v10737 = vpop.f32.mrb[0].mxu0
      %v10738 = vpop.f32.mrb[0].mxu0
      %v10739 = vadd.f32 %v983, %v10738
      %v10740 = vpop.f32.mrb[0].mxu0
      %10741 = vmatprep.mubr.bf16.mxu0 0
      %10742 = vmatmul.mubr.bf16.gmra.mrb[0].mxu0 %v10423
      %v10743 = vpop.f32.mrb[0].mxu0
      %v10744 = vadd.f32 %v989, %v10743
      %v10745 = vpop.f32.mrb[0].mxu0
      %v10746 = vpop.f32.mrb[0].mxu0
      %v10747 = vadd.f32 %v993, %v10746
      %v10748 = vpop.f32.mrb[0].mxu0
      %10749 = vmatprep.mubr.bf16.mxu0 0
      %10750 = vmatmul.mubr.bf16.gmra.mrb[0].mxu0 %v10426
      %v10751 = vpop.f32.mrb[0].mxu0
      %v10752 = vadd.f32 %v999, %v10751
      %v10753 = vpop.f32.mrb[0].mxu0
      %v10754 = vpop.f32.mrb[0].mxu0
      %v10755 = vadd.f32 %v1003, %v10754
      %v10756 = vpop.f32.mrb[0].mxu0
      %10757 = vmatprep.mubr.bf16.mxu0 0
      %10758 = vmatmul.mubr.bf16.gmra.mrb[0].mxu0 %v10429
      %v10759 = vpop.f32.mrb[0].mxu0
      %v10760 = vadd.f32 %v1009, %v10759
      %v10761 = vpop.f32.mrb[0].mxu0
      %v10762 = vpop.f32.mrb[0].mxu0
      %v10763 = vadd.f32 %v1013, %v10762
      %v10764 = vpop.f32.mrb[0].mxu0
      %10765 = vmatprep.mubr.bf16.mxu0 0
      %10766 = vmatmul.mubr.bf16.gmra.mrb[0].mxu0 %v10432
      %v10767 = vpop.f32.mrb[0].mxu0
      %v10768 = vadd.f32 %v1019, %v10767
      %v10769 = vpop.f32.mrb[0].mxu0
      %v10770 = vpop.f32.mrb[0].mxu0
      %v10771 = vadd.f32 %v1023, %v10770
      %v10772 = vpop.f32.mrb[0].mxu0
      %10773 = vmatprep.mubr.bf16.mxu0 0
      %10774 = vmatmul.mubr.bf16.gmra.mrb[0].mxu0 %v10435
      %v10775 = vpop.f32.mrb[0].mxu0
      %v10776 = vadd.f32 %v1029, %v10775
      %v10777 = vpop.f32.mrb[0].mxu0
      %v10778 = vpop.f32.mrb[0].mxu0
      %v10779 = vadd.f32 %v1033, %v10778
      %v10780 = vpop.f32.mrb[0].mxu0
      %10781 = vmatprep.mubr.bf16.mxu0 0
      %10782 = vmatmul.mubr.bf16.gmra.mrb[0].mxu0 %v10438
      %v10783 = vpop.f32.mrb[0].mxu0
      %v10784 = vadd.f32 %v1039, %v10783
      %v10785 = vpop.f32.mrb[0].mxu0
      %v10786 = vpop.f32.mrb[0].mxu0
      %v10787 = vadd.f32 %v1043, %v10786
      %v10788 = vpop.f32.mrb[0].mxu0
      %10789 = vmatprep.mubr.bf16.mxu0 0
      %10790 = vmatmul.mubr.bf16.gmra.mrb[0].mxu0 %v10441
      %v10791 = vpop.f32.mrb[0].mxu0
      %v10792 = vadd.f32 %v1049, %v10791
      %v10793 = vpop.f32.mrb[0].mxu0
      %v10794 = vpop.f32.mrb[0].mxu0
      %v10795 = vadd.f32 %v1053, %v10794
      %v10796 = vpop.f32.mrb[0].mxu0
      %10797 = vmatprep.mubr.bf16.mxu0 0
      %10798 = vmatmul.mubr.bf16.gmra.mrb[0].mxu0 %v10444
      %v10799 = vpop.f32.mrb[0].mxu0
      %v10800 = vadd.f32 %v1059, %v10799
      %v10801 = vpop.f32.mrb[0].mxu0
      %v10802 = vpop.f32.mrb[0].mxu0
      %v10803 = vadd.f32 %v1063, %v10802
      %v10804 = vpop.f32.mrb[0].mxu0
      %10805 = vmatprep.mubr.bf16.mxu0 0
      %10806 = vmatmul.mubr.bf16.gmra.mrb[0].mxu0 %v10447
      %v10807 = vpop.f32.mrb[0].mxu0
      %v10808 = vadd.f32 %v1069, %v10807
      %v10809 = vpop.f32.mrb[0].mxu0
      %v10810 = vpop.f32.mrb[0].mxu0
      %v10811 = vadd.f32 %v1073, %v10810
      %v10812 = vpop.f32.mrb[0].mxu0
      %10813 = vmatprep.mubr.bf16.mxu0 0
      %10814 = vmatmul.mubr.bf16.gmra.mrb[0].mxu0 %v10450
      %v10815 = vpop.f32.mrb[0].mxu0
      %v10816 = vadd.f32 %v1079, %v10815
      %v10817 = vpop.f32.mrb[0].mxu0
      %v10818 = vpop.f32.mrb[0].mxu0
      %v10819 = vadd.f32 %v1083, %v10818
      %v10820 = vpop.f32.mrb[0].mxu0
      %10821 = vmatprep.mubr.bf16.mxu0 0
      %10822 = vmatmul.mubr.bf16.gmra.mrb[0].mxu0 %v10453
      %v10823 = vpop.f32.mrb[0].mxu0
      %v10824 = vadd.f32 %v1089, %v10823
      %v10825 = vpop.f32.mrb[0].mxu0
      %v10826 = vpop.f32.mrb[0].mxu0
      %v10827 = vadd.f32 %v1093, %v10826
      %v10828 = vpop.f32.mrb[0].mxu0
      %10829 = vmatprep.mubr.bf16.mxu0 0
      %10830 = vmatmul.mubr.bf16.gmra.mrb[0].mxu0 %v10456
      %v10831 = vpop.f32.mrb[0].mxu0
      %v10832 = vadd.f32 %v1099, %v10831
      %v10833 = vpop.f32.mrb[0].mxu0
      %v10834 = vpop.f32.mrb[0].mxu0
      %v10835 = vadd.f32 %v1103, %v10834
      %v10836 = vpop.f32.mrb[0].mxu0
      %10837 = vmatprep.mubr.bf16.mxu0 0
      %10838 = vmatmul.mubr.bf16.gmra.mrb[0].mxu0 %v10459
      %v10839 = vpop.f32.mrb[0].mxu0
      %v10840 = vadd.f32 %v1109, %v10839
      %v10841 = vpop.f32.mrb[0].mxu0
      %v10842 = vpop.f32.mrb[0].mxu0
      %v10843 = vadd.f32 %v1113, %v10842
      %v10844 = vpop.f32.mrb[0].mxu0
      %10845 = vmatprep.mubr.bf16.mxu0 0
      %10846 = vmatmul.mubr.bf16.gmra.mrb[0].mxu0 %v10462
      %v10847 = vpop.f32.mrb[0].mxu0
      %v10848 = vadd.f32 %v1119, %v10847
      %v10849 = vpop.f32.mrb[0].mxu0
      %v10850 = vpop.f32.mrb[0].mxu0
      %v10851 = vadd.f32 %v1123, %v10850
      %v10852 = vpop.f32.mrb[0].mxu0
      %10853 = vmatprep.mubr.bf16.mxu0 0
      %10854 = vmatmul.mubr.bf16.gmra.mrb[0].mxu0 %v10465
      %v10855 = vpop.f32.mrb[0].mxu0
      %v10856 = vadd.f32 %v1129, %v10855
      %v10857 = vpop.f32.mrb[0].mxu0
      %v10858 = vpop.f32.mrb[0].mxu0
      %v10859 = vadd.f32 %v1133, %v10858
      %v10860 = vpop.f32.mrb[0].mxu0
      %10861 = vmatprep.mubr.bf16.mxu0 0
      %10862 = vmatmul.mubr.bf16.gmra.mrb[0].mxu0 %v10468
      %v10863 = vpop.f32.mrb[0].mxu0
      %v10864 = vadd.f32 %v1139, %v10863
      %v10865 = vpop.f32.mrb[0].mxu0
      %v10866 = vpop.f32.mrb[0].mxu0
      %v10867 = vadd.f32 %v1143, %v10866
      %v10868 = vpop.f32.mrb[0].mxu0
      %10869 = vmatprep.mubr.bf16.mxu0 0
      %10870 = vmatmul.mubr.bf16.gmra.mrb[0].mxu0 %v10471
      %v10871 = vpop.f32.mrb[0].mxu0
      %v10872 = vadd.f32 %v1149, %v10871
      %v10873 = vpop.f32.mrb[0].mxu0
      %v10874 = vpop.f32.mrb[0].mxu0
      %v10875 = vadd.f32 %v1153, %v10874
      %v10876 = vpop.f32.mrb[0].mxu0
      %10877 = vmatprep.mubr.bf16.mxu0 0
      %10878 = vmatmul.mubr.bf16.gmra.mrb[0].mxu0 %v10474
      %v10879 = vpop.f32.mrb[0].mxu0
      %v10880 = vadd.f32 %v1159, %v10879
      %v10881 = vpop.f32.mrb[0].mxu0
      %v10882 = vpop.f32.mrb[0].mxu0
      %v10883 = vadd.f32 %v1163, %v10882
      %v10884 = vpop.f32.mrb[0].mxu0
      %10885 = vmatprep.mubr.bf16.mxu0 0
      %10886 = vmatmul.mubr.bf16.gmra.mrb[0].mxu0 %v10477
      %v10887 = vpop.f32.mrb[0].mxu0
      %v10888 = vadd.f32 %v1169, %v10887
      %v10889 = vpop.f32.mrb[0].mxu0
      %v10890 = vpop.f32.mrb[0].mxu0
      %v10891 = vadd.f32 %v1173, %v10890
      %v10892 = vpop.f32.mrb[0].mxu0
      %10893 = vmatprep.mubr.bf16.mxu0 0
      %10894 = vmatmul.mubr.bf16.gmra.mrb[0].mxu0 %v10480
      %v10895 = vpop.f32.mrb[0].mxu0
      %v10896 = vadd.f32 %v1179, %v10895
      %v10897 = vpop.f32.mrb[0].mxu0
      %v10898 = vpop.f32.mrb[0].mxu0
      %v10899 = vadd.f32 %v1183, %v10898
      %v10900 = vpop.f32.mrb[0].mxu0
      %10901 = vmatprep.mubr.bf16.mxu0 0
      %10902 = vmatmul.mubr.bf16.gmra.mrb[0].mxu0 %v10483
      %v10903 = vpop.f32.mrb[0].mxu0
      %v10904 = vadd.f32 %v1189, %v10903
      %v10905 = vpop.f32.mrb[0].mxu0
      %v10906 = vpop.f32.mrb[0].mxu0
      %v10907 = vadd.f32 %v1193, %v10906
      %v10908 = vpop.f32.mrb[0].mxu0
      %10909 = vmatprep.mubr.bf16.mxu0 0
      %10910 = vmatmul.mubr.bf16.gmra.mrb[0].mxu0 %v10486
      %v10911 = vpop.f32.mrb[0].mxu0
      %v10912 = vadd.f32 %v1199, %v10911
      %v10913 = vpop.f32.mrb[0].mxu0
      %v10914 = vpop.f32.mrb[0].mxu0
      %v10915 = vadd.f32 %v1203, %v10914
      %v10916 = vpop.f32.mrb[0].mxu0
      %10917 = vmatprep.mubr.bf16.mxu0 0
      %10918 = vmatmul.mubr.bf16.gmra.mrb[0].mxu0 %v10489
      %v10919 = vpop.f32.mrb[0].mxu0
      %v10920 = vadd.f32 %v1209, %v10919
      %v10921 = vpop.f32.mrb[0].mxu0
      %v10922 = vpop.f32.mrb[0].mxu0
      %v10923 = vadd.f32 %v1213, %v10922
      %v10924 = vpop.f32.mrb[0].mxu0
      %10925 = vmatprep.mubr.bf16.mxu0 0
      %10926 = vmatmul.mubr.bf16.gmra.mrb[0].mxu0 %v10492
      %v10927 = vpop.f32.mrb[0].mxu0
      %v10928 = vadd.f32 %v1219, %v10927
      %v10929 = vpop.f32.mrb[0].mxu0
      %v10930 = vpop.f32.mrb[0].mxu0
      %v10931 = vadd.f32 %v1223, %v10930
      %v10932 = vpop.f32.mrb[0].mxu0
      %10933 = vmatprep.mubr.bf16.mxu0 0
      %10934 = vmatmul.mubr.bf16.gmra.mrb[0].mxu0 %v10495
      %v10935 = vpop.f32.mrb[0].mxu0
      %v10936 = vadd.f32 %v1229, %v10935
      %v10937 = vpop.f32.mrb[0].mxu0
      %v10938 = vpop.f32.mrb[0].mxu0
      %v10939 = vadd.f32 %v1233, %v10938
      %v10940 = vpop.f32.mrb[0].mxu0
      %10941 = vmatprep.mubr.bf16.mxu0 0
      %10942 = vmatmul.mubr.bf16.gmra.mrb[0].mxu0 %v10498
      %v10943 = vpop.f32.mrb[0].mxu0
      %v10944 = vadd.f32 %v1239, %v10943
      %v10945 = vpop.f32.mrb[0].mxu0
      %v10946 = vpop.f32.mrb[0].mxu0
      %v10947 = vadd.f32 %v1243, %v10946
      %v10948 = vpop.f32.mrb[0].mxu0
      %10949 = vmatprep.mubr.bf16.mxu0 0
      %10950 = vmatmul.mubr.bf16.gmra.mrb[0].mxu0 %v10501
      %v10951 = vpop.f32.mrb[0].mxu0
      %v10952 = vadd.f32 %v1249, %v10951
      %v10953 = vpop.f32.mrb[0].mxu0
      %v10954 = vpop.f32.mrb[0].mxu0
      %v10955 = vadd.f32 %v1253, %v10954
      %v10956 = vpop.f32.mrb[0].mxu0
      %10957 = vmatprep.mubr.bf16.mxu0 0
      %10958 = vmatmul.mubr.bf16.gmra.mrb[0].mxu0 %v10504
      %v10959 = vpop.f32.mrb[0].mxu0
      %v10960 = vadd.f32 %v1259, %v10959
      %v10961 = vpop.f32.mrb[0].mxu0
      %v10962 = vpop.f32.mrb[0].mxu0
      %v10963 = vadd.f32 %v1263, %v10962
      %v10964 = vpop.f32.mrb[0].mxu0
      %10965 = vmatprep.mubr.bf16.mxu0 0
      %10966 = vmatmul.mubr.bf16.gmra.mrb[0].mxu0 %v10507
      %v10967 = vpop.f32.mrb[0].mxu0
      %v10968 = vadd.f32 %v1269, %v10967
      %v10969 = vpop.f32.mrb[0].mxu0
      %v10970 = vpop.f32.mrb[0].mxu0
      %v10971 = vadd.f32 %v1273, %v10970
      %v10972 = vpop.f32.mrb[0].mxu0
      %10973 = vmatprep.mubr.bf16.mxu0 0
      %10974 = vmatmul.mubr.bf16.gmra.mrb[0].mxu0 %v10510
      %v10975 = vpop.f32.mrb[0].mxu0
      %v10976 = vadd.f32 %v1279, %v10975
      %v10977 = vpop.f32.mrb[0].mxu0
      %v10978 = vpop.f32.mrb[0].mxu0
      %v10979 = vadd.f32 %v1283, %v10978
      %v10980 = vpop.f32.mrb[0].mxu0
      %10981 = vmatprep.mubr.bf16.mxu0 0
      %10982 = vmatmul.mubr.bf16.gmra.mrb[0].mxu0 %v10513
      %v10983 = vpop.f32.mrb[0].mxu0
      %v10984 = vadd.f32 %v1289, %v10983
      %v10985 = vpop.f32.mrb[0].mxu0
      %v10986 = vpop.f32.mrb[0].mxu0
      %v10987 = vadd.f32 %v1293, %v10986
      %v10988 = vpop.f32.mrb[0].mxu0
      %10989 = vmatprep.mubr.bf16.mxu0 0
      %10990 = vmatmul.mubr.bf16.gmra.mrb[0].mxu0 %v10516
      %v10991 = vpop.f32.mrb[0].mxu0
      %v10992 = vadd.f32 %v1299, %v10991
      %v10993 = vpop.f32.mrb[0].mxu0
      %v10994 = vpop.f32.mrb[0].mxu0
      %v10995 = vadd.f32 %v1303, %v10994
      %v10996 = vpop.f32.mrb[0].mxu0
      %10997 = vmatprep.mubr.bf16.mxu0 0
      %10998 = vmatmul.mubr.bf16.gmra.mrb[0].mxu0 %v10519
      %v10999 = vpop.f32.mrb[0].mxu0
      %v11000 = vadd.f32 %v1309, %v10999
      %v11001 = vpop.f32.mrb[0].mxu0
      %v11002 = vpop.f32.mrb[0].mxu0
      %v11003 = vadd.f32 %v1313, %v11002
      %v11004 = vpop.f32.mrb[0].mxu0
      %11005 = vmatprep.mubr.bf16.mxu0 0
      %11006 = vmatmul.mubr.bf16.gmra.mrb[0].mxu0 %v10522
      %v11007 = vpop.f32.mrb[0].mxu0
      %v11008 = vadd.f32 %v1319, %v11007
      %v11009 = vpop.f32.mrb[0].mxu0
      %v11010 = vpop.f32.mrb[0].mxu0
      %v11011 = vadd.f32 %v1323, %v11010
      %v11012 = vpop.f32.mrb[0].mxu0
      %11013 = vmatprep.mubr.bf16.mxu0 0
      %11014 = vmatmul.mubr.bf16.gmra.mrb[0].mxu0 %v10525
      %v11015 = vpop.f32.mrb[0].mxu0
      %v11016 = vadd.f32 %v1329, %v11015
      %v11017 = vpop.f32.mrb[0].mxu0
      %v11018 = vpop.f32.mrb[0].mxu0
      %v11019 = vadd.f32 %v1333, %v11018
      %v11020 = vpop.f32.mrb[0].mxu0
      %11021 = vmatprep.mubr.bf16.mxu0 0
      %11022 = vmatmul.mubr.bf16.gmra.mrb[0].mxu0 %v10528
      %v11023 = vpop.f32.mrb[0].mxu0
      %v11024 = vadd.f32 %v1339, %v11023
      %v11025 = vpop.f32.mrb[0].mxu0
      %v11026 = vpop.f32.mrb[0].mxu0
      %v11027 = vadd.f32 %v1343, %v11026
      %v11028 = vpop.f32.mrb[0].mxu0
      %11029 = vmatprep.mubr.bf16.mxu0 0
      %11030 = vmatmul.mubr.bf16.gmra.mrb[0].mxu0 %v10531
      %v11031 = vpop.f32.mrb[0].mxu0
      %v11032 = vadd.f32 %v1349, %v11031
      %v11033 = vpop.f32.mrb[0].mxu0
      %v11034 = vpop.f32.mrb[0].mxu0
      %v11035 = vadd.f32 %v1353, %v11034
      %v11036 = vpop.f32.mrb[0].mxu0
      %11037 = vmatprep.mubr.bf16.mxu0 0
      %11038 = vmatmul.mubr.bf16.gmra.mrb[0].mxu0 %v10534
      %v11039 = vpop.f32.mrb[0].mxu0
      %v11040 = vadd.f32 %v1359, %v11039
      %v11041 = vpop.f32.mrb[0].mxu0
      %v11042 = vpop.f32.mrb[0].mxu0
      %v11043 = vadd.f32 %v1363, %v11042
      %v11044 = vpop.f32.mrb[0].mxu0
      %11045 = vmatprep.mubr.bf16.mxu0 0
      %11046 = vmatmul.mubr.bf16.gmra.mrb[0].mxu0 %v10537
      %v11047 = vpop.f32.mrb[0].mxu0
      %v11048 = vadd.f32 %v1369, %v11047
      %v11049 = vpop.f32.mrb[0].mxu0
      %v11050 = vpop.f32.mrb[0].mxu0
      %v11051 = vadd.f32 %v1373, %v11050
      %v11052 = vpop.f32.mrb[0].mxu0
      %11053 = vmatprep.mubr.bf16.mxu0 0
      %11054 = vmatmul.mubr.bf16.gmra.mrb[0].mxu0 %v10540
      %v11055 = vpop.f32.mrb[0].mxu0
      %v11056 = vadd.f32 %v1379, %v11055
      %v11057 = vpop.f32.mrb[0].mxu0
      %v11058 = vpop.f32.mrb[0].mxu0
      %v11059 = vadd.f32 %v1383, %v11058
      %v11060 = vpop.f32.mrb[0].mxu0
      %11061 = vmatprep.mubr.bf16.mxu0 0
      %11062 = vmatmul.mubr.bf16.gmra.mrb[0].mxu0 %v10543
      %v11063 = vpop.f32.mrb[0].mxu0
      %v11064 = vadd.f32 %v1389, %v11063
      %v11065 = vpop.f32.mrb[0].mxu0
      %v11066 = vpop.f32.mrb[0].mxu0
      %v11067 = vadd.f32 %v1393, %v11066
      %v11068 = vpop.f32.mrb[0].mxu0
      %11069 = vmatprep.mubr.bf16.mxu0 0
      %11070 = vmatmul.mubr.bf16.gmra.mrb[0].mxu0 %v10546
      %v11071 = vpop.f32.mrb[0].mxu0
      %v11072 = vadd.f32 %v1399, %v11071
      %v11073 = vpop.f32.mrb[0].mxu0
      %v11074 = vpop.f32.mrb[0].mxu0
      %v11075 = vadd.f32 %v1403, %v11074
      %v11076 = vpop.f32.mrb[0].mxu0
      %11077 = vmatprep.mubr.bf16.mxu0 0
      %11078 = vmatmul.mubr.bf16.gmra.mrb[0].mxu0 %v10549
      %v11079 = vpop.f32.mrb[0].mxu0
      %v11080 = vadd.f32 %v1409, %v11079
      %v11081 = vpop.f32.mrb[0].mxu0
      %v11082 = vpop.f32.mrb[0].mxu0
      %v11083 = vadd.f32 %v1413, %v11082
      %v11084 = vpop.f32.mrb[0].mxu0
      %11085 = vmatprep.mubr.bf16.mxu0 0
      %11086 = vmatmul.mubr.bf16.gmra.mrb[0].mxu0 %v10552
      %v11087 = vpop.f32.mrb[0].mxu0
      %v11088 = vadd.f32 %v1419, %v11087
      %v11089 = vpop.f32.mrb[0].mxu0
      %v11090 = vpop.f32.mrb[0].mxu0
      %v11091 = vadd.f32 %v1423, %v11090
      %v11092 = vpop.f32.mrb[0].mxu0
      %11093 = vmatprep.mubr.bf16.mxu0 0
      %11094 = vmatmul.mubr.bf16.gmra.mrb[0].mxu0 %v10555
      %v11095 = vpop.f32.mrb[0].mxu0
      %v11096 = vadd.f32 %v1429, %v11095
      %v11097 = vpop.f32.mrb[0].mxu0
      %v11098 = vpop.f32.mrb[0].mxu0
      %v11099 = vadd.f32 %v1433, %v11098
      %v11100 = vpop.f32.mrb[0].mxu0
      %11101 = vdwg.mxu0
      %v11102 = vld [vmem:[%s7] sm:$0x1]
      %v11104 = vlaneseq
      %v11105 = vshrl.u32 %v11104, 7
      %v11106 = vsub.s32 0, %v11105
      %v11107 = vrot.slane %v11102, %v11106
      %v11109 = vadd.f32 %v10592, %v11107
      %v11110 = vadd.f32 %v10595, %v11107
      %v11111 = vadd.f32 %v10600, %v11107
      %v11112 = vadd.f32 %v10603, %v11107
      %v11113 = vadd.f32 %v10608, %v11107
      %v11114 = vadd.f32 %v10611, %v11107
      %v11115 = vadd.f32 %v10616, %v11107
      %v11116 = vadd.f32 %v10619, %v11107
      %v11117 = vadd.f32 %v10624, %v11107
      %v11118 = vadd.f32 %v10627, %v11107
      %v11119 = vadd.f32 %v10632, %v11107
      %v11120 = vadd.f32 %v10635, %v11107
      %v11121 = vadd.f32 %v10640, %v11107
      %v11122 = vadd.f32 %v10643, %v11107
      %v11123 = vadd.f32 %v10648, %v11107
      %v11124 = vadd.f32 %v10651, %v11107
      %v11125 = vadd.f32 %v10656, %v11107
      %v11126 = vadd.f32 %v10659, %v11107
      %v11127 = vadd.f32 %v10664, %v11107
      %v11128 = vadd.f32 %v10667, %v11107
      %v11129 = vadd.f32 %v10672, %v11107
      %v11130 = vadd.f32 %v10675, %v11107
      %v11131 = vadd.f32 %v10680, %v11107
      %v11132 = vadd.f32 %v10683, %v11107
      %v11133 = vadd.f32 %v10688, %v11107
      %v11134 = vadd.f32 %v10691, %v11107
      %v11135 = vadd.f32 %v10696, %v11107
      %v11136 = vadd.f32 %v10699, %v11107
      %v11137 = vadd.f32 %v10704, %v11107
      %v11138 = vadd.f32 %v10707, %v11107
      %v11139 = vadd.f32 %v10712, %v11107
      %v11140 = vadd.f32 %v10715, %v11107
      %v11141 = vadd.f32 %v10720, %v11107
      %v11142 = vadd.f32 %v10723, %v11107
      %v11143 = vadd.f32 %v10728, %v11107
      %v11144 = vadd.f32 %v10731, %v11107
      %v11145 = vadd.f32 %v10736, %v11107
      %v11146 = vadd.f32 %v10739, %v11107
      %v11147 = vadd.f32 %v10744, %v11107
      %v11148 = vadd.f32 %v10747, %v11107
      %v11149 = vadd.f32 %v10752, %v11107
      %v11150 = vadd.f32 %v10755, %v11107
      %v11151 = vadd.f32 %v10760, %v11107
      %v11152 = vadd.f32 %v10763, %v11107
      %v11153 = vadd.f32 %v10768, %v11107
      %v11154 = vadd.f32 %v10771, %v11107
      %v11155 = vadd.f32 %v10776, %v11107
      %v11156 = vadd.f32 %v10779, %v11107
      %v11157 = vadd.f32 %v10784, %v11107
      %v11158 = vadd.f32 %v10787, %v11107
      %v11159 = vadd.f32 %v10792, %v11107
      %v11160 = vadd.f32 %v10795, %v11107
      %v11161 = vadd.f32 %v10800, %v11107
      %v11162 = vadd.f32 %v10803, %v11107
      %v11163 = vadd.f32 %v10808, %v11107
      %v11164 = vadd.f32 %v10811, %v11107
      %v11165 = vadd.f32 %v10816, %v11107
      %v11166 = vadd.f32 %v10819, %v11107
      %v11167 = vadd.f32 %v10824, %v11107
      %v11168 = vadd.f32 %v10827, %v11107
      %v11169 = vadd.f32 %v10832, %v11107
      %v11170 = vadd.f32 %v10835, %v11107
      %v11171 = vadd.f32 %v10840, %v11107
      %v11172 = vadd.f32 %v10843, %v11107
      %v11173 = vadd.f32 %v10848, %v11107
      %v11174 = vadd.f32 %v10851, %v11107
      %v11175 = vadd.f32 %v10856, %v11107
      %v11176 = vadd.f32 %v10859, %v11107
      %v11177 = vadd.f32 %v10864, %v11107
      %v11178 = vadd.f32 %v10867, %v11107
      %v11179 = vadd.f32 %v10872, %v11107
      %v11180 = vadd.f32 %v10875, %v11107
      %v11181 = vadd.f32 %v10880, %v11107
      %v11182 = vadd.f32 %v10883, %v11107
      %v11183 = vadd.f32 %v10888, %v11107
      %v11184 = vadd.f32 %v10891, %v11107
      %v11185 = vadd.f32 %v10896, %v11107
      %v11186 = vadd.f32 %v10899, %v11107
      %v11187 = vadd.f32 %v10904, %v11107
      %v11188 = vadd.f32 %v10907, %v11107
      %v11189 = vadd.f32 %v10912, %v11107
      %v11190 = vadd.f32 %v10915, %v11107
      %v11191 = vadd.f32 %v10920, %v11107
      %v11192 = vadd.f32 %v10923, %v11107
      %v11193 = vadd.f32 %v10928, %v11107
      %v11194 = vadd.f32 %v10931, %v11107
      %v11195 = vadd.f32 %v10936, %v11107
      %v11196 = vadd.f32 %v10939, %v11107
      %v11197 = vadd.f32 %v10944, %v11107
      %v11198 = vadd.f32 %v10947, %v11107
      %v11199 = vadd.f32 %v10952, %v11107
      %v11200 = vadd.f32 %v10955, %v11107
      %v11201 = vadd.f32 %v10960, %v11107
      %v11202 = vadd.f32 %v10963, %v11107
      %v11203 = vadd.f32 %v10968, %v11107
      %v11204 = vadd.f32 %v10971, %v11107
      %v11205 = vadd.f32 %v10976, %v11107
      %v11206 = vadd.f32 %v10979, %v11107
      %v11207 = vadd.f32 %v10984, %v11107
      %v11208 = vadd.f32 %v10987, %v11107
      %v11209 = vadd.f32 %v10992, %v11107
      %v11210 = vadd.f32 %v10995, %v11107
      %v11211 = vadd.f32 %v11000, %v11107
      %v11212 = vadd.f32 %v11003, %v11107
      %v11213 = vadd.f32 %v11008, %v11107
      %v11214 = vadd.f32 %v11011, %v11107
      %v11215 = vadd.f32 %v11016, %v11107
      %v11216 = vadd.f32 %v11019, %v11107
      %v11217 = vadd.f32 %v11024, %v11107
      %v11218 = vadd.f32 %v11027, %v11107
      %v11219 = vadd.f32 %v11032, %v11107
      %v11220 = vadd.f32 %v11035, %v11107
      %v11221 = vadd.f32 %v11040, %v11107
      %v11222 = vadd.f32 %v11043, %v11107
      %v11223 = vadd.f32 %v11048, %v11107
      %v11224 = vadd.f32 %v11051, %v11107
      %v11225 = vadd.f32 %v11056, %v11107
      %v11226 = vadd.f32 %v11059, %v11107
      %v11227 = vadd.f32 %v11064, %v11107
      %v11228 = vadd.f32 %v11067, %v11107
      %v11229 = vadd.f32 %v11072, %v11107
      %v11230 = vadd.f32 %v11075, %v11107
      %v11231 = vadd.f32 %v11080, %v11107
      %v11232 = vadd.f32 %v11083, %v11107
      %v11233 = vadd.f32 %v11088, %v11107
      %v11234 = vadd.f32 %v11091, %v11107
      %v11235 = vadd.f32 %v11096, %v11107
      %v11236 = vadd.f32 %v11099, %v11107
      %v11237 = vmax.f32 %v11109, 0.0
      %v11238 = vmax.f32 %v11110, 0.0
      %v11239 = vmax.f32 %v11111, 0.0
      %v11240 = vmax.f32 %v11112, 0.0
      %v11241 = vmax.f32 %v11113, 0.0
      %v11242 = vmax.f32 %v11114, 0.0
      %v11243 = vmax.f32 %v11115, 0.0
      %v11244 = vmax.f32 %v11116, 0.0
      %v11245 = vmax.f32 %v11117, 0.0
      %v11246 = vmax.f32 %v11118, 0.0
      %v11247 = vmax.f32 %v11119, 0.0
      %v11248 = vmax.f32 %v11120, 0.0
      %v11249 = vmax.f32 %v11121, 0.0
      %v11250 = vmax.f32 %v11122, 0.0
      %v11251 = vmax.f32 %v11123, 0.0
      %v11252 = vmax.f32 %v11124, 0.0
      %v11253 = vmax.f32 %v11125, 0.0
      %v11254 = vmax.f32 %v11126, 0.0
      %v11255 = vmax.f32 %v11127, 0.0
      %v11256 = vmax.f32 %v11128, 0.0
      %v11257 = vmax.f32 %v11129, 0.0
      %v11258 = vmax.f32 %v11130, 0.0
      %v11259 = vmax.f32 %v11131, 0.0
      %v11260 = vmax.f32 %v11132, 0.0
      %v11261 = vmax.f32 %v11133, 0.0
      %v11262 = vmax.f32 %v11134, 0.0
      %v11263 = vmax.f32 %v11135, 0.0
      %v11264 = vmax.f32 %v11136, 0.0
      %v11265 = vmax.f32 %v11137, 0.0
      %v11266 = vmax.f32 %v11138, 0.0
      %v11267 = vmax.f32 %v11139, 0.0
      %v11268 = vmax.f32 %v11140, 0.0
      %v11269 = vmax.f32 %v11141, 0.0
      %v11270 = vmax.f32 %v11142, 0.0
      %v11271 = vmax.f32 %v11143, 0.0
      %v11272 = vmax.f32 %v11144, 0.0
      %v11273 = vmax.f32 %v11145, 0.0
      %v11274 = vmax.f32 %v11146, 0.0
      %v11275 = vmax.f32 %v11147, 0.0
      %v11276 = vmax.f32 %v11148, 0.0
      %v11277 = vmax.f32 %v11149, 0.0
      %v11278 = vmax.f32 %v11150, 0.0
      %v11279 = vmax.f32 %v11151, 0.0
      %v11280 = vmax.f32 %v11152, 0.0
      %v11281 = vmax.f32 %v11153, 0.0
      %v11282 = vmax.f32 %v11154, 0.0
      %v11283 = vmax.f32 %v11155, 0.0
      %v11284 = vmax.f32 %v11156, 0.0
      %v11285 = vmax.f32 %v11157, 0.0
      %v11286 = vmax.f32 %v11158, 0.0
      %v11287 = vmax.f32 %v11159, 0.0
      %v11288 = vmax.f32 %v11160, 0.0
      %v11289 = vmax.f32 %v11161, 0.0
      %v11290 = vmax.f32 %v11162, 0.0
      %v11291 = vmax.f32 %v11163, 0.0
      %v11292 = vmax.f32 %v11164, 0.0
      %v11293 = vmax.f32 %v11165, 0.0
      %v11294 = vmax.f32 %v11166, 0.0
      %v11295 = vmax.f32 %v11167, 0.0
      %v11296 = vmax.f32 %v11168, 0.0
      %v11297 = vmax.f32 %v11169, 0.0
      %v11298 = vmax.f32 %v11170, 0.0
      %v11299 = vmax.f32 %v11171, 0.0
      %v11300 = vmax.f32 %v11172, 0.0
      %v11301 = vmax.f32 %v11173, 0.0
      %v11302 = vmax.f32 %v11174, 0.0
      %v11303 = vmax.f32 %v11175, 0.0
      %v11304 = vmax.f32 %v11176, 0.0
      %v11305 = vmax.f32 %v11177, 0.0
      %v11306 = vmax.f32 %v11178, 0.0
      %v11307 = vmax.f32 %v11179, 0.0
      %v11308 = vmax.f32 %v11180, 0.0
      %v11309 = vmax.f32 %v11181, 0.0
      %v11310 = vmax.f32 %v11182, 0.0
      %v11311 = vmax.f32 %v11183, 0.0
      %v11312 = vmax.f32 %v11184, 0.0
      %v11313 = vmax.f32 %v11185, 0.0
      %v11314 = vmax.f32 %v11186, 0.0
      %v11315 = vmax.f32 %v11187, 0.0
      %v11316 = vmax.f32 %v11188, 0.0
      %v11317 = vmax.f32 %v11189, 0.0
      %v11318 = vmax.f32 %v11190, 0.0
      %v11319 = vmax.f32 %v11191, 0.0
      %v11320 = vmax.f32 %v11192, 0.0
      %v11321 = vmax.f32 %v11193, 0.0
      %v11322 = vmax.f32 %v11194, 0.0
      %v11323 = vmax.f32 %v11195, 0.0
      %v11324 = vmax.f32 %v11196, 0.0
      %v11325 = vmax.f32 %v11197, 0.0
      %v11326 = vmax.f32 %v11198, 0.0
      %v11327 = vmax.f32 %v11199, 0.0
      %v11328 = vmax.f32 %v11200, 0.0
      %v11329 = vmax.f32 %v11201, 0.0
      %v11330 = vmax.f32 %v11202, 0.0
      %v11331 = vmax.f32 %v11203, 0.0
      %v11332 = vmax.f32 %v11204, 0.0
      %v11333 = vmax.f32 %v11205, 0.0
      %v11334 = vmax.f32 %v11206, 0.0
      %v11335 = vmax.f32 %v11207, 0.0
      %v11336 = vmax.f32 %v11208, 0.0
      %v11337 = vmax.f32 %v11209, 0.0
      %v11338 = vmax.f32 %v11210, 0.0
      %v11339 = vmax.f32 %v11211, 0.0
      %v11340 = vmax.f32 %v11212, 0.0
      %v11341 = vmax.f32 %v11213, 0.0
      %v11342 = vmax.f32 %v11214, 0.0
      %v11343 = vmax.f32 %v11215, 0.0
      %v11344 = vmax.f32 %v11216, 0.0
      %v11345 = vmax.f32 %v11217, 0.0
      %v11346 = vmax.f32 %v11218, 0.0
      %v11347 = vmax.f32 %v11219, 0.0
      %v11348 = vmax.f32 %v11220, 0.0
      %v11349 = vmax.f32 %v11221, 0.0
      %v11350 = vmax.f32 %v11222, 0.0
      %v11351 = vmax.f32 %v11223, 0.0
      %v11352 = vmax.f32 %v11224, 0.0
      %v11353 = vmax.f32 %v11225, 0.0
      %v11354 = vmax.f32 %v11226, 0.0
      %v11355 = vmax.f32 %v11227, 0.0
      %v11356 = vmax.f32 %v11228, 0.0
      %v11357 = vmax.f32 %v11229, 0.0
      %v11358 = vmax.f32 %v11230, 0.0
      %v11359 = vmax.f32 %v11231, 0.0
      %v11360 = vmax.f32 %v11232, 0.0
      %v11361 = vmax.f32 %v11233, 0.0
      %v11362 = vmax.f32 %v11234, 0.0
      %v11363 = vmax.f32 %v11235, 0.0
      %v11364 = vmax.f32 %v11236, 0.0
      %v11365 = vld [vmem:[%s8] sm:$0xf]
      %v11366 = vld [vmem:[%s8 + $0x4] sm:$0xf]
      %v11367 = vld [vmem:[%s8 + $0x8] sm:$0xf]
      %v11368 = vld [vmem:[%s8 + $0xc] sm:$0xf]
      %v11369 = vpack.c.bf16 %v11238, %v11237
      %v11370 = vpack.c.bf16 %v11240, %v11239
      %v11371 = vpack.c.bf16 %v11242, %v11241
      %v11372 = vpack.c.bf16 %v11244, %v11243
      %v11373 = vpack.c.bf16 %v11246, %v11245
      %v11374 = vpack.c.bf16 %v11248, %v11247
      %v11375 = vpack.c.bf16 %v11250, %v11249
      %v11376 = vpack.c.bf16 %v11252, %v11251
      %v11377 = vpack.c.bf16 %v11254, %v11253
      %v11378 = vpack.c.bf16 %v11256, %v11255
      %v11379 = vpack.c.bf16 %v11258, %v11257
      %v11380 = vpack.c.bf16 %v11260, %v11259
      %v11381 = vpack.c.bf16 %v11262, %v11261
      %v11382 = vpack.c.bf16 %v11264, %v11263
      %v11383 = vpack.c.bf16 %v11266, %v11265
      %v11384 = vpack.c.bf16 %v11268, %v11267
      %v11385 = vpack.c.bf16 %v11270, %v11269
      %v11386 = vpack.c.bf16 %v11272, %v11271
      %v11387 = vpack.c.bf16 %v11274, %v11273
      %v11388 = vpack.c.bf16 %v11276, %v11275
      %v11389 = vpack.c.bf16 %v11278, %v11277
      %v11390 = vpack.c.bf16 %v11280, %v11279
      %v11391 = vpack.c.bf16 %v11282, %v11281
      %v11392 = vpack.c.bf16 %v11284, %v11283
      %v11393 = vpack.c.bf16 %v11286, %v11285
      %v11394 = vpack.c.bf16 %v11288, %v11287
      %v11395 = vpack.c.bf16 %v11290, %v11289
      %v11396 = vpack.c.bf16 %v11292, %v11291
      %v11397 = vpack.c.bf16 %v11294, %v11293
      %v11398 = vpack.c.bf16 %v11296, %v11295
      %v11399 = vpack.c.bf16 %v11298, %v11297
      %v11400 = vpack.c.bf16 %v11300, %v11299
      %v11401 = vpack.c.bf16 %v11302, %v11301
      %v11402 = vpack.c.bf16 %v11304, %v11303
      %v11403 = vpack.c.bf16 %v11306, %v11305
      %v11404 = vpack.c.bf16 %v11308, %v11307
      %v11405 = vpack.c.bf16 %v11310, %v11309
      %v11406 = vpack.c.bf16 %v11312, %v11311
      %v11407 = vpack.c.bf16 %v11314, %v11313
      %v11408 = vpack.c.bf16 %v11316, %v11315
      %v11409 = vpack.c.bf16 %v11318, %v11317
      %v11410 = vpack.c.bf16 %v11320, %v11319
      %v11411 = vpack.c.bf16 %v11322, %v11321
      %v11412 = vpack.c.bf16 %v11324, %v11323
      %v11413 = vpack.c.bf16 %v11326, %v11325
      %v11414 = vpack.c.bf16 %v11328, %v11327
      %v11415 = vpack.c.bf16 %v11330, %v11329
      %v11416 = vpack.c.bf16 %v11332, %v11331
      %v11417 = vpack.c.bf16 %v11334, %v11333
      %v11418 = vpack.c.bf16 %v11336, %v11335
      %v11419 = vpack.c.bf16 %v11338, %v11337
      %v11420 = vpack.c.bf16 %v11340, %v11339
      %v11421 = vpack.c.bf16 %v11342, %v11341
      %v11422 = vpack.c.bf16 %v11344, %v11343
      %v11423 = vpack.c.bf16 %v11346, %v11345
      %v11424 = vpack.c.bf16 %v11348, %v11347
      %v11425 = vpack.c.bf16 %v11350, %v11349
      %v11426 = vpack.c.bf16 %v11352, %v11351
      %v11427 = vpack.c.bf16 %v11354, %v11353
      %v11428 = vpack.c.bf16 %v11356, %v11355
      %v11429 = vpack.c.bf16 %v11358, %v11357
      %v11430 = vpack.c.bf16 %v11360, %v11359
      %v11431 = vpack.c.bf16 %v11362, %v11361
      %v11432 = vpack.c.bf16 %v11364, %v11363
      %v11433 = vld [vmem:[%s9] sm:$0x1]
      %v11435 = vlaneseq
      %v11436 = vshrl.u32 %v11435, 7
      %v11437 = vsub.s32 0, %v11436
      %v11438 = vrot.slane %v11433, %v11437
      %v11444 = vunpack.c.l.b16 %v11365
      %v11445 = vunpack.c.l.b16 %v11366
      %v11446 = vunpack.c.l.b16 %v11367
      %v11447 = vunpack.c.l.b16 %v11368
      %v11448 = vpack.c.b16 %v11445, %v11444
      %v11449 = vpack.c.b16 %v11447, %v11446
      %vm11452 = vcmask 261120
      %v11454 = vsel %vm11452, %v11369, 0
      %v11457 = vsel %vm11452, %v11370, 0
      %v11460 = vsel %vm11452, %v11371, 0
      %v11463 = vsel %vm11452, %v11372, 0
      %v11466 = vsel %vm11452, %v11373, 0
      %v11469 = vsel %vm11452, %v11374, 0
      %v11472 = vsel %vm11452, %v11375, 0
      %v11475 = vsel %vm11452, %v11376, 0
      %v11478 = vsel %vm11452, %v11377, 0
      %v11481 = vsel %vm11452, %v11378, 0
      %v11484 = vsel %vm11452, %v11379, 0
      %v11487 = vsel %vm11452, %v11380, 0
      %v11490 = vsel %vm11452, %v11381, 0
      %v11493 = vsel %vm11452, %v11382, 0
      %v11496 = vsel %vm11452, %v11383, 0
      %v11499 = vsel %vm11452, %v11384, 0
      %v11502 = vsel %vm11452, %v11385, 0
      %v11505 = vsel %vm11452, %v11386, 0
      %v11508 = vsel %vm11452, %v11387, 0
      %v11511 = vsel %vm11452, %v11388, 0
      %v11514 = vsel %vm11452, %v11389, 0
      %v11517 = vsel %vm11452, %v11390, 0
      %v11520 = vsel %vm11452, %v11391, 0
      %v11523 = vsel %vm11452, %v11392, 0
      %v11526 = vsel %vm11452, %v11393, 0
      %v11529 = vsel %vm11452, %v11394, 0
      %v11532 = vsel %vm11452, %v11395, 0
      %v11535 = vsel %vm11452, %v11396, 0
      %v11538 = vsel %vm11452, %v11397, 0
      %v11541 = vsel %vm11452, %v11398, 0
      %v11544 = vsel %vm11452, %v11399, 0
      %v11547 = vsel %vm11452, %v11400, 0
      %v11550 = vsel %vm11452, %v11401, 0
      %v11553 = vsel %vm11452, %v11402, 0
      %v11556 = vsel %vm11452, %v11403, 0
      %v11559 = vsel %vm11452, %v11404, 0
      %v11562 = vsel %vm11452, %v11405, 0
      %v11565 = vsel %vm11452, %v11406, 0
      %v11568 = vsel %vm11452, %v11407, 0
      %v11571 = vsel %vm11452, %v11408, 0
      %v11574 = vsel %vm11452, %v11409, 0
      %v11577 = vsel %vm11452, %v11410, 0
      %v11580 = vsel %vm11452, %v11411, 0
      %v11583 = vsel %vm11452, %v11412, 0
      %v11586 = vsel %vm11452, %v11413, 0
      %v11589 = vsel %vm11452, %v11414, 0
      %v11592 = vsel %vm11452, %v11415, 0
      %v11595 = vsel %vm11452, %v11416, 0
      %v11598 = vsel %vm11452, %v11417, 0
      %v11601 = vsel %vm11452, %v11418, 0
      %v11604 = vsel %vm11452, %v11419, 0
      %v11607 = vsel %vm11452, %v11420, 0
      %v11610 = vsel %vm11452, %v11421, 0
      %v11613 = vsel %vm11452, %v11422, 0
      %v11616 = vsel %vm11452, %v11423, 0
      %v11619 = vsel %vm11452, %v11424, 0
      %v11622 = vsel %vm11452, %v11425, 0
      %v11625 = vsel %vm11452, %v11426, 0
      %v11628 = vsel %vm11452, %v11427, 0
      %v11631 = vsel %vm11452, %v11428, 0
      %v11634 = vsel %vm11452, %v11429, 0
      %v11637 = vsel %vm11452, %v11430, 0
      %v11640 = vsel %vm11452, %v11431, 0
      %v11643 = vsel %vm11452, %v11432, 0
      %11645 = vmatprep.subr.bf16.mxu0 0
      %11646 = vmatpush1.bf16.msra.mxu0 %v11448
      %11647 = vmatprep.subr.bf16.mxu0 0
      %11648 = vmatpush1.bf16.msra.mxu0 %v11449
      %11649 = vmatprep.subr.bf16.mxu0 0
      %11650 = vmatpush1.bf16.msra.mxu0 0
      %11651 = vmatprep.subr.bf16.mxu0 0
      %11652 = vmatpush1.bf16.msra.mxu0 0
      %11653 = vmatprep.subr.bf16.mxu0 0
      %11654 = vmatpush1.bf16.msra.mxu0 0
      %11655 = vmatprep.subr.bf16.mxu0 0
      %11656 = vmatpush1.bf16.msra.mxu0 0
      %11657 = vmatprep.subr.bf16.mxu0 0
      %11658 = vmatpush1.bf16.msra.mxu0 0
      %11659 = vmatprep.subr.bf16.mxu0 0
      %11660 = vmatpush1.bf16.msra.mxu0 0
      %11661 = vmatprep.subr.bf16.mxu0 0
      %11662 = vmatpush1.bf16.msra.mxu0 0
      %11663 = vmatprep.subr.bf16.mxu0 0
      %11664 = vmatpush1.bf16.msra.mxu0 0
      %11665 = vmatprep.subr.bf16.mxu0 0
      %11666 = vmatpush1.bf16.msra.mxu0 0
      %11667 = vmatprep.subr.bf16.mxu0 0
      %11668 = vmatpush1.bf16.msra.mxu0 0
      %11669 = vmatprep.subr.bf16.mxu0 0
      %11670 = vmatpush1.bf16.msra.mxu0 0
      %11671 = vmatprep.subr.bf16.mxu0 0
      %11672 = vmatpush1.bf16.msra.mxu0 0
      %11673 = vmatprep.subr.bf16.mxu0 0
      %11674 = vmatpush1.bf16.msra.mxu0 0
      %11675 = vmatprep.subr.bf16.mxu0 0
      %11676 = vmatpush1.bf16.msra.mxu0 0
      %11677 = vmatprep.mubr.bf16.mxu0 0
      %11678 = vmatmul.mubr.bf16.gmra.mrb[0].mxu0 %v11454
      %v11679 = vpop.f32.mrb[0].mxu0
      %v11680 = vadd.f32 %v11438, %v11679
      %v11681 = vpop.f32.mrb[0].mxu0
      %v11682 = vpop.f32.mrb[0].mxu0
      %v11683 = vadd.f32 %v11438, %v11682
      %v11684 = vpop.f32.mrb[0].mxu0
      %11685 = vmatprep.mubr.bf16.mxu0 0
      %11686 = vmatmul.mubr.bf16.gmra.mrb[0].mxu0 %v11457
      %v11687 = vpop.f32.mrb[0].mxu0
      %v11688 = vadd.f32 %v11438, %v11687
      %v11689 = vpop.f32.mrb[0].mxu0
      %v11690 = vpop.f32.mrb[0].mxu0
      %v11691 = vadd.f32 %v11438, %v11690
      %v11692 = vpop.f32.mrb[0].mxu0
      %11693 = vmatprep.mubr.bf16.mxu0 0
      %11694 = vmatmul.mubr.bf16.gmra.mrb[0].mxu0 %v11460
      %v11695 = vpop.f32.mrb[0].mxu0
      %v11696 = vadd.f32 %v11438, %v11695
      %v11697 = vpop.f32.mrb[0].mxu0
      %v11698 = vpop.f32.mrb[0].mxu0
      %v11699 = vadd.f32 %v11438, %v11698
      %v11700 = vpop.f32.mrb[0].mxu0
      %11701 = vmatprep.mubr.bf16.mxu0 0
      %11702 = vmatmul.mubr.bf16.gmra.mrb[0].mxu0 %v11463
      %v11703 = vpop.f32.mrb[0].mxu0
      %v11704 = vadd.f32 %v11438, %v11703
      %v11705 = vpop.f32.mrb[0].mxu0
      %v11706 = vpop.f32.mrb[0].mxu0
      %v11707 = vadd.f32 %v11438, %v11706
      %v11708 = vpop.f32.mrb[0].mxu0
      %11709 = vmatprep.mubr.bf16.mxu0 0
      %11710 = vmatmul.mubr.bf16.gmra.mrb[0].mxu0 %v11466
      %v11711 = vpop.f32.mrb[0].mxu0
      %v11712 = vadd.f32 %v11438, %v11711
      %v11713 = vpop.f32.mrb[0].mxu0
      %v11714 = vpop.f32.mrb[0].mxu0
      %v11715 = vadd.f32 %v11438, %v11714
      %v11716 = vpop.f32.mrb[0].mxu0
      %11717 = vmatprep.mubr.bf16.mxu0 0
      %11718 = vmatmul.mubr.bf16.gmra.mrb[0].mxu0 %v11469
      %v11719 = vpop.f32.mrb[0].mxu0
      %v11720 = vadd.f32 %v11438, %v11719
      %v11721 = vpop.f32.mrb[0].mxu0
      %v11722 = vpop.f32.mrb[0].mxu0
      %v11723 = vadd.f32 %v11438, %v11722
      %v11724 = vpop.f32.mrb[0].mxu0
      %11725 = vmatprep.mubr.bf16.mxu0 0
      %11726 = vmatmul.mubr.bf16.gmra.mrb[0].mxu0 %v11472
      %v11727 = vpop.f32.mrb[0].mxu0
      %v11728 = vadd.f32 %v11438, %v11727
      %v11729 = vpop.f32.mrb[0].mxu0
      %v11730 = vpop.f32.mrb[0].mxu0
      %v11731 = vadd.f32 %v11438, %v11730
      %v11732 = vpop.f32.mrb[0].mxu0
      %11733 = vmatprep.mubr.bf16.mxu0 0
      %11734 = vmatmul.mubr.bf16.gmra.mrb[0].mxu0 %v11475
      %v11735 = vpop.f32.mrb[0].mxu0
      %v11736 = vadd.f32 %v11438, %v11735
      %v11737 = vpop.f32.mrb[0].mxu0
      %v11738 = vpop.f32.mrb[0].mxu0
      %v11739 = vadd.f32 %v11438, %v11738
      %v11740 = vpop.f32.mrb[0].mxu0
      %11741 = vmatprep.mubr.bf16.mxu0 0
      %11742 = vmatmul.mubr.bf16.gmra.mrb[0].mxu0 %v11478
      %v11743 = vpop.f32.mrb[0].mxu0
      %v11744 = vadd.f32 %v11438, %v11743
      %v11745 = vpop.f32.mrb[0].mxu0
      %v11746 = vpop.f32.mrb[0].mxu0
      %v11747 = vadd.f32 %v11438, %v11746
      %v11748 = vpop.f32.mrb[0].mxu0
      %11749 = vmatprep.mubr.bf16.mxu0 0
      %11750 = vmatmul.mubr.bf16.gmra.mrb[0].mxu0 %v11481
      %v11751 = vpop.f32.mrb[0].mxu0
      %v11752 = vadd.f32 %v11438, %v11751
      %v11753 = vpop.f32.mrb[0].mxu0
      %v11754 = vpop.f32.mrb[0].mxu0
      %v11755 = vadd.f32 %v11438, %v11754
      %v11756 = vpop.f32.mrb[0].mxu0
      %11757 = vmatprep.mubr.bf16.mxu0 0
      %11758 = vmatmul.mubr.bf16.gmra.mrb[0].mxu0 %v11484
      %v11759 = vpop.f32.mrb[0].mxu0
      %v11760 = vadd.f32 %v11438, %v11759
      %v11761 = vpop.f32.mrb[0].mxu0
      %v11762 = vpop.f32.mrb[0].mxu0
      %v11763 = vadd.f32 %v11438, %v11762
      %v11764 = vpop.f32.mrb[0].mxu0
      %11765 = vmatprep.mubr.bf16.mxu0 0
      %11766 = vmatmul.mubr.bf16.gmra.mrb[0].mxu0 %v11487
      %v11767 = vpop.f32.mrb[0].mxu0
      %v11768 = vadd.f32 %v11438, %v11767
      %v11769 = vpop.f32.mrb[0].mxu0
      %v11770 = vpop.f32.mrb[0].mxu0
      %v11771 = vadd.f32 %v11438, %v11770
      %v11772 = vpop.f32.mrb[0].mxu0
      %11773 = vmatprep.mubr.bf16.mxu0 0
      %11774 = vmatmul.mubr.bf16.gmra.mrb[0].mxu0 %v11490
      %v11775 = vpop.f32.mrb[0].mxu0
      %v11776 = vadd.f32 %v11438, %v11775
      %v11777 = vpop.f32.mrb[0].mxu0
      %v11778 = vpop.f32.mrb[0].mxu0
      %v11779 = vadd.f32 %v11438, %v11778
      %v11780 = vpop.f32.mrb[0].mxu0
      %11781 = vmatprep.mubr.bf16.mxu0 0
      %11782 = vmatmul.mubr.bf16.gmra.mrb[0].mxu0 %v11493
      %v11783 = vpop.f32.mrb[0].mxu0
      %v11784 = vadd.f32 %v11438, %v11783
      %v11785 = vpop.f32.mrb[0].mxu0
      %v11786 = vpop.f32.mrb[0].mxu0
      %v11787 = vadd.f32 %v11438, %v11786
      %v11788 = vpop.f32.mrb[0].mxu0
      %11789 = vmatprep.mubr.bf16.mxu0 0
      %11790 = vmatmul.mubr.bf16.gmra.mrb[0].mxu0 %v11496
      %v11791 = vpop.f32.mrb[0].mxu0
      %v11792 = vadd.f32 %v11438, %v11791
      %v11793 = vpop.f32.mrb[0].mxu0
      %v11794 = vpop.f32.mrb[0].mxu0
      %v11795 = vadd.f32 %v11438, %v11794
      %v11796 = vpop.f32.mrb[0].mxu0
      %11797 = vmatprep.mubr.bf16.mxu0 0
      %11798 = vmatmul.mubr.bf16.gmra.mrb[0].mxu0 %v11499
      %v11799 = vpop.f32.mrb[0].mxu0
      %v11800 = vadd.f32 %v11438, %v11799
      %v11801 = vpop.f32.mrb[0].mxu0
      %v11802 = vpop.f32.mrb[0].mxu0
      %v11803 = vadd.f32 %v11438, %v11802
      %v11804 = vpop.f32.mrb[0].mxu0
      %11805 = vmatprep.mubr.bf16.mxu0 0
      %11806 = vmatmul.mubr.bf16.gmra.mrb[0].mxu0 %v11502
      %v11807 = vpop.f32.mrb[0].mxu0
      %v11808 = vadd.f32 %v11438, %v11807
      %v11809 = vpop.f32.mrb[0].mxu0
      %v11810 = vpop.f32.mrb[0].mxu0
      %v11811 = vadd.f32 %v11438, %v11810
      %v11812 = vpop.f32.mrb[0].mxu0
      %11813 = vmatprep.mubr.bf16.mxu0 0
      %11814 = vmatmul.mubr.bf16.gmra.mrb[0].mxu0 %v11505
      %v11815 = vpop.f32.mrb[0].mxu0
      %v11816 = vadd.f32 %v11438, %v11815
      %v11817 = vpop.f32.mrb[0].mxu0
      %v11818 = vpop.f32.mrb[0].mxu0
      %v11819 = vadd.f32 %v11438, %v11818
      %v11820 = vpop.f32.mrb[0].mxu0
      %11821 = vmatprep.mubr.bf16.mxu0 0
      %11822 = vmatmul.mubr.bf16.gmra.mrb[0].mxu0 %v11508
      %v11823 = vpop.f32.mrb[0].mxu0
      %v11824 = vadd.f32 %v11438, %v11823
      %v11825 = vpop.f32.mrb[0].mxu0
      %v11826 = vpop.f32.mrb[0].mxu0
      %v11827 = vadd.f32 %v11438, %v11826
      %v11828 = vpop.f32.mrb[0].mxu0
      %11829 = vmatprep.mubr.bf16.mxu0 0
      %11830 = vmatmul.mubr.bf16.gmra.mrb[0].mxu0 %v11511
      %v11831 = vpop.f32.mrb[0].mxu0
      %v11832 = vadd.f32 %v11438, %v11831
      %v11833 = vpop.f32.mrb[0].mxu0
      %v11834 = vpop.f32.mrb[0].mxu0
      %v11835 = vadd.f32 %v11438, %v11834
      %v11836 = vpop.f32.mrb[0].mxu0
      %11837 = vmatprep.mubr.bf16.mxu0 0
      %11838 = vmatmul.mubr.bf16.gmra.mrb[0].mxu0 %v11514
      %v11839 = vpop.f32.mrb[0].mxu0
      %v11840 = vadd.f32 %v11438, %v11839
      %v11841 = vpop.f32.mrb[0].mxu0
      %v11842 = vpop.f32.mrb[0].mxu0
      %v11843 = vadd.f32 %v11438, %v11842
      %v11844 = vpop.f32.mrb[0].mxu0
      %11845 = vmatprep.mubr.bf16.mxu0 0
      %11846 = vmatmul.mubr.bf16.gmra.mrb[0].mxu0 %v11517
      %v11847 = vpop.f32.mrb[0].mxu0
      %v11848 = vadd.f32 %v11438, %v11847
      %v11849 = vpop.f32.mrb[0].mxu0
      %v11850 = vpop.f32.mrb[0].mxu0
      %v11851 = vadd.f32 %v11438, %v11850
      %v11852 = vpop.f32.mrb[0].mxu0
      %11853 = vmatprep.mubr.bf16.mxu0 0
      %11854 = vmatmul.mubr.bf16.gmra.mrb[0].mxu0 %v11520
      %v11855 = vpop.f32.mrb[0].mxu0
      %v11856 = vadd.f32 %v11438, %v11855
      %v11857 = vpop.f32.mrb[0].mxu0
      %v11858 = vpop.f32.mrb[0].mxu0
      %v11859 = vadd.f32 %v11438, %v11858
      %v11860 = vpop.f32.mrb[0].mxu0
      %11861 = vmatprep.mubr.bf16.mxu0 0
      %11862 = vmatmul.mubr.bf16.gmra.mrb[0].mxu0 %v11523
      %v11863 = vpop.f32.mrb[0].mxu0
      %v11864 = vadd.f32 %v11438, %v11863
      %v11865 = vpop.f32.mrb[0].mxu0
      %v11866 = vpop.f32.mrb[0].mxu0
      %v11867 = vadd.f32 %v11438, %v11866
      %v11868 = vpop.f32.mrb[0].mxu0
      %11869 = vmatprep.mubr.bf16.mxu0 0
      %11870 = vmatmul.mubr.bf16.gmra.mrb[0].mxu0 %v11526
      %v11871 = vpop.f32.mrb[0].mxu0
      %v11872 = vadd.f32 %v11438, %v11871
      %v11873 = vpop.f32.mrb[0].mxu0
      %v11874 = vpop.f32.mrb[0].mxu0
      %v11875 = vadd.f32 %v11438, %v11874
      %v11876 = vpop.f32.mrb[0].mxu0
      %11877 = vmatprep.mubr.bf16.mxu0 0
      %11878 = vmatmul.mubr.bf16.gmra.mrb[0].mxu0 %v11529
      %v11879 = vpop.f32.mrb[0].mxu0
      %v11880 = vadd.f32 %v11438, %v11879
      %v11881 = vpop.f32.mrb[0].mxu0
      %v11882 = vpop.f32.mrb[0].mxu0
      %v11883 = vadd.f32 %v11438, %v11882
      %v11884 = vpop.f32.mrb[0].mxu0
      %11885 = vmatprep.mubr.bf16.mxu0 0
      %11886 = vmatmul.mubr.bf16.gmra.mrb[0].mxu0 %v11532
      %v11887 = vpop.f32.mrb[0].mxu0
      %v11888 = vadd.f32 %v11438, %v11887
      %v11889 = vpop.f32.mrb[0].mxu0
      %v11890 = vpop.f32.mrb[0].mxu0
      %v11891 = vadd.f32 %v11438, %v11890
      %v11892 = vpop.f32.mrb[0].mxu0
      %11893 = vmatprep.mubr.bf16.mxu0 0
      %11894 = vmatmul.mubr.bf16.gmra.mrb[0].mxu0 %v11535
      %v11895 = vpop.f32.mrb[0].mxu0
      %v11896 = vadd.f32 %v11438, %v11895
      %v11897 = vpop.f32.mrb[0].mxu0
      %v11898 = vpop.f32.mrb[0].mxu0
      %v11899 = vadd.f32 %v11438, %v11898
      %v11900 = vpop.f32.mrb[0].mxu0
      %11901 = vmatprep.mubr.bf16.mxu0 0
      %11902 = vmatmul.mubr.bf16.gmra.mrb[0].mxu0 %v11538
      %v11903 = vpop.f32.mrb[0].mxu0
      %v11904 = vadd.f32 %v11438, %v11903
      %v11905 = vpop.f32.mrb[0].mxu0
      %v11906 = vpop.f32.mrb[0].mxu0
      %v11907 = vadd.f32 %v11438, %v11906
      %v11908 = vpop.f32.mrb[0].mxu0
      %11909 = vmatprep.mubr.bf16.mxu0 0
      %11910 = vmatmul.mubr.bf16.gmra.mrb[0].mxu0 %v11541
      %v11911 = vpop.f32.mrb[0].mxu0
      %v11912 = vadd.f32 %v11438, %v11911
      %v11913 = vpop.f32.mrb[0].mxu0
      %v11914 = vpop.f32.mrb[0].mxu0
      %v11915 = vadd.f32 %v11438, %v11914
      %v11916 = vpop.f32.mrb[0].mxu0
      %11917 = vmatprep.mubr.bf16.mxu0 0
      %11918 = vmatmul.mubr.bf16.gmra.mrb[0].mxu0 %v11544
      %v11919 = vpop.f32.mrb[0].mxu0
      %v11920 = vadd.f32 %v11438, %v11919
      %v11921 = vpop.f32.mrb[0].mxu0
      %v11922 = vpop.f32.mrb[0].mxu0
      %v11923 = vadd.f32 %v11438, %v11922
      %v11924 = vpop.f32.mrb[0].mxu0
      %11925 = vmatprep.mubr.bf16.mxu0 0
      %11926 = vmatmul.mubr.bf16.gmra.mrb[0].mxu0 %v11547
      %v11927 = vpop.f32.mrb[0].mxu0
      %v11928 = vadd.f32 %v11438, %v11927
      %v11929 = vpop.f32.mrb[0].mxu0
      %v11930 = vpop.f32.mrb[0].mxu0
      %v11931 = vadd.f32 %v11438, %v11930
      %v11932 = vpop.f32.mrb[0].mxu0
      %11933 = vmatprep.mubr.bf16.mxu0 0
      %11934 = vmatmul.mubr.bf16.gmra.mrb[0].mxu0 %v11550
      %v11935 = vpop.f32.mrb[0].mxu0
      %v11936 = vadd.f32 %v11438, %v11935
      %v11937 = vpop.f32.mrb[0].mxu0
      %v11938 = vpop.f32.mrb[0].mxu0
      %v11939 = vadd.f32 %v11438, %v11938
      %v11940 = vpop.f32.mrb[0].mxu0
      %11941 = vmatprep.mubr.bf16.mxu0 0
      %11942 = vmatmul.mubr.bf16.gmra.mrb[0].mxu0 %v11553
      %v11943 = vpop.f32.mrb[0].mxu0
      %v11944 = vadd.f32 %v11438, %v11943
      %v11945 = vpop.f32.mrb[0].mxu0
      %v11946 = vpop.f32.mrb[0].mxu0
      %v11947 = vadd.f32 %v11438, %v11946
      %v11948 = vpop.f32.mrb[0].mxu0
      %11949 = vmatprep.mubr.bf16.mxu0 0
      %11950 = vmatmul.mubr.bf16.gmra.mrb[0].mxu0 %v11556
      %v11951 = vpop.f32.mrb[0].mxu0
      %v11952 = vadd.f32 %v11438, %v11951
      %v11953 = vpop.f32.mrb[0].mxu0
      %v11954 = vpop.f32.mrb[0].mxu0
      %v11955 = vadd.f32 %v11438, %v11954
      %v11956 = vpop.f32.mrb[0].mxu0
      %11957 = vmatprep.mubr.bf16.mxu0 0
      %11958 = vmatmul.mubr.bf16.gmra.mrb[0].mxu0 %v11559
      %v11959 = vpop.f32.mrb[0].mxu0
      %v11960 = vadd.f32 %v11438, %v11959
      %v11961 = vpop.f32.mrb[0].mxu0
      %v11962 = vpop.f32.mrb[0].mxu0
      %v11963 = vadd.f32 %v11438, %v11962
      %v11964 = vpop.f32.mrb[0].mxu0
      %11965 = vmatprep.mubr.bf16.mxu0 0
      %11966 = vmatmul.mubr.bf16.gmra.mrb[0].mxu0 %v11562
      %v11967 = vpop.f32.mrb[0].mxu0
      %v11968 = vadd.f32 %v11438, %v11967
      %v11969 = vpop.f32.mrb[0].mxu0
      %v11970 = vpop.f32.mrb[0].mxu0
      %v11971 = vadd.f32 %v11438, %v11970
      %v11972 = vpop.f32.mrb[0].mxu0
      %11973 = vmatprep.mubr.bf16.mxu0 0
      %11974 = vmatmul.mubr.bf16.gmra.mrb[0].mxu0 %v11565
      %v11975 = vpop.f32.mrb[0].mxu0
      %v11976 = vadd.f32 %v11438, %v11975
      %v11977 = vpop.f32.mrb[0].mxu0
      %v11978 = vpop.f32.mrb[0].mxu0
      %v11979 = vadd.f32 %v11438, %v11978
      %v11980 = vpop.f32.mrb[0].mxu0
      %11981 = vmatprep.mubr.bf16.mxu0 0
      %11982 = vmatmul.mubr.bf16.gmra.mrb[0].mxu0 %v11568
      %v11983 = vpop.f32.mrb[0].mxu0
      %v11984 = vadd.f32 %v11438, %v11983
      %v11985 = vpop.f32.mrb[0].mxu0
      %v11986 = vpop.f32.mrb[0].mxu0
      %v11987 = vadd.f32 %v11438, %v11986
      %v11988 = vpop.f32.mrb[0].mxu0
      %11989 = vmatprep.mubr.bf16.mxu0 0
      %11990 = vmatmul.mubr.bf16.gmra.mrb[0].mxu0 %v11571
      %v11991 = vpop.f32.mrb[0].mxu0
      %v11992 = vadd.f32 %v11438, %v11991
      %v11993 = vpop.f32.mrb[0].mxu0
      %v11994 = vpop.f32.mrb[0].mxu0
      %v11995 = vadd.f32 %v11438, %v11994
      %v11996 = vpop.f32.mrb[0].mxu0
      %11997 = vmatprep.mubr.bf16.mxu0 0
      %11998 = vmatmul.mubr.bf16.gmra.mrb[0].mxu0 %v11574
      %v11999 = vpop.f32.mrb[0].mxu0
      %v12000 = vadd.f32 %v11438, %v11999
      %v12001 = vpop.f32.mrb[0].mxu0
      %v12002 = vpop.f32.mrb[0].mxu0
      %v12003 = vadd.f32 %v11438, %v12002
      %v12004 = vpop.f32.mrb[0].mxu0
      %12005 = vmatprep.mubr.bf16.mxu0 0
      %12006 = vmatmul.mubr.bf16.gmra.mrb[0].mxu0 %v11577
      %v12007 = vpop.f32.mrb[0].mxu0
      %v12008 = vadd.f32 %v11438, %v12007
      %v12009 = vpop.f32.mrb[0].mxu0
      %v12010 = vpop.f32.mrb[0].mxu0
      %v12011 = vadd.f32 %v11438, %v12010
      %v12012 = vpop.f32.mrb[0].mxu0
      %12013 = vmatprep.mubr.bf16.mxu0 0
      %12014 = vmatmul.mubr.bf16.gmra.mrb[0].mxu0 %v11580
      %v12015 = vpop.f32.mrb[0].mxu0
      %v12016 = vadd.f32 %v11438, %v12015
      %v12017 = vpop.f32.mrb[0].mxu0
      %v12018 = vpop.f32.mrb[0].mxu0
      %v12019 = vadd.f32 %v11438, %v12018
      %v12020 = vpop.f32.mrb[0].mxu0
      %12021 = vmatprep.mubr.bf16.mxu0 0
      %12022 = vmatmul.mubr.bf16.gmra.mrb[0].mxu0 %v11583
      %v12023 = vpop.f32.mrb[0].mxu0
      %v12024 = vadd.f32 %v11438, %v12023
      %v12025 = vpop.f32.mrb[0].mxu0
      %v12026 = vpop.f32.mrb[0].mxu0
      %v12027 = vadd.f32 %v11438, %v12026
      %v12028 = vpop.f32.mrb[0].mxu0
      %12029 = vmatprep.mubr.bf16.mxu0 0
      %12030 = vmatmul.mubr.bf16.gmra.mrb[0].mxu0 %v11586
      %v12031 = vpop.f32.mrb[0].mxu0
      %v12032 = vadd.f32 %v11438, %v12031
      %v12033 = vpop.f32.mrb[0].mxu0
      %v12034 = vpop.f32.mrb[0].mxu0
      %v12035 = vadd.f32 %v11438, %v12034
      %v12036 = vpop.f32.mrb[0].mxu0
      %12037 = vmatprep.mubr.bf16.mxu0 0
      %12038 = vmatmul.mubr.bf16.gmra.mrb[0].mxu0 %v11589
      %v12039 = vpop.f32.mrb[0].mxu0
      %v12040 = vadd.f32 %v11438, %v12039
      %v12041 = vpop.f32.mrb[0].mxu0
      %v12042 = vpop.f32.mrb[0].mxu0
      %v12043 = vadd.f32 %v11438, %v12042
      %v12044 = vpop.f32.mrb[0].mxu0
      %12045 = vmatprep.mubr.bf16.mxu0 0
      %12046 = vmatmul.mubr.bf16.gmra.mrb[0].mxu0 %v11592
      %v12047 = vpop.f32.mrb[0].mxu0
      %v12048 = vadd.f32 %v11438, %v12047
      %v12049 = vpop.f32.mrb[0].mxu0
      %v12050 = vpop.f32.mrb[0].mxu0
      %v12051 = vadd.f32 %v11438, %v12050
      %v12052 = vpop.f32.mrb[0].mxu0
      %12053 = vmatprep.mubr.bf16.mxu0 0
      %12054 = vmatmul.mubr.bf16.gmra.mrb[0].mxu0 %v11595
      %v12055 = vpop.f32.mrb[0].mxu0
      %v12056 = vadd.f32 %v11438, %v12055
      %v12057 = vpop.f32.mrb[0].mxu0
      %v12058 = vpop.f32.mrb[0].mxu0
      %v12059 = vadd.f32 %v11438, %v12058
      %v12060 = vpop.f32.mrb[0].mxu0
      %12061 = vmatprep.mubr.bf16.mxu0 0
      %12062 = vmatmul.mubr.bf16.gmra.mrb[0].mxu0 %v11598
      %v12063 = vpop.f32.mrb[0].mxu0
      %v12064 = vadd.f32 %v11438, %v12063
      %v12065 = vpop.f32.mrb[0].mxu0
      %v12066 = vpop.f32.mrb[0].mxu0
      %v12067 = vadd.f32 %v11438, %v12066
      %v12068 = vpop.f32.mrb[0].mxu0
      %12069 = vmatprep.mubr.bf16.mxu0 0
      %12070 = vmatmul.mubr.bf16.gmra.mrb[0].mxu0 %v11601
      %v12071 = vpop.f32.mrb[0].mxu0
      %v12072 = vadd.f32 %v11438, %v12071
      %v12073 = vpop.f32.mrb[0].mxu0
      %v12074 = vpop.f32.mrb[0].mxu0
      %v12075 = vadd.f32 %v11438, %v12074
      %v12076 = vpop.f32.mrb[0].mxu0
      %12077 = vmatprep.mubr.bf16.mxu0 0
      %12078 = vmatmul.mubr.bf16.gmra.mrb[0].mxu0 %v11604
      %v12079 = vpop.f32.mrb[0].mxu0
      %v12080 = vadd.f32 %v11438, %v12079
      %v12081 = vpop.f32.mrb[0].mxu0
      %v12082 = vpop.f32.mrb[0].mxu0
      %v12083 = vadd.f32 %v11438, %v12082
      %v12084 = vpop.f32.mrb[0].mxu0
      %12085 = vmatprep.mubr.bf16.mxu0 0
      %12086 = vmatmul.mubr.bf16.gmra.mrb[0].mxu0 %v11607
      %v12087 = vpop.f32.mrb[0].mxu0
      %v12088 = vadd.f32 %v11438, %v12087
      %v12089 = vpop.f32.mrb[0].mxu0
      %v12090 = vpop.f32.mrb[0].mxu0
      %v12091 = vadd.f32 %v11438, %v12090
      %v12092 = vpop.f32.mrb[0].mxu0
      %12093 = vmatprep.mubr.bf16.mxu0 0
      %12094 = vmatmul.mubr.bf16.gmra.mrb[0].mxu0 %v11610
      %v12095 = vpop.f32.mrb[0].mxu0
      %v12096 = vadd.f32 %v11438, %v12095
      %v12097 = vpop.f32.mrb[0].mxu0
      %v12098 = vpop.f32.mrb[0].mxu0
      %v12099 = vadd.f32 %v11438, %v12098
      %v12100 = vpop.f32.mrb[0].mxu0
      %12101 = vmatprep.mubr.bf16.mxu0 0
      %12102 = vmatmul.mubr.bf16.gmra.mrb[0].mxu0 %v11613
      %v12103 = vpop.f32.mrb[0].mxu0
      %v12104 = vadd.f32 %v11438, %v12103
      %v12105 = vpop.f32.mrb[0].mxu0
      %v12106 = vpop.f32.mrb[0].mxu0
      %v12107 = vadd.f32 %v11438, %v12106
      %v12108 = vpop.f32.mrb[0].mxu0
      %12109 = vmatprep.mubr.bf16.mxu0 0
      %12110 = vmatmul.mubr.bf16.gmra.mrb[0].mxu0 %v11616
      %v12111 = vpop.f32.mrb[0].mxu0
      %v12112 = vadd.f32 %v11438, %v12111
      %v12113 = vpop.f32.mrb[0].mxu0
      %v12114 = vpop.f32.mrb[0].mxu0
      %v12115 = vadd.f32 %v11438, %v12114
      %v12116 = vpop.f32.mrb[0].mxu0
      %12117 = vmatprep.mubr.bf16.mxu0 0
      %12118 = vmatmul.mubr.bf16.gmra.mrb[0].mxu0 %v11619
      %v12119 = vpop.f32.mrb[0].mxu0
      %v12120 = vadd.f32 %v11438, %v12119
      %v12121 = vpop.f32.mrb[0].mxu0
      %v12122 = vpop.f32.mrb[0].mxu0
      %v12123 = vadd.f32 %v11438, %v12122
      %v12124 = vpop.f32.mrb[0].mxu0
      %12125 = vmatprep.mubr.bf16.mxu0 0
      %12126 = vmatmul.mubr.bf16.gmra.mrb[0].mxu0 %v11622
      %v12127 = vpop.f32.mrb[0].mxu0
      %v12128 = vadd.f32 %v11438, %v12127
      %v12129 = vpop.f32.mrb[0].mxu0
      %v12130 = vpop.f32.mrb[0].mxu0
      %v12131 = vadd.f32 %v11438, %v12130
      %v12132 = vpop.f32.mrb[0].mxu0
      %12133 = vmatprep.mubr.bf16.mxu0 0
      %12134 = vmatmul.mubr.bf16.gmra.mrb[0].mxu0 %v11625
      %v12135 = vpop.f32.mrb[0].mxu0
      %v12136 = vadd.f32 %v11438, %v12135
      %v12137 = vpop.f32.mrb[0].mxu0
      %v12138 = vpop.f32.mrb[0].mxu0
      %v12139 = vadd.f32 %v11438, %v12138
      %v12140 = vpop.f32.mrb[0].mxu0
      %12141 = vmatprep.mubr.bf16.mxu0 0
      %12142 = vmatmul.mubr.bf16.gmra.mrb[0].mxu0 %v11628
      %v12143 = vpop.f32.mrb[0].mxu0
      %v12144 = vadd.f32 %v11438, %v12143
      %v12145 = vpop.f32.mrb[0].mxu0
      %v12146 = vpop.f32.mrb[0].mxu0
      %v12147 = vadd.f32 %v11438, %v12146
      %v12148 = vpop.f32.mrb[0].mxu0
      %12149 = vmatprep.mubr.bf16.mxu0 0
      %12150 = vmatmul.mubr.bf16.gmra.mrb[0].mxu0 %v11631
      %v12151 = vpop.f32.mrb[0].mxu0
      %v12152 = vadd.f32 %v11438, %v12151
      %v12153 = vpop.f32.mrb[0].mxu0
      %v12154 = vpop.f32.mrb[0].mxu0
      %v12155 = vadd.f32 %v11438, %v12154
      %v12156 = vpop.f32.mrb[0].mxu0
      %12157 = vmatprep.mubr.bf16.mxu0 0
      %12158 = vmatmul.mubr.bf16.gmra.mrb[0].mxu0 %v11634
      %v12159 = vpop.f32.mrb[0].mxu0
      %v12160 = vadd.f32 %v11438, %v12159
      %v12161 = vpop.f32.mrb[0].mxu0
      %v12162 = vpop.f32.mrb[0].mxu0
      %v12163 = vadd.f32 %v11438, %v12162
      %v12164 = vpop.f32.mrb[0].mxu0
      %12165 = vmatprep.mubr.bf16.mxu0 0
      %12166 = vmatmul.mubr.bf16.gmra.mrb[0].mxu0 %v11637
      %v12167 = vpop.f32.mrb[0].mxu0
      %v12168 = vadd.f32 %v11438, %v12167
      %v12169 = vpop.f32.mrb[0].mxu0
      %v12170 = vpop.f32.mrb[0].mxu0
      %v12171 = vadd.f32 %v11438, %v12170
      %v12172 = vpop.f32.mrb[0].mxu0
      %12173 = vmatprep.mubr.bf16.mxu0 0
      %12174 = vmatmul.mubr.bf16.gmra.mrb[0].mxu0 %v11640
      %v12175 = vpop.f32.mrb[0].mxu0
      %v12176 = vadd.f32 %v11438, %v12175
      %v12177 = vpop.f32.mrb[0].mxu0
      %v12178 = vpop.f32.mrb[0].mxu0
      %v12179 = vadd.f32 %v11438, %v12178
      %v12180 = vpop.f32.mrb[0].mxu0
      %12181 = vmatprep.mubr.bf16.mxu0 0
      %12182 = vmatmul.mubr.bf16.gmra.mrb[0].mxu0 %v11643
      %v12183 = vpop.f32.mrb[0].mxu0
      %v12184 = vadd.f32 %v11438, %v12183
      %v12185 = vpop.f32.mrb[0].mxu0
      %v12186 = vpop.f32.mrb[0].mxu0
      %v12187 = vadd.f32 %v11438, %v12186
      %v12188 = vpop.f32.mrb[0].mxu0
      %12189 = vdwg.mxu0
      %v12190 = vlaneseq
      %v12191 = vand.u32 %v12190, 127
      %vm12192 = vcmp.eq.s32.totalorder %v12191, 3
      %12194 = vset.pattern.permute.xlu0 64
      %12195 = vperm.xlu0 %12194, %v9759
      %v12196 = vpop.permute.xlu0 %12195
      %12199 = vset.pattern.permute.xlu0 64
      %12200 = vperm.xlu0 %12199, %v9762
      %v12201 = vpop.permute.xlu0 %12200
      %12204 = vset.pattern.permute.xlu0 64
      %12205 = vperm.xlu0 %12204, %v9767
      %v12206 = vpop.permute.xlu0 %12205
      %12209 = vset.pattern.permute.xlu0 64
      %12210 = vperm.xlu0 %12209, %v9770
      %v12211 = vpop.permute.xlu0 %12210
      %12214 = vset.pattern.permute.xlu0 64
      %12215 = vperm.xlu0 %12214, %v9775
      %v12216 = vpop.permute.xlu0 %12215
      %12219 = vset.pattern.permute.xlu0 64
      %12220 = vperm.xlu0 %12219, %v9778
      %v12221 = vpop.permute.xlu0 %12220
      %12224 = vset.pattern.permute.xlu0 64
      %12225 = vperm.xlu0 %12224, %v9783
      %v12226 = vpop.permute.xlu0 %12225
      %12229 = vset.pattern.permute.xlu0 64
      %12230 = vperm.xlu0 %12229, %v9786
      %v12231 = vpop.permute.xlu0 %12230
      %12234 = vset.pattern.permute.xlu0 64
      %12235 = vperm.xlu0 %12234, %v9791
      %v12236 = vpop.permute.xlu0 %12235
      %12239 = vset.pattern.permute.xlu0 64
      %12240 = vperm.xlu0 %12239, %v9794
      %v12241 = vpop.permute.xlu0 %12240
      %12244 = vset.pattern.permute.xlu0 64
      %12245 = vperm.xlu0 %12244, %v9799
      %v12246 = vpop.permute.xlu0 %12245
      %12249 = vset.pattern.permute.xlu0 64
      %12250 = vperm.xlu0 %12249, %v9802
      %v12251 = vpop.permute.xlu0 %12250
      %12254 = vset.pattern.permute.xlu0 64
      %12255 = vperm.xlu0 %12254, %v9807
      %v12256 = vpop.permute.xlu0 %12255
      %12259 = vset.pattern.permute.xlu0 64
      %12260 = vperm.xlu0 %12259, %v9810
      %v12261 = vpop.permute.xlu0 %12260
      %12264 = vset.pattern.permute.xlu0 64
      %12265 = vperm.xlu0 %12264, %v9815
      %v12266 = vpop.permute.xlu0 %12265
      %12269 = vset.pattern.permute.xlu0 64
      %12270 = vperm.xlu0 %12269, %v9818
      %v12271 = vpop.permute.xlu0 %12270
      %12274 = vset.pattern.permute.xlu0 64
      %12275 = vperm.xlu0 %12274, %v9823
      %v12276 = vpop.permute.xlu0 %12275
      %12279 = vset.pattern.permute.xlu0 64
      %12280 = vperm.xlu0 %12279, %v9826
      %v12281 = vpop.permute.xlu0 %12280
      %12284 = vset.pattern.permute.xlu0 64
      %12285 = vperm.xlu0 %12284, %v9831
      %v12286 = vpop.permute.xlu0 %12285
      %12289 = vset.pattern.permute.xlu0 64
      %12290 = vperm.xlu0 %12289, %v9834
      %v12291 = vpop.permute.xlu0 %12290
      %12294 = vset.pattern.permute.xlu0 64
      %12295 = vperm.xlu0 %12294, %v9839
      %v12296 = vpop.permute.xlu0 %12295
      %12299 = vset.pattern.permute.xlu0 64
      %12300 = vperm.xlu0 %12299, %v9842
      %v12301 = vpop.permute.xlu0 %12300
      %12304 = vset.pattern.permute.xlu0 64
      %12305 = vperm.xlu0 %12304, %v9847
      %v12306 = vpop.permute.xlu0 %12305
      %12309 = vset.pattern.permute.xlu0 64
      %12310 = vperm.xlu0 %12309, %v9850
      %v12311 = vpop.permute.xlu0 %12310
      %12314 = vset.pattern.permute.xlu0 64
      %12315 = vperm.xlu0 %12314, %v9855
      %v12316 = vpop.permute.xlu0 %12315
      %12319 = vset.pattern.permute.xlu0 64
      %12320 = vperm.xlu0 %12319, %v9858
      %v12321 = vpop.permute.xlu0 %12320
      %12324 = vset.pattern.permute.xlu0 64
      %12325 = vperm.xlu0 %12324, %v9863
      %v12326 = vpop.permute.xlu0 %12325
      %12329 = vset.pattern.permute.xlu0 64
      %12330 = vperm.xlu0 %12329, %v9866
      %v12331 = vpop.permute.xlu0 %12330
      %12334 = vset.pattern.permute.xlu0 64
      %12335 = vperm.xlu0 %12334, %v9871
      %v12336 = vpop.permute.xlu0 %12335
      %12339 = vset.pattern.permute.xlu0 64
      %12340 = vperm.xlu0 %12339, %v9874
      %v12341 = vpop.permute.xlu0 %12340
      %12344 = vset.pattern.permute.xlu0 64
      %12345 = vperm.xlu0 %12344, %v9879
      %v12346 = vpop.permute.xlu0 %12345
      %12349 = vset.pattern.permute.xlu0 64
      %12350 = vperm.xlu0 %12349, %v9882
      %v12351 = vpop.permute.xlu0 %12350
      %12354 = vset.pattern.permute.xlu0 64
      %12355 = vperm.xlu0 %12354, %v9887
      %v12356 = vpop.permute.xlu0 %12355
      %12359 = vset.pattern.permute.xlu0 64
      %12360 = vperm.xlu0 %12359, %v9890
      %v12361 = vpop.permute.xlu0 %12360
      %12364 = vset.pattern.permute.xlu0 64
      %12365 = vperm.xlu0 %12364, %v9895
      %v12366 = vpop.permute.xlu0 %12365
      %12369 = vset.pattern.permute.xlu0 64
      %12370 = vperm.xlu0 %12369, %v9898
      %v12371 = vpop.permute.xlu0 %12370
      %12374 = vset.pattern.permute.xlu0 64
      %12375 = vperm.xlu0 %12374, %v9903
      %v12376 = vpop.permute.xlu0 %12375
      %12379 = vset.pattern.permute.xlu0 64
      %12380 = vperm.xlu0 %12379, %v9906
      %v12381 = vpop.permute.xlu0 %12380
      %12384 = vset.pattern.permute.xlu0 64
      %12385 = vperm.xlu0 %12384, %v9911
      %v12386 = vpop.permute.xlu0 %12385
      %12389 = vset.pattern.permute.xlu0 64
      %12390 = vperm.xlu0 %12389, %v9914
      %v12391 = vpop.permute.xlu0 %12390
      %12394 = vset.pattern.permute.xlu0 64
      %12395 = vperm.xlu0 %12394, %v9919
      %v12396 = vpop.permute.xlu0 %12395
      %12399 = vset.pattern.permute.xlu0 64
      %12400 = vperm.xlu0 %12399, %v9922
      %v12401 = vpop.permute.xlu0 %12400
      %12404 = vset.pattern.permute.xlu0 64
      %12405 = vperm.xlu0 %12404, %v9927
      %v12406 = vpop.permute.xlu0 %12405
      %12409 = vset.pattern.permute.xlu0 64
      %12410 = vperm.xlu0 %12409, %v9930
      %v12411 = vpop.permute.xlu0 %12410
      %12414 = vset.pattern.permute.xlu0 64
      %12415 = vperm.xlu0 %12414, %v9935
      %v12416 = vpop.permute.xlu0 %12415
      %12419 = vset.pattern.permute.xlu0 64
      %12420 = vperm.xlu0 %12419, %v9938
      %v12421 = vpop.permute.xlu0 %12420
      %12424 = vset.pattern.permute.xlu0 64
      %12425 = vperm.xlu0 %12424, %v9943
      %v12426 = vpop.permute.xlu0 %12425
      %12429 = vset.pattern.permute.xlu0 64
      %12430 = vperm.xlu0 %12429, %v9946
      %v12431 = vpop.permute.xlu0 %12430
      %12434 = vset.pattern.permute.xlu0 64
      %12435 = vperm.xlu0 %12434, %v9951
      %v12436 = vpop.permute.xlu0 %12435
      %12439 = vset.pattern.permute.xlu0 64
      %12440 = vperm.xlu0 %12439, %v9954
      %v12441 = vpop.permute.xlu0 %12440
      %12444 = vset.pattern.permute.xlu0 64
      %12445 = vperm.xlu0 %12444, %v9959
      %v12446 = vpop.permute.xlu0 %12445
      %12449 = vset.pattern.permute.xlu0 64
      %12450 = vperm.xlu0 %12449, %v9962
      %v12451 = vpop.permute.xlu0 %12450
      %12454 = vset.pattern.permute.xlu0 64
      %12455 = vperm.xlu0 %12454, %v9967
      %v12456 = vpop.permute.xlu0 %12455
      %12459 = vset.pattern.permute.xlu0 64
      %12460 = vperm.xlu0 %12459, %v9970
      %v12461 = vpop.permute.xlu0 %12460
      %12464 = vset.pattern.permute.xlu0 64
      %12465 = vperm.xlu0 %12464, %v9975
      %v12466 = vpop.permute.xlu0 %12465
      %12469 = vset.pattern.permute.xlu0 64
      %12470 = vperm.xlu0 %12469, %v9978
      %v12471 = vpop.permute.xlu0 %12470
      %12474 = vset.pattern.permute.xlu0 64
      %12475 = vperm.xlu0 %12474, %v9983
      %v12476 = vpop.permute.xlu0 %12475
      %12479 = vset.pattern.permute.xlu0 64
      %12480 = vperm.xlu0 %12479, %v9986
      %v12481 = vpop.permute.xlu0 %12480
      %12484 = vset.pattern.permute.xlu0 64
      %12485 = vperm.xlu0 %12484, %v9991
      %v12486 = vpop.permute.xlu0 %12485
      %12489 = vset.pattern.permute.xlu0 64
      %12490 = vperm.xlu0 %12489, %v9994
      %v12491 = vpop.permute.xlu0 %12490
      %12494 = vset.pattern.permute.xlu0 64
      %12495 = vperm.xlu0 %12494, %v9999
      %v12496 = vpop.permute.xlu0 %12495
      %12499 = vset.pattern.permute.xlu0 64
      %12500 = vperm.xlu0 %12499, %v10002
      %v12501 = vpop.permute.xlu0 %12500
      %12504 = vset.pattern.permute.xlu0 64
      %12505 = vperm.xlu0 %12504, %v10007
      %v12506 = vpop.permute.xlu0 %12505
      %12509 = vset.pattern.permute.xlu0 64
      %12510 = vperm.xlu0 %12509, %v10010
      %v12511 = vpop.permute.xlu0 %12510
      %12514 = vset.pattern.permute.xlu0 64
      %12515 = vperm.xlu0 %12514, %v10015
      %v12516 = vpop.permute.xlu0 %12515
      %12519 = vset.pattern.permute.xlu0 64
      %12520 = vperm.xlu0 %12519, %v10018
      %v12521 = vpop.permute.xlu0 %12520
      %12524 = vset.pattern.permute.xlu0 64
      %12525 = vperm.xlu0 %12524, %v10023
      %v12526 = vpop.permute.xlu0 %12525
      %12529 = vset.pattern.permute.xlu0 64
      %12530 = vperm.xlu0 %12529, %v10026
      %v12531 = vpop.permute.xlu0 %12530
      %12534 = vset.pattern.permute.xlu0 64
      %12535 = vperm.xlu0 %12534, %v10031
      %v12536 = vpop.permute.xlu0 %12535
      %12539 = vset.pattern.permute.xlu0 64
      %12540 = vperm.xlu0 %12539, %v10034
      %v12541 = vpop.permute.xlu0 %12540
      %12544 = vset.pattern.permute.xlu0 64
      %12545 = vperm.xlu0 %12544, %v10039
      %v12546 = vpop.permute.xlu0 %12545
      %12549 = vset.pattern.permute.xlu0 64
      %12550 = vperm.xlu0 %12549, %v10042
      %v12551 = vpop.permute.xlu0 %12550
      %12554 = vset.pattern.permute.xlu0 64
      %12555 = vperm.xlu0 %12554, %v10047
      %v12556 = vpop.permute.xlu0 %12555
      %12559 = vset.pattern.permute.xlu0 64
      %12560 = vperm.xlu0 %12559, %v10050
      %v12561 = vpop.permute.xlu0 %12560
      %12564 = vset.pattern.permute.xlu0 64
      %12565 = vperm.xlu0 %12564, %v10055
      %v12566 = vpop.permute.xlu0 %12565
      %12569 = vset.pattern.permute.xlu0 64
      %12570 = vperm.xlu0 %12569, %v10058
      %v12571 = vpop.permute.xlu0 %12570
      %12574 = vset.pattern.permute.xlu0 64
      %12575 = vperm.xlu0 %12574, %v10063
      %v12576 = vpop.permute.xlu0 %12575
      %12579 = vset.pattern.permute.xlu0 64
      %12580 = vperm.xlu0 %12579, %v10066
      %v12581 = vpop.permute.xlu0 %12580
      %12584 = vset.pattern.permute.xlu0 64
      %12585 = vperm.xlu0 %12584, %v10071
      %v12586 = vpop.permute.xlu0 %12585
      %12589 = vset.pattern.permute.xlu0 64
      %12590 = vperm.xlu0 %12589, %v10074
      %v12591 = vpop.permute.xlu0 %12590
      %12594 = vset.pattern.permute.xlu0 64
      %12595 = vperm.xlu0 %12594, %v10079
      %v12596 = vpop.permute.xlu0 %12595
      %12599 = vset.pattern.permute.xlu0 64
      %12600 = vperm.xlu0 %12599, %v10082
      %v12601 = vpop.permute.xlu0 %12600
      %12604 = vset.pattern.permute.xlu0 64
      %12605 = vperm.xlu0 %12604, %v10087
      %v12606 = vpop.permute.xlu0 %12605
      %12609 = vset.pattern.permute.xlu0 64
      %12610 = vperm.xlu0 %12609, %v10090
      %v12611 = vpop.permute.xlu0 %12610
      %12614 = vset.pattern.permute.xlu0 64
      %12615 = vperm.xlu0 %12614, %v10095
      %v12616 = vpop.permute.xlu0 %12615
      %12619 = vset.pattern.permute.xlu0 64
      %12620 = vperm.xlu0 %12619, %v10098
      %v12621 = vpop.permute.xlu0 %12620
      %12624 = vset.pattern.permute.xlu0 64
      %12625 = vperm.xlu0 %12624, %v10103
      %v12626 = vpop.permute.xlu0 %12625
      %12629 = vset.pattern.permute.xlu0 64
      %12630 = vperm.xlu0 %12629, %v10106
      %v12631 = vpop.permute.xlu0 %12630
      %12634 = vset.pattern.permute.xlu0 64
      %12635 = vperm.xlu0 %12634, %v10111
      %v12636 = vpop.permute.xlu0 %12635
      %12639 = vset.pattern.permute.xlu0 64
      %12640 = vperm.xlu0 %12639, %v10114
      %v12641 = vpop.permute.xlu0 %12640
      %12644 = vset.pattern.permute.xlu0 64
      %12645 = vperm.xlu0 %12644, %v10119
      %v12646 = vpop.permute.xlu0 %12645
      %12649 = vset.pattern.permute.xlu0 64
      %12650 = vperm.xlu0 %12649, %v10122
      %v12651 = vpop.permute.xlu0 %12650
      %12654 = vset.pattern.permute.xlu0 64
      %12655 = vperm.xlu0 %12654, %v10127
      %v12656 = vpop.permute.xlu0 %12655
      %12659 = vset.pattern.permute.xlu0 64
      %12660 = vperm.xlu0 %12659, %v10130
      %v12661 = vpop.permute.xlu0 %12660
      %12664 = vset.pattern.permute.xlu0 64
      %12665 = vperm.xlu0 %12664, %v10135
      %v12666 = vpop.permute.xlu0 %12665
      %12669 = vset.pattern.permute.xlu0 64
      %12670 = vperm.xlu0 %12669, %v10138
      %v12671 = vpop.permute.xlu0 %12670
      %12674 = vset.pattern.permute.xlu0 64
      %12675 = vperm.xlu0 %12674, %v10143
      %v12676 = vpop.permute.xlu0 %12675
      %12679 = vset.pattern.permute.xlu0 64
      %12680 = vperm.xlu0 %12679, %v10146
      %v12681 = vpop.permute.xlu0 %12680
      %12684 = vset.pattern.permute.xlu0 64
      %12685 = vperm.xlu0 %12684, %v10151
      %v12686 = vpop.permute.xlu0 %12685
      %12689 = vset.pattern.permute.xlu0 64
      %12690 = vperm.xlu0 %12689, %v10154
      %v12691 = vpop.permute.xlu0 %12690
      %12694 = vset.pattern.permute.xlu0 64
      %12695 = vperm.xlu0 %12694, %v10159
      %v12696 = vpop.permute.xlu0 %12695
      %12699 = vset.pattern.permute.xlu0 64
      %12700 = vperm.xlu0 %12699, %v10162
      %v12701 = vpop.permute.xlu0 %12700
      %12704 = vset.pattern.permute.xlu0 64
      %12705 = vperm.xlu0 %12704, %v10167
      %v12706 = vpop.permute.xlu0 %12705
      %12709 = vset.pattern.permute.xlu0 64
      %12710 = vperm.xlu0 %12709, %v10170
      %v12711 = vpop.permute.xlu0 %12710
      %12714 = vset.pattern.permute.xlu0 64
      %12715 = vperm.xlu0 %12714, %v10175
      %v12716 = vpop.permute.xlu0 %12715
      %12719 = vset.pattern.permute.xlu0 64
      %12720 = vperm.xlu0 %12719, %v10178
      %v12721 = vpop.permute.xlu0 %12720
      %12724 = vset.pattern.permute.xlu0 64
      %12725 = vperm.xlu0 %12724, %v10183
      %v12726 = vpop.permute.xlu0 %12725
      %12729 = vset.pattern.permute.xlu0 64
      %12730 = vperm.xlu0 %12729, %v10186
      %v12731 = vpop.permute.xlu0 %12730
      %12734 = vset.pattern.permute.xlu0 64
      %12735 = vperm.xlu0 %12734, %v10191
      %v12736 = vpop.permute.xlu0 %12735
      %12739 = vset.pattern.permute.xlu0 64
      %12740 = vperm.xlu0 %12739, %v10194
      %v12741 = vpop.permute.xlu0 %12740
      %12744 = vset.pattern.permute.xlu0 64
      %12745 = vperm.xlu0 %12744, %v10199
      %v12746 = vpop.permute.xlu0 %12745
      %12749 = vset.pattern.permute.xlu0 64
      %12750 = vperm.xlu0 %12749, %v10202
      %v12751 = vpop.permute.xlu0 %12750
      %12754 = vset.pattern.permute.xlu0 64
      %12755 = vperm.xlu0 %12754, %v10207
      %v12756 = vpop.permute.xlu0 %12755
      %12759 = vset.pattern.permute.xlu0 64
      %12760 = vperm.xlu0 %12759, %v10210
      %v12761 = vpop.permute.xlu0 %12760
      %12764 = vset.pattern.permute.xlu0 64
      %12765 = vperm.xlu0 %12764, %v10215
      %v12766 = vpop.permute.xlu0 %12765
      %12769 = vset.pattern.permute.xlu0 64
      %12770 = vperm.xlu0 %12769, %v10218
      %v12771 = vpop.permute.xlu0 %12770
      %12774 = vset.pattern.permute.xlu0 64
      %12775 = vperm.xlu0 %12774, %v10223
      %v12776 = vpop.permute.xlu0 %12775
      %12779 = vset.pattern.permute.xlu0 64
      %12780 = vperm.xlu0 %12779, %v10226
      %v12781 = vpop.permute.xlu0 %12780
      %12784 = vset.pattern.permute.xlu0 64
      %12785 = vperm.xlu0 %12784, %v10231
      %v12786 = vpop.permute.xlu0 %12785
      %12789 = vset.pattern.permute.xlu0 64
      %12790 = vperm.xlu0 %12789, %v10234
      %v12791 = vpop.permute.xlu0 %12790
      %12794 = vset.pattern.permute.xlu0 64
      %12795 = vperm.xlu0 %12794, %v10239
      %v12796 = vpop.permute.xlu0 %12795
      %12799 = vset.pattern.permute.xlu0 64
      %12800 = vperm.xlu0 %12799, %v10242
      %v12801 = vpop.permute.xlu0 %12800
      %12804 = vset.pattern.permute.xlu0 64
      %12805 = vperm.xlu0 %12804, %v10247
      %v12806 = vpop.permute.xlu0 %12805
      %12809 = vset.pattern.permute.xlu0 64
      %12810 = vperm.xlu0 %12809, %v10250
      %v12811 = vpop.permute.xlu0 %12810
      %12814 = vset.pattern.permute.xlu0 64
      %12815 = vperm.xlu0 %12814, %v10255
      %v12816 = vpop.permute.xlu0 %12815
      %12819 = vset.pattern.permute.xlu0 64
      %12820 = vperm.xlu0 %12819, %v10258
      %v12821 = vpop.permute.xlu0 %12820
      %12824 = vset.pattern.permute.xlu0 64
      %12825 = vperm.xlu0 %12824, %v10263
      %v12826 = vpop.permute.xlu0 %12825
      %12829 = vset.pattern.permute.xlu0 64
      %12830 = vperm.xlu0 %12829, %v10266
      %v12831 = vpop.permute.xlu0 %12830
      %v12833 = vsel %vm12192, %v12196, %v11680
      %v12834 = vsel %vm12192, %v12201, %v11683
      %v12835 = vsel %vm12192, %v12206, %v11688
      %v12836 = vsel %vm12192, %v12211, %v11691
      %v12837 = vsel %vm12192, %v12216, %v11696
      %v12838 = vsel %vm12192, %v12221, %v11699
      %v12839 = vsel %vm12192, %v12226, %v11704
      %v12840 = vsel %vm12192, %v12231, %v11707
      %v12841 = vsel %vm12192, %v12236, %v11712
      %v12842 = vsel %vm12192, %v12241, %v11715
      %v12843 = vsel %vm12192, %v12246, %v11720
      %v12844 = vsel %vm12192, %v12251, %v11723
      %v12845 = vsel %vm12192, %v12256, %v11728
      %v12846 = vsel %vm12192, %v12261, %v11731
      %v12847 = vsel %vm12192, %v12266, %v11736
      %v12848 = vsel %vm12192, %v12271, %v11739
      %v12849 = vsel %vm12192, %v12276, %v11744
      %v12850 = vsel %vm12192, %v12281, %v11747
      %v12851 = vsel %vm12192, %v12286, %v11752
      %v12852 = vsel %vm12192, %v12291, %v11755
      %v12853 = vsel %vm12192, %v12296, %v11760
      %v12854 = vsel %vm12192, %v12301, %v11763
      %v12855 = vsel %vm12192, %v12306, %v11768
      %v12856 = vsel %vm12192, %v12311, %v11771
      %v12857 = vsel %vm12192, %v12316, %v11776
      %v12858 = vsel %vm12192, %v12321, %v11779
      %v12859 = vsel %vm12192, %v12326, %v11784
      %v12860 = vsel %vm12192, %v12331, %v11787
      %v12861 = vsel %vm12192, %v12336, %v11792
      %v12862 = vsel %vm12192, %v12341, %v11795
      %v12863 = vsel %vm12192, %v12346, %v11800
      %v12864 = vsel %vm12192, %v12351, %v11803
      %v12865 = vsel %vm12192, %v12356, %v11808
      %v12866 = vsel %vm12192, %v12361, %v11811
      %v12867 = vsel %vm12192, %v12366, %v11816
      %v12868 = vsel %vm12192, %v12371, %v11819
      %v12869 = vsel %vm12192, %v12376, %v11824
      %v12870 = vsel %vm12192, %v12381, %v11827
      %v12871 = vsel %vm12192, %v12386, %v11832
      %v12872 = vsel %vm12192, %v12391, %v11835
      %v12873 = vsel %vm12192, %v12396, %v11840
      %v12874 = vsel %vm12192, %v12401, %v11843
      %v12875 = vsel %vm12192, %v12406, %v11848
      %v12876 = vsel %vm12192, %v12411, %v11851
      %v12877 = vsel %vm12192, %v12416, %v11856
      %v12878 = vsel %vm12192, %v12421, %v11859
      %v12879 = vsel %vm12192, %v12426, %v11864
      %v12880 = vsel %vm12192, %v12431, %v11867
      %v12881 = vsel %vm12192, %v12436, %v11872
      %v12882 = vsel %vm12192, %v12441, %v11875
      %v12883 = vsel %vm12192, %v12446, %v11880
      %v12884 = vsel %vm12192, %v12451, %v11883
      %v12885 = vsel %vm12192, %v12456, %v11888
      %v12886 = vsel %vm12192, %v12461, %v11891
      %v12887 = vsel %vm12192, %v12466, %v11896
      %v12888 = vsel %vm12192, %v12471, %v11899
      %v12889 = vsel %vm12192, %v12476, %v11904
      %v12890 = vsel %vm12192, %v12481, %v11907
      %v12891 = vsel %vm12192, %v12486, %v11912
      %v12892 = vsel %vm12192, %v12491, %v11915
      %v12893 = vsel %vm12192, %v12496, %v11920
      %v12894 = vsel %vm12192, %v12501, %v11923
      %v12895 = vsel %vm12192, %v12506, %v11928
      %v12896 = vsel %vm12192, %v12511, %v11931
      %v12897 = vsel %vm12192, %v12516, %v11936
      %v12898 = vsel %vm12192, %v12521, %v11939
      %v12899 = vsel %vm12192, %v12526, %v11944
      %v12900 = vsel %vm12192, %v12531, %v11947
      %v12901 = vsel %vm12192, %v12536, %v11952
      %v12902 = vsel %vm12192, %v12541, %v11955
      %v12903 = vsel %vm12192, %v12546, %v11960
      %v12904 = vsel %vm12192, %v12551, %v11963
      %v12905 = vsel %vm12192, %v12556, %v11968
      %v12906 = vsel %vm12192, %v12561, %v11971
      %v12907 = vsel %vm12192, %v12566, %v11976
      %v12908 = vsel %vm12192, %v12571, %v11979
      %v12909 = vsel %vm12192, %v12576, %v11984
      %v12910 = vsel %vm12192, %v12581, %v11987
      %v12911 = vsel %vm12192, %v12586, %v11992
      %v12912 = vsel %vm12192, %v12591, %v11995
      %v12913 = vsel %vm12192, %v12596, %v12000
      %v12914 = vsel %vm12192, %v12601, %v12003
      %v12915 = vsel %vm12192, %v12606, %v12008
      %v12916 = vsel %vm12192, %v12611, %v12011
      %v12917 = vsel %vm12192, %v12616, %v12016
      %v12918 = vsel %vm12192, %v12621, %v12019
      %v12919 = vsel %vm12192, %v12626, %v12024
      %v12920 = vsel %vm12192, %v12631, %v12027
      %v12921 = vsel %vm12192, %v12636, %v12032
      %v12922 = vsel %vm12192, %v12641, %v12035
      %v12923 = vsel %vm12192, %v12646, %v12040
      %v12924 = vsel %vm12192, %v12651, %v12043
      %v12925 = vsel %vm12192, %v12656, %v12048
      %v12926 = vsel %vm12192, %v12661, %v12051
      %v12927 = vsel %vm12192, %v12666, %v12056
      %v12928 = vsel %vm12192, %v12671, %v12059
      %v12929 = vsel %vm12192, %v12676, %v12064
      %v12930 = vsel %vm12192, %v12681, %v12067
      %v12931 = vsel %vm12192, %v12686, %v12072
      %v12932 = vsel %vm12192, %v12691, %v12075
      %v12933 = vsel %vm12192, %v12696, %v12080
      %v12934 = vsel %vm12192, %v12701, %v12083
      %v12935 = vsel %vm12192, %v12706, %v12088
      %v12936 = vsel %vm12192, %v12711, %v12091
      %v12937 = vsel %vm12192, %v12716, %v12096
      %v12938 = vsel %vm12192, %v12721, %v12099
      %v12939 = vsel %vm12192, %v12726, %v12104
      %v12940 = vsel %vm12192, %v12731, %v12107
      %v12941 = vsel %vm12192, %v12736, %v12112
      %v12942 = vsel %vm12192, %v12741, %v12115
      %v12943 = vsel %vm12192, %v12746, %v12120
      %v12944 = vsel %vm12192, %v12751, %v12123
      %v12945 = vsel %vm12192, %v12756, %v12128
      %v12946 = vsel %vm12192, %v12761, %v12131
      %v12947 = vsel %vm12192, %v12766, %v12136
      %v12948 = vsel %vm12192, %v12771, %v12139
      %v12949 = vsel %vm12192, %v12776, %v12144
      %v12950 = vsel %vm12192, %v12781, %v12147
      %v12951 = vsel %vm12192, %v12786, %v12152
      %v12952 = vsel %vm12192, %v12791, %v12155
      %v12953 = vsel %vm12192, %v12796, %v12160
      %v12954 = vsel %vm12192, %v12801, %v12163
      %v12955 = vsel %vm12192, %v12806, %v12168
      %v12956 = vsel %vm12192, %v12811, %v12171
      %v12957 = vsel %vm12192, %v12816, %v12176
      %v12958 = vsel %vm12192, %v12821, %v12179
      %v12959 = vsel %vm12192, %v12826, %v12184
      %v12960 = vsel %vm12192, %v12831, %v12187
      %vm12961 = vcmask 31744
      %12962 = vst.msk [vmem:[%s361] sm:$0xff] %vm12961, %v12833
      %12963 = vst.msk [vmem:[%s361 + $0x8] sm:$0xff] %vm12961, %v12834
      %12964 = vst.msk [vmem:[%s361 + $0x10] sm:$0xff] %vm12961, %v12835
      %12965 = vst.msk [vmem:[%s361 + $0x18] sm:$0xff] %vm12961, %v12836
      %12966 = vst.msk [vmem:[%s361 + $0x20] sm:$0xff] %vm12961, %v12837
      %12967 = vst.msk [vmem:[%s361 + $0x28] sm:$0xff] %vm12961, %v12838
      %12968 = vst.msk [vmem:[%s361 + $0x30] sm:$0xff] %vm12961, %v12839
      %12969 = vst.msk [vmem:[%s361 + $0x38] sm:$0xff] %vm12961, %v12840
      %12970 = vst.msk [vmem:[%s361 + $0x40] sm:$0xff] %vm12961, %v12841
      %12971 = vst.msk [vmem:[%s361 + $0x48] sm:$0xff] %vm12961, %v12842
      %12972 = vst.msk [vmem:[%s361 + $0x50] sm:$0xff] %vm12961, %v12843
      %12973 = vst.msk [vmem:[%s361 + $0x58] sm:$0xff] %vm12961, %v12844
      %12974 = vst.msk [vmem:[%s361 + $0x60] sm:$0xff] %vm12961, %v12845
      %12975 = vst.msk [vmem:[%s361 + $0x68] sm:$0xff] %vm12961, %v12846
      %12976 = vst.msk [vmem:[%s361 + $0x70] sm:$0xff] %vm12961, %v12847
      %12977 = vst.msk [vmem:[%s361 + $0x78] sm:$0xff] %vm12961, %v12848
      %12978 = vst.msk [vmem:[%s361 + $0x80] sm:$0xff] %vm12961, %v12849
      %12979 = vst.msk [vmem:[%s361 + $0x88] sm:$0xff] %vm12961, %v12850
      %12980 = vst.msk [vmem:[%s361 + $0x90] sm:$0xff] %vm12961, %v12851
      %12981 = vst.msk [vmem:[%s361 + $0x98] sm:$0xff] %vm12961, %v12852
      %12982 = vst.msk [vmem:[%s361 + $0xa0] sm:$0xff] %vm12961, %v12853
      %12983 = vst.msk [vmem:[%s361 + $0xa8] sm:$0xff] %vm12961, %v12854
      %12984 = vst.msk [vmem:[%s361 + $0xb0] sm:$0xff] %vm12961, %v12855
      %12985 = vst.msk [vmem:[%s361 + $0xb8] sm:$0xff] %vm12961, %v12856
      %12986 = vst.msk [vmem:[%s361 + $0xc0] sm:$0xff] %vm12961, %v12857
      %12987 = vst.msk [vmem:[%s361 + $0xc8] sm:$0xff] %vm12961, %v12858
      %12988 = vst.msk [vmem:[%s361 + $0xd0] sm:$0xff] %vm12961, %v12859
      %12989 = vst.msk [vmem:[%s361 + $0xd8] sm:$0xff] %vm12961, %v12860
      %12990 = vst.msk [vmem:[%s361 + $0xe0] sm:$0xff] %vm12961, %v12861
      %12991 = vst.msk [vmem:[%s361 + $0xe8] sm:$0xff] %vm12961, %v12862
      %12992 = vst.msk [vmem:[%s361 + $0xf0] sm:$0xff] %vm12961, %v12863
      %12993 = vst.msk [vmem:[%s361 + $0xf8] sm:$0xff] %vm12961, %v12864
      %12994 = vst.msk [vmem:[%s361 + $0x100] sm:$0xff] %vm12961, %v12865
      %12995 = vst.msk [vmem:[%s361 + $0x108] sm:$0xff] %vm12961, %v12866
      %12996 = vst.msk [vmem:[%s361 + $0x110] sm:$0xff] %vm12961, %v12867
      %12997 = vst.msk [vmem:[%s361 + $0x118] sm:$0xff] %vm12961, %v12868
      %12998 = vst.msk [vmem:[%s361 + $0x120] sm:$0xff] %vm12961, %v12869
      %12999 = vst.msk [vmem:[%s361 + $0x128] sm:$0xff] %vm12961, %v12870
      %13000 = vst.msk [vmem:[%s361 + $0x130] sm:$0xff] %vm12961, %v12871
      %13001 = vst.msk [vmem:[%s361 + $0x138] sm:$0xff] %vm12961, %v12872
      %13002 = vst.msk [vmem:[%s361 + $0x140] sm:$0xff] %vm12961, %v12873
      %13003 = vst.msk [vmem:[%s361 + $0x148] sm:$0xff] %vm12961, %v12874
      %13004 = vst.msk [vmem:[%s361 + $0x150] sm:$0xff] %vm12961, %v12875
      %13005 = vst.msk [vmem:[%s361 + $0x158] sm:$0xff] %vm12961, %v12876
      %13006 = vst.msk [vmem:[%s361 + $0x160] sm:$0xff] %vm12961, %v12877
      %13007 = vst.msk [vmem:[%s361 + $0x168] sm:$0xff] %vm12961, %v12878
      %13008 = vst.msk [vmem:[%s361 + $0x170] sm:$0xff] %vm12961, %v12879
      %13009 = vst.msk [vmem:[%s361 + $0x178] sm:$0xff] %vm12961, %v12880
      %13010 = vst.msk [vmem:[%s361 + $0x180] sm:$0xff] %vm12961, %v12881
      %13011 = vst.msk [vmem:[%s361 + $0x188] sm:$0xff] %vm12961, %v12882
      %13012 = vst.msk [vmem:[%s361 + $0x190] sm:$0xff] %vm12961, %v12883
      %13013 = vst.msk [vmem:[%s361 + $0x198] sm:$0xff] %vm12961, %v12884
      %13014 = vst.msk [vmem:[%s361 + $0x1a0] sm:$0xff] %vm12961, %v12885
      %13015 = vst.msk [vmem:[%s361 + $0x1a8] sm:$0xff] %vm12961, %v12886
      %13016 = vst.msk [vmem:[%s361 + $0x1b0] sm:$0xff] %vm12961, %v12887
      %13017 = vst.msk [vmem:[%s361 + $0x1b8] sm:$0xff] %vm12961, %v12888
      %13018 = vst.msk [vmem:[%s361 + $0x1c0] sm:$0xff] %vm12961, %v12889
      %13019 = vst.msk [vmem:[%s361 + $0x1c8] sm:$0xff] %vm12961, %v12890
      %13020 = vst.msk [vmem:[%s361 + $0x1d0] sm:$0xff] %vm12961, %v12891
      %13021 = vst.msk [vmem:[%s361 + $0x1d8] sm:$0xff] %vm12961, %v12892
      %13022 = vst.msk [vmem:[%s361 + $0x1e0] sm:$0xff] %vm12961, %v12893
      %13023 = vst.msk [vmem:[%s361 + $0x1e8] sm:$0xff] %vm12961, %v12894
      %13024 = vst.msk [vmem:[%s361 + $0x1f0] sm:$0xff] %vm12961, %v12895
      %13025 = vst.msk [vmem:[%s361 + $0x1f8] sm:$0xff] %vm12961, %v12896
      %13026 = vst.msk [vmem:[%s361 + $0x200] sm:$0xff] %vm12961, %v12897
      %13027 = vst.msk [vmem:[%s361 + $0x208] sm:$0xff] %vm12961, %v12898
      %13028 = vst.msk [vmem:[%s361 + $0x210] sm:$0xff] %vm12961, %v12899
      %13029 = vst.msk [vmem:[%s361 + $0x218] sm:$0xff] %vm12961, %v12900
      %13030 = vst.msk [vmem:[%s361 + $0x220] sm:$0xff] %vm12961, %v12901
      %13031 = vst.msk [vmem:[%s361 + $0x228] sm:$0xff] %vm12961, %v12902
      %13032 = vst.msk [vmem:[%s361 + $0x230] sm:$0xff] %vm12961, %v12903
      %13033 = vst.msk [vmem:[%s361 + $0x238] sm:$0xff] %vm12961, %v12904
      %13034 = vst.msk [vmem:[%s361 + $0x240] sm:$0xff] %vm12961, %v12905
      %13035 = vst.msk [vmem:[%s361 + $0x248] sm:$0xff] %vm12961, %v12906
      %13036 = vst.msk [vmem:[%s361 + $0x250] sm:$0xff] %vm12961, %v12907
      %13037 = vst.msk [vmem:[%s361 + $0x258] sm:$0xff] %vm12961, %v12908
      %13038 = vst.msk [vmem:[%s361 + $0x260] sm:$0xff] %vm12961, %v12909
      %13039 = vst.msk [vmem:[%s361 + $0x268] sm:$0xff] %vm12961, %v12910
      %13040 = vst.msk [vmem:[%s361 + $0x270] sm:$0xff] %vm12961, %v12911
      %13041 = vst.msk [vmem:[%s361 + $0x278] sm:$0xff] %vm12961, %v12912
      %13042 = vst.msk [vmem:[%s361 + $0x280] sm:$0xff] %vm12961, %v12913
      %13043 = vst.msk [vmem:[%s361 + $0x288] sm:$0xff] %vm12961, %v12914
      %13044 = vst.msk [vmem:[%s361 + $0x290] sm:$0xff] %vm12961, %v12915
      %13045 = vst.msk [vmem:[%s361 + $0x298] sm:$0xff] %vm12961, %v12916
      %13046 = vst.msk [vmem:[%s361 + $0x2a0] sm:$0xff] %vm12961, %v12917
      %13047 = vst.msk [vmem:[%s361 + $0x2a8] sm:$0xff] %vm12961, %v12918
      %13048 = vst.msk [vmem:[%s361 + $0x2b0] sm:$0xff] %vm12961, %v12919
      %13049 = vst.msk [vmem:[%s361 + $0x2b8] sm:$0xff] %vm12961, %v12920
      %13050 = vst.msk [vmem:[%s361 + $0x2c0] sm:$0xff] %vm12961, %v12921
      %13051 = vst.msk [vmem:[%s361 + $0x2c8] sm:$0xff] %vm12961, %v12922
      %13052 = vst.msk [vmem:[%s361 + $0x2d0] sm:$0xff] %vm12961, %v12923
      %13053 = vst.msk [vmem:[%s361 + $0x2d8] sm:$0xff] %vm12961, %v12924
      %13054 = vst.msk [vmem:[%s361 + $0x2e0] sm:$0xff] %vm12961, %v12925
      %13055 = vst.msk [vmem:[%s361 + $0x2e8] sm:$0xff] %vm12961, %v12926
      %13056 = vst.msk [vmem:[%s361 + $0x2f0] sm:$0xff] %vm12961, %v12927
      %13057 = vst.msk [vmem:[%s361 + $0x2f8] sm:$0xff] %vm12961, %v12928
      %13058 = vst.msk [vmem:[%s361 + $0x300] sm:$0xff] %vm12961, %v12929
      %13059 = vst.msk [vmem:[%s361 + $0x308] sm:$0xff] %vm12961, %v12930
      %13060 = vst.msk [vmem:[%s361 + $0x310] sm:$0xff] %vm12961, %v12931
      %13061 = vst.msk [vmem:[%s361 + $0x318] sm:$0xff] %vm12961, %v12932
      %13062 = vst.msk [vmem:[%s361 + $0x320] sm:$0xff] %vm12961, %v12933
      %13063 = vst.msk [vmem:[%s361 + $0x328] sm:$0xff] %vm12961, %v12934
      %13064 = vst.msk [vmem:[%s361 + $0x330] sm:$0xff] %vm12961, %v12935
      %13065 = vst.msk [vmem:[%s361 + $0x338] sm:$0xff] %vm12961, %v12936
      %13066 = vst.msk [vmem:[%s361 + $0x340] sm:$0xff] %vm12961, %v12937
      %13067 = vst.msk [vmem:[%s361 + $0x348] sm:$0xff] %vm12961, %v12938
      %13068 = vst.msk [vmem:[%s361 + $0x350] sm:$0xff] %vm12961, %v12939
      %13069 = vst.msk [vmem:[%s361 + $0x358] sm:$0xff] %vm12961, %v12940
      %13070 = vst.msk [vmem:[%s361 + $0x360] sm:$0xff] %vm12961, %v12941
      %13071 = vst.msk [vmem:[%s361 + $0x368] sm:$0xff] %vm12961, %v12942
      %13072 = vst.msk [vmem:[%s361 + $0x370] sm:$0xff] %vm12961, %v12943
      %13073 = vst.msk [vmem:[%s361 + $0x378] sm:$0xff] %vm12961, %v12944
      %13074 = vst.msk [vmem:[%s361 + $0x380] sm:$0xff] %vm12961, %v12945
      %13075 = vst.msk [vmem:[%s361 + $0x388] sm:$0xff] %vm12961, %v12946
      %13076 = vst.msk [vmem:[%s361 + $0x390] sm:$0xff] %vm12961, %v12947
      %13077 = vst.msk [vmem:[%s361 + $0x398] sm:$0xff] %vm12961, %v12948
      %13078 = vst.msk [vmem:[%s361 + $0x3a0] sm:$0xff] %vm12961, %v12949
      %13079 = vst.msk [vmem:[%s361 + $0x3a8] sm:$0xff] %vm12961, %v12950
      %13080 = vst.msk [vmem:[%s361 + $0x3b0] sm:$0xff] %vm12961, %v12951
      %13081 = vst.msk [vmem:[%s361 + $0x3b8] sm:$0xff] %vm12961, %v12952
      %13082 = vst.msk [vmem:[%s361 + $0x3c0] sm:$0xff] %vm12961, %v12953
      %13083 = vst.msk [vmem:[%s361 + $0x3c8] sm:$0xff] %vm12961, %v12954
      %13084 = vst.msk [vmem:[%s361 + $0x3d0] sm:$0xff] %vm12961, %v12955
      %13085 = vst.msk [vmem:[%s361 + $0x3d8] sm:$0xff] %vm12961, %v12956
      %13086 = vst.msk [vmem:[%s361 + $0x3e0] sm:$0xff] %vm12961, %v12957
      %13087 = vst.msk [vmem:[%s361 + $0x3e8] sm:$0xff] %vm12961, %v12958
      %13088 = vst.msk [vmem:[%s361 + $0x3f0] sm:$0xff] %vm12961, %v12959
      %13089 = vst.msk [vmem:[%s361 + $0x3f8] sm:$0xff] %vm12961, %v12960
      %s13090 = smul.u32 128, %s21
      %p13091 = scmp.lt.s32.totalorder %s13090, 255
      %s13092 = scalar_select %p13091, %s13090, 255
      %s13093 = smul.addr %s13092, 8
      %s13094 = scalar_lea.vmem %s10, %s13093
      // Predicated region
      $region61: #{tpu_custom_call.1} parent=59 // pred_check
        %p13095 = pneg %p254
      $region62: #{tpu_custom_call.1} parent=59 // pred_check_branch
        %13097 = sbr.rel (%p13095) target = $region64
      $region63: #{tpu_custom_call.1} parent=59 // pred_region
        %s13098 = smul.u32 128, %s21
      $region64: #{tpu_custom_call.1} parent=59 // pred_fallthru
        _
    $region60: #{tpu_custom_call.1} parent=5 // pred_fallthru
      _
    %p13099 = scmp.le.s32.totalorder 2, %s16
    // Predicated region
    $region65: #{tpu_custom_call.1} parent=5 // pred_check
      %p13100 = pneg %p13099
    $region66: #{tpu_custom_call.1} parent=5 // pred_check_branch
      %13102 = sbr.rel (%p13100) target = $region68
    $region67: #{tpu_custom_call.1} parent=5 // pred_region
      %s13103 = ssub.s32 %s16, 2
      // Predicated region
      $region69: #{tpu_custom_call.1} parent=67 // pred_check
        %p13104 = pneg %p260
      $region70: #{tpu_custom_call.1} parent=67 // pred_check_branch
        %13106 = sbr.rel (%p13104) target = $region72
      $region71: #{tpu_custom_call.1} parent=67 // pred_region
        %s13107 = smul.u32 128, %s22
        %p13108 = scmp.lt.s32.totalorder %s13107, 255
        %s13109 = scalar_select %p13108, %s13107, 255
        %s13110 = smul.addr %s13109, 8
        %s13111 = scalar_lea.vmem %s10, %s13110
      $region72: #{tpu_custom_call.1} parent=67 // pred_fallthru
        _
    $region68: #{tpu_custom_call.1} parent=5 // pred_fallthru
      _
  $region6: #{tpu_custom_call.1} parent=0 // loop_footer
    %s20 = sadd.s32 1, %s16
  $region7: #{tpu_custom_call.1} parent=0 // loop_footer_branch
    %15 = sbr.rel target = $region3
  $region8: #{tpu_custom_call.1} parent=0 // loop_exit
    _

</llo_original>
